<compile_context>
chip_gen: v7x
topology: tpu7x:2x2x1
jax: 0.10.0
libtpu: 0.0.40
codegen_flags: <defaults>
</compile_context>

<pallas_src>
import functools

import jax
import jax.numpy as jnp
import numpy as np
from jax.experimental import pallas as pl
from jax.experimental.pallas import tpu as pltpu

_LANE = 128
_VMEM_BUDGET = 16 * 1024 * 1024   # target resident working set per grid step
_VMEM_LIMIT = 32 * 1024 * 1024    # scoped VMEM limit, safe on v5e/v6e/v7x


def _bilinear_taps(in_size: int, out_size: int, scale: float):
    """Per-output-index 2-tap (index, weight) pairs reproducing PyTorch's
    F.interpolate(mode='bilinear', align_corners=False) along one axis."""
    dst = np.arange(out_size, dtype=np.float64)
    src = (dst + 0.5) / scale - 0.5
    src = np.maximum(src, 0.0)                       # PyTorch clamps negative src
    i0 = np.clip(np.floor(src).astype(np.int64), 0, in_size - 1)
    i1 = np.minimum(i0 + 1, in_size - 1)
    frac = src - i0
    w0 = 1.0 - frac
    w1 = frac
    # merge duplicate taps at the right edge (i1 == i0)
    w0 = np.where(i1 == i0, w0 + w1, w0)
    w1 = np.where(i1 == i0, 0.0, w1)
    return (i0.tolist(), [float(v) for v in w0],
            i1.tolist(), [float(v) for v in w1])


def _bilinear_weight_matrix(in_size: int, out_size: int, scale: float) -> np.ndarray:
    """Dense (out, in) interpolation matrix -- used only for the reference."""
    i0, w0, i1, w1 = _bilinear_taps(in_size, out_size, scale)
    m = np.zeros((out_size, in_size), dtype=np.float32)
    rows = np.arange(out_size)
    np.add.at(m, (rows, i0), w0)
    np.add.at(m, (rows, i1), w1)
    return m


def _make_kernel(h_out: int, w_out: int, h_taps, w_taps):
    hi0, hw0, hi1, hw1 = h_taps
    wi0, ww0, wi1, ww1 = w_taps

    def kernel(x_ref, o_ref, tmp_ref):
        # x_ref  : (H,     W,     *batch)   native dtype
        # tmp_ref: (H_out, W,     *batch)   f32 scratch
        # o_ref  : (H_out, W_out, *batch)
        # Height pass: 2-tap blend of input rows (leading-axis slices, VPU).
        for ho in range(h_out):
            r = x_ref[hi0[ho]].astype(jnp.float32)
            if hw0[ho] != 1.0:
                r = r * hw0[ho]
            if hw1[ho] != 0.0:
                r = r + hw1[ho] * x_ref[hi1[ho]].astype(jnp.float32)
            tmp_ref[ho] = r
        # Width pass: 2-tap blend of intermediate columns.
        for wo in range(w_out):
            c = tmp_ref[:, wi0[wo]]
            if ww0[wo] != 1.0:
                c = c * ww0[wo]
            if ww1[wo] != 0.0:
                c = c + ww1[wo] * tmp_ref[:, wi1[wo]]
            o_ref[:, wo] = c.astype(o_ref.dtype)

    return kernel


def _choose_group_block(num_groups: int, group_bytes: int) -> int:
    """Pick how many 128-plane groups go in one grid step (VMEM-budgeted).
    Legal values are num_groups itself or a multiple of 8 (BlockSpec rule)."""
    fit = max(1, _VMEM_BUDGET // max(1, group_bytes))
    if fit >= num_groups:
        if num_groups >= 16:
            # keep >= 2 grid steps so both v7x TensorCores get work
            return max(8, (num_groups // 2) // 8 * 8)
        return num_groups
    return max(8, (min(fit, num_groups) // 8) * 8)


@functools.partial(jax.jit, static_argnames=("scale_factor",))
def interpolate_bilinear(x: jax.Array, scale_factor: int = 2) -> jax.Array:
    """Pallas equivalent of Interpolate(scale_factor, mode='bilinear') forward.

    x: (N, C, H, W)  ->  (N, C, H*scale, W*scale)
    """
    n, c, h, w = x.shape
    sf = float(scale_factor)
    h_out, w_out = int(h * scale_factor), int(w * scale_factor)
    itemsize = jnp.dtype(x.dtype).itemsize
    b = n * c

    kernel = _make_kernel(h_out, w_out,
                          _bilinear_taps(h, h_out, sf),
                          _bilinear_taps(w, w_out, sf))

    xb = x.reshape(b, h, w)

    if b >= _LANE:
        # ---- lane-dense 4-D path: (H, W, G, 128), both TCs can be fed ----
        b_pad = (-b) % _LANE
        if b_pad:
            xb = jnp.pad(xb, ((0, b_pad), (0, 0), (0, 0)))
        bp = b + b_pad
        g = bp // _LANE
        group_bytes = _LANE * (2 * h * w * itemsize            # in, double-buffered
                               + 2 * h_out * w_out * itemsize  # out, double-buffered
                               + h_out * w * 4)                # f32 scratch
        tbg = _choose_group_block(g, group_bytes)
        xt = xb.reshape(g, _LANE, h, w).transpose(2, 3, 0, 1)  # (H, W, G, 128)
        grid = (pl.cdiv(g, tbg),)
        in_spec = pl.BlockSpec((h, w, tbg, _LANE), lambda i: (0, 0, i, 0))
        out_spec = pl.BlockSpec((h_out, w_out, tbg, _LANE), lambda i: (0, 0, i, 0))
        out_shape = jax.ShapeDtypeStruct((h_out, w_out, g, _LANE), x.dtype)
        scratch = pltpu.VMEM((h_out, w, tbg, _LANE), jnp.float32)
    else:
        # ---- small-batch 3-D path: (H, W, B), single grid step ----
        xt = xb.transpose(1, 2, 0)                             # (H, W, B)
        grid = (1,)
        in_spec = pl.BlockSpec((h, w, b), lambda i: (0, 0, 0))
        out_spec = pl.BlockSpec((h_out, w_out, b), lambda i: (0, 0, 0))
        out_shape = jax.ShapeDtypeStruct((h_out, w_out, b), x.dtype)
        scratch = pltpu.VMEM((h_out, w, b), jnp.float32)

    yt = pl.pallas_call(
        kernel,
        out_shape=out_shape,
        grid=grid,
        in_specs=[in_spec],
        out_specs=out_spec,
        scratch_shapes=[scratch],
        compiler_params=pltpu.CompilerParams(
            dimension_semantics=("parallel",),
            vmem_limit_bytes=_VMEM_LIMIT,
        ),
    )(xt)

    if b >= _LANE:
        y = yt.transpose(2, 3, 0, 1).reshape(-1, h_out, w_out)[:b]
    else:
        y = yt.transpose(2, 0, 1)
    return y.reshape(n, c, h_out, w_out)


if __name__ == "__main__":
    key = jax.random.PRNGKey(0)

    # Small shape consistent with the module (exercises the 3-D small-batch path).
    x = jax.random.normal(key, (2, 4, 16, 16), dtype=jnp.float32)
    y = interpolate_bilinear(x, scale_factor=2)
    y = jax.block_until_ready(y)
    assert y.shape == (2, 4, 32, 32), y.shape

    wh = jnp.asarray(_bilinear_weight_matrix(16, 32, 2.0))
    ww = jnp.asarray(_bilinear_weight_matrix(16, 32, 2.0))
    ref = jnp.einsum("oh,nchw,pw->ncop", wh, x, ww)
    np.testing.assert_allclose(np.asarray(y), np.asarray(ref), atol=1e-5, rtol=1e-5)

    # Second check with >=128 planes to exercise the lane-dense batched path.
    x2 = jax.random.normal(jax.random.PRNGKey(1), (2, 128, 16, 16), dtype=jnp.float32)
    y2 = jax.block_until_ready(interpolate_bilinear(x2, scale_factor=2))
    assert y2.shape == (2, 128, 32, 32), y2.shape
    ref2 = jnp.einsum("oh,nchw,pw->ncop", wh, x2, ww)
    np.testing.assert_allclose(np.asarray(y2), np.asarray(ref2), atol=1e-5, rtol=1e-5)

    print("KERNEL_OK")
</pallas_src>

<mosaic_0001>
module attributes {stable_mosaic.version = 11 : i64} {
  func.func @kernel(%arg0: i32, %arg1: memref<16x16x8xf32, #tpu.memory_space<vmem>>, %arg2: memref<32x32x8xf32, #tpu.memory_space<vmem>>, %arg3: memref<32x16x8xf32, #tpu.memory_space<vmem>>) attributes {dimension_semantics = [#tpu.dimension_semantics<parallel>], iteration_bounds = array<i64: 1>, scalar_prefetch = 0 : i64, scratch_operands = 1 : i64, tpu.core_type = #tpu.core_type<tc>, window_params = [{pipeline_mode = #tpu.pipeline_mode<synchronous>, transform_indices = @transform_0, window_bounds = array<i64: 16, 16, 8>}, {pipeline_mode = #tpu.pipeline_mode<synchronous>, transform_indices = @transform_1, window_bounds = array<i64: 32, 32, 8>}]} {
    %c0 = arith.constant 0 : index
    %c0_0 = arith.constant 0 : index
    %c0_1 = arith.constant 0 : index
    %0 = vector.load %arg1[%c0, %c0_0, %c0_1] : memref<16x16x8xf32, #tpu.memory_space<vmem>>, vector<1x16x8xf32>
    %1 = vector.shape_cast %0 : vector<1x16x8xf32> to vector<16x8xf32>
    %c0_2 = arith.constant 0 : index
    %c0_3 = arith.constant 0 : index
    %c0_4 = arith.constant 0 : index
    %2 = vector.load %arg3[%c0_2, %c0_3, %c0_4] : memref<32x16x8xf32, #tpu.memory_space<vmem>>, vector<1x16x8xf32>
    %3 = vector.shape_cast %2 : vector<1x16x8xf32> to vector<16x8xf32>
    %4 = vector.shape_cast %1 : vector<16x8xf32> to vector<1x16x8xf32>
    tpu.vector_store %arg3[%c0_2, %c0_3, %c0_4], %4 {strides = array<i32>} : memref<32x16x8xf32, #tpu.memory_space<vmem>>, vector<1x16x8xf32>,
    %c0_5 = arith.constant 0 : index
    %c0_6 = arith.constant 0 : index
    %c0_7 = arith.constant 0 : index
    %5 = vector.load %arg1[%c0_5, %c0_6, %c0_7] : memref<16x16x8xf32, #tpu.memory_space<vmem>>, vector<1x16x8xf32>
    %6 = vector.shape_cast %5 : vector<1x16x8xf32> to vector<16x8xf32>
    %cst = arith.constant 7.500000e-01 : f32
    %7 = vector.broadcast %cst : f32 to vector<16x8xf32>
    %8 = arith.mulf %6, %7 : vector<16x8xf32>
    %c1 = arith.constant 1 : index
    %c0_8 = arith.constant 0 : index
    %c0_9 = arith.constant 0 : index
    %9 = vector.load %arg1[%c1, %c0_8, %c0_9] : memref<16x16x8xf32, #tpu.memory_space<vmem>>, vector<1x16x8xf32>
    %10 = vector.shape_cast %9 : vector<1x16x8xf32> to vector<16x8xf32>
    %cst_10 = arith.constant 2.500000e-01 : f32
    %11 = vector.broadcast %cst_10 : f32 to vector<16x8xf32>
    %12 = arith.mulf %11, %10 : vector<16x8xf32>
    %13 = arith.addf %8, %12 : vector<16x8xf32>
    %c1_11 = arith.constant 1 : index
    %c0_12 = arith.constant 0 : index
    %c0_13 = arith.constant 0 : index
    %14 = vector.load %arg3[%c1_11, %c0_12, %c0_13] : memref<32x16x8xf32, #tpu.memory_space<vmem>>, vector<1x16x8xf32>
    %15 = vector.shape_cast %14 : vector<1x16x8xf32> to vector<16x8xf32>
    %16 = vector.shape_cast %13 : vector<16x8xf32> to vector<1x16x8xf32>
    tpu.vector_store %arg3[%c1_11, %c0_12, %c0_13], %16 {strides = array<i32>} : memref<32x16x8xf32, #tpu.memory_space<vmem>>, vector<1x16x8xf32>,
    %c0_14 = arith.constant 0 : index
    %c0_15 = arith.constant 0 : index
    %c0_16 = arith.constant 0 : index
    %17 = vector.load %arg1[%c0_14, %c0_15, %c0_16] : memref<16x16x8xf32, #tpu.memory_space<vmem>>, vector<1x16x8xf32>
    %18 = vector.shape_cast %17 : vector<1x16x8xf32> to vector<16x8xf32>
    %cst_17 = arith.constant 2.500000e-01 : f32
    %19 = vector.broadcast %cst_17 : f32 to vector<16x8xf32>
    %20 = arith.mulf %18, %19 : vector<16x8xf32>
    %c1_18 = arith.constant 1 : index
    %c0_19 = arith.constant 0 : index
    %c0_20 = arith.constant 0 : index
    %21 = vector.load %arg1[%c1_18, %c0_19, %c0_20] : memref<16x16x8xf32, #tpu.memory_space<vmem>>, vector<1x16x8xf32>
    %22 = vector.shape_cast %21 : vector<1x16x8xf32> to vector<16x8xf32>
    %cst_21 = arith.constant 7.500000e-01 : f32
    %23 = vector.broadcast %cst_21 : f32 to vector<16x8xf32>
    %24 = arith.mulf %23, %22 : vector<16x8xf32>
    %25 = arith.addf %20, %24 : vector<16x8xf32>
    %c2 = arith.constant 2 : index
    %c0_22 = arith.constant 0 : index
    %c0_23 = arith.constant 0 : index
    %26 = vector.load %arg3[%c2, %c0_22, %c0_23] : memref<32x16x8xf32, #tpu.memory_space<vmem>>, vector<1x16x8xf32>
    %27 = vector.shape_cast %26 : vector<1x16x8xf32> to vector<16x8xf32>
    %28 = vector.shape_cast %25 : vector<16x8xf32> to vector<1x16x8xf32>
    tpu.vector_store %arg3[%c2, %c0_22, %c0_23], %28 {strides = array<i32>} : memref<32x16x8xf32, #tpu.memory_space<vmem>>, vector<1x16x8xf32>,
    %c1_24 = arith.constant 1 : index
    %c0_25 = arith.constant 0 : index
    %c0_26 = arith.constant 0 : index
    %29 = vector.load %arg1[%c1_24, %c0_25, %c0_26] : memref<16x16x8xf32, #tpu.memory_space<vmem>>, vector<1x16x8xf32>
    %30 = vector.shape_cast %29 : vector<1x16x8xf32> to vector<16x8xf32>
    %cst_27 = arith.constant 7.500000e-01 : f32
    %31 = vector.broadcast %cst_27 : f32 to vector<16x8xf32>
    %32 = arith.mulf %30, %31 : vector<16x8xf32>
    %c2_28 = arith.constant 2 : index
    %c0_29 = arith.constant 0 : index
    %c0_30 = arith.constant 0 : index
    %33 = vector.load %arg1[%c2_28, %c0_29, %c0_30] : memref<16x16x8xf32, #tpu.memory_space<vmem>>, vector<1x16x8xf32>
    %34 = vector.shape_cast %33 : vector<1x16x8xf32> to vector<16x8xf32>
    %cst_31 = arith.constant 2.500000e-01 : f32
    %35 = vector.broadcast %cst_31 : f32 to vector<16x8xf32>
    %36 = arith.mulf %35, %34 : vector<16x8xf32>
    %37 = arith.addf %32, %36 : vector<16x8xf32>
    %c3 = arith.constant 3 : index
    %c0_32 = arith.constant 0 : index
    %c0_33 = arith.constant 0 : index
    %38 = vector.load %arg3[%c3, %c0_32, %c0_33] : memref<32x16x8xf32, #tpu.memory_space<vmem>>, vector<1x16x8xf32>
    %39 = vector.shape_cast %38 : vector<1x16x8xf32> to vector<16x8xf32>
    %40 = vector.shape_cast %37 : vector<16x8xf32> to vector<1x16x8xf32>
    tpu.vector_store %arg3[%c3, %c0_32, %c0_33], %40 {strides = array<i32>} : memref<32x16x8xf32, #tpu.memory_space<vmem>>, vector<1x16x8xf32>,
    %c1_34 = arith.constant 1 : index
    %c0_35 = arith.constant 0 : index
    %c0_36 = arith.constant 0 : index
    %41 = vector.load %arg1[%c1_34, %c0_35, %c0_36] : memref<16x16x8xf32, #tpu.memory_space<vmem>>, vector<1x16x8xf32>
    %42 = vector.shape_cast %41 : vector<1x16x8xf32> to vector<16x8xf32>
    %cst_37 = arith.constant 2.500000e-01 : f32
    %43 = vector.broadcast %cst_37 : f32 to vector<16x8xf32>
    %44 = arith.mulf %42, %43 : vector<16x8xf32>
    %c2_38 = arith.constant 2 : index
    %c0_39 = arith.constant 0 : index
    %c0_40 = arith.constant 0 : index
    %45 = vector.load %arg1[%c2_38, %c0_39, %c0_40] : memref<16x16x8xf32, #tpu.memory_space<vmem>>, vector<1x16x8xf32>
    %46 = vector.shape_cast %45 : vector<1x16x8xf32> to vector<16x8xf32>
    %cst_41 = arith.constant 7.500000e-01 : f32
    %47 = vector.broadcast %cst_41 : f32 to vector<16x8xf32>
    %48 = arith.mulf %47, %46 : vector<16x8xf32>
    %49 = arith.addf %44, %48 : vector<16x8xf32>
    %c4 = arith.constant 4 : index
    %c0_42 = arith.constant 0 : index
    %c0_43 = arith.constant 0 : index
    %50 = vector.load %arg3[%c4, %c0_42, %c0_43] : memref<32x16x8xf32, #tpu.memory_space<vmem>>, vector<1x16x8xf32>
    %51 = vector.shape_cast %50 : vector<1x16x8xf32> to vector<16x8xf32>
    %52 = vector.shape_cast %49 : vector<16x8xf32> to vector<1x16x8xf32>
    tpu.vector_store %arg3[%c4, %c0_42, %c0_43], %52 {strides = array<i32>} : memref<32x16x8xf32, #tpu.memory_space<vmem>>, vector<1x16x8xf32>,
    %c2_44 = arith.constant 2 : index
    %c0_45 = arith.constant 0 : index
    %c0_46 = arith.constant 0 : index
    %53 = vector.load %arg1[%c2_44, %c0_45, %c0_46] : memref<16x16x8xf32, #tpu.memory_space<vmem>>, vector<1x16x8xf32>
    %54 = vector.shape_cast %53 : vector<1x16x8xf32> to vector<16x8xf32>
    %cst_47 = arith.constant 7.500000e-01 : f32
    %55 = vector.broadcast %cst_47 : f32 to vector<16x8xf32>
    %56 = arith.mulf %54, %55 : vector<16x8xf32>
    %c3_48 = arith.constant 3 : index
    %c0_49 = arith.constant 0 : index
    %c0_50 = arith.constant 0 : index
    %57 = vector.load %arg1[%c3_48, %c0_49, %c0_50] : memref<16x16x8xf32, #tpu.memory_space<vmem>>, vector<1x16x8xf32>
    %58 = vector.shape_cast %57 : vector<1x16x8xf32> to vector<16x8xf32>
    %cst_51 = arith.constant 2.500000e-01 : f32
    %59 = vector.broadcast %cst_51 : f32 to vector<16x8xf32>
    %60 = arith.mulf %59, %58 : vector<16x8xf32>
    %61 = arith.addf %56, %60 : vector<16x8xf32>
    %c5 = arith.constant 5 : index
    %c0_52 = arith.constant 0 : index
    %c0_53 = arith.constant 0 : index
    %62 = vector.load %arg3[%c5, %c0_52, %c0_53] : memref<32x16x8xf32, #tpu.memory_space<vmem>>, vector<1x16x8xf32>
    %63 = vector.shape_cast %62 : vector<1x16x8xf32> to vector<16x8xf32>
    %64 = vector.shape_cast %61 : vector<16x8xf32> to vector<1x16x8xf32>
    tpu.vector_store %arg3[%c5, %c0_52, %c0_53], %64 {strides = array<i32>} : memref<32x16x8xf32, #tpu.memory_space<vmem>>, vector<1x16x8xf32>,
    %c2_54 = arith.constant 2 : index
    %c0_55 = arith.constant 0 : index
    %c0_56 = arith.constant 0 : index
    %65 = vector.load %arg1[%c2_54, %c0_55, %c0_56] : memref<16x16x8xf32, #tpu.memory_space<vmem>>, vector<1x16x8xf32>
    %66 = vector.shape_cast %65 : vector<1x16x8xf32> to vector<16x8xf32>
    %cst_57 = arith.constant 2.500000e-01 : f32
    %67 = vector.broadcast %cst_57 : f32 to vector<16x8xf32>
    %68 = arith.mulf %66, %67 : vector<16x8xf32>
    %c3_58 = arith.constant 3 : index
    %c0_59 = arith.constant 0 : index
    %c0_60 = arith.constant 0 : index
    %69 = vector.load %arg1[%c3_58, %c0_59, %c0_60] : memref<16x16x8xf32, #tpu.memory_space<vmem>>, vector<1x16x8xf32>
    %70 = vector.shape_cast %69 : vector<1x16x8xf32> to vector<16x8xf32>
    %cst_61 = arith.constant 7.500000e-01 : f32
    %71 = vector.broadcast %cst_61 : f32 to vector<16x8xf32>
    %72 = arith.mulf %71, %70 : vector<16x8xf32>
    %73 = arith.addf %68, %72 : vector<16x8xf32>
    %c6 = arith.constant 6 : index
    %c0_62 = arith.constant 0 : index
    %c0_63 = arith.constant 0 : index
    %74 = vector.load %arg3[%c6, %c0_62, %c0_63] : memref<32x16x8xf32, #tpu.memory_space<vmem>>, vector<1x16x8xf32>
    %75 = vector.shape_cast %74 : vector<1x16x8xf32> to vector<16x8xf32>
    %76 = vector.shape_cast %73 : vector<16x8xf32> to vector<1x16x8xf32>
    tpu.vector_store %arg3[%c6, %c0_62, %c0_63], %76 {strides = array<i32>} : memref<32x16x8xf32, #tpu.memory_space<vmem>>, vector<1x16x8xf32>,
    %c3_64 = arith.constant 3 : index
    %c0_65 = arith.constant 0 : index
    %c0_66 = arith.constant 0 : index
    %77 = vector.load %arg1[%c3_64, %c0_65, %c0_66] : memref<16x16x8xf32, #tpu.memory_space<vmem>>, vector<1x16x8xf32>
    %78 = vector.shape_cast %77 : vector<1x16x8xf32> to vector<16x8xf32>
    %cst_67 = arith.constant 7.500000e-01 : f32
    %79 = vector.broadcast %cst_67 : f32 to vector<16x8xf32>
    %80 = arith.mulf %78, %79 : vector<16x8xf32>
    %c4_68 = arith.constant 4 : index
    %c0_69 = arith.constant 0 : index
    %c0_70 = arith.constant 0 : index
    %81 = vector.load %arg1[%c4_68, %c0_69, %c0_70] : memref<16x16x8xf32, #tpu.memory_space<vmem>>, vector<1x16x8xf32>
    %82 = vector.shape_cast %81 : vector<1x16x8xf32> to vector<16x8xf32>
    %cst_71 = arith.constant 2.500000e-01 : f32
    %83 = vector.broadcast %cst_71 : f32 to vector<16x8xf32>
    %84 = arith.mulf %83, %82 : vector<16x8xf32>
    %85 = arith.addf %80, %84 : vector<16x8xf32>
    %c7 = arith.constant 7 : index
    %c0_72 = arith.constant 0 : index
    %c0_73 = arith.constant 0 : index
    %86 = vector.load %arg3[%c7, %c0_72, %c0_73] : memref<32x16x8xf32, #tpu.memory_space<vmem>>, vector<1x16x8xf32>
    %87 = vector.shape_cast %86 : vector<1x16x8xf32> to vector<16x8xf32>
    %88 = vector.shape_cast %85 : vector<16x8xf32> to vector<1x16x8xf32>
    tpu.vector_store %arg3[%c7, %c0_72, %c0_73], %88 {strides = array<i32>} : memref<32x16x8xf32, #tpu.memory_space<vmem>>, vector<1x16x8xf32>,
    %c3_74 = arith.constant 3 : index
    %c0_75 = arith.constant 0 : index
    %c0_76 = arith.constant 0 : index
    %89 = vector.load %arg1[%c3_74, %c0_75, %c0_76] : memref<16x16x8xf32, #tpu.memory_space<vmem>>, vector<1x16x8xf32>
    %90 = vector.shape_cast %89 : vector<1x16x8xf32> to vector<16x8xf32>
    %cst_77 = arith.constant 2.500000e-01 : f32
    %91 = vector.broadcast %cst_77 : f32 to vector<16x8xf32>
    %92 = arith.mulf %90, %91 : vector<16x8xf32>
    %c4_78 = arith.constant 4 : index
    %c0_79 = arith.constant 0 : index
    %c0_80 = arith.constant 0 : index
    %93 = vector.load %arg1[%c4_78, %c0_79, %c0_80] : memref<16x16x8xf32, #tpu.memory_space<vmem>>, vector<1x16x8xf32>
    %94 = vector.shape_cast %93 : vector<1x16x8xf32> to vector<16x8xf32>
    %cst_81 = arith.constant 7.500000e-01 : f32
    %95 = vector.broadcast %cst_81 : f32 to vector<16x8xf32>
    %96 = arith.mulf %95, %94 : vector<16x8xf32>
    %97 = arith.addf %92, %96 : vector<16x8xf32>
    %c8 = arith.constant 8 : index
    %c0_82 = arith.constant 0 : index
    %c0_83 = arith.constant 0 : index
    %98 = vector.load %arg3[%c8, %c0_82, %c0_83] : memref<32x16x8xf32, #tpu.memory_space<vmem>>, vector<1x16x8xf32>
    %99 = vector.shape_cast %98 : vector<1x16x8xf32> to vector<16x8xf32>
    %100 = vector.shape_cast %97 : vector<16x8xf32> to vector<1x16x8xf32>
    tpu.vector_store %arg3[%c8, %c0_82, %c0_83], %100 {strides = array<i32>} : memref<32x16x8xf32, #tpu.memory_space<vmem>>, vector<1x16x8xf32>,
    %c4_84 = arith.constant 4 : index
    %c0_85 = arith.constant 0 : index
    %c0_86 = arith.constant 0 : index
    %101 = vector.load %arg1[%c4_84, %c0_85, %c0_86] : memref<16x16x8xf32, #tpu.memory_space<vmem>>, vector<1x16x8xf32>
    %102 = vector.shape_cast %101 : vector<1x16x8xf32> to vector<16x8xf32>
    %cst_87 = arith.constant 7.500000e-01 : f32
    %103 = vector.broadcast %cst_87 : f32 to vector<16x8xf32>
    %104 = arith.mulf %102, %103 : vector<16x8xf32>
    %c5_88 = arith.constant 5 : index
    %c0_89 = arith.constant 0 : index
    %c0_90 = arith.constant 0 : index
    %105 = vector.load %arg1[%c5_88, %c0_89, %c0_90] : memref<16x16x8xf32, #tpu.memory_space<vmem>>, vector<1x16x8xf32>
    %106 = vector.shape_cast %105 : vector<1x16x8xf32> to vector<16x8xf32>
    %cst_91 = arith.constant 2.500000e-01 : f32
    %107 = vector.broadcast %cst_91 : f32 to vector<16x8xf32>
    %108 = arith.mulf %107, %106 : vector<16x8xf32>
    %109 = arith.addf %104, %108 : vector<16x8xf32>
    %c9 = arith.constant 9 : index
    %c0_92 = arith.constant 0 : index
    %c0_93 = arith.constant 0 : index
    %110 = vector.load %arg3[%c9, %c0_92, %c0_93] : memref<32x16x8xf32, #tpu.memory_space<vmem>>, vector<1x16x8xf32>
    %111 = vector.shape_cast %110 : vector<1x16x8xf32> to vector<16x8xf32>
    %112 = vector.shape_cast %109 : vector<16x8xf32> to vector<1x16x8xf32>
    tpu.vector_store %arg3[%c9, %c0_92, %c0_93], %112 {strides = array<i32>} : memref<32x16x8xf32, #tpu.memory_space<vmem>>, vector<1x16x8xf32>,
    %c4_94 = arith.constant 4 : index
    %c0_95 = arith.constant 0 : index
    %c0_96 = arith.constant 0 : index
    %113 = vector.load %arg1[%c4_94, %c0_95, %c0_96] : memref<16x16x8xf32, #tpu.memory_space<vmem>>, vector<1x16x8xf32>
    %114 = vector.shape_cast %113 : vector<1x16x8xf32> to vector<16x8xf32>
    %cst_97 = arith.constant 2.500000e-01 : f32
    %115 = vector.broadcast %cst_97 : f32 to vector<16x8xf32>
    %116 = arith.mulf %114, %115 : vector<16x8xf32>
    %c5_98 = arith.constant 5 : index
    %c0_99 = arith.constant 0 : index
    %c0_100 = arith.constant 0 : index
    %117 = vector.load %arg1[%c5_98, %c0_99, %c0_100] : memref<16x16x8xf32, #tpu.memory_space<vmem>>, vector<1x16x8xf32>
    %118 = vector.shape_cast %117 : vector<1x16x8xf32> to vector<16x8xf32>
    %cst_101 = arith.constant 7.500000e-01 : f32
    %119 = vector.broadcast %cst_101 : f32 to vector<16x8xf32>
    %120 = arith.mulf %119, %118 : vector<16x8xf32>
    %121 = arith.addf %116, %120 : vector<16x8xf32>
    %c10 = arith.constant 10 : index
    %c0_102 = arith.constant 0 : index
    %c0_103 = arith.constant 0 : index
    %122 = vector.load %arg3[%c10, %c0_102, %c0_103] : memref<32x16x8xf32, #tpu.memory_space<vmem>>, vector<1x16x8xf32>
    %123 = vector.shape_cast %122 : vector<1x16x8xf32> to vector<16x8xf32>
    %124 = vector.shape_cast %121 : vector<16x8xf32> to vector<1x16x8xf32>
    tpu.vector_store %arg3[%c10, %c0_102, %c0_103], %124 {strides = array<i32>} : memref<32x16x8xf32, #tpu.memory_space<vmem>>, vector<1x16x8xf32>,
    %c5_104 = arith.constant 5 : index
    %c0_105 = arith.constant 0 : index
    %c0_106 = arith.constant 0 : index
    %125 = vector.load %arg1[%c5_104, %c0_105, %c0_106] : memref<16x16x8xf32, #tpu.memory_space<vmem>>, vector<1x16x8xf32>
    %126 = vector.shape_cast %125 : vector<1x16x8xf32> to vector<16x8xf32>
    %cst_107 = arith.constant 7.500000e-01 : f32
    %127 = vector.broadcast %cst_107 : f32 to vector<16x8xf32>
    %128 = arith.mulf %126, %127 : vector<16x8xf32>
    %c6_108 = arith.constant 6 : index
    %c0_109 = arith.constant 0 : index
    %c0_110 = arith.constant 0 : index
    %129 = vector.load %arg1[%c6_108, %c0_109, %c0_110] : memref<16x16x8xf32, #tpu.memory_space<vmem>>, vector<1x16x8xf32>
    %130 = vector.shape_cast %129 : vector<1x16x8xf32> to vector<16x8xf32>
    %cst_111 = arith.constant 2.500000e-01 : f32
    %131 = vector.broadcast %cst_111 : f32 to vector<16x8xf32>
    %132 = arith.mulf %131, %130 : vector<16x8xf32>
    %133 = arith.addf %128, %132 : vector<16x8xf32>
    %c11 = arith.constant 11 : index
    %c0_112 = arith.constant 0 : index
    %c0_113 = arith.constant 0 : index
    %134 = vector.load %arg3[%c11, %c0_112, %c0_113] : memref<32x16x8xf32, #tpu.memory_space<vmem>>, vector<1x16x8xf32>
    %135 = vector.shape_cast %134 : vector<1x16x8xf32> to vector<16x8xf32>
    %136 = vector.shape_cast %133 : vector<16x8xf32> to vector<1x16x8xf32>
    tpu.vector_store %arg3[%c11, %c0_112, %c0_113], %136 {strides = array<i32>} : memref<32x16x8xf32, #tpu.memory_space<vmem>>, vector<1x16x8xf32>,
    %c5_114 = arith.constant 5 : index
    %c0_115 = arith.constant 0 : index
    %c0_116 = arith.constant 0 : index
    %137 = vector.load %arg1[%c5_114, %c0_115, %c0_116] : memref<16x16x8xf32, #tpu.memory_space<vmem>>, vector<1x16x8xf32>
    %138 = vector.shape_cast %137 : vector<1x16x8xf32> to vector<16x8xf32>
    %cst_117 = arith.constant 2.500000e-01 : f32
    %139 = vector.broadcast %cst_117 : f32 to vector<16x8xf32>
    %140 = arith.mulf %138, %139 : vector<16x8xf32>
    %c6_118 = arith.constant 6 : index
    %c0_119 = arith.constant 0 : index
    %c0_120 = arith.constant 0 : index
    %141 = vector.load %arg1[%c6_118, %c0_119, %c0_120] : memref<16x16x8xf32, #tpu.memory_space<vmem>>, vector<1x16x8xf32>
    %142 = vector.shape_cast %141 : vector<1x16x8xf32> to vector<16x8xf32>
    %cst_121 = arith.constant 7.500000e-01 : f32
    %143 = vector.broadcast %cst_121 : f32 to vector<16x8xf32>
    %144 = arith.mulf %143, %142 : vector<16x8xf32>
    %145 = arith.addf %140, %144 : vector<16x8xf32>
    %c12 = arith.constant 12 : index
    %c0_122 = arith.constant 0 : index
    %c0_123 = arith.constant 0 : index
    %146 = vector.load %arg3[%c12, %c0_122, %c0_123] : memref<32x16x8xf32, #tpu.memory_space<vmem>>, vector<1x16x8xf32>
    %147 = vector.shape_cast %146 : vector<1x16x8xf32> to vector<16x8xf32>
    %148 = vector.shape_cast %145 : vector<16x8xf32> to vector<1x16x8xf32>
    tpu.vector_store %arg3[%c12, %c0_122, %c0_123], %148 {strides = array<i32>} : memref<32x16x8xf32, #tpu.memory_space<vmem>>, vector<1x16x8xf32>,
    %c6_124 = arith.constant 6 : index
    %c0_125 = arith.constant 0 : index
    %c0_126 = arith.constant 0 : index
    %149 = vector.load %arg1[%c6_124, %c0_125, %c0_126] : memref<16x16x8xf32, #tpu.memory_space<vmem>>, vector<1x16x8xf32>
    %150 = vector.shape_cast %149 : vector<1x16x8xf32> to vector<16x8xf32>
    %cst_127 = arith.constant 7.500000e-01 : f32
    %151 = vector.broadcast %cst_127 : f32 to vector<16x8xf32>
    %152 = arith.mulf %150, %151 : vector<16x8xf32>
    %c7_128 = arith.constant 7 : index
    %c0_129 = arith.constant 0 : index
    %c0_130 = arith.constant 0 : index
    %153 = vector.load %arg1[%c7_128, %c0_129, %c0_130] : memref<16x16x8xf32, #tpu.memory_space<vmem>>, vector<1x16x8xf32>
    %154 = vector.shape_cast %153 : vector<1x16x8xf32> to vector<16x8xf32>
    %cst_131 = arith.constant 2.500000e-01 : f32
    %155 = vector.broadcast %cst_131 : f32 to vector<16x8xf32>
    %156 = arith.mulf %155, %154 : vector<16x8xf32>
    %157 = arith.addf %152, %156 : vector<16x8xf32>
    %c13 = arith.constant 13 : index
    %c0_132 = arith.constant 0 : index
    %c0_133 = arith.constant 0 : index
    %158 = vector.load %arg3[%c13, %c0_132, %c0_133] : memref<32x16x8xf32, #tpu.memory_space<vmem>>, vector<1x16x8xf32>
    %159 = vector.shape_cast %158 : vector<1x16x8xf32> to vector<16x8xf32>
    %160 = vector.shape_cast %157 : vector<16x8xf32> to vector<1x16x8xf32>
    tpu.vector_store %arg3[%c13, %c0_132, %c0_133], %160 {strides = array<i32>} : memref<32x16x8xf32, #tpu.memory_space<vmem>>, vector<1x16x8xf32>,
    %c6_134 = arith.constant 6 : index
    %c0_135 = arith.constant 0 : index
    %c0_136 = arith.constant 0 : index
    %161 = vector.load %arg1[%c6_134, %c0_135, %c0_136] : memref<16x16x8xf32, #tpu.memory_space<vmem>>, vector<1x16x8xf32>
    %162 = vector.shape_cast %161 : vector<1x16x8xf32> to vector<16x8xf32>
    %cst_137 = arith.constant 2.500000e-01 : f32
    %163 = vector.broadcast %cst_137 : f32 to vector<16x8xf32>
    %164 = arith.mulf %162, %163 : vector<16x8xf32>
    %c7_138 = arith.constant 7 : index
    %c0_139 = arith.constant 0 : index
    %c0_140 = arith.constant 0 : index
    %165 = vector.load %arg1[%c7_138, %c0_139, %c0_140] : memref<16x16x8xf32, #tpu.memory_space<vmem>>, vector<1x16x8xf32>
    %166 = vector.shape_cast %165 : vector<1x16x8xf32> to vector<16x8xf32>
    %cst_141 = arith.constant 7.500000e-01 : f32
    %167 = vector.broadcast %cst_141 : f32 to vector<16x8xf32>
    %168 = arith.mulf %167, %166 : vector<16x8xf32>
    %169 = arith.addf %164, %168 : vector<16x8xf32>
    %c14 = arith.constant 14 : index
    %c0_142 = arith.constant 0 : index
    %c0_143 = arith.constant 0 : index
    %170 = vector.load %arg3[%c14, %c0_142, %c0_143] : memref<32x16x8xf32, #tpu.memory_space<vmem>>, vector<1x16x8xf32>
    %171 = vector.shape_cast %170 : vector<1x16x8xf32> to vector<16x8xf32>
    %172 = vector.shape_cast %169 : vector<16x8xf32> to vector<1x16x8xf32>
    tpu.vector_store %arg3[%c14, %c0_142, %c0_143], %172 {strides = array<i32>} : memref<32x16x8xf32, #tpu.memory_space<vmem>>, vector<1x16x8xf32>,
    %c7_144 = arith.constant 7 : index
    %c0_145 = arith.constant 0 : index
    %c0_146 = arith.constant 0 : index
    %173 = vector.load %arg1[%c7_144, %c0_145, %c0_146] : memref<16x16x8xf32, #tpu.memory_space<vmem>>, vector<1x16x8xf32>
    %174 = vector.shape_cast %173 : vector<1x16x8xf32> to vector<16x8xf32>
    %cst_147 = arith.constant 7.500000e-01 : f32
    %175 = vector.broadcast %cst_147 : f32 to vector<16x8xf32>
    %176 = arith.mulf %174, %175 : vector<16x8xf32>
    %c8_148 = arith.constant 8 : index
    %c0_149 = arith.constant 0 : index
    %c0_150 = arith.constant 0 : index
    %177 = vector.load %arg1[%c8_148, %c0_149, %c0_150] : memref<16x16x8xf32, #tpu.memory_space<vmem>>, vector<1x16x8xf32>
    %178 = vector.shape_cast %177 : vector<1x16x8xf32> to vector<16x8xf32>
    %cst_151 = arith.constant 2.500000e-01 : f32
    %179 = vector.broadcast %cst_151 : f32 to vector<16x8xf32>
    %180 = arith.mulf %179, %178 : vector<16x8xf32>
    %181 = arith.addf %176, %180 : vector<16x8xf32>
    %c15 = arith.constant 15 : index
    %c0_152 = arith.constant 0 : index
    %c0_153 = arith.constant 0 : index
    %182 = vector.load %arg3[%c15, %c0_152, %c0_153] : memref<32x16x8xf32, #tpu.memory_space<vmem>>, vector<1x16x8xf32>
    %183 = vector.shape_cast %182 : vector<1x16x8xf32> to vector<16x8xf32>
    %184 = vector.shape_cast %181 : vector<16x8xf32> to vector<1x16x8xf32>
    tpu.vector_store %arg3[%c15, %c0_152, %c0_153], %184 {strides = array<i32>} : memref<32x16x8xf32, #tpu.memory_space<vmem>>, vector<1x16x8xf32>,
    %c7_154 = arith.constant 7 : index
    %c0_155 = arith.constant 0 : index
    %c0_156 = arith.constant 0 : index
    %185 = vector.load %arg1[%c7_154, %c0_155, %c0_156] : memref<16x16x8xf32, #tpu.memory_space<vmem>>, vector<1x16x8xf32>
    %186 = vector.shape_cast %185 : vector<1x16x8xf32> to vector<16x8xf32>
    %cst_157 = arith.constant 2.500000e-01 : f32
    %187 = vector.broadcast %cst_157 : f32 to vector<16x8xf32>
    %188 = arith.mulf %186, %187 : vector<16x8xf32>
    %c8_158 = arith.constant 8 : index
    %c0_159 = arith.constant 0 : index
    %c0_160 = arith.constant 0 : index
    %189 = vector.load %arg1[%c8_158, %c0_159, %c0_160] : memref<16x16x8xf32, #tpu.memory_space<vmem>>, vector<1x16x8xf32>
    %190 = vector.shape_cast %189 : vector<1x16x8xf32> to vector<16x8xf32>
    %cst_161 = arith.constant 7.500000e-01 : f32
    %191 = vector.broadcast %cst_161 : f32 to vector<16x8xf32>
    %192 = arith.mulf %191, %190 : vector<16x8xf32>
    %193 = arith.addf %188, %192 : vector<16x8xf32>
    %c16 = arith.constant 16 : index
    %c0_162 = arith.constant 0 : index
    %c0_163 = arith.constant 0 : index
    %194 = vector.load %arg3[%c16, %c0_162, %c0_163] : memref<32x16x8xf32, #tpu.memory_space<vmem>>, vector<1x16x8xf32>
    %195 = vector.shape_cast %194 : vector<1x16x8xf32> to vector<16x8xf32>
    %196 = vector.shape_cast %193 : vector<16x8xf32> to vector<1x16x8xf32>
    tpu.vector_store %arg3[%c16, %c0_162, %c0_163], %196 {strides = array<i32>} : memref<32x16x8xf32, #tpu.memory_space<vmem>>, vector<1x16x8xf32>,
    %c8_164 = arith.constant 8 : index
    %c0_165 = arith.constant 0 : index
    %c0_166 = arith.constant 0 : index
    %197 = vector.load %arg1[%c8_164, %c0_165, %c0_166] : memref<16x16x8xf32, #tpu.memory_space<vmem>>, vector<1x16x8xf32>
    %198 = vector.shape_cast %197 : vector<1x16x8xf32> to vector<16x8xf32>
    %cst_167 = arith.constant 7.500000e-01 : f32
    %199 = vector.broadcast %cst_167 : f32 to vector<16x8xf32>
    %200 = arith.mulf %198, %199 : vector<16x8xf32>
    %c9_168 = arith.constant 9 : index
    %c0_169 = arith.constant 0 : index
    %c0_170 = arith.constant 0 : index
    %201 = vector.load %arg1[%c9_168, %c0_169, %c0_170] : memref<16x16x8xf32, #tpu.memory_space<vmem>>, vector<1x16x8xf32>
    %202 = vector.shape_cast %201 : vector<1x16x8xf32> to vector<16x8xf32>
    %cst_171 = arith.constant 2.500000e-01 : f32
    %203 = vector.broadcast %cst_171 : f32 to vector<16x8xf32>
    %204 = arith.mulf %203, %202 : vector<16x8xf32>
    %205 = arith.addf %200, %204 : vector<16x8xf32>
    %c17 = arith.constant 17 : index
    %c0_172 = arith.constant 0 : index
    %c0_173 = arith.constant 0 : index
    %206 = vector.load %arg3[%c17, %c0_172, %c0_173] : memref<32x16x8xf32, #tpu.memory_space<vmem>>, vector<1x16x8xf32>
    %207 = vector.shape_cast %206 : vector<1x16x8xf32> to vector<16x8xf32>
    %208 = vector.shape_cast %205 : vector<16x8xf32> to vector<1x16x8xf32>
    tpu.vector_store %arg3[%c17, %c0_172, %c0_173], %208 {strides = array<i32>} : memref<32x16x8xf32, #tpu.memory_space<vmem>>, vector<1x16x8xf32>,
    %c8_174 = arith.constant 8 : index
    %c0_175 = arith.constant 0 : index
    %c0_176 = arith.constant 0 : index
    %209 = vector.load %arg1[%c8_174, %c0_175, %c0_176] : memref<16x16x8xf32, #tpu.memory_space<vmem>>, vector<1x16x8xf32>
    %210 = vector.shape_cast %209 : vector<1x16x8xf32> to vector<16x8xf32>
    %cst_177 = arith.constant 2.500000e-01 : f32
    %211 = vector.broadcast %cst_177 : f32 to vector<16x8xf32>
    %212 = arith.mulf %210, %211 : vector<16x8xf32>
    %c9_178 = arith.constant 9 : index
    %c0_179 = arith.constant 0 : index
    %c0_180 = arith.constant 0 : index
    %213 = vector.load %arg1[%c9_178, %c0_179, %c0_180] : memref<16x16x8xf32, #tpu.memory_space<vmem>>, vector<1x16x8xf32>
    %214 = vector.shape_cast %213 : vector<1x16x8xf32> to vector<16x8xf32>
    %cst_181 = arith.constant 7.500000e-01 : f32
    %215 = vector.broadcast %cst_181 : f32 to vector<16x8xf32>
    %216 = arith.mulf %215, %214 : vector<16x8xf32>
    %217 = arith.addf %212, %216 : vector<16x8xf32>
    %c18 = arith.constant 18 : index
    %c0_182 = arith.constant 0 : index
    %c0_183 = arith.constant 0 : index
    %218 = vector.load %arg3[%c18, %c0_182, %c0_183] : memref<32x16x8xf32, #tpu.memory_space<vmem>>, vector<1x16x8xf32>
    %219 = vector.shape_cast %218 : vector<1x16x8xf32> to vector<16x8xf32>
    %220 = vector.shape_cast %217 : vector<16x8xf32> to vector<1x16x8xf32>
    tpu.vector_store %arg3[%c18, %c0_182, %c0_183], %220 {strides = array<i32>} : memref<32x16x8xf32, #tpu.memory_space<vmem>>, vector<1x16x8xf32>,
    %c9_184 = arith.constant 9 : index
    %c0_185 = arith.constant 0 : index
    %c0_186 = arith.constant 0 : index
    %221 = vector.load %arg1[%c9_184, %c0_185, %c0_186] : memref<16x16x8xf32, #tpu.memory_space<vmem>>, vector<1x16x8xf32>
    %222 = vector.shape_cast %221 : vector<1x16x8xf32> to vector<16x8xf32>
    %cst_187 = arith.constant 7.500000e-01 : f32
    %223 = vector.broadcast %cst_187 : f32 to vector<16x8xf32>
    %224 = arith.mulf %222, %223 : vector<16x8xf32>
    %c10_188 = arith.constant 10 : index
    %c0_189 = arith.constant 0 : index
    %c0_190 = arith.constant 0 : index
    %225 = vector.load %arg1[%c10_188, %c0_189, %c0_190] : memref<16x16x8xf32, #tpu.memory_space<vmem>>, vector<1x16x8xf32>
    %226 = vector.shape_cast %225 : vector<1x16x8xf32> to vector<16x8xf32>
    %cst_191 = arith.constant 2.500000e-01 : f32
    %227 = vector.broadcast %cst_191 : f32 to vector<16x8xf32>
    %228 = arith.mulf %227, %226 : vector<16x8xf32>
    %229 = arith.addf %224, %228 : vector<16x8xf32>
    %c19 = arith.constant 19 : index
    %c0_192 = arith.constant 0 : index
    %c0_193 = arith.constant 0 : index
    %230 = vector.load %arg3[%c19, %c0_192, %c0_193] : memref<32x16x8xf32, #tpu.memory_space<vmem>>, vector<1x16x8xf32>
    %231 = vector.shape_cast %230 : vector<1x16x8xf32> to vector<16x8xf32>
    %232 = vector.shape_cast %229 : vector<16x8xf32> to vector<1x16x8xf32>
    tpu.vector_store %arg3[%c19, %c0_192, %c0_193], %232 {strides = array<i32>} : memref<32x16x8xf32, #tpu.memory_space<vmem>>, vector<1x16x8xf32>,
    %c9_194 = arith.constant 9 : index
    %c0_195 = arith.constant 0 : index
    %c0_196 = arith.constant 0 : index
    %233 = vector.load %arg1[%c9_194, %c0_195, %c0_196] : memref<16x16x8xf32, #tpu.memory_space<vmem>>, vector<1x16x8xf32>
    %234 = vector.shape_cast %233 : vector<1x16x8xf32> to vector<16x8xf32>
    %cst_197 = arith.constant 2.500000e-01 : f32
    %235 = vector.broadcast %cst_197 : f32 to vector<16x8xf32>
    %236 = arith.mulf %234, %235 : vector<16x8xf32>
    %c10_198 = arith.constant 10 : index
    %c0_199 = arith.constant 0 : index
    %c0_200 = arith.constant 0 : index
    %237 = vector.load %arg1[%c10_198, %c0_199, %c0_200] : memref<16x16x8xf32, #tpu.memory_space<vmem>>, vector<1x16x8xf32>
    %238 = vector.shape_cast %237 : vector<1x16x8xf32> to vector<16x8xf32>
    %cst_201 = arith.constant 7.500000e-01 : f32
    %239 = vector.broadcast %cst_201 : f32 to vector<16x8xf32>
    %240 = arith.mulf %239, %238 : vector<16x8xf32>
    %241 = arith.addf %236, %240 : vector<16x8xf32>
    %c20 = arith.constant 20 : index
    %c0_202 = arith.constant 0 : index
    %c0_203 = arith.constant 0 : index
    %242 = vector.load %arg3[%c20, %c0_202, %c0_203] : memref<32x16x8xf32, #tpu.memory_space<vmem>>, vector<1x16x8xf32>
    %243 = vector.shape_cast %242 : vector<1x16x8xf32> to vector<16x8xf32>
    %244 = vector.shape_cast %241 : vector<16x8xf32> to vector<1x16x8xf32>
    tpu.vector_store %arg3[%c20, %c0_202, %c0_203], %244 {strides = array<i32>} : memref<32x16x8xf32, #tpu.memory_space<vmem>>, vector<1x16x8xf32>,
    %c10_204 = arith.constant 10 : index
    %c0_205 = arith.constant 0 : index
    %c0_206 = arith.constant 0 : index
    %245 = vector.load %arg1[%c10_204, %c0_205, %c0_206] : memref<16x16x8xf32, #tpu.memory_space<vmem>>, vector<1x16x8xf32>
    %246 = vector.shape_cast %245 : vector<1x16x8xf32> to vector<16x8xf32>
    %cst_207 = arith.constant 7.500000e-01 : f32
    %247 = vector.broadcast %cst_207 : f32 to vector<16x8xf32>
    %248 = arith.mulf %246, %247 : vector<16x8xf32>
    %c11_208 = arith.constant 11 : index
    %c0_209 = arith.constant 0 : index
    %c0_210 = arith.constant 0 : index
    %249 = vector.load %arg1[%c11_208, %c0_209, %c0_210] : memref<16x16x8xf32, #tpu.memory_space<vmem>>, vector<1x16x8xf32>
    %250 = vector.shape_cast %249 : vector<1x16x8xf32> to vector<16x8xf32>
    %cst_211 = arith.constant 2.500000e-01 : f32
    %251 = vector.broadcast %cst_211 : f32 to vector<16x8xf32>
    %252 = arith.mulf %251, %250 : vector<16x8xf32>
    %253 = arith.addf %248, %252 : vector<16x8xf32>
    %c21 = arith.constant 21 : index
    %c0_212 = arith.constant 0 : index
    %c0_213 = arith.constant 0 : index
    %254 = vector.load %arg3[%c21, %c0_212, %c0_213] : memref<32x16x8xf32, #tpu.memory_space<vmem>>, vector<1x16x8xf32>
    %255 = vector.shape_cast %254 : vector<1x16x8xf32> to vector<16x8xf32>
    %256 = vector.shape_cast %253 : vector<16x8xf32> to vector<1x16x8xf32>
    tpu.vector_store %arg3[%c21, %c0_212, %c0_213], %256 {strides = array<i32>} : memref<32x16x8xf32, #tpu.memory_space<vmem>>, vector<1x16x8xf32>,
    %c10_214 = arith.constant 10 : index
    %c0_215 = arith.constant 0 : index
    %c0_216 = arith.constant 0 : index
    %257 = vector.load %arg1[%c10_214, %c0_215, %c0_216] : memref<16x16x8xf32, #tpu.memory_space<vmem>>, vector<1x16x8xf32>
    %258 = vector.shape_cast %257 : vector<1x16x8xf32> to vector<16x8xf32>
    %cst_217 = arith.constant 2.500000e-01 : f32
    %259 = vector.broadcast %cst_217 : f32 to vector<16x8xf32>
    %260 = arith.mulf %258, %259 : vector<16x8xf32>
    %c11_218 = arith.constant 11 : index
    %c0_219 = arith.constant 0 : index
    %c0_220 = arith.constant 0 : index
    %261 = vector.load %arg1[%c11_218, %c0_219, %c0_220] : memref<16x16x8xf32, #tpu.memory_space<vmem>>, vector<1x16x8xf32>
    %262 = vector.shape_cast %261 : vector<1x16x8xf32> to vector<16x8xf32>
    %cst_221 = arith.constant 7.500000e-01 : f32
    %263 = vector.broadcast %cst_221 : f32 to vector<16x8xf32>
    %264 = arith.mulf %263, %262 : vector<16x8xf32>
    %265 = arith.addf %260, %264 : vector<16x8xf32>
    %c22 = arith.constant 22 : index
    %c0_222 = arith.constant 0 : index
    %c0_223 = arith.constant 0 : index
    %266 = vector.load %arg3[%c22, %c0_222, %c0_223] : memref<32x16x8xf32, #tpu.memory_space<vmem>>, vector<1x16x8xf32>
    %267 = vector.shape_cast %266 : vector<1x16x8xf32> to vector<16x8xf32>
    %268 = vector.shape_cast %265 : vector<16x8xf32> to vector<1x16x8xf32>
    tpu.vector_store %arg3[%c22, %c0_222, %c0_223], %268 {strides = array<i32>} : memref<32x16x8xf32, #tpu.memory_space<vmem>>, vector<1x16x8xf32>,
    %c11_224 = arith.constant 11 : index
    %c0_225 = arith.constant 0 : index
    %c0_226 = arith.constant 0 : index
    %269 = vector.load %arg1[%c11_224, %c0_225, %c0_226] : memref<16x16x8xf32, #tpu.memory_space<vmem>>, vector<1x16x8xf32>
    %270 = vector.shape_cast %269 : vector<1x16x8xf32> to vector<16x8xf32>
    %cst_227 = arith.constant 7.500000e-01 : f32
    %271 = vector.broadcast %cst_227 : f32 to vector<16x8xf32>
    %272 = arith.mulf %270, %271 : vector<16x8xf32>
    %c12_228 = arith.constant 12 : index
    %c0_229 = arith.constant 0 : index
    %c0_230 = arith.constant 0 : index
    %273 = vector.load %arg1[%c12_228, %c0_229, %c0_230] : memref<16x16x8xf32, #tpu.memory_space<vmem>>, vector<1x16x8xf32>
    %274 = vector.shape_cast %273 : vector<1x16x8xf32> to vector<16x8xf32>
    %cst_231 = arith.constant 2.500000e-01 : f32
    %275 = vector.broadcast %cst_231 : f32 to vector<16x8xf32>
    %276 = arith.mulf %275, %274 : vector<16x8xf32>
    %277 = arith.addf %272, %276 : vector<16x8xf32>
    %c23 = arith.constant 23 : index
    %c0_232 = arith.constant 0 : index
    %c0_233 = arith.constant 0 : index
    %278 = vector.load %arg3[%c23, %c0_232, %c0_233] : memref<32x16x8xf32, #tpu.memory_space<vmem>>, vector<1x16x8xf32>
    %279 = vector.shape_cast %278 : vector<1x16x8xf32> to vector<16x8xf32>
    %280 = vector.shape_cast %277 : vector<16x8xf32> to vector<1x16x8xf32>
    tpu.vector_store %arg3[%c23, %c0_232, %c0_233], %280 {strides = array<i32>} : memref<32x16x8xf32, #tpu.memory_space<vmem>>, vector<1x16x8xf32>,
    %c11_234 = arith.constant 11 : index
    %c0_235 = arith.constant 0 : index
    %c0_236 = arith.constant 0 : index
    %281 = vector.load %arg1[%c11_234, %c0_235, %c0_236] : memref<16x16x8xf32, #tpu.memory_space<vmem>>, vector<1x16x8xf32>
    %282 = vector.shape_cast %281 : vector<1x16x8xf32> to vector<16x8xf32>
    %cst_237 = arith.constant 2.500000e-01 : f32
    %283 = vector.broadcast %cst_237 : f32 to vector<16x8xf32>
    %284 = arith.mulf %282, %283 : vector<16x8xf32>
    %c12_238 = arith.constant 12 : index
    %c0_239 = arith.constant 0 : index
    %c0_240 = arith.constant 0 : index
    %285 = vector.load %arg1[%c12_238, %c0_239, %c0_240] : memref<16x16x8xf32, #tpu.memory_space<vmem>>, vector<1x16x8xf32>
    %286 = vector.shape_cast %285 : vector<1x16x8xf32> to vector<16x8xf32>
    %cst_241 = arith.constant 7.500000e-01 : f32
    %287 = vector.broadcast %cst_241 : f32 to vector<16x8xf32>
    %288 = arith.mulf %287, %286 : vector<16x8xf32>
    %289 = arith.addf %284, %288 : vector<16x8xf32>
    %c24 = arith.constant 24 : index
    %c0_242 = arith.constant 0 : index
    %c0_243 = arith.constant 0 : index
    %290 = vector.load %arg3[%c24, %c0_242, %c0_243] : memref<32x16x8xf32, #tpu.memory_space<vmem>>, vector<1x16x8xf32>
    %291 = vector.shape_cast %290 : vector<1x16x8xf32> to vector<16x8xf32>
    %292 = vector.shape_cast %289 : vector<16x8xf32> to vector<1x16x8xf32>
    tpu.vector_store %arg3[%c24, %c0_242, %c0_243], %292 {strides = array<i32>} : memref<32x16x8xf32, #tpu.memory_space<vmem>>, vector<1x16x8xf32>,
    %c12_244 = arith.constant 12 : index
    %c0_245 = arith.constant 0 : index
    %c0_246 = arith.constant 0 : index
    %293 = vector.load %arg1[%c12_244, %c0_245, %c0_246] : memref<16x16x8xf32, #tpu.memory_space<vmem>>, vector<1x16x8xf32>
    %294 = vector.shape_cast %293 : vector<1x16x8xf32> to vector<16x8xf32>
    %cst_247 = arith.constant 7.500000e-01 : f32
    %295 = vector.broadcast %cst_247 : f32 to vector<16x8xf32>
    %296 = arith.mulf %294, %295 : vector<16x8xf32>
    %c13_248 = arith.constant 13 : index
    %c0_249 = arith.constant 0 : index
    %c0_250 = arith.constant 0 : index
    %297 = vector.load %arg1[%c13_248, %c0_249, %c0_250] : memref<16x16x8xf32, #tpu.memory_space<vmem>>, vector<1x16x8xf32>
    %298 = vector.shape_cast %297 : vector<1x16x8xf32> to vector<16x8xf32>
    %cst_251 = arith.constant 2.500000e-01 : f32
    %299 = vector.broadcast %cst_251 : f32 to vector<16x8xf32>
    %300 = arith.mulf %299, %298 : vector<16x8xf32>
    %301 = arith.addf %296, %300 : vector<16x8xf32>
    %c25 = arith.constant 25 : index
    %c0_252 = arith.constant 0 : index
    %c0_253 = arith.constant 0 : index
    %302 = vector.load %arg3[%c25, %c0_252, %c0_253] : memref<32x16x8xf32, #tpu.memory_space<vmem>>, vector<1x16x8xf32>
    %303 = vector.shape_cast %302 : vector<1x16x8xf32> to vector<16x8xf32>
    %304 = vector.shape_cast %301 : vector<16x8xf32> to vector<1x16x8xf32>
    tpu.vector_store %arg3[%c25, %c0_252, %c0_253], %304 {strides = array<i32>} : memref<32x16x8xf32, #tpu.memory_space<vmem>>, vector<1x16x8xf32>,
    %c12_254 = arith.constant 12 : index
    %c0_255 = arith.constant 0 : index
    %c0_256 = arith.constant 0 : index
    %305 = vector.load %arg1[%c12_254, %c0_255, %c0_256] : memref<16x16x8xf32, #tpu.memory_space<vmem>>, vector<1x16x8xf32>
    %306 = vector.shape_cast %305 : vector<1x16x8xf32> to vector<16x8xf32>
    %cst_257 = arith.constant 2.500000e-01 : f32
    %307 = vector.broadcast %cst_257 : f32 to vector<16x8xf32>
    %308 = arith.mulf %306, %307 : vector<16x8xf32>
    %c13_258 = arith.constant 13 : index
    %c0_259 = arith.constant 0 : index
    %c0_260 = arith.constant 0 : index
    %309 = vector.load %arg1[%c13_258, %c0_259, %c0_260] : memref<16x16x8xf32, #tpu.memory_space<vmem>>, vector<1x16x8xf32>
    %310 = vector.shape_cast %309 : vector<1x16x8xf32> to vector<16x8xf32>
    %cst_261 = arith.constant 7.500000e-01 : f32
    %311 = vector.broadcast %cst_261 : f32 to vector<16x8xf32>
    %312 = arith.mulf %311, %310 : vector<16x8xf32>
    %313 = arith.addf %308, %312 : vector<16x8xf32>
    %c26 = arith.constant 26 : index
    %c0_262 = arith.constant 0 : index
    %c0_263 = arith.constant 0 : index
    %314 = vector.load %arg3[%c26, %c0_262, %c0_263] : memref<32x16x8xf32, #tpu.memory_space<vmem>>, vector<1x16x8xf32>
    %315 = vector.shape_cast %314 : vector<1x16x8xf32> to vector<16x8xf32>
    %316 = vector.shape_cast %313 : vector<16x8xf32> to vector<1x16x8xf32>
    tpu.vector_store %arg3[%c26, %c0_262, %c0_263], %316 {strides = array<i32>} : memref<32x16x8xf32, #tpu.memory_space<vmem>>, vector<1x16x8xf32>,
    %c13_264 = arith.constant 13 : index
    %c0_265 = arith.constant 0 : index
    %c0_266 = arith.constant 0 : index
    %317 = vector.load %arg1[%c13_264, %c0_265, %c0_266] : memref<16x16x8xf32, #tpu.memory_space<vmem>>, vector<1x16x8xf32>
    %318 = vector.shape_cast %317 : vector<1x16x8xf32> to vector<16x8xf32>
    %cst_267 = arith.constant 7.500000e-01 : f32
    %319 = vector.broadcast %cst_267 : f32 to vector<16x8xf32>
    %320 = arith.mulf %318, %319 : vector<16x8xf32>
    %c14_268 = arith.constant 14 : index
    %c0_269 = arith.constant 0 : index
    %c0_270 = arith.constant 0 : index
    %321 = vector.load %arg1[%c14_268, %c0_269, %c0_270] : memref<16x16x8xf32, #tpu.memory_space<vmem>>, vector<1x16x8xf32>
    %322 = vector.shape_cast %321 : vector<1x16x8xf32> to vector<16x8xf32>
    %cst_271 = arith.constant 2.500000e-01 : f32
    %323 = vector.broadcast %cst_271 : f32 to vector<16x8xf32>
    %324 = arith.mulf %323, %322 : vector<16x8xf32>
    %325 = arith.addf %320, %324 : vector<16x8xf32>
    %c27 = arith.constant 27 : index
    %c0_272 = arith.constant 0 : index
    %c0_273 = arith.constant 0 : index
    %326 = vector.load %arg3[%c27, %c0_272, %c0_273] : memref<32x16x8xf32, #tpu.memory_space<vmem>>, vector<1x16x8xf32>
    %327 = vector.shape_cast %326 : vector<1x16x8xf32> to vector<16x8xf32>
    %328 = vector.shape_cast %325 : vector<16x8xf32> to vector<1x16x8xf32>
    tpu.vector_store %arg3[%c27, %c0_272, %c0_273], %328 {strides = array<i32>} : memref<32x16x8xf32, #tpu.memory_space<vmem>>, vector<1x16x8xf32>,
    %c13_274 = arith.constant 13 : index
    %c0_275 = arith.constant 0 : index
    %c0_276 = arith.constant 0 : index
    %329 = vector.load %arg1[%c13_274, %c0_275, %c0_276] : memref<16x16x8xf32, #tpu.memory_space<vmem>>, vector<1x16x8xf32>
    %330 = vector.shape_cast %329 : vector<1x16x8xf32> to vector<16x8xf32>
    %cst_277 = arith.constant 2.500000e-01 : f32
    %331 = vector.broadcast %cst_277 : f32 to vector<16x8xf32>
    %332 = arith.mulf %330, %331 : vector<16x8xf32>
    %c14_278 = arith.constant 14 : index
    %c0_279 = arith.constant 0 : index
    %c0_280 = arith.constant 0 : index
    %333 = vector.load %arg1[%c14_278, %c0_279, %c0_280] : memref<16x16x8xf32, #tpu.memory_space<vmem>>, vector<1x16x8xf32>
    %334 = vector.shape_cast %333 : vector<1x16x8xf32> to vector<16x8xf32>
    %cst_281 = arith.constant 7.500000e-01 : f32
    %335 = vector.broadcast %cst_281 : f32 to vector<16x8xf32>
    %336 = arith.mulf %335, %334 : vector<16x8xf32>
    %337 = arith.addf %332, %336 : vector<16x8xf32>
    %c28 = arith.constant 28 : index
    %c0_282 = arith.constant 0 : index
    %c0_283 = arith.constant 0 : index
    %338 = vector.load %arg3[%c28, %c0_282, %c0_283] : memref<32x16x8xf32, #tpu.memory_space<vmem>>, vector<1x16x8xf32>
    %339 = vector.shape_cast %338 : vector<1x16x8xf32> to vector<16x8xf32>
    %340 = vector.shape_cast %337 : vector<16x8xf32> to vector<1x16x8xf32>
    tpu.vector_store %arg3[%c28, %c0_282, %c0_283], %340 {strides = array<i32>} : memref<32x16x8xf32, #tpu.memory_space<vmem>>, vector<1x16x8xf32>,
    %c14_284 = arith.constant 14 : index
    %c0_285 = arith.constant 0 : index
    %c0_286 = arith.constant 0 : index
    %341 = vector.load %arg1[%c14_284, %c0_285, %c0_286] : memref<16x16x8xf32, #tpu.memory_space<vmem>>, vector<1x16x8xf32>
    %342 = vector.shape_cast %341 : vector<1x16x8xf32> to vector<16x8xf32>
    %cst_287 = arith.constant 7.500000e-01 : f32
    %343 = vector.broadcast %cst_287 : f32 to vector<16x8xf32>
    %344 = arith.mulf %342, %343 : vector<16x8xf32>
    %c15_288 = arith.constant 15 : index
    %c0_289 = arith.constant 0 : index
    %c0_290 = arith.constant 0 : index
    %345 = vector.load %arg1[%c15_288, %c0_289, %c0_290] : memref<16x16x8xf32, #tpu.memory_space<vmem>>, vector<1x16x8xf32>
    %346 = vector.shape_cast %345 : vector<1x16x8xf32> to vector<16x8xf32>
    %cst_291 = arith.constant 2.500000e-01 : f32
    %347 = vector.broadcast %cst_291 : f32 to vector<16x8xf32>
    %348 = arith.mulf %347, %346 : vector<16x8xf32>
    %349 = arith.addf %344, %348 : vector<16x8xf32>
    %c29 = arith.constant 29 : index
    %c0_292 = arith.constant 0 : index
    %c0_293 = arith.constant 0 : index
    %350 = vector.load %arg3[%c29, %c0_292, %c0_293] : memref<32x16x8xf32, #tpu.memory_space<vmem>>, vector<1x16x8xf32>
    %351 = vector.shape_cast %350 : vector<1x16x8xf32> to vector<16x8xf32>
    %352 = vector.shape_cast %349 : vector<16x8xf32> to vector<1x16x8xf32>
    tpu.vector_store %arg3[%c29, %c0_292, %c0_293], %352 {strides = array<i32>} : memref<32x16x8xf32, #tpu.memory_space<vmem>>, vector<1x16x8xf32>,
    %c14_294 = arith.constant 14 : index
    %c0_295 = arith.constant 0 : index
    %c0_296 = arith.constant 0 : index
    %353 = vector.load %arg1[%c14_294, %c0_295, %c0_296] : memref<16x16x8xf32, #tpu.memory_space<vmem>>, vector<1x16x8xf32>
    %354 = vector.shape_cast %353 : vector<1x16x8xf32> to vector<16x8xf32>
    %cst_297 = arith.constant 2.500000e-01 : f32
    %355 = vector.broadcast %cst_297 : f32 to vector<16x8xf32>
    %356 = arith.mulf %354, %355 : vector<16x8xf32>
    %c15_298 = arith.constant 15 : index
    %c0_299 = arith.constant 0 : index
    %c0_300 = arith.constant 0 : index
    %357 = vector.load %arg1[%c15_298, %c0_299, %c0_300] : memref<16x16x8xf32, #tpu.memory_space<vmem>>, vector<1x16x8xf32>
    %358 = vector.shape_cast %357 : vector<1x16x8xf32> to vector<16x8xf32>
    %cst_301 = arith.constant 7.500000e-01 : f32
    %359 = vector.broadcast %cst_301 : f32 to vector<16x8xf32>
    %360 = arith.mulf %359, %358 : vector<16x8xf32>
    %361 = arith.addf %356, %360 : vector<16x8xf32>
    %c30 = arith.constant 30 : index
    %c0_302 = arith.constant 0 : index
    %c0_303 = arith.constant 0 : index
    %362 = vector.load %arg3[%c30, %c0_302, %c0_303] : memref<32x16x8xf32, #tpu.memory_space<vmem>>, vector<1x16x8xf32>
    %363 = vector.shape_cast %362 : vector<1x16x8xf32> to vector<16x8xf32>
    %364 = vector.shape_cast %361 : vector<16x8xf32> to vector<1x16x8xf32>
    tpu.vector_store %arg3[%c30, %c0_302, %c0_303], %364 {strides = array<i32>} : memref<32x16x8xf32, #tpu.memory_space<vmem>>, vector<1x16x8xf32>,
    %c15_304 = arith.constant 15 : index
    %c0_305 = arith.constant 0 : index
    %c0_306 = arith.constant 0 : index
    %365 = vector.load %arg1[%c15_304, %c0_305, %c0_306] : memref<16x16x8xf32, #tpu.memory_space<vmem>>, vector<1x16x8xf32>
    %366 = vector.shape_cast %365 : vector<1x16x8xf32> to vector<16x8xf32>
    %c31 = arith.constant 31 : index
    %c0_307 = arith.constant 0 : index
    %c0_308 = arith.constant 0 : index
    %367 = vector.load %arg3[%c31, %c0_307, %c0_308] : memref<32x16x8xf32, #tpu.memory_space<vmem>>, vector<1x16x8xf32>
    %368 = vector.shape_cast %367 : vector<1x16x8xf32> to vector<16x8xf32>
    %369 = vector.shape_cast %366 : vector<16x8xf32> to vector<1x16x8xf32>
    tpu.vector_store %arg3[%c31, %c0_307, %c0_308], %369 {strides = array<i32>} : memref<32x16x8xf32, #tpu.memory_space<vmem>>, vector<1x16x8xf32>,
    %c0_309 = arith.constant 0 : index
    %c0_310 = arith.constant 0 : index
    %c0_311 = arith.constant 0 : index
    %370 = vector.load %arg3[%c0_309, %c0_310, %c0_311] : memref<32x16x8xf32, #tpu.memory_space<vmem>>, vector<32x1x8xf32>
    %371 = vector.shape_cast %370 : vector<32x1x8xf32> to vector<32x8xf32>
    %c0_312 = arith.constant 0 : index
    %c0_313 = arith.constant 0 : index
    %c0_314 = arith.constant 0 : index
    %372 = vector.load %arg2[%c0_312, %c0_313, %c0_314] : memref<32x32x8xf32, #tpu.memory_space<vmem>>, vector<32x1x8xf32>
    %373 = vector.shape_cast %372 : vector<32x1x8xf32> to vector<32x8xf32>
    %374 = vector.shape_cast %371 : vector<32x8xf32> to vector<32x1x8xf32>
    tpu.vector_store %arg2[%c0_312, %c0_313, %c0_314], %374 {strides = array<i32>} : memref<32x32x8xf32, #tpu.memory_space<vmem>>, vector<32x1x8xf32>,
    %c0_315 = arith.constant 0 : index
    %c0_316 = arith.constant 0 : index
    %c0_317 = arith.constant 0 : index
    %375 = vector.load %arg3[%c0_315, %c0_316, %c0_317] : memref<32x16x8xf32, #tpu.memory_space<vmem>>, vector<32x1x8xf32>
    %376 = vector.shape_cast %375 : vector<32x1x8xf32> to vector<32x8xf32>
    %cst_318 = arith.constant 7.500000e-01 : f32
    %377 = vector.broadcast %cst_318 : f32 to vector<32x8xf32>
    %378 = arith.mulf %376, %377 : vector<32x8xf32>
    %c0_319 = arith.constant 0 : index
    %c1_320 = arith.constant 1 : index
    %c0_321 = arith.constant 0 : index
    %379 = vector.load %arg3[%c0_319, %c1_320, %c0_321] : memref<32x16x8xf32, #tpu.memory_space<vmem>>, vector<32x1x8xf32>
    %380 = vector.shape_cast %379 : vector<32x1x8xf32> to vector<32x8xf32>
    %cst_322 = arith.constant 2.500000e-01 : f32
    %381 = vector.broadcast %cst_322 : f32 to vector<32x8xf32>
    %382 = arith.mulf %381, %380 : vector<32x8xf32>
    %383 = arith.addf %378, %382 : vector<32x8xf32>
    %c0_323 = arith.constant 0 : index
    %c1_324 = arith.constant 1 : index
    %c0_325 = arith.constant 0 : index
    %384 = vector.load %arg2[%c0_323, %c1_324, %c0_325] : memref<32x32x8xf32, #tpu.memory_space<vmem>>, vector<32x1x8xf32>
    %385 = vector.shape_cast %384 : vector<32x1x8xf32> to vector<32x8xf32>
    %386 = vector.shape_cast %383 : vector<32x8xf32> to vector<32x1x8xf32>
    tpu.vector_store %arg2[%c0_323, %c1_324, %c0_325], %386 {strides = array<i32>} : memref<32x32x8xf32, #tpu.memory_space<vmem>>, vector<32x1x8xf32>,
    %c0_326 = arith.constant 0 : index
    %c0_327 = arith.constant 0 : index
    %c0_328 = arith.constant 0 : index
    %387 = vector.load %arg3[%c0_326, %c0_327, %c0_328] : memref<32x16x8xf32, #tpu.memory_space<vmem>>, vector<32x1x8xf32>
    %388 = vector.shape_cast %387 : vector<32x1x8xf32> to vector<32x8xf32>
    %cst_329 = arith.constant 2.500000e-01 : f32
    %389 = vector.broadcast %cst_329 : f32 to vector<32x8xf32>
    %390 = arith.mulf %388, %389 : vector<32x8xf32>
    %c0_330 = arith.constant 0 : index
    %c1_331 = arith.constant 1 : index
    %c0_332 = arith.constant 0 : index
    %391 = vector.load %arg3[%c0_330, %c1_331, %c0_332] : memref<32x16x8xf32, #tpu.memory_space<vmem>>, vector<32x1x8xf32>
    %392 = vector.shape_cast %391 : vector<32x1x8xf32> to vector<32x8xf32>
    %cst_333 = arith.constant 7.500000e-01 : f32
    %393 = vector.broadcast %cst_333 : f32 to vector<32x8xf32>
    %394 = arith.mulf %393, %392 : vector<32x8xf32>
    %395 = arith.addf %390, %394 : vector<32x8xf32>
    %c0_334 = arith.constant 0 : index
    %c2_335 = arith.constant 2 : index
    %c0_336 = arith.constant 0 : index
    %396 = vector.load %arg2[%c0_334, %c2_335, %c0_336] : memref<32x32x8xf32, #tpu.memory_space<vmem>>, vector<32x1x8xf32>
    %397 = vector.shape_cast %396 : vector<32x1x8xf32> to vector<32x8xf32>
    %398 = vector.shape_cast %395 : vector<32x8xf32> to vector<32x1x8xf32>
    tpu.vector_store %arg2[%c0_334, %c2_335, %c0_336], %398 {strides = array<i32>} : memref<32x32x8xf32, #tpu.memory_space<vmem>>, vector<32x1x8xf32>,
    %c0_337 = arith.constant 0 : index
    %c1_338 = arith.constant 1 : index
    %c0_339 = arith.constant 0 : index
    %399 = vector.load %arg3[%c0_337, %c1_338, %c0_339] : memref<32x16x8xf32, #tpu.memory_space<vmem>>, vector<32x1x8xf32>
    %400 = vector.shape_cast %399 : vector<32x1x8xf32> to vector<32x8xf32>
    %cst_340 = arith.constant 7.500000e-01 : f32
    %401 = vector.broadcast %cst_340 : f32 to vector<32x8xf32>
    %402 = arith.mulf %400, %401 : vector<32x8xf32>
    %c0_341 = arith.constant 0 : index
    %c2_342 = arith.constant 2 : index
    %c0_343 = arith.constant 0 : index
    %403 = vector.load %arg3[%c0_341, %c2_342, %c0_343] : memref<32x16x8xf32, #tpu.memory_space<vmem>>, vector<32x1x8xf32>
    %404 = vector.shape_cast %403 : vector<32x1x8xf32> to vector<32x8xf32>
    %cst_344 = arith.constant 2.500000e-01 : f32
    %405 = vector.broadcast %cst_344 : f32 to vector<32x8xf32>
    %406 = arith.mulf %405, %404 : vector<32x8xf32>
    %407 = arith.addf %402, %406 : vector<32x8xf32>
    %c0_345 = arith.constant 0 : index
    %c3_346 = arith.constant 3 : index
    %c0_347 = arith.constant 0 : index
    %408 = vector.load %arg2[%c0_345, %c3_346, %c0_347] : memref<32x32x8xf32, #tpu.memory_space<vmem>>, vector<32x1x8xf32>
    %409 = vector.shape_cast %408 : vector<32x1x8xf32> to vector<32x8xf32>
    %410 = vector.shape_cast %407 : vector<32x8xf32> to vector<32x1x8xf32>
    tpu.vector_store %arg2[%c0_345, %c3_346, %c0_347], %410 {strides = array<i32>} : memref<32x32x8xf32, #tpu.memory_space<vmem>>, vector<32x1x8xf32>,
    %c0_348 = arith.constant 0 : index
    %c1_349 = arith.constant 1 : index
    %c0_350 = arith.constant 0 : index
    %411 = vector.load %arg3[%c0_348, %c1_349, %c0_350] : memref<32x16x8xf32, #tpu.memory_space<vmem>>, vector<32x1x8xf32>
    %412 = vector.shape_cast %411 : vector<32x1x8xf32> to vector<32x8xf32>
    %cst_351 = arith.constant 2.500000e-01 : f32
    %413 = vector.broadcast %cst_351 : f32 to vector<32x8xf32>
    %414 = arith.mulf %412, %413 : vector<32x8xf32>
    %c0_352 = arith.constant 0 : index
    %c2_353 = arith.constant 2 : index
    %c0_354 = arith.constant 0 : index
    %415 = vector.load %arg3[%c0_352, %c2_353, %c0_354] : memref<32x16x8xf32, #tpu.memory_space<vmem>>, vector<32x1x8xf32>
    %416 = vector.shape_cast %415 : vector<32x1x8xf32> to vector<32x8xf32>
    %cst_355 = arith.constant 7.500000e-01 : f32
    %417 = vector.broadcast %cst_355 : f32 to vector<32x8xf32>
    %418 = arith.mulf %417, %416 : vector<32x8xf32>
    %419 = arith.addf %414, %418 : vector<32x8xf32>
    %c0_356 = arith.constant 0 : index
    %c4_357 = arith.constant 4 : index
    %c0_358 = arith.constant 0 : index
    %420 = vector.load %arg2[%c0_356, %c4_357, %c0_358] : memref<32x32x8xf32, #tpu.memory_space<vmem>>, vector<32x1x8xf32>
    %421 = vector.shape_cast %420 : vector<32x1x8xf32> to vector<32x8xf32>
    %422 = vector.shape_cast %419 : vector<32x8xf32> to vector<32x1x8xf32>
    tpu.vector_store %arg2[%c0_356, %c4_357, %c0_358], %422 {strides = array<i32>} : memref<32x32x8xf32, #tpu.memory_space<vmem>>, vector<32x1x8xf32>,
    %c0_359 = arith.constant 0 : index
    %c2_360 = arith.constant 2 : index
    %c0_361 = arith.constant 0 : index
    %423 = vector.load %arg3[%c0_359, %c2_360, %c0_361] : memref<32x16x8xf32, #tpu.memory_space<vmem>>, vector<32x1x8xf32>
    %424 = vector.shape_cast %423 : vector<32x1x8xf32> to vector<32x8xf32>
    %cst_362 = arith.constant 7.500000e-01 : f32
    %425 = vector.broadcast %cst_362 : f32 to vector<32x8xf32>
    %426 = arith.mulf %424, %425 : vector<32x8xf32>
    %c0_363 = arith.constant 0 : index
    %c3_364 = arith.constant 3 : index
    %c0_365 = arith.constant 0 : index
    %427 = vector.load %arg3[%c0_363, %c3_364, %c0_365] : memref<32x16x8xf32, #tpu.memory_space<vmem>>, vector<32x1x8xf32>
    %428 = vector.shape_cast %427 : vector<32x1x8xf32> to vector<32x8xf32>
    %cst_366 = arith.constant 2.500000e-01 : f32
    %429 = vector.broadcast %cst_366 : f32 to vector<32x8xf32>
    %430 = arith.mulf %429, %428 : vector<32x8xf32>
    %431 = arith.addf %426, %430 : vector<32x8xf32>
    %c0_367 = arith.constant 0 : index
    %c5_368 = arith.constant 5 : index
    %c0_369 = arith.constant 0 : index
    %432 = vector.load %arg2[%c0_367, %c5_368, %c0_369] : memref<32x32x8xf32, #tpu.memory_space<vmem>>, vector<32x1x8xf32>
    %433 = vector.shape_cast %432 : vector<32x1x8xf32> to vector<32x8xf32>
    %434 = vector.shape_cast %431 : vector<32x8xf32> to vector<32x1x8xf32>
    tpu.vector_store %arg2[%c0_367, %c5_368, %c0_369], %434 {strides = array<i32>} : memref<32x32x8xf32, #tpu.memory_space<vmem>>, vector<32x1x8xf32>,
    %c0_370 = arith.constant 0 : index
    %c2_371 = arith.constant 2 : index
    %c0_372 = arith.constant 0 : index
    %435 = vector.load %arg3[%c0_370, %c2_371, %c0_372] : memref<32x16x8xf32, #tpu.memory_space<vmem>>, vector<32x1x8xf32>
    %436 = vector.shape_cast %435 : vector<32x1x8xf32> to vector<32x8xf32>
    %cst_373 = arith.constant 2.500000e-01 : f32
    %437 = vector.broadcast %cst_373 : f32 to vector<32x8xf32>
    %438 = arith.mulf %436, %437 : vector<32x8xf32>
    %c0_374 = arith.constant 0 : index
    %c3_375 = arith.constant 3 : index
    %c0_376 = arith.constant 0 : index
    %439 = vector.load %arg3[%c0_374, %c3_375, %c0_376] : memref<32x16x8xf32, #tpu.memory_space<vmem>>, vector<32x1x8xf32>
    %440 = vector.shape_cast %439 : vector<32x1x8xf32> to vector<32x8xf32>
    %cst_377 = arith.constant 7.500000e-01 : f32
    %441 = vector.broadcast %cst_377 : f32 to vector<32x8xf32>
    %442 = arith.mulf %441, %440 : vector<32x8xf32>
    %443 = arith.addf %438, %442 : vector<32x8xf32>
    %c0_378 = arith.constant 0 : index
    %c6_379 = arith.constant 6 : index
    %c0_380 = arith.constant 0 : index
    %444 = vector.load %arg2[%c0_378, %c6_379, %c0_380] : memref<32x32x8xf32, #tpu.memory_space<vmem>>, vector<32x1x8xf32>
    %445 = vector.shape_cast %444 : vector<32x1x8xf32> to vector<32x8xf32>
    %446 = vector.shape_cast %443 : vector<32x8xf32> to vector<32x1x8xf32>
    tpu.vector_store %arg2[%c0_378, %c6_379, %c0_380], %446 {strides = array<i32>} : memref<32x32x8xf32, #tpu.memory_space<vmem>>, vector<32x1x8xf32>,
    %c0_381 = arith.constant 0 : index
    %c3_382 = arith.constant 3 : index
    %c0_383 = arith.constant 0 : index
    %447 = vector.load %arg3[%c0_381, %c3_382, %c0_383] : memref<32x16x8xf32, #tpu.memory_space<vmem>>, vector<32x1x8xf32>
    %448 = vector.shape_cast %447 : vector<32x1x8xf32> to vector<32x8xf32>
    %cst_384 = arith.constant 7.500000e-01 : f32
    %449 = vector.broadcast %cst_384 : f32 to vector<32x8xf32>
    %450 = arith.mulf %448, %449 : vector<32x8xf32>
    %c0_385 = arith.constant 0 : index
    %c4_386 = arith.constant 4 : index
    %c0_387 = arith.constant 0 : index
    %451 = vector.load %arg3[%c0_385, %c4_386, %c0_387] : memref<32x16x8xf32, #tpu.memory_space<vmem>>, vector<32x1x8xf32>
    %452 = vector.shape_cast %451 : vector<32x1x8xf32> to vector<32x8xf32>
    %cst_388 = arith.constant 2.500000e-01 : f32
    %453 = vector.broadcast %cst_388 : f32 to vector<32x8xf32>
    %454 = arith.mulf %453, %452 : vector<32x8xf32>
    %455 = arith.addf %450, %454 : vector<32x8xf32>
    %c0_389 = arith.constant 0 : index
    %c7_390 = arith.constant 7 : index
    %c0_391 = arith.constant 0 : index
    %456 = vector.load %arg2[%c0_389, %c7_390, %c0_391] : memref<32x32x8xf32, #tpu.memory_space<vmem>>, vector<32x1x8xf32>
    %457 = vector.shape_cast %456 : vector<32x1x8xf32> to vector<32x8xf32>
    %458 = vector.shape_cast %455 : vector<32x8xf32> to vector<32x1x8xf32>
    tpu.vector_store %arg2[%c0_389, %c7_390, %c0_391], %458 {strides = array<i32>} : memref<32x32x8xf32, #tpu.memory_space<vmem>>, vector<32x1x8xf32>,
    %c0_392 = arith.constant 0 : index
    %c3_393 = arith.constant 3 : index
    %c0_394 = arith.constant 0 : index
    %459 = vector.load %arg3[%c0_392, %c3_393, %c0_394] : memref<32x16x8xf32, #tpu.memory_space<vmem>>, vector<32x1x8xf32>
    %460 = vector.shape_cast %459 : vector<32x1x8xf32> to vector<32x8xf32>
    %cst_395 = arith.constant 2.500000e-01 : f32
    %461 = vector.broadcast %cst_395 : f32 to vector<32x8xf32>
    %462 = arith.mulf %460, %461 : vector<32x8xf32>
    %c0_396 = arith.constant 0 : index
    %c4_397 = arith.constant 4 : index
    %c0_398 = arith.constant 0 : index
    %463 = vector.load %arg3[%c0_396, %c4_397, %c0_398] : memref<32x16x8xf32, #tpu.memory_space<vmem>>, vector<32x1x8xf32>
    %464 = vector.shape_cast %463 : vector<32x1x8xf32> to vector<32x8xf32>
    %cst_399 = arith.constant 7.500000e-01 : f32
    %465 = vector.broadcast %cst_399 : f32 to vector<32x8xf32>
    %466 = arith.mulf %465, %464 : vector<32x8xf32>
    %467 = arith.addf %462, %466 : vector<32x8xf32>
    %c0_400 = arith.constant 0 : index
    %c8_401 = arith.constant 8 : index
    %c0_402 = arith.constant 0 : index
    %468 = vector.load %arg2[%c0_400, %c8_401, %c0_402] : memref<32x32x8xf32, #tpu.memory_space<vmem>>, vector<32x1x8xf32>
    %469 = vector.shape_cast %468 : vector<32x1x8xf32> to vector<32x8xf32>
    %470 = vector.shape_cast %467 : vector<32x8xf32> to vector<32x1x8xf32>
    tpu.vector_store %arg2[%c0_400, %c8_401, %c0_402], %470 {strides = array<i32>} : memref<32x32x8xf32, #tpu.memory_space<vmem>>, vector<32x1x8xf32>,
    %c0_403 = arith.constant 0 : index
    %c4_404 = arith.constant 4 : index
    %c0_405 = arith.constant 0 : index
    %471 = vector.load %arg3[%c0_403, %c4_404, %c0_405] : memref<32x16x8xf32, #tpu.memory_space<vmem>>, vector<32x1x8xf32>
    %472 = vector.shape_cast %471 : vector<32x1x8xf32> to vector<32x8xf32>
    %cst_406 = arith.constant 7.500000e-01 : f32
    %473 = vector.broadcast %cst_406 : f32 to vector<32x8xf32>
    %474 = arith.mulf %472, %473 : vector<32x8xf32>
    %c0_407 = arith.constant 0 : index
    %c5_408 = arith.constant 5 : index
    %c0_409 = arith.constant 0 : index
    %475 = vector.load %arg3[%c0_407, %c5_408, %c0_409] : memref<32x16x8xf32, #tpu.memory_space<vmem>>, vector<32x1x8xf32>
    %476 = vector.shape_cast %475 : vector<32x1x8xf32> to vector<32x8xf32>
    %cst_410 = arith.constant 2.500000e-01 : f32
    %477 = vector.broadcast %cst_410 : f32 to vector<32x8xf32>
    %478 = arith.mulf %477, %476 : vector<32x8xf32>
    %479 = arith.addf %474, %478 : vector<32x8xf32>
    %c0_411 = arith.constant 0 : index
    %c9_412 = arith.constant 9 : index
    %c0_413 = arith.constant 0 : index
    %480 = vector.load %arg2[%c0_411, %c9_412, %c0_413] : memref<32x32x8xf32, #tpu.memory_space<vmem>>, vector<32x1x8xf32>
    %481 = vector.shape_cast %480 : vector<32x1x8xf32> to vector<32x8xf32>
    %482 = vector.shape_cast %479 : vector<32x8xf32> to vector<32x1x8xf32>
    tpu.vector_store %arg2[%c0_411, %c9_412, %c0_413], %482 {strides = array<i32>} : memref<32x32x8xf32, #tpu.memory_space<vmem>>, vector<32x1x8xf32>,
    %c0_414 = arith.constant 0 : index
    %c4_415 = arith.constant 4 : index
    %c0_416 = arith.constant 0 : index
    %483 = vector.load %arg3[%c0_414, %c4_415, %c0_416] : memref<32x16x8xf32, #tpu.memory_space<vmem>>, vector<32x1x8xf32>
    %484 = vector.shape_cast %483 : vector<32x1x8xf32> to vector<32x8xf32>
    %cst_417 = arith.constant 2.500000e-01 : f32
    %485 = vector.broadcast %cst_417 : f32 to vector<32x8xf32>
    %486 = arith.mulf %484, %485 : vector<32x8xf32>
    %c0_418 = arith.constant 0 : index
    %c5_419 = arith.constant 5 : index
    %c0_420 = arith.constant 0 : index
    %487 = vector.load %arg3[%c0_418, %c5_419, %c0_420] : memref<32x16x8xf32, #tpu.memory_space<vmem>>, vector<32x1x8xf32>
    %488 = vector.shape_cast %487 : vector<32x1x8xf32> to vector<32x8xf32>
    %cst_421 = arith.constant 7.500000e-01 : f32
    %489 = vector.broadcast %cst_421 : f32 to vector<32x8xf32>
    %490 = arith.mulf %489, %488 : vector<32x8xf32>
    %491 = arith.addf %486, %490 : vector<32x8xf32>
    %c0_422 = arith.constant 0 : index
    %c10_423 = arith.constant 10 : index
    %c0_424 = arith.constant 0 : index
    %492 = vector.load %arg2[%c0_422, %c10_423, %c0_424] : memref<32x32x8xf32, #tpu.memory_space<vmem>>, vector<32x1x8xf32>
    %493 = vector.shape_cast %492 : vector<32x1x8xf32> to vector<32x8xf32>
    %494 = vector.shape_cast %491 : vector<32x8xf32> to vector<32x1x8xf32>
    tpu.vector_store %arg2[%c0_422, %c10_423, %c0_424], %494 {strides = array<i32>} : memref<32x32x8xf32, #tpu.memory_space<vmem>>, vector<32x1x8xf32>,
    %c0_425 = arith.constant 0 : index
    %c5_426 = arith.constant 5 : index
    %c0_427 = arith.constant 0 : index
    %495 = vector.load %arg3[%c0_425, %c5_426, %c0_427] : memref<32x16x8xf32, #tpu.memory_space<vmem>>, vector<32x1x8xf32>
    %496 = vector.shape_cast %495 : vector<32x1x8xf32> to vector<32x8xf32>
    %cst_428 = arith.constant 7.500000e-01 : f32
    %497 = vector.broadcast %cst_428 : f32 to vector<32x8xf32>
    %498 = arith.mulf %496, %497 : vector<32x8xf32>
    %c0_429 = arith.constant 0 : index
    %c6_430 = arith.constant 6 : index
    %c0_431 = arith.constant 0 : index
    %499 = vector.load %arg3[%c0_429, %c6_430, %c0_431] : memref<32x16x8xf32, #tpu.memory_space<vmem>>, vector<32x1x8xf32>
    %500 = vector.shape_cast %499 : vector<32x1x8xf32> to vector<32x8xf32>
    %cst_432 = arith.constant 2.500000e-01 : f32
    %501 = vector.broadcast %cst_432 : f32 to vector<32x8xf32>
    %502 = arith.mulf %501, %500 : vector<32x8xf32>
    %503 = arith.addf %498, %502 : vector<32x8xf32>
    %c0_433 = arith.constant 0 : index
    %c11_434 = arith.constant 11 : index
    %c0_435 = arith.constant 0 : index
    %504 = vector.load %arg2[%c0_433, %c11_434, %c0_435] : memref<32x32x8xf32, #tpu.memory_space<vmem>>, vector<32x1x8xf32>
    %505 = vector.shape_cast %504 : vector<32x1x8xf32> to vector<32x8xf32>
    %506 = vector.shape_cast %503 : vector<32x8xf32> to vector<32x1x8xf32>
    tpu.vector_store %arg2[%c0_433, %c11_434, %c0_435], %506 {strides = array<i32>} : memref<32x32x8xf32, #tpu.memory_space<vmem>>, vector<32x1x8xf32>,
    %c0_436 = arith.constant 0 : index
    %c5_437 = arith.constant 5 : index
    %c0_438 = arith.constant 0 : index
    %507 = vector.load %arg3[%c0_436, %c5_437, %c0_438] : memref<32x16x8xf32, #tpu.memory_space<vmem>>, vector<32x1x8xf32>
    %508 = vector.shape_cast %507 : vector<32x1x8xf32> to vector<32x8xf32>
    %cst_439 = arith.constant 2.500000e-01 : f32
    %509 = vector.broadcast %cst_439 : f32 to vector<32x8xf32>
    %510 = arith.mulf %508, %509 : vector<32x8xf32>
    %c0_440 = arith.constant 0 : index
    %c6_441 = arith.constant 6 : index
    %c0_442 = arith.constant 0 : index
    %511 = vector.load %arg3[%c0_440, %c6_441, %c0_442] : memref<32x16x8xf32, #tpu.memory_space<vmem>>, vector<32x1x8xf32>
    %512 = vector.shape_cast %511 : vector<32x1x8xf32> to vector<32x8xf32>
    %cst_443 = arith.constant 7.500000e-01 : f32
    %513 = vector.broadcast %cst_443 : f32 to vector<32x8xf32>
    %514 = arith.mulf %513, %512 : vector<32x8xf32>
    %515 = arith.addf %510, %514 : vector<32x8xf32>
    %c0_444 = arith.constant 0 : index
    %c12_445 = arith.constant 12 : index
    %c0_446 = arith.constant 0 : index
    %516 = vector.load %arg2[%c0_444, %c12_445, %c0_446] : memref<32x32x8xf32, #tpu.memory_space<vmem>>, vector<32x1x8xf32>
    %517 = vector.shape_cast %516 : vector<32x1x8xf32> to vector<32x8xf32>
    %518 = vector.shape_cast %515 : vector<32x8xf32> to vector<32x1x8xf32>
    tpu.vector_store %arg2[%c0_444, %c12_445, %c0_446], %518 {strides = array<i32>} : memref<32x32x8xf32, #tpu.memory_space<vmem>>, vector<32x1x8xf32>,
    %c0_447 = arith.constant 0 : index
    %c6_448 = arith.constant 6 : index
    %c0_449 = arith.constant 0 : index
    %519 = vector.load %arg3[%c0_447, %c6_448, %c0_449] : memref<32x16x8xf32, #tpu.memory_space<vmem>>, vector<32x1x8xf32>
    %520 = vector.shape_cast %519 : vector<32x1x8xf32> to vector<32x8xf32>
    %cst_450 = arith.constant 7.500000e-01 : f32
    %521 = vector.broadcast %cst_450 : f32 to vector<32x8xf32>
    %522 = arith.mulf %520, %521 : vector<32x8xf32>
    %c0_451 = arith.constant 0 : index
    %c7_452 = arith.constant 7 : index
    %c0_453 = arith.constant 0 : index
    %523 = vector.load %arg3[%c0_451, %c7_452, %c0_453] : memref<32x16x8xf32, #tpu.memory_space<vmem>>, vector<32x1x8xf32>
    %524 = vector.shape_cast %523 : vector<32x1x8xf32> to vector<32x8xf32>
    %cst_454 = arith.constant 2.500000e-01 : f32
    %525 = vector.broadcast %cst_454 : f32 to vector<32x8xf32>
    %526 = arith.mulf %525, %524 : vector<32x8xf32>
    %527 = arith.addf %522, %526 : vector<32x8xf32>
    %c0_455 = arith.constant 0 : index
    %c13_456 = arith.constant 13 : index
    %c0_457 = arith.constant 0 : index
    %528 = vector.load %arg2[%c0_455, %c13_456, %c0_457] : memref<32x32x8xf32, #tpu.memory_space<vmem>>, vector<32x1x8xf32>
    %529 = vector.shape_cast %528 : vector<32x1x8xf32> to vector<32x8xf32>
    %530 = vector.shape_cast %527 : vector<32x8xf32> to vector<32x1x8xf32>
    tpu.vector_store %arg2[%c0_455, %c13_456, %c0_457], %530 {strides = array<i32>} : memref<32x32x8xf32, #tpu.memory_space<vmem>>, vector<32x1x8xf32>,
    %c0_458 = arith.constant 0 : index
    %c6_459 = arith.constant 6 : index
    %c0_460 = arith.constant 0 : index
    %531 = vector.load %arg3[%c0_458, %c6_459, %c0_460] : memref<32x16x8xf32, #tpu.memory_space<vmem>>, vector<32x1x8xf32>
    %532 = vector.shape_cast %531 : vector<32x1x8xf32> to vector<32x8xf32>
    %cst_461 = arith.constant 2.500000e-01 : f32
    %533 = vector.broadcast %cst_461 : f32 to vector<32x8xf32>
    %534 = arith.mulf %532, %533 : vector<32x8xf32>
    %c0_462 = arith.constant 0 : index
    %c7_463 = arith.constant 7 : index
    %c0_464 = arith.constant 0 : index
    %535 = vector.load %arg3[%c0_462, %c7_463, %c0_464] : memref<32x16x8xf32, #tpu.memory_space<vmem>>, vector<32x1x8xf32>
    %536 = vector.shape_cast %535 : vector<32x1x8xf32> to vector<32x8xf32>
    %cst_465 = arith.constant 7.500000e-01 : f32
    %537 = vector.broadcast %cst_465 : f32 to vector<32x8xf32>
    %538 = arith.mulf %537, %536 : vector<32x8xf32>
    %539 = arith.addf %534, %538 : vector<32x8xf32>
    %c0_466 = arith.constant 0 : index
    %c14_467 = arith.constant 14 : index
    %c0_468 = arith.constant 0 : index
    %540 = vector.load %arg2[%c0_466, %c14_467, %c0_468] : memref<32x32x8xf32, #tpu.memory_space<vmem>>, vector<32x1x8xf32>
    %541 = vector.shape_cast %540 : vector<32x1x8xf32> to vector<32x8xf32>
    %542 = vector.shape_cast %539 : vector<32x8xf32> to vector<32x1x8xf32>
    tpu.vector_store %arg2[%c0_466, %c14_467, %c0_468], %542 {strides = array<i32>} : memref<32x32x8xf32, #tpu.memory_space<vmem>>, vector<32x1x8xf32>,
    %c0_469 = arith.constant 0 : index
    %c7_470 = arith.constant 7 : index
    %c0_471 = arith.constant 0 : index
    %543 = vector.load %arg3[%c0_469, %c7_470, %c0_471] : memref<32x16x8xf32, #tpu.memory_space<vmem>>, vector<32x1x8xf32>
    %544 = vector.shape_cast %543 : vector<32x1x8xf32> to vector<32x8xf32>
    %cst_472 = arith.constant 7.500000e-01 : f32
    %545 = vector.broadcast %cst_472 : f32 to vector<32x8xf32>
    %546 = arith.mulf %544, %545 : vector<32x8xf32>
    %c0_473 = arith.constant 0 : index
    %c8_474 = arith.constant 8 : index
    %c0_475 = arith.constant 0 : index
    %547 = vector.load %arg3[%c0_473, %c8_474, %c0_475] : memref<32x16x8xf32, #tpu.memory_space<vmem>>, vector<32x1x8xf32>
    %548 = vector.shape_cast %547 : vector<32x1x8xf32> to vector<32x8xf32>
    %cst_476 = arith.constant 2.500000e-01 : f32
    %549 = vector.broadcast %cst_476 : f32 to vector<32x8xf32>
    %550 = arith.mulf %549, %548 : vector<32x8xf32>
    %551 = arith.addf %546, %550 : vector<32x8xf32>
    %c0_477 = arith.constant 0 : index
    %c15_478 = arith.constant 15 : index
    %c0_479 = arith.constant 0 : index
    %552 = vector.load %arg2[%c0_477, %c15_478, %c0_479] : memref<32x32x8xf32, #tpu.memory_space<vmem>>, vector<32x1x8xf32>
    %553 = vector.shape_cast %552 : vector<32x1x8xf32> to vector<32x8xf32>
    %554 = vector.shape_cast %551 : vector<32x8xf32> to vector<32x1x8xf32>
    tpu.vector_store %arg2[%c0_477, %c15_478, %c0_479], %554 {strides = array<i32>} : memref<32x32x8xf32, #tpu.memory_space<vmem>>, vector<32x1x8xf32>,
    %c0_480 = arith.constant 0 : index
    %c7_481 = arith.constant 7 : index
    %c0_482 = arith.constant 0 : index
    %555 = vector.load %arg3[%c0_480, %c7_481, %c0_482] : memref<32x16x8xf32, #tpu.memory_space<vmem>>, vector<32x1x8xf32>
    %556 = vector.shape_cast %555 : vector<32x1x8xf32> to vector<32x8xf32>
    %cst_483 = arith.constant 2.500000e-01 : f32
    %557 = vector.broadcast %cst_483 : f32 to vector<32x8xf32>
    %558 = arith.mulf %556, %557 : vector<32x8xf32>
    %c0_484 = arith.constant 0 : index
    %c8_485 = arith.constant 8 : index
    %c0_486 = arith.constant 0 : index
    %559 = vector.load %arg3[%c0_484, %c8_485, %c0_486] : memref<32x16x8xf32, #tpu.memory_space<vmem>>, vector<32x1x8xf32>
    %560 = vector.shape_cast %559 : vector<32x1x8xf32> to vector<32x8xf32>
    %cst_487 = arith.constant 7.500000e-01 : f32
    %561 = vector.broadcast %cst_487 : f32 to vector<32x8xf32>
    %562 = arith.mulf %561, %560 : vector<32x8xf32>
    %563 = arith.addf %558, %562 : vector<32x8xf32>
    %c0_488 = arith.constant 0 : index
    %c16_489 = arith.constant 16 : index
    %c0_490 = arith.constant 0 : index
    %564 = vector.load %arg2[%c0_488, %c16_489, %c0_490] : memref<32x32x8xf32, #tpu.memory_space<vmem>>, vector<32x1x8xf32>
    %565 = vector.shape_cast %564 : vector<32x1x8xf32> to vector<32x8xf32>
    %566 = vector.shape_cast %563 : vector<32x8xf32> to vector<32x1x8xf32>
    tpu.vector_store %arg2[%c0_488, %c16_489, %c0_490], %566 {strides = array<i32>} : memref<32x32x8xf32, #tpu.memory_space<vmem>>, vector<32x1x8xf32>,
    %c0_491 = arith.constant 0 : index
    %c8_492 = arith.constant 8 : index
    %c0_493 = arith.constant 0 : index
    %567 = vector.load %arg3[%c0_491, %c8_492, %c0_493] : memref<32x16x8xf32, #tpu.memory_space<vmem>>, vector<32x1x8xf32>
    %568 = vector.shape_cast %567 : vector<32x1x8xf32> to vector<32x8xf32>
    %cst_494 = arith.constant 7.500000e-01 : f32
    %569 = vector.broadcast %cst_494 : f32 to vector<32x8xf32>
    %570 = arith.mulf %568, %569 : vector<32x8xf32>
    %c0_495 = arith.constant 0 : index
    %c9_496 = arith.constant 9 : index
    %c0_497 = arith.constant 0 : index
    %571 = vector.load %arg3[%c0_495, %c9_496, %c0_497] : memref<32x16x8xf32, #tpu.memory_space<vmem>>, vector<32x1x8xf32>
    %572 = vector.shape_cast %571 : vector<32x1x8xf32> to vector<32x8xf32>
    %cst_498 = arith.constant 2.500000e-01 : f32
    %573 = vector.broadcast %cst_498 : f32 to vector<32x8xf32>
    %574 = arith.mulf %573, %572 : vector<32x8xf32>
    %575 = arith.addf %570, %574 : vector<32x8xf32>
    %c0_499 = arith.constant 0 : index
    %c17_500 = arith.constant 17 : index
    %c0_501 = arith.constant 0 : index
    %576 = vector.load %arg2[%c0_499, %c17_500, %c0_501] : memref<32x32x8xf32, #tpu.memory_space<vmem>>, vector<32x1x8xf32>
    %577 = vector.shape_cast %576 : vector<32x1x8xf32> to vector<32x8xf32>
    %578 = vector.shape_cast %575 : vector<32x8xf32> to vector<32x1x8xf32>
    tpu.vector_store %arg2[%c0_499, %c17_500, %c0_501], %578 {strides = array<i32>} : memref<32x32x8xf32, #tpu.memory_space<vmem>>, vector<32x1x8xf32>,
    %c0_502 = arith.constant 0 : index
    %c8_503 = arith.constant 8 : index
    %c0_504 = arith.constant 0 : index
    %579 = vector.load %arg3[%c0_502, %c8_503, %c0_504] : memref<32x16x8xf32, #tpu.memory_space<vmem>>, vector<32x1x8xf32>
    %580 = vector.shape_cast %579 : vector<32x1x8xf32> to vector<32x8xf32>
    %cst_505 = arith.constant 2.500000e-01 : f32
    %581 = vector.broadcast %cst_505 : f32 to vector<32x8xf32>
    %582 = arith.mulf %580, %581 : vector<32x8xf32>
    %c0_506 = arith.constant 0 : index
    %c9_507 = arith.constant 9 : index
    %c0_508 = arith.constant 0 : index
    %583 = vector.load %arg3[%c0_506, %c9_507, %c0_508] : memref<32x16x8xf32, #tpu.memory_space<vmem>>, vector<32x1x8xf32>
    %584 = vector.shape_cast %583 : vector<32x1x8xf32> to vector<32x8xf32>
    %cst_509 = arith.constant 7.500000e-01 : f32
    %585 = vector.broadcast %cst_509 : f32 to vector<32x8xf32>
    %586 = arith.mulf %585, %584 : vector<32x8xf32>
    %587 = arith.addf %582, %586 : vector<32x8xf32>
    %c0_510 = arith.constant 0 : index
    %c18_511 = arith.constant 18 : index
    %c0_512 = arith.constant 0 : index
    %588 = vector.load %arg2[%c0_510, %c18_511, %c0_512] : memref<32x32x8xf32, #tpu.memory_space<vmem>>, vector<32x1x8xf32>
    %589 = vector.shape_cast %588 : vector<32x1x8xf32> to vector<32x8xf32>
    %590 = vector.shape_cast %587 : vector<32x8xf32> to vector<32x1x8xf32>
    tpu.vector_store %arg2[%c0_510, %c18_511, %c0_512], %590 {strides = array<i32>} : memref<32x32x8xf32, #tpu.memory_space<vmem>>, vector<32x1x8xf32>,
    %c0_513 = arith.constant 0 : index
    %c9_514 = arith.constant 9 : index
    %c0_515 = arith.constant 0 : index
    %591 = vector.load %arg3[%c0_513, %c9_514, %c0_515] : memref<32x16x8xf32, #tpu.memory_space<vmem>>, vector<32x1x8xf32>
    %592 = vector.shape_cast %591 : vector<32x1x8xf32> to vector<32x8xf32>
    %cst_516 = arith.constant 7.500000e-01 : f32
    %593 = vector.broadcast %cst_516 : f32 to vector<32x8xf32>
    %594 = arith.mulf %592, %593 : vector<32x8xf32>
    %c0_517 = arith.constant 0 : index
    %c10_518 = arith.constant 10 : index
    %c0_519 = arith.constant 0 : index
    %595 = vector.load %arg3[%c0_517, %c10_518, %c0_519] : memref<32x16x8xf32, #tpu.memory_space<vmem>>, vector<32x1x8xf32>
    %596 = vector.shape_cast %595 : vector<32x1x8xf32> to vector<32x8xf32>
    %cst_520 = arith.constant 2.500000e-01 : f32
    %597 = vector.broadcast %cst_520 : f32 to vector<32x8xf32>
    %598 = arith.mulf %597, %596 : vector<32x8xf32>
    %599 = arith.addf %594, %598 : vector<32x8xf32>
    %c0_521 = arith.constant 0 : index
    %c19_522 = arith.constant 19 : index
    %c0_523 = arith.constant 0 : index
    %600 = vector.load %arg2[%c0_521, %c19_522, %c0_523] : memref<32x32x8xf32, #tpu.memory_space<vmem>>, vector<32x1x8xf32>
    %601 = vector.shape_cast %600 : vector<32x1x8xf32> to vector<32x8xf32>
    %602 = vector.shape_cast %599 : vector<32x8xf32> to vector<32x1x8xf32>
    tpu.vector_store %arg2[%c0_521, %c19_522, %c0_523], %602 {strides = array<i32>} : memref<32x32x8xf32, #tpu.memory_space<vmem>>, vector<32x1x8xf32>,
    %c0_524 = arith.constant 0 : index
    %c9_525 = arith.constant 9 : index
    %c0_526 = arith.constant 0 : index
    %603 = vector.load %arg3[%c0_524, %c9_525, %c0_526] : memref<32x16x8xf32, #tpu.memory_space<vmem>>, vector<32x1x8xf32>
    %604 = vector.shape_cast %603 : vector<32x1x8xf32> to vector<32x8xf32>
    %cst_527 = arith.constant 2.500000e-01 : f32
    %605 = vector.broadcast %cst_527 : f32 to vector<32x8xf32>
    %606 = arith.mulf %604, %605 : vector<32x8xf32>
    %c0_528 = arith.constant 0 : index
    %c10_529 = arith.constant 10 : index
    %c0_530 = arith.constant 0 : index
    %607 = vector.load %arg3[%c0_528, %c10_529, %c0_530] : memref<32x16x8xf32, #tpu.memory_space<vmem>>, vector<32x1x8xf32>
    %608 = vector.shape_cast %607 : vector<32x1x8xf32> to vector<32x8xf32>
    %cst_531 = arith.constant 7.500000e-01 : f32
    %609 = vector.broadcast %cst_531 : f32 to vector<32x8xf32>
    %610 = arith.mulf %609, %608 : vector<32x8xf32>
    %611 = arith.addf %606, %610 : vector<32x8xf32>
    %c0_532 = arith.constant 0 : index
    %c20_533 = arith.constant 20 : index
    %c0_534 = arith.constant 0 : index
    %612 = vector.load %arg2[%c0_532, %c20_533, %c0_534] : memref<32x32x8xf32, #tpu.memory_space<vmem>>, vector<32x1x8xf32>
    %613 = vector.shape_cast %612 : vector<32x1x8xf32> to vector<32x8xf32>
    %614 = vector.shape_cast %611 : vector<32x8xf32> to vector<32x1x8xf32>
    tpu.vector_store %arg2[%c0_532, %c20_533, %c0_534], %614 {strides = array<i32>} : memref<32x32x8xf32, #tpu.memory_space<vmem>>, vector<32x1x8xf32>,
    %c0_535 = arith.constant 0 : index
    %c10_536 = arith.constant 10 : index
    %c0_537 = arith.constant 0 : index
    %615 = vector.load %arg3[%c0_535, %c10_536, %c0_537] : memref<32x16x8xf32, #tpu.memory_space<vmem>>, vector<32x1x8xf32>
    %616 = vector.shape_cast %615 : vector<32x1x8xf32> to vector<32x8xf32>
    %cst_538 = arith.constant 7.500000e-01 : f32
    %617 = vector.broadcast %cst_538 : f32 to vector<32x8xf32>
    %618 = arith.mulf %616, %617 : vector<32x8xf32>
    %c0_539 = arith.constant 0 : index
    %c11_540 = arith.constant 11 : index
    %c0_541 = arith.constant 0 : index
    %619 = vector.load %arg3[%c0_539, %c11_540, %c0_541] : memref<32x16x8xf32, #tpu.memory_space<vmem>>, vector<32x1x8xf32>
    %620 = vector.shape_cast %619 : vector<32x1x8xf32> to vector<32x8xf32>
    %cst_542 = arith.constant 2.500000e-01 : f32
    %621 = vector.broadcast %cst_542 : f32 to vector<32x8xf32>
    %622 = arith.mulf %621, %620 : vector<32x8xf32>
    %623 = arith.addf %618, %622 : vector<32x8xf32>
    %c0_543 = arith.constant 0 : index
    %c21_544 = arith.constant 21 : index
    %c0_545 = arith.constant 0 : index
    %624 = vector.load %arg2[%c0_543, %c21_544, %c0_545] : memref<32x32x8xf32, #tpu.memory_space<vmem>>, vector<32x1x8xf32>
    %625 = vector.shape_cast %624 : vector<32x1x8xf32> to vector<32x8xf32>
    %626 = vector.shape_cast %623 : vector<32x8xf32> to vector<32x1x8xf32>
    tpu.vector_store %arg2[%c0_543, %c21_544, %c0_545], %626 {strides = array<i32>} : memref<32x32x8xf32, #tpu.memory_space<vmem>>, vector<32x1x8xf32>,
    %c0_546 = arith.constant 0 : index
    %c10_547 = arith.constant 10 : index
    %c0_548 = arith.constant 0 : index
    %627 = vector.load %arg3[%c0_546, %c10_547, %c0_548] : memref<32x16x8xf32, #tpu.memory_space<vmem>>, vector<32x1x8xf32>
    %628 = vector.shape_cast %627 : vector<32x1x8xf32> to vector<32x8xf32>
    %cst_549 = arith.constant 2.500000e-01 : f32
    %629 = vector.broadcast %cst_549 : f32 to vector<32x8xf32>
    %630 = arith.mulf %628, %629 : vector<32x8xf32>
    %c0_550 = arith.constant 0 : index
    %c11_551 = arith.constant 11 : index
    %c0_552 = arith.constant 0 : index
    %631 = vector.load %arg3[%c0_550, %c11_551, %c0_552] : memref<32x16x8xf32, #tpu.memory_space<vmem>>, vector<32x1x8xf32>
    %632 = vector.shape_cast %631 : vector<32x1x8xf32> to vector<32x8xf32>
    %cst_553 = arith.constant 7.500000e-01 : f32
    %633 = vector.broadcast %cst_553 : f32 to vector<32x8xf32>
    %634 = arith.mulf %633, %632 : vector<32x8xf32>
    %635 = arith.addf %630, %634 : vector<32x8xf32>
    %c0_554 = arith.constant 0 : index
    %c22_555 = arith.constant 22 : index
    %c0_556 = arith.constant 0 : index
    %636 = vector.load %arg2[%c0_554, %c22_555, %c0_556] : memref<32x32x8xf32, #tpu.memory_space<vmem>>, vector<32x1x8xf32>
    %637 = vector.shape_cast %636 : vector<32x1x8xf32> to vector<32x8xf32>
    %638 = vector.shape_cast %635 : vector<32x8xf32> to vector<32x1x8xf32>
    tpu.vector_store %arg2[%c0_554, %c22_555, %c0_556], %638 {strides = array<i32>} : memref<32x32x8xf32, #tpu.memory_space<vmem>>, vector<32x1x8xf32>,
    %c0_557 = arith.constant 0 : index
    %c11_558 = arith.constant 11 : index
    %c0_559 = arith.constant 0 : index
    %639 = vector.load %arg3[%c0_557, %c11_558, %c0_559] : memref<32x16x8xf32, #tpu.memory_space<vmem>>, vector<32x1x8xf32>
    %640 = vector.shape_cast %639 : vector<32x1x8xf32> to vector<32x8xf32>
    %cst_560 = arith.constant 7.500000e-01 : f32
    %641 = vector.broadcast %cst_560 : f32 to vector<32x8xf32>
    %642 = arith.mulf %640, %641 : vector<32x8xf32>
    %c0_561 = arith.constant 0 : index
    %c12_562 = arith.constant 12 : index
    %c0_563 = arith.constant 0 : index
    %643 = vector.load %arg3[%c0_561, %c12_562, %c0_563] : memref<32x16x8xf32, #tpu.memory_space<vmem>>, vector<32x1x8xf32>
    %644 = vector.shape_cast %643 : vector<32x1x8xf32> to vector<32x8xf32>
    %cst_564 = arith.constant 2.500000e-01 : f32
    %645 = vector.broadcast %cst_564 : f32 to vector<32x8xf32>
    %646 = arith.mulf %645, %644 : vector<32x8xf32>
    %647 = arith.addf %642, %646 : vector<32x8xf32>
    %c0_565 = arith.constant 0 : index
    %c23_566 = arith.constant 23 : index
    %c0_567 = arith.constant 0 : index
    %648 = vector.load %arg2[%c0_565, %c23_566, %c0_567] : memref<32x32x8xf32, #tpu.memory_space<vmem>>, vector<32x1x8xf32>
    %649 = vector.shape_cast %648 : vector<32x1x8xf32> to vector<32x8xf32>
    %650 = vector.shape_cast %647 : vector<32x8xf32> to vector<32x1x8xf32>
    tpu.vector_store %arg2[%c0_565, %c23_566, %c0_567], %650 {strides = array<i32>} : memref<32x32x8xf32, #tpu.memory_space<vmem>>, vector<32x1x8xf32>,
    %c0_568 = arith.constant 0 : index
    %c11_569 = arith.constant 11 : index
    %c0_570 = arith.constant 0 : index
    %651 = vector.load %arg3[%c0_568, %c11_569, %c0_570] : memref<32x16x8xf32, #tpu.memory_space<vmem>>, vector<32x1x8xf32>
    %652 = vector.shape_cast %651 : vector<32x1x8xf32> to vector<32x8xf32>
    %cst_571 = arith.constant 2.500000e-01 : f32
    %653 = vector.broadcast %cst_571 : f32 to vector<32x8xf32>
    %654 = arith.mulf %652, %653 : vector<32x8xf32>
    %c0_572 = arith.constant 0 : index
    %c12_573 = arith.constant 12 : index
    %c0_574 = arith.constant 0 : index
    %655 = vector.load %arg3[%c0_572, %c12_573, %c0_574] : memref<32x16x8xf32, #tpu.memory_space<vmem>>, vector<32x1x8xf32>
    %656 = vector.shape_cast %655 : vector<32x1x8xf32> to vector<32x8xf32>
    %cst_575 = arith.constant 7.500000e-01 : f32
    %657 = vector.broadcast %cst_575 : f32 to vector<32x8xf32>
    %658 = arith.mulf %657, %656 : vector<32x8xf32>
    %659 = arith.addf %654, %658 : vector<32x8xf32>
    %c0_576 = arith.constant 0 : index
    %c24_577 = arith.constant 24 : index
    %c0_578 = arith.constant 0 : index
    %660 = vector.load %arg2[%c0_576, %c24_577, %c0_578] : memref<32x32x8xf32, #tpu.memory_space<vmem>>, vector<32x1x8xf32>
    %661 = vector.shape_cast %660 : vector<32x1x8xf32> to vector<32x8xf32>
    %662 = vector.shape_cast %659 : vector<32x8xf32> to vector<32x1x8xf32>
    tpu.vector_store %arg2[%c0_576, %c24_577, %c0_578], %662 {strides = array<i32>} : memref<32x32x8xf32, #tpu.memory_space<vmem>>, vector<32x1x8xf32>,
    %c0_579 = arith.constant 0 : index
    %c12_580 = arith.constant 12 : index
    %c0_581 = arith.constant 0 : index
    %663 = vector.load %arg3[%c0_579, %c12_580, %c0_581] : memref<32x16x8xf32, #tpu.memory_space<vmem>>, vector<32x1x8xf32>
    %664 = vector.shape_cast %663 : vector<32x1x8xf32> to vector<32x8xf32>
    %cst_582 = arith.constant 7.500000e-01 : f32
    %665 = vector.broadcast %cst_582 : f32 to vector<32x8xf32>
    %666 = arith.mulf %664, %665 : vector<32x8xf32>
    %c0_583 = arith.constant 0 : index
    %c13_584 = arith.constant 13 : index
    %c0_585 = arith.constant 0 : index
    %667 = vector.load %arg3[%c0_583, %c13_584, %c0_585] : memref<32x16x8xf32, #tpu.memory_space<vmem>>, vector<32x1x8xf32>
    %668 = vector.shape_cast %667 : vector<32x1x8xf32> to vector<32x8xf32>
    %cst_586 = arith.constant 2.500000e-01 : f32
    %669 = vector.broadcast %cst_586 : f32 to vector<32x8xf32>
    %670 = arith.mulf %669, %668 : vector<32x8xf32>
    %671 = arith.addf %666, %670 : vector<32x8xf32>
    %c0_587 = arith.constant 0 : index
    %c25_588 = arith.constant 25 : index
    %c0_589 = arith.constant 0 : index
    %672 = vector.load %arg2[%c0_587, %c25_588, %c0_589] : memref<32x32x8xf32, #tpu.memory_space<vmem>>, vector<32x1x8xf32>
    %673 = vector.shape_cast %672 : vector<32x1x8xf32> to vector<32x8xf32>
    %674 = vector.shape_cast %671 : vector<32x8xf32> to vector<32x1x8xf32>
    tpu.vector_store %arg2[%c0_587, %c25_588, %c0_589], %674 {strides = array<i32>} : memref<32x32x8xf32, #tpu.memory_space<vmem>>, vector<32x1x8xf32>,
    %c0_590 = arith.constant 0 : index
    %c12_591 = arith.constant 12 : index
    %c0_592 = arith.constant 0 : index
    %675 = vector.load %arg3[%c0_590, %c12_591, %c0_592] : memref<32x16x8xf32, #tpu.memory_space<vmem>>, vector<32x1x8xf32>
    %676 = vector.shape_cast %675 : vector<32x1x8xf32> to vector<32x8xf32>
    %cst_593 = arith.constant 2.500000e-01 : f32
    %677 = vector.broadcast %cst_593 : f32 to vector<32x8xf32>
    %678 = arith.mulf %676, %677 : vector<32x8xf32>
    %c0_594 = arith.constant 0 : index
    %c13_595 = arith.constant 13 : index
    %c0_596 = arith.constant 0 : index
    %679 = vector.load %arg3[%c0_594, %c13_595, %c0_596] : memref<32x16x8xf32, #tpu.memory_space<vmem>>, vector<32x1x8xf32>
    %680 = vector.shape_cast %679 : vector<32x1x8xf32> to vector<32x8xf32>
    %cst_597 = arith.constant 7.500000e-01 : f32
    %681 = vector.broadcast %cst_597 : f32 to vector<32x8xf32>
    %682 = arith.mulf %681, %680 : vector<32x8xf32>
    %683 = arith.addf %678, %682 : vector<32x8xf32>
    %c0_598 = arith.constant 0 : index
    %c26_599 = arith.constant 26 : index
    %c0_600 = arith.constant 0 : index
    %684 = vector.load %arg2[%c0_598, %c26_599, %c0_600] : memref<32x32x8xf32, #tpu.memory_space<vmem>>, vector<32x1x8xf32>
    %685 = vector.shape_cast %684 : vector<32x1x8xf32> to vector<32x8xf32>
    %686 = vector.shape_cast %683 : vector<32x8xf32> to vector<32x1x8xf32>
    tpu.vector_store %arg2[%c0_598, %c26_599, %c0_600], %686 {strides = array<i32>} : memref<32x32x8xf32, #tpu.memory_space<vmem>>, vector<32x1x8xf32>,
    %c0_601 = arith.constant 0 : index
    %c13_602 = arith.constant 13 : index
    %c0_603 = arith.constant 0 : index
    %687 = vector.load %arg3[%c0_601, %c13_602, %c0_603] : memref<32x16x8xf32, #tpu.memory_space<vmem>>, vector<32x1x8xf32>
    %688 = vector.shape_cast %687 : vector<32x1x8xf32> to vector<32x8xf32>
    %cst_604 = arith.constant 7.500000e-01 : f32
    %689 = vector.broadcast %cst_604 : f32 to vector<32x8xf32>
    %690 = arith.mulf %688, %689 : vector<32x8xf32>
    %c0_605 = arith.constant 0 : index
    %c14_606 = arith.constant 14 : index
    %c0_607 = arith.constant 0 : index
    %691 = vector.load %arg3[%c0_605, %c14_606, %c0_607] : memref<32x16x8xf32, #tpu.memory_space<vmem>>, vector<32x1x8xf32>
    %692 = vector.shape_cast %691 : vector<32x1x8xf32> to vector<32x8xf32>
    %cst_608 = arith.constant 2.500000e-01 : f32
    %693 = vector.broadcast %cst_608 : f32 to vector<32x8xf32>
    %694 = arith.mulf %693, %692 : vector<32x8xf32>
    %695 = arith.addf %690, %694 : vector<32x8xf32>
    %c0_609 = arith.constant 0 : index
    %c27_610 = arith.constant 27 : index
    %c0_611 = arith.constant 0 : index
    %696 = vector.load %arg2[%c0_609, %c27_610, %c0_611] : memref<32x32x8xf32, #tpu.memory_space<vmem>>, vector<32x1x8xf32>
    %697 = vector.shape_cast %696 : vector<32x1x8xf32> to vector<32x8xf32>
    %698 = vector.shape_cast %695 : vector<32x8xf32> to vector<32x1x8xf32>
    tpu.vector_store %arg2[%c0_609, %c27_610, %c0_611], %698 {strides = array<i32>} : memref<32x32x8xf32, #tpu.memory_space<vmem>>, vector<32x1x8xf32>,
    %c0_612 = arith.constant 0 : index
    %c13_613 = arith.constant 13 : index
    %c0_614 = arith.constant 0 : index
    %699 = vector.load %arg3[%c0_612, %c13_613, %c0_614] : memref<32x16x8xf32, #tpu.memory_space<vmem>>, vector<32x1x8xf32>
    %700 = vector.shape_cast %699 : vector<32x1x8xf32> to vector<32x8xf32>
    %cst_615 = arith.constant 2.500000e-01 : f32
    %701 = vector.broadcast %cst_615 : f32 to vector<32x8xf32>
    %702 = arith.mulf %700, %701 : vector<32x8xf32>
    %c0_616 = arith.constant 0 : index
    %c14_617 = arith.constant 14 : index
    %c0_618 = arith.constant 0 : index
    %703 = vector.load %arg3[%c0_616, %c14_617, %c0_618] : memref<32x16x8xf32, #tpu.memory_space<vmem>>, vector<32x1x8xf32>
    %704 = vector.shape_cast %703 : vector<32x1x8xf32> to vector<32x8xf32>
    %cst_619 = arith.constant 7.500000e-01 : f32
    %705 = vector.broadcast %cst_619 : f32 to vector<32x8xf32>
    %706 = arith.mulf %705, %704 : vector<32x8xf32>
    %707 = arith.addf %702, %706 : vector<32x8xf32>
    %c0_620 = arith.constant 0 : index
    %c28_621 = arith.constant 28 : index
    %c0_622 = arith.constant 0 : index
    %708 = vector.load %arg2[%c0_620, %c28_621, %c0_622] : memref<32x32x8xf32, #tpu.memory_space<vmem>>, vector<32x1x8xf32>
    %709 = vector.shape_cast %708 : vector<32x1x8xf32> to vector<32x8xf32>
    %710 = vector.shape_cast %707 : vector<32x8xf32> to vector<32x1x8xf32>
    tpu.vector_store %arg2[%c0_620, %c28_621, %c0_622], %710 {strides = array<i32>} : memref<32x32x8xf32, #tpu.memory_space<vmem>>, vector<32x1x8xf32>,
    %c0_623 = arith.constant 0 : index
    %c14_624 = arith.constant 14 : index
    %c0_625 = arith.constant 0 : index
    %711 = vector.load %arg3[%c0_623, %c14_624, %c0_625] : memref<32x16x8xf32, #tpu.memory_space<vmem>>, vector<32x1x8xf32>
    %712 = vector.shape_cast %711 : vector<32x1x8xf32> to vector<32x8xf32>
    %cst_626 = arith.constant 7.500000e-01 : f32
    %713 = vector.broadcast %cst_626 : f32 to vector<32x8xf32>
    %714 = arith.mulf %712, %713 : vector<32x8xf32>
    %c0_627 = arith.constant 0 : index
    %c15_628 = arith.constant 15 : index
    %c0_629 = arith.constant 0 : index
    %715 = vector.load %arg3[%c0_627, %c15_628, %c0_629] : memref<32x16x8xf32, #tpu.memory_space<vmem>>, vector<32x1x8xf32>
    %716 = vector.shape_cast %715 : vector<32x1x8xf32> to vector<32x8xf32>
    %cst_630 = arith.constant 2.500000e-01 : f32
    %717 = vector.broadcast %cst_630 : f32 to vector<32x8xf32>
    %718 = arith.mulf %717, %716 : vector<32x8xf32>
    %719 = arith.addf %714, %718 : vector<32x8xf32>
    %c0_631 = arith.constant 0 : index
    %c29_632 = arith.constant 29 : index
    %c0_633 = arith.constant 0 : index
    %720 = vector.load %arg2[%c0_631, %c29_632, %c0_633] : memref<32x32x8xf32, #tpu.memory_space<vmem>>, vector<32x1x8xf32>
    %721 = vector.shape_cast %720 : vector<32x1x8xf32> to vector<32x8xf32>
    %722 = vector.shape_cast %719 : vector<32x8xf32> to vector<32x1x8xf32>
    tpu.vector_store %arg2[%c0_631, %c29_632, %c0_633], %722 {strides = array<i32>} : memref<32x32x8xf32, #tpu.memory_space<vmem>>, vector<32x1x8xf32>,
    %c0_634 = arith.constant 0 : index
    %c14_635 = arith.constant 14 : index
    %c0_636 = arith.constant 0 : index
    %723 = vector.load %arg3[%c0_634, %c14_635, %c0_636] : memref<32x16x8xf32, #tpu.memory_space<vmem>>, vector<32x1x8xf32>
    %724 = vector.shape_cast %723 : vector<32x1x8xf32> to vector<32x8xf32>
    %cst_637 = arith.constant 2.500000e-01 : f32
    %725 = vector.broadcast %cst_637 : f32 to vector<32x8xf32>
    %726 = arith.mulf %724, %725 : vector<32x8xf32>
    %c0_638 = arith.constant 0 : index
    %c15_639 = arith.constant 15 : index
    %c0_640 = arith.constant 0 : index
    %727 = vector.load %arg3[%c0_638, %c15_639, %c0_640] : memref<32x16x8xf32, #tpu.memory_space<vmem>>, vector<32x1x8xf32>
    %728 = vector.shape_cast %727 : vector<32x1x8xf32> to vector<32x8xf32>
    %cst_641 = arith.constant 7.500000e-01 : f32
    %729 = vector.broadcast %cst_641 : f32 to vector<32x8xf32>
    %730 = arith.mulf %729, %728 : vector<32x8xf32>
    %731 = arith.addf %726, %730 : vector<32x8xf32>
    %c0_642 = arith.constant 0 : index
    %c30_643 = arith.constant 30 : index
    %c0_644 = arith.constant 0 : index
    %732 = vector.load %arg2[%c0_642, %c30_643, %c0_644] : memref<32x32x8xf32, #tpu.memory_space<vmem>>, vector<32x1x8xf32>
    %733 = vector.shape_cast %732 : vector<32x1x8xf32> to vector<32x8xf32>
    %734 = vector.shape_cast %731 : vector<32x8xf32> to vector<32x1x8xf32>
    tpu.vector_store %arg2[%c0_642, %c30_643, %c0_644], %734 {strides = array<i32>} : memref<32x32x8xf32, #tpu.memory_space<vmem>>, vector<32x1x8xf32>,
    %c0_645 = arith.constant 0 : index
    %c15_646 = arith.constant 15 : index
    %c0_647 = arith.constant 0 : index
    %735 = vector.load %arg3[%c0_645, %c15_646, %c0_647] : memref<32x16x8xf32, #tpu.memory_space<vmem>>, vector<32x1x8xf32>
    %736 = vector.shape_cast %735 : vector<32x1x8xf32> to vector<32x8xf32>
    %c0_648 = arith.constant 0 : index
    %c31_649 = arith.constant 31 : index
    %c0_650 = arith.constant 0 : index
    %737 = vector.load %arg2[%c0_648, %c31_649, %c0_650] : memref<32x32x8xf32, #tpu.memory_space<vmem>>, vector<32x1x8xf32>
    %738 = vector.shape_cast %737 : vector<32x1x8xf32> to vector<32x8xf32>
    %739 = vector.shape_cast %736 : vector<32x8xf32> to vector<32x1x8xf32>
    tpu.vector_store %arg2[%c0_648, %c31_649, %c0_650], %739 {strides = array<i32>} : memref<32x32x8xf32, #tpu.memory_space<vmem>>, vector<32x1x8xf32>,
    return
  }
  func.func @transform_0(%arg0: i32) -> (i32, i32, i32) {
    %c0_i32 = arith.constant 0 : i32
    %c0_i32_0 = arith.constant 0 : i32
    %c0_i32_1 = arith.constant 0 : i32
    %c0_i32_2 = arith.constant 0 : i32
    return %c0_i32, %c0_i32_0, %c0_i32_1 : i32, i32, i32
  }
  func.func @transform_1(%arg0: i32) -> (i32, i32, i32) {
    %c0_i32 = arith.constant 0 : i32
    %c0_i32_0 = arith.constant 0 : i32
    %c0_i32_1 = arith.constant 0 : i32
    %c0_i32_2 = arith.constant 0 : i32
    return %c0_i32, %c0_i32_0, %c0_i32_1 : i32, i32, i32
  }
}

</mosaic_0001>

<llo_original>
// kernel: interpolate_bilinear.1
$region0: #{interpolate_bilinear.1}
  #allocation0 [shape = 'u32[]', space=smem, size = 0x4, offset = 0x4, fixed_abs, tag = 'smem constant byte address 0x4 - core index']
  #allocation1 [shape = 'u32[144,128]{1,0:T(1,128)}', space=vmem, size = 0x12000, scoped, tag = 'internal scratch']
  #allocation2 [shape = 'f32[32,16,8]{2,1,0:T(8,128)}', space=vmem, size = 0x40000, scoped, tag = 'scratch operand']
  %s0 = inlined_call_operand.vmem [shape: f32[16,16,8], index: 0, kind: input, shape index: {}]
  %s1 = inlined_call_operand.vmem [shape: f32[32,32,8], index: 1, kind: output, shape index: {}]
  %s2 = sld [smem:[#allocation0]]
  $region14: #{interpolate_bilinear.1} parent=0
    _
  %s4 = ssub.s32 1, %s2
  %s5 = scalar_select 0, %s4, %s2
  // Predicated region
  $region2: #{interpolate_bilinear.1} parent=0 // pred_check
    _
  $region3: #{interpolate_bilinear.1} parent=0 // pred_check_branch
    %7 = sbr.rel (0) target = $region5
  $region4: #{interpolate_bilinear.1} parent=0 // pred_region
    _
  $region5: #{interpolate_bilinear.1} parent=0 // pred_fallthru
    _
  %v8 = vld [vmem:[%s0] sm:$0xff]
  %v9 = vld [vmem:[%s0 + $0x8] sm:$0xff]
  %vm10 = vcmask 64512
  %11 = vst.msk [vmem:[#allocation2] sm:$0xff] %vm10, %v8
  %12 = vst.msk [vmem:[#allocation2 + $0x8] sm:$0xff] %vm10, %v9
  %v13 = vld [vmem:[%s0] sm:$0xff]
  %v14 = vld [vmem:[%s0 + $0x8] sm:$0xff]
  %v15 = vmul.f32 %v13, 0.75
  %v16 = vmul.f32 %v14, 0.75
  %s17 = scalar_lea.vmem %s0, 16
  %v18 = vld [vmem:[%s17] sm:$0xff]
  %v19 = vld [vmem:[%s17 + $0x8] sm:$0xff]
  %v20 = vmul.f32 %v18, 0.25
  %v21 = vmul.f32 %v19, 0.25
  %v22 = vadd.f32 %v15, %v20
  %v23 = vadd.f32 %v16, %v21
  %s24 = scalar_lea.vmem [#allocation2], 16
  %25 = vst.msk [vmem:[%s24] sm:$0xff] %vm10, %v22
  %26 = vst.msk [vmem:[%s24 + $0x8] sm:$0xff] %vm10, %v23
  %v27 = vld [vmem:[%s0] sm:$0xff]
  %v28 = vld [vmem:[%s0 + $0x8] sm:$0xff]
  %v29 = vmul.f32 %v27, 0.25
  %v30 = vmul.f32 %v28, 0.25
  %v31 = vld [vmem:[%s17] sm:$0xff]
  %v32 = vld [vmem:[%s17 + $0x8] sm:$0xff]
  %v33 = vmul.f32 %v31, 0.75
  %v34 = vmul.f32 %v32, 0.75
  %v35 = vadd.f32 %v29, %v33
  %v36 = vadd.f32 %v30, %v34
  %s37 = scalar_lea.vmem [#allocation2], 32
  %38 = vst.msk [vmem:[%s37] sm:$0xff] %vm10, %v35
  %39 = vst.msk [vmem:[%s37 + $0x8] sm:$0xff] %vm10, %v36
  %v40 = vld [vmem:[%s17] sm:$0xff]
  %v41 = vld [vmem:[%s17 + $0x8] sm:$0xff]
  %v42 = vmul.f32 %v40, 0.75
  %v43 = vmul.f32 %v41, 0.75
  %s44 = scalar_lea.vmem %s0, 32
  %v45 = vld [vmem:[%s44] sm:$0xff]
  %v46 = vld [vmem:[%s44 + $0x8] sm:$0xff]
  %v47 = vmul.f32 %v45, 0.25
  %v48 = vmul.f32 %v46, 0.25
  %v49 = vadd.f32 %v42, %v47
  %v50 = vadd.f32 %v43, %v48
  %s51 = scalar_lea.vmem [#allocation2], 48
  %52 = vst.msk [vmem:[%s51] sm:$0xff] %vm10, %v49
  %53 = vst.msk [vmem:[%s51 + $0x8] sm:$0xff] %vm10, %v50
  %v54 = vld [vmem:[%s17] sm:$0xff]
  %v55 = vld [vmem:[%s17 + $0x8] sm:$0xff]
  %v56 = vmul.f32 %v54, 0.25
  %v57 = vmul.f32 %v55, 0.25
  %v58 = vld [vmem:[%s44] sm:$0xff]
  %v59 = vld [vmem:[%s44 + $0x8] sm:$0xff]
  %v60 = vmul.f32 %v58, 0.75
  %v61 = vmul.f32 %v59, 0.75
  %v62 = vadd.f32 %v56, %v60
  %v63 = vadd.f32 %v57, %v61
  %s64 = scalar_lea.vmem [#allocation2], 64
  %65 = vst.msk [vmem:[%s64] sm:$0xff] %vm10, %v62
  %66 = vst.msk [vmem:[%s64 + $0x8] sm:$0xff] %vm10, %v63
  %v67 = vld [vmem:[%s44] sm:$0xff]
  %v68 = vld [vmem:[%s44 + $0x8] sm:$0xff]
  %v69 = vmul.f32 %v67, 0.75
  %v70 = vmul.f32 %v68, 0.75
  %s71 = scalar_lea.vmem %s0, 48
  %v72 = vld [vmem:[%s71] sm:$0xff]
  %v73 = vld [vmem:[%s71 + $0x8] sm:$0xff]
  %v74 = vmul.f32 %v72, 0.25
  %v75 = vmul.f32 %v73, 0.25
  %v76 = vadd.f32 %v69, %v74
  %v77 = vadd.f32 %v70, %v75
  %s78 = scalar_lea.vmem [#allocation2], 80
  %79 = vst.msk [vmem:[%s78] sm:$0xff] %vm10, %v76
  %80 = vst.msk [vmem:[%s78 + $0x8] sm:$0xff] %vm10, %v77
  %v81 = vld [vmem:[%s44] sm:$0xff]
  %v82 = vld [vmem:[%s44 + $0x8] sm:$0xff]
  %v83 = vmul.f32 %v81, 0.25
  %v84 = vmul.f32 %v82, 0.25
  %v85 = vld [vmem:[%s71] sm:$0xff]
  %v86 = vld [vmem:[%s71 + $0x8] sm:$0xff]
  %v87 = vmul.f32 %v85, 0.75
  %v88 = vmul.f32 %v86, 0.75
  %v89 = vadd.f32 %v83, %v87
  %v90 = vadd.f32 %v84, %v88
  %s91 = scalar_lea.vmem [#allocation2], 96
  %92 = vst.msk [vmem:[%s91] sm:$0xff] %vm10, %v89
  %93 = vst.msk [vmem:[%s91 + $0x8] sm:$0xff] %vm10, %v90
  %v94 = vld [vmem:[%s71] sm:$0xff]
  %v95 = vld [vmem:[%s71 + $0x8] sm:$0xff]
  %v96 = vmul.f32 %v94, 0.75
  %v97 = vmul.f32 %v95, 0.75
  %s98 = scalar_lea.vmem %s0, 64
  %v99 = vld [vmem:[%s98] sm:$0xff]
  %v100 = vld [vmem:[%s98 + $0x8] sm:$0xff]
  %v101 = vmul.f32 %v99, 0.25
  %v102 = vmul.f32 %v100, 0.25
  %v103 = vadd.f32 %v96, %v101
  %v104 = vadd.f32 %v97, %v102
  %s105 = scalar_lea.vmem [#allocation2], 112
  %106 = vst.msk [vmem:[%s105] sm:$0xff] %vm10, %v103
  %107 = vst.msk [vmem:[%s105 + $0x8] sm:$0xff] %vm10, %v104
  %v108 = vld [vmem:[%s71] sm:$0xff]
  %v109 = vld [vmem:[%s71 + $0x8] sm:$0xff]
  %v110 = vmul.f32 %v108, 0.25
  %v111 = vmul.f32 %v109, 0.25
  %v112 = vld [vmem:[%s98] sm:$0xff]
  %v113 = vld [vmem:[%s98 + $0x8] sm:$0xff]
  %v114 = vmul.f32 %v112, 0.75
  %v115 = vmul.f32 %v113, 0.75
  %v116 = vadd.f32 %v110, %v114
  %v117 = vadd.f32 %v111, %v115
  %s118 = scalar_lea.vmem [#allocation2], 128
  %119 = vst.msk [vmem:[%s118] sm:$0xff] %vm10, %v116
  %120 = vst.msk [vmem:[%s118 + $0x8] sm:$0xff] %vm10, %v117
  %v121 = vld [vmem:[%s98] sm:$0xff]
  %v122 = vld [vmem:[%s98 + $0x8] sm:$0xff]
  %v123 = vmul.f32 %v121, 0.75
  %v124 = vmul.f32 %v122, 0.75
  %s125 = scalar_lea.vmem %s0, 80
  %v126 = vld [vmem:[%s125] sm:$0xff]
  %v127 = vld [vmem:[%s125 + $0x8] sm:$0xff]
  %v128 = vmul.f32 %v126, 0.25
  %v129 = vmul.f32 %v127, 0.25
  %v130 = vadd.f32 %v123, %v128
  %v131 = vadd.f32 %v124, %v129
  %s132 = scalar_lea.vmem [#allocation2], 144
  %133 = vst.msk [vmem:[%s132] sm:$0xff] %vm10, %v130
  %134 = vst.msk [vmem:[%s132 + $0x8] sm:$0xff] %vm10, %v131
  %v135 = vld [vmem:[%s98] sm:$0xff]
  %v136 = vld [vmem:[%s98 + $0x8] sm:$0xff]
  %v137 = vmul.f32 %v135, 0.25
  %v138 = vmul.f32 %v136, 0.25
  %v139 = vld [vmem:[%s125] sm:$0xff]
  %v140 = vld [vmem:[%s125 + $0x8] sm:$0xff]
  %v141 = vmul.f32 %v139, 0.75
  %v142 = vmul.f32 %v140, 0.75
  %v143 = vadd.f32 %v137, %v141
  %v144 = vadd.f32 %v138, %v142
  %s145 = scalar_lea.vmem [#allocation2], 160
  %146 = vst.msk [vmem:[%s145] sm:$0xff] %vm10, %v143
  %147 = vst.msk [vmem:[%s145 + $0x8] sm:$0xff] %vm10, %v144
  %v148 = vld [vmem:[%s125] sm:$0xff]
  %v149 = vld [vmem:[%s125 + $0x8] sm:$0xff]
  %v150 = vmul.f32 %v148, 0.75
  %v151 = vmul.f32 %v149, 0.75
  %s152 = scalar_lea.vmem %s0, 96
  %v153 = vld [vmem:[%s152] sm:$0xff]
  %v154 = vld [vmem:[%s152 + $0x8] sm:$0xff]
  %v155 = vmul.f32 %v153, 0.25
  %v156 = vmul.f32 %v154, 0.25
  %v157 = vadd.f32 %v150, %v155
  %v158 = vadd.f32 %v151, %v156
  %s159 = scalar_lea.vmem [#allocation2], 176
  %160 = vst.msk [vmem:[%s159] sm:$0xff] %vm10, %v157
  %161 = vst.msk [vmem:[%s159 + $0x8] sm:$0xff] %vm10, %v158
  %v162 = vld [vmem:[%s125] sm:$0xff]
  %v163 = vld [vmem:[%s125 + $0x8] sm:$0xff]
  %v164 = vmul.f32 %v162, 0.25
  %v165 = vmul.f32 %v163, 0.25
  %v166 = vld [vmem:[%s152] sm:$0xff]
  %v167 = vld [vmem:[%s152 + $0x8] sm:$0xff]
  %v168 = vmul.f32 %v166, 0.75
  %v169 = vmul.f32 %v167, 0.75
  %v170 = vadd.f32 %v164, %v168
  %v171 = vadd.f32 %v165, %v169
  %s172 = scalar_lea.vmem [#allocation2], 192
  %173 = vst.msk [vmem:[%s172] sm:$0xff] %vm10, %v170
  %174 = vst.msk [vmem:[%s172 + $0x8] sm:$0xff] %vm10, %v171
  %v175 = vld [vmem:[%s152] sm:$0xff]
  %v176 = vld [vmem:[%s152 + $0x8] sm:$0xff]
  %v177 = vmul.f32 %v175, 0.75
  %v178 = vmul.f32 %v176, 0.75
  %s179 = scalar_lea.vmem %s0, 112
  %v180 = vld [vmem:[%s179] sm:$0xff]
  %v181 = vld [vmem:[%s179 + $0x8] sm:$0xff]
  %v182 = vmul.f32 %v180, 0.25
  %v183 = vmul.f32 %v181, 0.25
  %v184 = vadd.f32 %v177, %v182
  %v185 = vadd.f32 %v178, %v183
  %s186 = scalar_lea.vmem [#allocation2], 208
  %187 = vst.msk [vmem:[%s186] sm:$0xff] %vm10, %v184
  %188 = vst.msk [vmem:[%s186 + $0x8] sm:$0xff] %vm10, %v185
  %v189 = vld [vmem:[%s152] sm:$0xff]
  %v190 = vld [vmem:[%s152 + $0x8] sm:$0xff]
  %v191 = vmul.f32 %v189, 0.25
  %v192 = vmul.f32 %v190, 0.25
  %v193 = vld [vmem:[%s179] sm:$0xff]
  %v194 = vld [vmem:[%s179 + $0x8] sm:$0xff]
  %v195 = vmul.f32 %v193, 0.75
  %v196 = vmul.f32 %v194, 0.75
  %v197 = vadd.f32 %v191, %v195
  %v198 = vadd.f32 %v192, %v196
  %s199 = scalar_lea.vmem [#allocation2], 224
  %200 = vst.msk [vmem:[%s199] sm:$0xff] %vm10, %v197
  %201 = vst.msk [vmem:[%s199 + $0x8] sm:$0xff] %vm10, %v198
  %v202 = vld [vmem:[%s179] sm:$0xff]
  %v203 = vld [vmem:[%s179 + $0x8] sm:$0xff]
  %v204 = vmul.f32 %v202, 0.75
  %v205 = vmul.f32 %v203, 0.75
  %s206 = scalar_lea.vmem %s0, 128
  %v207 = vld [vmem:[%s206] sm:$0xff]
  %v208 = vld [vmem:[%s206 + $0x8] sm:$0xff]
  %v209 = vmul.f32 %v207, 0.25
  %v210 = vmul.f32 %v208, 0.25
  %v211 = vadd.f32 %v204, %v209
  %v212 = vadd.f32 %v205, %v210
  %s213 = scalar_lea.vmem [#allocation2], 240
  %214 = vst.msk [vmem:[%s213] sm:$0xff] %vm10, %v211
  %215 = vst.msk [vmem:[%s213 + $0x8] sm:$0xff] %vm10, %v212
  %v216 = vld [vmem:[%s179] sm:$0xff]
  %v217 = vld [vmem:[%s179 + $0x8] sm:$0xff]
  %v218 = vmul.f32 %v216, 0.25
  %v219 = vmul.f32 %v217, 0.25
  %v220 = vld [vmem:[%s206] sm:$0xff]
  %v221 = vld [vmem:[%s206 + $0x8] sm:$0xff]
  %v222 = vmul.f32 %v220, 0.75
  %v223 = vmul.f32 %v221, 0.75
  %v224 = vadd.f32 %v218, %v222
  %v225 = vadd.f32 %v219, %v223
  %s226 = scalar_lea.vmem [#allocation2], 256
  %227 = vst.msk [vmem:[%s226] sm:$0xff] %vm10, %v224
  %228 = vst.msk [vmem:[%s226 + $0x8] sm:$0xff] %vm10, %v225
  %v229 = vld [vmem:[%s206] sm:$0xff]
  %v230 = vld [vmem:[%s206 + $0x8] sm:$0xff]
  %v231 = vmul.f32 %v229, 0.75
  %v232 = vmul.f32 %v230, 0.75
  %s233 = scalar_lea.vmem %s0, 144
  %v234 = vld [vmem:[%s233] sm:$0xff]
  %v235 = vld [vmem:[%s233 + $0x8] sm:$0xff]
  %v236 = vmul.f32 %v234, 0.25
  %v237 = vmul.f32 %v235, 0.25
  %v238 = vadd.f32 %v231, %v236
  %v239 = vadd.f32 %v232, %v237
  %s240 = scalar_lea.vmem [#allocation2], 272
  %241 = vst.msk [vmem:[%s240] sm:$0xff] %vm10, %v238
  %242 = vst.msk [vmem:[%s240 + $0x8] sm:$0xff] %vm10, %v239
  %v243 = vld [vmem:[%s206] sm:$0xff]
  %v244 = vld [vmem:[%s206 + $0x8] sm:$0xff]
  %v245 = vmul.f32 %v243, 0.25
  %v246 = vmul.f32 %v244, 0.25
  %v247 = vld [vmem:[%s233] sm:$0xff]
  %v248 = vld [vmem:[%s233 + $0x8] sm:$0xff]
  %v249 = vmul.f32 %v247, 0.75
  %v250 = vmul.f32 %v248, 0.75
  %v251 = vadd.f32 %v245, %v249
  %v252 = vadd.f32 %v246, %v250
  %s253 = scalar_lea.vmem [#allocation2], 288
  %254 = vst.msk [vmem:[%s253] sm:$0xff] %vm10, %v251
  %255 = vst.msk [vmem:[%s253 + $0x8] sm:$0xff] %vm10, %v252
  %v256 = vld [vmem:[%s233] sm:$0xff]
  %v257 = vld [vmem:[%s233 + $0x8] sm:$0xff]
  %v258 = vmul.f32 %v256, 0.75
  %v259 = vmul.f32 %v257, 0.75
  %s260 = scalar_lea.vmem %s0, 160
  %v261 = vld [vmem:[%s260] sm:$0xff]
  %v262 = vld [vmem:[%s260 + $0x8] sm:$0xff]
  %v263 = vmul.f32 %v261, 0.25
  %v264 = vmul.f32 %v262, 0.25
  %v265 = vadd.f32 %v258, %v263
  %v266 = vadd.f32 %v259, %v264
  %s267 = scalar_lea.vmem [#allocation2], 304
  %268 = vst.msk [vmem:[%s267] sm:$0xff] %vm10, %v265
  %269 = vst.msk [vmem:[%s267 + $0x8] sm:$0xff] %vm10, %v266
  %v270 = vld [vmem:[%s233] sm:$0xff]
  %v271 = vld [vmem:[%s233 + $0x8] sm:$0xff]
  %v272 = vmul.f32 %v270, 0.25
  %v273 = vmul.f32 %v271, 0.25
  %v274 = vld [vmem:[%s260] sm:$0xff]
  %v275 = vld [vmem:[%s260 + $0x8] sm:$0xff]
  %v276 = vmul.f32 %v274, 0.75
  %v277 = vmul.f32 %v275, 0.75
  %v278 = vadd.f32 %v272, %v276
  %v279 = vadd.f32 %v273, %v277
  %s280 = scalar_lea.vmem [#allocation2], 320
  %281 = vst.msk [vmem:[%s280] sm:$0xff] %vm10, %v278
  %282 = vst.msk [vmem:[%s280 + $0x8] sm:$0xff] %vm10, %v279
  %v283 = vld [vmem:[%s260] sm:$0xff]
  %v284 = vld [vmem:[%s260 + $0x8] sm:$0xff]
  %v285 = vmul.f32 %v283, 0.75
  %v286 = vmul.f32 %v284, 0.75
  %s287 = scalar_lea.vmem %s0, 176
  %v288 = vld [vmem:[%s287] sm:$0xff]
  %v289 = vld [vmem:[%s287 + $0x8] sm:$0xff]
  %v290 = vmul.f32 %v288, 0.25
  %v291 = vmul.f32 %v289, 0.25
  %v292 = vadd.f32 %v285, %v290
  %v293 = vadd.f32 %v286, %v291
  %s294 = scalar_lea.vmem [#allocation2], 336
  %295 = vst.msk [vmem:[%s294] sm:$0xff] %vm10, %v292
  %296 = vst.msk [vmem:[%s294 + $0x8] sm:$0xff] %vm10, %v293
  %v297 = vld [vmem:[%s260] sm:$0xff]
  %v298 = vld [vmem:[%s260 + $0x8] sm:$0xff]
  %v299 = vmul.f32 %v297, 0.25
  %v300 = vmul.f32 %v298, 0.25
  %v301 = vld [vmem:[%s287] sm:$0xff]
  %v302 = vld [vmem:[%s287 + $0x8] sm:$0xff]
  %v303 = vmul.f32 %v301, 0.75
  %v304 = vmul.f32 %v302, 0.75
  %v305 = vadd.f32 %v299, %v303
  %v306 = vadd.f32 %v300, %v304
  %s307 = scalar_lea.vmem [#allocation2], 352
  %308 = vst.msk [vmem:[%s307] sm:$0xff] %vm10, %v305
  %309 = vst.msk [vmem:[%s307 + $0x8] sm:$0xff] %vm10, %v306
  %v310 = vld [vmem:[%s287] sm:$0xff]
  %v311 = vld [vmem:[%s287 + $0x8] sm:$0xff]
  %v312 = vmul.f32 %v310, 0.75
  %v313 = vmul.f32 %v311, 0.75
  %s314 = scalar_lea.vmem %s0, 192
  %v315 = vld [vmem:[%s314] sm:$0xff]
  %v316 = vld [vmem:[%s314 + $0x8] sm:$0xff]
  %v317 = vmul.f32 %v315, 0.25
  %v318 = vmul.f32 %v316, 0.25
  %v319 = vadd.f32 %v312, %v317
  %v320 = vadd.f32 %v313, %v318
  %s321 = scalar_lea.vmem [#allocation2], 368
  %322 = vst.msk [vmem:[%s321] sm:$0xff] %vm10, %v319
  %323 = vst.msk [vmem:[%s321 + $0x8] sm:$0xff] %vm10, %v320
  %v324 = vld [vmem:[%s287] sm:$0xff]
  %v325 = vld [vmem:[%s287 + $0x8] sm:$0xff]
  %v326 = vmul.f32 %v324, 0.25
  %v327 = vmul.f32 %v325, 0.25
  %v328 = vld [vmem:[%s314] sm:$0xff]
  %v329 = vld [vmem:[%s314 + $0x8] sm:$0xff]
  %v330 = vmul.f32 %v328, 0.75
  %v331 = vmul.f32 %v329, 0.75
  %v332 = vadd.f32 %v326, %v330
  %v333 = vadd.f32 %v327, %v331
  %s334 = scalar_lea.vmem [#allocation2], 384
  %335 = vst.msk [vmem:[%s334] sm:$0xff] %vm10, %v332
  %336 = vst.msk [vmem:[%s334 + $0x8] sm:$0xff] %vm10, %v333
  %v337 = vld [vmem:[%s314] sm:$0xff]
  %v338 = vld [vmem:[%s314 + $0x8] sm:$0xff]
  %v339 = vmul.f32 %v337, 0.75
  %v340 = vmul.f32 %v338, 0.75
  %s341 = scalar_lea.vmem %s0, 208
  %v342 = vld [vmem:[%s341] sm:$0xff]
  %v343 = vld [vmem:[%s341 + $0x8] sm:$0xff]
  %v344 = vmul.f32 %v342, 0.25
  %v345 = vmul.f32 %v343, 0.25
  %v346 = vadd.f32 %v339, %v344
  %v347 = vadd.f32 %v340, %v345
  %s348 = scalar_lea.vmem [#allocation2], 400
  %349 = vst.msk [vmem:[%s348] sm:$0xff] %vm10, %v346
  %350 = vst.msk [vmem:[%s348 + $0x8] sm:$0xff] %vm10, %v347
  %v351 = vld [vmem:[%s314] sm:$0xff]
  %v352 = vld [vmem:[%s314 + $0x8] sm:$0xff]
  %v353 = vmul.f32 %v351, 0.25
  %v354 = vmul.f32 %v352, 0.25
  %v355 = vld [vmem:[%s341] sm:$0xff]
  %v356 = vld [vmem:[%s341 + $0x8] sm:$0xff]
  %v357 = vmul.f32 %v355, 0.75
  %v358 = vmul.f32 %v356, 0.75
  %v359 = vadd.f32 %v353, %v357
  %v360 = vadd.f32 %v354, %v358
  %s361 = scalar_lea.vmem [#allocation2], 416
  %362 = vst.msk [vmem:[%s361] sm:$0xff] %vm10, %v359
  %363 = vst.msk [vmem:[%s361 + $0x8] sm:$0xff] %vm10, %v360
  %v364 = vld [vmem:[%s341] sm:$0xff]
  %v365 = vld [vmem:[%s341 + $0x8] sm:$0xff]
  %v366 = vmul.f32 %v364, 0.75
  %v367 = vmul.f32 %v365, 0.75
  %s368 = scalar_lea.vmem %s0, 224
  %v369 = vld [vmem:[%s368] sm:$0xff]
  %v370 = vld [vmem:[%s368 + $0x8] sm:$0xff]
  %v371 = vmul.f32 %v369, 0.25
  %v372 = vmul.f32 %v370, 0.25
  %v373 = vadd.f32 %v366, %v371
  %v374 = vadd.f32 %v367, %v372
  %s375 = scalar_lea.vmem [#allocation2], 432
  %376 = vst.msk [vmem:[%s375] sm:$0xff] %vm10, %v373
  %377 = vst.msk [vmem:[%s375 + $0x8] sm:$0xff] %vm10, %v374
  %v378 = vld [vmem:[%s341] sm:$0xff]
  %v379 = vld [vmem:[%s341 + $0x8] sm:$0xff]
  %v380 = vmul.f32 %v378, 0.25
  %v381 = vmul.f32 %v379, 0.25
  %v382 = vld [vmem:[%s368] sm:$0xff]
  %v383 = vld [vmem:[%s368 + $0x8] sm:$0xff]
  %v384 = vmul.f32 %v382, 0.75
  %v385 = vmul.f32 %v383, 0.75
  %v386 = vadd.f32 %v380, %v384
  %v387 = vadd.f32 %v381, %v385
  %s388 = scalar_lea.vmem [#allocation2], 448
  %389 = vst.msk [vmem:[%s388] sm:$0xff] %vm10, %v386
  %390 = vst.msk [vmem:[%s388 + $0x8] sm:$0xff] %vm10, %v387
  %v391 = vld [vmem:[%s368] sm:$0xff]
  %v392 = vld [vmem:[%s368 + $0x8] sm:$0xff]
  %v393 = vmul.f32 %v391, 0.75
  %v394 = vmul.f32 %v392, 0.75
  %s395 = scalar_lea.vmem %s0, 240
  %v396 = vld [vmem:[%s395] sm:$0xff]
  %v397 = vld [vmem:[%s395 + $0x8] sm:$0xff]
  %v398 = vmul.f32 %v396, 0.25
  %v399 = vmul.f32 %v397, 0.25
  %v400 = vadd.f32 %v393, %v398
  %v401 = vadd.f32 %v394, %v399
  %s402 = scalar_lea.vmem [#allocation2], 464
  %403 = vst.msk [vmem:[%s402] sm:$0xff] %vm10, %v400
  %404 = vst.msk [vmem:[%s402 + $0x8] sm:$0xff] %vm10, %v401
  %v405 = vld [vmem:[%s368] sm:$0xff]
  %v406 = vld [vmem:[%s368 + $0x8] sm:$0xff]
  %v407 = vmul.f32 %v405, 0.25
  %v408 = vmul.f32 %v406, 0.25
  %v409 = vld [vmem:[%s395] sm:$0xff]
  %v410 = vld [vmem:[%s395 + $0x8] sm:$0xff]
  %v411 = vmul.f32 %v409, 0.75
  %v412 = vmul.f32 %v410, 0.75
  %v413 = vadd.f32 %v407, %v411
  %v414 = vadd.f32 %v408, %v412
  %s415 = scalar_lea.vmem [#allocation2], 480
  %416 = vst.msk [vmem:[%s415] sm:$0xff] %vm10, %v413
  %417 = vst.msk [vmem:[%s415 + $0x8] sm:$0xff] %vm10, %v414
  %v418 = vld [vmem:[%s395] sm:$0xff]
  %v419 = vld [vmem:[%s395 + $0x8] sm:$0xff]
  %s420 = scalar_lea.vmem [#allocation2], 496
  %421 = vst.msk [vmem:[%s420] sm:$0xff] %vm10, %v418
  %422 = vst.msk [vmem:[%s420 + $0x8] sm:$0xff] %vm10, %v419
  %v423 = vld [vmem:[#allocation2] sm:$0x1]
  %v424 = vld [vmem:[#allocation2 + $0x10] sm:$0x1]
  %v425 = vld [vmem:[#allocation2 + $0x20] sm:$0x1]
  %v426 = vld [vmem:[#allocation2 + $0x30] sm:$0x1]
  %v427 = vld [vmem:[#allocation2 + $0x40] sm:$0x1]
  %v428 = vld [vmem:[#allocation2 + $0x50] sm:$0x1]
  %v429 = vld [vmem:[#allocation2 + $0x60] sm:$0x1]
  %v430 = vld [vmem:[#allocation2 + $0x70] sm:$0x1]
  %v431 = vld [vmem:[#allocation2 + $0x80] sm:$0x1]
  %v432 = vld [vmem:[#allocation2 + $0x90] sm:$0x1]
  %v433 = vld [vmem:[#allocation2 + $0xa0] sm:$0x1]
  %v434 = vld [vmem:[#allocation2 + $0xb0] sm:$0x1]
  %v435 = vld [vmem:[#allocation2 + $0xc0] sm:$0x1]
  %v436 = vld [vmem:[#allocation2 + $0xd0] sm:$0x1]
  %v437 = vld [vmem:[#allocation2 + $0xe0] sm:$0x1]
  %v438 = vld [vmem:[#allocation2 + $0xf0] sm:$0x1]
  %v439 = vld [vmem:[#allocation2 + $0x100] sm:$0x1]
  %v440 = vld [vmem:[#allocation2 + $0x110] sm:$0x1]
  %v441 = vld [vmem:[#allocation2 + $0x120] sm:$0x1]
  %v442 = vld [vmem:[#allocation2 + $0x130] sm:$0x1]
  %v443 = vld [vmem:[#allocation2 + $0x140] sm:$0x1]
  %v444 = vld [vmem:[#allocation2 + $0x150] sm:$0x1]
  %v445 = vld [vmem:[#allocation2 + $0x160] sm:$0x1]
  %v446 = vld [vmem:[#allocation2 + $0x170] sm:$0x1]
  %v447 = vld [vmem:[#allocation2 + $0x180] sm:$0x1]
  %v448 = vld [vmem:[#allocation2 + $0x190] sm:$0x1]
  %v449 = vld [vmem:[#allocation2 + $0x1a0] sm:$0x1]
  %v450 = vld [vmem:[#allocation2 + $0x1b0] sm:$0x1]
  %v451 = vld [vmem:[#allocation2 + $0x1c0] sm:$0x1]
  %v452 = vld [vmem:[#allocation2 + $0x1d0] sm:$0x1]
  %v453 = vld [vmem:[#allocation2 + $0x1e0] sm:$0x1]
  %v454 = vld [vmem:[#allocation2 + $0x1f0] sm:$0x1]
  %vm455 = vcmask 57344
  %456 = vst.msk [vmem:[%s1] sm:$0x1] %vm455, %v423
  %457 = vst.msk [vmem:[%s1 + $0x20] sm:$0x1] %vm455, %v424
  %458 = vst.msk [vmem:[%s1 + $0x40] sm:$0x1] %vm455, %v425
  %459 = vst.msk [vmem:[%s1 + $0x60] sm:$0x1] %vm455, %v426
  %460 = vst.msk [vmem:[%s1 + $0x80] sm:$0x1] %vm455, %v427
  %461 = vst.msk [vmem:[%s1 + $0xa0] sm:$0x1] %vm455, %v428
  %462 = vst.msk [vmem:[%s1 + $0xc0] sm:$0x1] %vm455, %v429
  %463 = vst.msk [vmem:[%s1 + $0xe0] sm:$0x1] %vm455, %v430
  %464 = vst.msk [vmem:[%s1 + $0x100] sm:$0x1] %vm455, %v431
  %465 = vst.msk [vmem:[%s1 + $0x120] sm:$0x1] %vm455, %v432
  %466 = vst.msk [vmem:[%s1 + $0x140] sm:$0x1] %vm455, %v433
  %467 = vst.msk [vmem:[%s1 + $0x160] sm:$0x1] %vm455, %v434
  %468 = vst.msk [vmem:[%s1 + $0x180] sm:$0x1] %vm455, %v435
  %469 = vst.msk [vmem:[%s1 + $0x1a0] sm:$0x1] %vm455, %v436
  %470 = vst.msk [vmem:[%s1 + $0x1c0] sm:$0x1] %vm455, %v437
  %471 = vst.msk [vmem:[%s1 + $0x1e0] sm:$0x1] %vm455, %v438
  %472 = vst.msk [vmem:[%s1 + $0x200] sm:$0x1] %vm455, %v439
  %473 = vst.msk [vmem:[%s1 + $0x220] sm:$0x1] %vm455, %v440
  %474 = vst.msk [vmem:[%s1 + $0x240] sm:$0x1] %vm455, %v441
  %475 = vst.msk [vmem:[%s1 + $0x260] sm:$0x1] %vm455, %v442
  %476 = vst.msk [vmem:[%s1 + $0x280] sm:$0x1] %vm455, %v443
  %477 = vst.msk [vmem:[%s1 + $0x2a0] sm:$0x1] %vm455, %v444
  %478 = vst.msk [vmem:[%s1 + $0x2c0] sm:$0x1] %vm455, %v445
  %479 = vst.msk [vmem:[%s1 + $0x2e0] sm:$0x1] %vm455, %v446
  %480 = vst.msk [vmem:[%s1 + $0x300] sm:$0x1] %vm455, %v447
  %481 = vst.msk [vmem:[%s1 + $0x320] sm:$0x1] %vm455, %v448
  %482 = vst.msk [vmem:[%s1 + $0x340] sm:$0x1] %vm455, %v449
  %483 = vst.msk [vmem:[%s1 + $0x360] sm:$0x1] %vm455, %v450
  %484 = vst.msk [vmem:[%s1 + $0x380] sm:$0x1] %vm455, %v451
  %485 = vst.msk [vmem:[%s1 + $0x3a0] sm:$0x1] %vm455, %v452
  %486 = vst.msk [vmem:[%s1 + $0x3c0] sm:$0x1] %vm455, %v453
  %487 = vst.msk [vmem:[%s1 + $0x3e0] sm:$0x1] %vm455, %v454
  %v488 = vld [vmem:[#allocation2] sm:$0x1]
  %v489 = vld [vmem:[#allocation2 + $0x10] sm:$0x1]
  %v490 = vld [vmem:[#allocation2 + $0x20] sm:$0x1]
  %v491 = vld [vmem:[#allocation2 + $0x30] sm:$0x1]
  %v492 = vld [vmem:[#allocation2 + $0x40] sm:$0x1]
  %v493 = vld [vmem:[#allocation2 + $0x50] sm:$0x1]
  %v494 = vld [vmem:[#allocation2 + $0x60] sm:$0x1]
  %v495 = vld [vmem:[#allocation2 + $0x70] sm:$0x1]
  %v496 = vld [vmem:[#allocation2 + $0x80] sm:$0x1]
  %v497 = vld [vmem:[#allocation2 + $0x90] sm:$0x1]
  %v498 = vld [vmem:[#allocation2 + $0xa0] sm:$0x1]
  %v499 = vld [vmem:[#allocation2 + $0xb0] sm:$0x1]
  %v500 = vld [vmem:[#allocation2 + $0xc0] sm:$0x1]
  %v501 = vld [vmem:[#allocation2 + $0xd0] sm:$0x1]
  %v502 = vld [vmem:[#allocation2 + $0xe0] sm:$0x1]
  %v503 = vld [vmem:[#allocation2 + $0xf0] sm:$0x1]
  %v504 = vld [vmem:[#allocation2 + $0x100] sm:$0x1]
  %v505 = vld [vmem:[#allocation2 + $0x110] sm:$0x1]
  %v506 = vld [vmem:[#allocation2 + $0x120] sm:$0x1]
  %v507 = vld [vmem:[#allocation2 + $0x130] sm:$0x1]
  %v508 = vld [vmem:[#allocation2 + $0x140] sm:$0x1]
  %v509 = vld [vmem:[#allocation2 + $0x150] sm:$0x1]
  %v510 = vld [vmem:[#allocation2 + $0x160] sm:$0x1]
  %v511 = vld [vmem:[#allocation2 + $0x170] sm:$0x1]
  %v512 = vld [vmem:[#allocation2 + $0x180] sm:$0x1]
  %v513 = vld [vmem:[#allocation2 + $0x190] sm:$0x1]
  %v514 = vld [vmem:[#allocation2 + $0x1a0] sm:$0x1]
  %v515 = vld [vmem:[#allocation2 + $0x1b0] sm:$0x1]
  %v516 = vld [vmem:[#allocation2 + $0x1c0] sm:$0x1]
  %v517 = vld [vmem:[#allocation2 + $0x1d0] sm:$0x1]
  %v518 = vld [vmem:[#allocation2 + $0x1e0] sm:$0x1]
  %v519 = vld [vmem:[#allocation2 + $0x1f0] sm:$0x1]
  %v520 = vmul.f32 %v488, 0.75
  %v521 = vmul.f32 %v489, 0.75
  %v522 = vmul.f32 %v490, 0.75
  %v523 = vmul.f32 %v491, 0.75
  %v524 = vmul.f32 %v492, 0.75
  %v525 = vmul.f32 %v493, 0.75
  %v526 = vmul.f32 %v494, 0.75
  %v527 = vmul.f32 %v495, 0.75
  %v528 = vmul.f32 %v496, 0.75
  %v529 = vmul.f32 %v497, 0.75
  %v530 = vmul.f32 %v498, 0.75
  %v531 = vmul.f32 %v499, 0.75
  %v532 = vmul.f32 %v500, 0.75
  %v533 = vmul.f32 %v501, 0.75
  %v534 = vmul.f32 %v502, 0.75
  %v535 = vmul.f32 %v503, 0.75
  %v536 = vmul.f32 %v504, 0.75
  %v537 = vmul.f32 %v505, 0.75
  %v538 = vmul.f32 %v506, 0.75
  %v539 = vmul.f32 %v507, 0.75
  %v540 = vmul.f32 %v508, 0.75
  %v541 = vmul.f32 %v509, 0.75
  %v542 = vmul.f32 %v510, 0.75
  %v543 = vmul.f32 %v511, 0.75
  %v544 = vmul.f32 %v512, 0.75
  %v545 = vmul.f32 %v513, 0.75
  %v546 = vmul.f32 %v514, 0.75
  %v547 = vmul.f32 %v515, 0.75
  %v548 = vmul.f32 %v516, 0.75
  %v549 = vmul.f32 %v517, 0.75
  %v550 = vmul.f32 %v518, 0.75
  %v551 = vmul.f32 %v519, 0.75
  %v552 = vld [vmem:[#allocation2 + $0x1] sm:$0x1]
  %v553 = vld [vmem:[#allocation2 + $0x11] sm:$0x1]
  %v554 = vld [vmem:[#allocation2 + $0x21] sm:$0x1]
  %v555 = vld [vmem:[#allocation2 + $0x31] sm:$0x1]
  %v556 = vld [vmem:[#allocation2 + $0x41] sm:$0x1]
  %v557 = vld [vmem:[#allocation2 + $0x51] sm:$0x1]
  %v558 = vld [vmem:[#allocation2 + $0x61] sm:$0x1]
  %v559 = vld [vmem:[#allocation2 + $0x71] sm:$0x1]
  %v560 = vld [vmem:[#allocation2 + $0x81] sm:$0x1]
  %v561 = vld [vmem:[#allocation2 + $0x91] sm:$0x1]
  %v562 = vld [vmem:[#allocation2 + $0xa1] sm:$0x1]
  %v563 = vld [vmem:[#allocation2 + $0xb1] sm:$0x1]
  %v564 = vld [vmem:[#allocation2 + $0xc1] sm:$0x1]
  %v565 = vld [vmem:[#allocation2 + $0xd1] sm:$0x1]
  %v566 = vld [vmem:[#allocation2 + $0xe1] sm:$0x1]
  %v567 = vld [vmem:[#allocation2 + $0xf1] sm:$0x1]
  %v568 = vld [vmem:[#allocation2 + $0x101] sm:$0x1]
  %v569 = vld [vmem:[#allocation2 + $0x111] sm:$0x1]
  %v570 = vld [vmem:[#allocation2 + $0x121] sm:$0x1]
  %v571 = vld [vmem:[#allocation2 + $0x131] sm:$0x1]
  %v572 = vld [vmem:[#allocation2 + $0x141] sm:$0x1]
  %v573 = vld [vmem:[#allocation2 + $0x151] sm:$0x1]
  %v574 = vld [vmem:[#allocation2 + $0x161] sm:$0x1]
  %v575 = vld [vmem:[#allocation2 + $0x171] sm:$0x1]
  %v576 = vld [vmem:[#allocation2 + $0x181] sm:$0x1]
  %v577 = vld [vmem:[#allocation2 + $0x191] sm:$0x1]
  %v578 = vld [vmem:[#allocation2 + $0x1a1] sm:$0x1]
  %v579 = vld [vmem:[#allocation2 + $0x1b1] sm:$0x1]
  %v580 = vld [vmem:[#allocation2 + $0x1c1] sm:$0x1]
  %v581 = vld [vmem:[#allocation2 + $0x1d1] sm:$0x1]
  %v582 = vld [vmem:[#allocation2 + $0x1e1] sm:$0x1]
  %v583 = vld [vmem:[#allocation2 + $0x1f1] sm:$0x1]
  %v584 = vmul.f32 %v552, 0.25
  %v585 = vmul.f32 %v553, 0.25
  %v586 = vmul.f32 %v554, 0.25
  %v587 = vmul.f32 %v555, 0.25
  %v588 = vmul.f32 %v556, 0.25
  %v589 = vmul.f32 %v557, 0.25
  %v590 = vmul.f32 %v558, 0.25
  %v591 = vmul.f32 %v559, 0.25
  %v592 = vmul.f32 %v560, 0.25
  %v593 = vmul.f32 %v561, 0.25
  %v594 = vmul.f32 %v562, 0.25
  %v595 = vmul.f32 %v563, 0.25
  %v596 = vmul.f32 %v564, 0.25
  %v597 = vmul.f32 %v565, 0.25
  %v598 = vmul.f32 %v566, 0.25
  %v599 = vmul.f32 %v567, 0.25
  %v600 = vmul.f32 %v568, 0.25
  %v601 = vmul.f32 %v569, 0.25
  %v602 = vmul.f32 %v570, 0.25
  %v603 = vmul.f32 %v571, 0.25
  %v604 = vmul.f32 %v572, 0.25
  %v605 = vmul.f32 %v573, 0.25
  %v606 = vmul.f32 %v574, 0.25
  %v607 = vmul.f32 %v575, 0.25
  %v608 = vmul.f32 %v576, 0.25
  %v609 = vmul.f32 %v577, 0.25
  %v610 = vmul.f32 %v578, 0.25
  %v611 = vmul.f32 %v579, 0.25
  %v612 = vmul.f32 %v580, 0.25
  %v613 = vmul.f32 %v581, 0.25
  %v614 = vmul.f32 %v582, 0.25
  %v615 = vmul.f32 %v583, 0.25
  %v616 = vadd.f32 %v520, %v584
  %v617 = vadd.f32 %v521, %v585
  %v618 = vadd.f32 %v522, %v586
  %v619 = vadd.f32 %v523, %v587
  %v620 = vadd.f32 %v524, %v588
  %v621 = vadd.f32 %v525, %v589
  %v622 = vadd.f32 %v526, %v590
  %v623 = vadd.f32 %v527, %v591
  %v624 = vadd.f32 %v528, %v592
  %v625 = vadd.f32 %v529, %v593
  %v626 = vadd.f32 %v530, %v594
  %v627 = vadd.f32 %v531, %v595
  %v628 = vadd.f32 %v532, %v596
  %v629 = vadd.f32 %v533, %v597
  %v630 = vadd.f32 %v534, %v598
  %v631 = vadd.f32 %v535, %v599
  %v632 = vadd.f32 %v536, %v600
  %v633 = vadd.f32 %v537, %v601
  %v634 = vadd.f32 %v538, %v602
  %v635 = vadd.f32 %v539, %v603
  %v636 = vadd.f32 %v540, %v604
  %v637 = vadd.f32 %v541, %v605
  %v638 = vadd.f32 %v542, %v606
  %v639 = vadd.f32 %v543, %v607
  %v640 = vadd.f32 %v544, %v608
  %v641 = vadd.f32 %v545, %v609
  %v642 = vadd.f32 %v546, %v610
  %v643 = vadd.f32 %v547, %v611
  %v644 = vadd.f32 %v548, %v612
  %v645 = vadd.f32 %v549, %v613
  %v646 = vadd.f32 %v550, %v614
  %v647 = vadd.f32 %v551, %v615
  %648 = vst.msk [vmem:[%s1 + $0x1] sm:$0x1] %vm455, %v616
  %649 = vst.msk [vmem:[%s1 + $0x21] sm:$0x1] %vm455, %v617
  %650 = vst.msk [vmem:[%s1 + $0x41] sm:$0x1] %vm455, %v618
  %651 = vst.msk [vmem:[%s1 + $0x61] sm:$0x1] %vm455, %v619
  %652 = vst.msk [vmem:[%s1 + $0x81] sm:$0x1] %vm455, %v620
  %653 = vst.msk [vmem:[%s1 + $0xa1] sm:$0x1] %vm455, %v621
  %654 = vst.msk [vmem:[%s1 + $0xc1] sm:$0x1] %vm455, %v622
  %655 = vst.msk [vmem:[%s1 + $0xe1] sm:$0x1] %vm455, %v623
  %656 = vst.msk [vmem:[%s1 + $0x101] sm:$0x1] %vm455, %v624
  %657 = vst.msk [vmem:[%s1 + $0x121] sm:$0x1] %vm455, %v625
  %658 = vst.msk [vmem:[%s1 + $0x141] sm:$0x1] %vm455, %v626
  %659 = vst.msk [vmem:[%s1 + $0x161] sm:$0x1] %vm455, %v627
  %660 = vst.msk [vmem:[%s1 + $0x181] sm:$0x1] %vm455, %v628
  %661 = vst.msk [vmem:[%s1 + $0x1a1] sm:$0x1] %vm455, %v629
  %662 = vst.msk [vmem:[%s1 + $0x1c1] sm:$0x1] %vm455, %v630
  %663 = vst.msk [vmem:[%s1 + $0x1e1] sm:$0x1] %vm455, %v631
  %664 = vst.msk [vmem:[%s1 + $0x201] sm:$0x1] %vm455, %v632
  %665 = vst.msk [vmem:[%s1 + $0x221] sm:$0x1] %vm455, %v633
  %666 = vst.msk [vmem:[%s1 + $0x241] sm:$0x1] %vm455, %v634
  %667 = vst.msk [vmem:[%s1 + $0x261] sm:$0x1] %vm455, %v635
  %668 = vst.msk [vmem:[%s1 + $0x281] sm:$0x1] %vm455, %v636
  %669 = vst.msk [vmem:[%s1 + $0x2a1] sm:$0x1] %vm455, %v637
  %670 = vst.msk [vmem:[%s1 + $0x2c1] sm:$0x1] %vm455, %v638
  %671 = vst.msk [vmem:[%s1 + $0x2e1] sm:$0x1] %vm455, %v639
  %672 = vst.msk [vmem:[%s1 + $0x301] sm:$0x1] %vm455, %v640
  %673 = vst.msk [vmem:[%s1 + $0x321] sm:$0x1] %vm455, %v641
  %674 = vst.msk [vmem:[%s1 + $0x341] sm:$0x1] %vm455, %v642
  %675 = vst.msk [vmem:[%s1 + $0x361] sm:$0x1] %vm455, %v643
  %676 = vst.msk [vmem:[%s1 + $0x381] sm:$0x1] %vm455, %v644
  %677 = vst.msk [vmem:[%s1 + $0x3a1] sm:$0x1] %vm455, %v645
  %678 = vst.msk [vmem:[%s1 + $0x3c1] sm:$0x1] %vm455, %v646
  %679 = vst.msk [vmem:[%s1 + $0x3e1] sm:$0x1] %vm455, %v647
  %v680 = vld [vmem:[#allocation2] sm:$0x1]
  %v681 = vld [vmem:[#allocation2 + $0x10] sm:$0x1]
  %v682 = vld [vmem:[#allocation2 + $0x20] sm:$0x1]
  %v683 = vld [vmem:[#allocation2 + $0x30] sm:$0x1]
  %v684 = vld [vmem:[#allocation2 + $0x40] sm:$0x1]
  %v685 = vld [vmem:[#allocation2 + $0x50] sm:$0x1]
  %v686 = vld [vmem:[#allocation2 + $0x60] sm:$0x1]
  %v687 = vld [vmem:[#allocation2 + $0x70] sm:$0x1]
  %v688 = vld [vmem:[#allocation2 + $0x80] sm:$0x1]
  %v689 = vld [vmem:[#allocation2 + $0x90] sm:$0x1]
  %v690 = vld [vmem:[#allocation2 + $0xa0] sm:$0x1]
  %v691 = vld [vmem:[#allocation2 + $0xb0] sm:$0x1]
  %v692 = vld [vmem:[#allocation2 + $0xc0] sm:$0x1]
  %v693 = vld [vmem:[#allocation2 + $0xd0] sm:$0x1]
  %v694 = vld [vmem:[#allocation2 + $0xe0] sm:$0x1]
  %v695 = vld [vmem:[#allocation2 + $0xf0] sm:$0x1]
  %v696 = vld [vmem:[#allocation2 + $0x100] sm:$0x1]
  %v697 = vld [vmem:[#allocation2 + $0x110] sm:$0x1]
  %v698 = vld [vmem:[#allocation2 + $0x120] sm:$0x1]
  %v699 = vld [vmem:[#allocation2 + $0x130] sm:$0x1]
  %v700 = vld [vmem:[#allocation2 + $0x140] sm:$0x1]
  %v701 = vld [vmem:[#allocation2 + $0x150] sm:$0x1]
  %v702 = vld [vmem:[#allocation2 + $0x160] sm:$0x1]
  %v703 = vld [vmem:[#allocation2 + $0x170] sm:$0x1]
  %v704 = vld [vmem:[#allocation2 + $0x180] sm:$0x1]
  %v705 = vld [vmem:[#allocation2 + $0x190] sm:$0x1]
  %v706 = vld [vmem:[#allocation2 + $0x1a0] sm:$0x1]
  %v707 = vld [vmem:[#allocation2 + $0x1b0] sm:$0x1]
  %v708 = vld [vmem:[#allocation2 + $0x1c0] sm:$0x1]
  %v709 = vld [vmem:[#allocation2 + $0x1d0] sm:$0x1]
  %v710 = vld [vmem:[#allocation2 + $0x1e0] sm:$0x1]
  %v711 = vld [vmem:[#allocation2 + $0x1f0] sm:$0x1]
  %v712 = vmul.f32 %v680, 0.25
  %v713 = vmul.f32 %v681, 0.25
  %v714 = vmul.f32 %v682, 0.25
  %v715 = vmul.f32 %v683, 0.25
  %v716 = vmul.f32 %v684, 0.25
  %v717 = vmul.f32 %v685, 0.25
  %v718 = vmul.f32 %v686, 0.25
  %v719 = vmul.f32 %v687, 0.25
  %v720 = vmul.f32 %v688, 0.25
  %v721 = vmul.f32 %v689, 0.25
  %v722 = vmul.f32 %v690, 0.25
  %v723 = vmul.f32 %v691, 0.25
  %v724 = vmul.f32 %v692, 0.25
  %v725 = vmul.f32 %v693, 0.25
  %v726 = vmul.f32 %v694, 0.25
  %v727 = vmul.f32 %v695, 0.25
  %v728 = vmul.f32 %v696, 0.25
  %v729 = vmul.f32 %v697, 0.25
  %v730 = vmul.f32 %v698, 0.25
  %v731 = vmul.f32 %v699, 0.25
  %v732 = vmul.f32 %v700, 0.25
  %v733 = vmul.f32 %v701, 0.25
  %v734 = vmul.f32 %v702, 0.25
  %v735 = vmul.f32 %v703, 0.25
  %v736 = vmul.f32 %v704, 0.25
  %v737 = vmul.f32 %v705, 0.25
  %v738 = vmul.f32 %v706, 0.25
  %v739 = vmul.f32 %v707, 0.25
  %v740 = vmul.f32 %v708, 0.25
  %v741 = vmul.f32 %v709, 0.25
  %v742 = vmul.f32 %v710, 0.25
  %v743 = vmul.f32 %v711, 0.25
  %v744 = vld [vmem:[#allocation2 + $0x1] sm:$0x1]
  %v745 = vld [vmem:[#allocation2 + $0x11] sm:$0x1]
  %v746 = vld [vmem:[#allocation2 + $0x21] sm:$0x1]
  %v747 = vld [vmem:[#allocation2 + $0x31] sm:$0x1]
  %v748 = vld [vmem:[#allocation2 + $0x41] sm:$0x1]
  %v749 = vld [vmem:[#allocation2 + $0x51] sm:$0x1]
  %v750 = vld [vmem:[#allocation2 + $0x61] sm:$0x1]
  %v751 = vld [vmem:[#allocation2 + $0x71] sm:$0x1]
  %v752 = vld [vmem:[#allocation2 + $0x81] sm:$0x1]
  %v753 = vld [vmem:[#allocation2 + $0x91] sm:$0x1]
  %v754 = vld [vmem:[#allocation2 + $0xa1] sm:$0x1]
  %v755 = vld [vmem:[#allocation2 + $0xb1] sm:$0x1]
  %v756 = vld [vmem:[#allocation2 + $0xc1] sm:$0x1]
  %v757 = vld [vmem:[#allocation2 + $0xd1] sm:$0x1]
  %v758 = vld [vmem:[#allocation2 + $0xe1] sm:$0x1]
  %v759 = vld [vmem:[#allocation2 + $0xf1] sm:$0x1]
  %v760 = vld [vmem:[#allocation2 + $0x101] sm:$0x1]
  %v761 = vld [vmem:[#allocation2 + $0x111] sm:$0x1]
  %v762 = vld [vmem:[#allocation2 + $0x121] sm:$0x1]
  %v763 = vld [vmem:[#allocation2 + $0x131] sm:$0x1]
  %v764 = vld [vmem:[#allocation2 + $0x141] sm:$0x1]
  %v765 = vld [vmem:[#allocation2 + $0x151] sm:$0x1]
  %v766 = vld [vmem:[#allocation2 + $0x161] sm:$0x1]
  %v767 = vld [vmem:[#allocation2 + $0x171] sm:$0x1]
  %v768 = vld [vmem:[#allocation2 + $0x181] sm:$0x1]
  %v769 = vld [vmem:[#allocation2 + $0x191] sm:$0x1]
  %v770 = vld [vmem:[#allocation2 + $0x1a1] sm:$0x1]
  %v771 = vld [vmem:[#allocation2 + $0x1b1] sm:$0x1]
  %v772 = vld [vmem:[#allocation2 + $0x1c1] sm:$0x1]
  %v773 = vld [vmem:[#allocation2 + $0x1d1] sm:$0x1]
  %v774 = vld [vmem:[#allocation2 + $0x1e1] sm:$0x1]
  %v775 = vld [vmem:[#allocation2 + $0x1f1] sm:$0x1]
  %v776 = vmul.f32 %v744, 0.75
  %v777 = vmul.f32 %v745, 0.75
  %v778 = vmul.f32 %v746, 0.75
  %v779 = vmul.f32 %v747, 0.75
  %v780 = vmul.f32 %v748, 0.75
  %v781 = vmul.f32 %v749, 0.75
  %v782 = vmul.f32 %v750, 0.75
  %v783 = vmul.f32 %v751, 0.75
  %v784 = vmul.f32 %v752, 0.75
  %v785 = vmul.f32 %v753, 0.75
  %v786 = vmul.f32 %v754, 0.75
  %v787 = vmul.f32 %v755, 0.75
  %v788 = vmul.f32 %v756, 0.75
  %v789 = vmul.f32 %v757, 0.75
  %v790 = vmul.f32 %v758, 0.75
  %v791 = vmul.f32 %v759, 0.75
  %v792 = vmul.f32 %v760, 0.75
  %v793 = vmul.f32 %v761, 0.75
  %v794 = vmul.f32 %v762, 0.75
  %v795 = vmul.f32 %v763, 0.75
  %v796 = vmul.f32 %v764, 0.75
  %v797 = vmul.f32 %v765, 0.75
  %v798 = vmul.f32 %v766, 0.75
  %v799 = vmul.f32 %v767, 0.75
  %v800 = vmul.f32 %v768, 0.75
  %v801 = vmul.f32 %v769, 0.75
  %v802 = vmul.f32 %v770, 0.75
  %v803 = vmul.f32 %v771, 0.75
  %v804 = vmul.f32 %v772, 0.75
  %v805 = vmul.f32 %v773, 0.75
  %v806 = vmul.f32 %v774, 0.75
  %v807 = vmul.f32 %v775, 0.75
  %v808 = vadd.f32 %v712, %v776
  %v809 = vadd.f32 %v713, %v777
  %v810 = vadd.f32 %v714, %v778
  %v811 = vadd.f32 %v715, %v779
  %v812 = vadd.f32 %v716, %v780
  %v813 = vadd.f32 %v717, %v781
  %v814 = vadd.f32 %v718, %v782
  %v815 = vadd.f32 %v719, %v783
  %v816 = vadd.f32 %v720, %v784
  %v817 = vadd.f32 %v721, %v785
  %v818 = vadd.f32 %v722, %v786
  %v819 = vadd.f32 %v723, %v787
  %v820 = vadd.f32 %v724, %v788
  %v821 = vadd.f32 %v725, %v789
  %v822 = vadd.f32 %v726, %v790
  %v823 = vadd.f32 %v727, %v791
  %v824 = vadd.f32 %v728, %v792
  %v825 = vadd.f32 %v729, %v793
  %v826 = vadd.f32 %v730, %v794
  %v827 = vadd.f32 %v731, %v795
  %v828 = vadd.f32 %v732, %v796
  %v829 = vadd.f32 %v733, %v797
  %v830 = vadd.f32 %v734, %v798
  %v831 = vadd.f32 %v735, %v799
  %v832 = vadd.f32 %v736, %v800
  %v833 = vadd.f32 %v737, %v801
  %v834 = vadd.f32 %v738, %v802
  %v835 = vadd.f32 %v739, %v803
  %v836 = vadd.f32 %v740, %v804
  %v837 = vadd.f32 %v741, %v805
  %v838 = vadd.f32 %v742, %v806
  %v839 = vadd.f32 %v743, %v807
  %840 = vst.msk [vmem:[%s1 + $0x2] sm:$0x1] %vm455, %v808
  %841 = vst.msk [vmem:[%s1 + $0x22] sm:$0x1] %vm455, %v809
  %842 = vst.msk [vmem:[%s1 + $0x42] sm:$0x1] %vm455, %v810
  %843 = vst.msk [vmem:[%s1 + $0x62] sm:$0x1] %vm455, %v811
  %844 = vst.msk [vmem:[%s1 + $0x82] sm:$0x1] %vm455, %v812
  %845 = vst.msk [vmem:[%s1 + $0xa2] sm:$0x1] %vm455, %v813
  %846 = vst.msk [vmem:[%s1 + $0xc2] sm:$0x1] %vm455, %v814
  %847 = vst.msk [vmem:[%s1 + $0xe2] sm:$0x1] %vm455, %v815
  %848 = vst.msk [vmem:[%s1 + $0x102] sm:$0x1] %vm455, %v816
  %849 = vst.msk [vmem:[%s1 + $0x122] sm:$0x1] %vm455, %v817
  %850 = vst.msk [vmem:[%s1 + $0x142] sm:$0x1] %vm455, %v818
  %851 = vst.msk [vmem:[%s1 + $0x162] sm:$0x1] %vm455, %v819
  %852 = vst.msk [vmem:[%s1 + $0x182] sm:$0x1] %vm455, %v820
  %853 = vst.msk [vmem:[%s1 + $0x1a2] sm:$0x1] %vm455, %v821
  %854 = vst.msk [vmem:[%s1 + $0x1c2] sm:$0x1] %vm455, %v822
  %855 = vst.msk [vmem:[%s1 + $0x1e2] sm:$0x1] %vm455, %v823
  %856 = vst.msk [vmem:[%s1 + $0x202] sm:$0x1] %vm455, %v824
  %857 = vst.msk [vmem:[%s1 + $0x222] sm:$0x1] %vm455, %v825
  %858 = vst.msk [vmem:[%s1 + $0x242] sm:$0x1] %vm455, %v826
  %859 = vst.msk [vmem:[%s1 + $0x262] sm:$0x1] %vm455, %v827
  %860 = vst.msk [vmem:[%s1 + $0x282] sm:$0x1] %vm455, %v828
  %861 = vst.msk [vmem:[%s1 + $0x2a2] sm:$0x1] %vm455, %v829
  %862 = vst.msk [vmem:[%s1 + $0x2c2] sm:$0x1] %vm455, %v830
  %863 = vst.msk [vmem:[%s1 + $0x2e2] sm:$0x1] %vm455, %v831
  %864 = vst.msk [vmem:[%s1 + $0x302] sm:$0x1] %vm455, %v832
  %865 = vst.msk [vmem:[%s1 + $0x322] sm:$0x1] %vm455, %v833
  %866 = vst.msk [vmem:[%s1 + $0x342] sm:$0x1] %vm455, %v834
  %867 = vst.msk [vmem:[%s1 + $0x362] sm:$0x1] %vm455, %v835
  %868 = vst.msk [vmem:[%s1 + $0x382] sm:$0x1] %vm455, %v836
  %869 = vst.msk [vmem:[%s1 + $0x3a2] sm:$0x1] %vm455, %v837
  %870 = vst.msk [vmem:[%s1 + $0x3c2] sm:$0x1] %vm455, %v838
  %871 = vst.msk [vmem:[%s1 + $0x3e2] sm:$0x1] %vm455, %v839
  %v872 = vld [vmem:[#allocation2 + $0x1] sm:$0x1]
  %v873 = vld [vmem:[#allocation2 + $0x11] sm:$0x1]
  %v874 = vld [vmem:[#allocation2 + $0x21] sm:$0x1]
  %v875 = vld [vmem:[#allocation2 + $0x31] sm:$0x1]
  %v876 = vld [vmem:[#allocation2 + $0x41] sm:$0x1]
  %v877 = vld [vmem:[#allocation2 + $0x51] sm:$0x1]
  %v878 = vld [vmem:[#allocation2 + $0x61] sm:$0x1]
  %v879 = vld [vmem:[#allocation2 + $0x71] sm:$0x1]
  %v880 = vld [vmem:[#allocation2 + $0x81] sm:$0x1]
  %v881 = vld [vmem:[#allocation2 + $0x91] sm:$0x1]
  %v882 = vld [vmem:[#allocation2 + $0xa1] sm:$0x1]
  %v883 = vld [vmem:[#allocation2 + $0xb1] sm:$0x1]
  %v884 = vld [vmem:[#allocation2 + $0xc1] sm:$0x1]
  %v885 = vld [vmem:[#allocation2 + $0xd1] sm:$0x1]
  %v886 = vld [vmem:[#allocation2 + $0xe1] sm:$0x1]
  %v887 = vld [vmem:[#allocation2 + $0xf1] sm:$0x1]
  %v888 = vld [vmem:[#allocation2 + $0x101] sm:$0x1]
  %v889 = vld [vmem:[#allocation2 + $0x111] sm:$0x1]
  %v890 = vld [vmem:[#allocation2 + $0x121] sm:$0x1]
  %v891 = vld [vmem:[#allocation2 + $0x131] sm:$0x1]
  %v892 = vld [vmem:[#allocation2 + $0x141] sm:$0x1]
  %v893 = vld [vmem:[#allocation2 + $0x151] sm:$0x1]
  %v894 = vld [vmem:[#allocation2 + $0x161] sm:$0x1]
  %v895 = vld [vmem:[#allocation2 + $0x171] sm:$0x1]
  %v896 = vld [vmem:[#allocation2 + $0x181] sm:$0x1]
  %v897 = vld [vmem:[#allocation2 + $0x191] sm:$0x1]
  %v898 = vld [vmem:[#allocation2 + $0x1a1] sm:$0x1]
  %v899 = vld [vmem:[#allocation2 + $0x1b1] sm:$0x1]
  %v900 = vld [vmem:[#allocation2 + $0x1c1] sm:$0x1]
  %v901 = vld [vmem:[#allocation2 + $0x1d1] sm:$0x1]
  %v902 = vld [vmem:[#allocation2 + $0x1e1] sm:$0x1]
  %v903 = vld [vmem:[#allocation2 + $0x1f1] sm:$0x1]
  %v904 = vmul.f32 %v872, 0.75
  %v905 = vmul.f32 %v873, 0.75
  %v906 = vmul.f32 %v874, 0.75
  %v907 = vmul.f32 %v875, 0.75
  %v908 = vmul.f32 %v876, 0.75
  %v909 = vmul.f32 %v877, 0.75
  %v910 = vmul.f32 %v878, 0.75
  %v911 = vmul.f32 %v879, 0.75
  %v912 = vmul.f32 %v880, 0.75
  %v913 = vmul.f32 %v881, 0.75
  %v914 = vmul.f32 %v882, 0.75
  %v915 = vmul.f32 %v883, 0.75
  %v916 = vmul.f32 %v884, 0.75
  %v917 = vmul.f32 %v885, 0.75
  %v918 = vmul.f32 %v886, 0.75
  %v919 = vmul.f32 %v887, 0.75
  %v920 = vmul.f32 %v888, 0.75
  %v921 = vmul.f32 %v889, 0.75
  %v922 = vmul.f32 %v890, 0.75
  %v923 = vmul.f32 %v891, 0.75
  %v924 = vmul.f32 %v892, 0.75
  %v925 = vmul.f32 %v893, 0.75
  %v926 = vmul.f32 %v894, 0.75
  %v927 = vmul.f32 %v895, 0.75
  %v928 = vmul.f32 %v896, 0.75
  %v929 = vmul.f32 %v897, 0.75
  %v930 = vmul.f32 %v898, 0.75
  %v931 = vmul.f32 %v899, 0.75
  %v932 = vmul.f32 %v900, 0.75
  %v933 = vmul.f32 %v901, 0.75
  %v934 = vmul.f32 %v902, 0.75
  %v935 = vmul.f32 %v903, 0.75
  %v936 = vld [vmem:[#allocation2 + $0x2] sm:$0x1]
  %v937 = vld [vmem:[#allocation2 + $0x12] sm:$0x1]
  %v938 = vld [vmem:[#allocation2 + $0x22] sm:$0x1]
  %v939 = vld [vmem:[#allocation2 + $0x32] sm:$0x1]
  %v940 = vld [vmem:[#allocation2 + $0x42] sm:$0x1]
  %v941 = vld [vmem:[#allocation2 + $0x52] sm:$0x1]
  %v942 = vld [vmem:[#allocation2 + $0x62] sm:$0x1]
  %v943 = vld [vmem:[#allocation2 + $0x72] sm:$0x1]
  %v944 = vld [vmem:[#allocation2 + $0x82] sm:$0x1]
  %v945 = vld [vmem:[#allocation2 + $0x92] sm:$0x1]
  %v946 = vld [vmem:[#allocation2 + $0xa2] sm:$0x1]
  %v947 = vld [vmem:[#allocation2 + $0xb2] sm:$0x1]
  %v948 = vld [vmem:[#allocation2 + $0xc2] sm:$0x1]
  %v949 = vld [vmem:[#allocation2 + $0xd2] sm:$0x1]
  %v950 = vld [vmem:[#allocation2 + $0xe2] sm:$0x1]
  %v951 = vld [vmem:[#allocation2 + $0xf2] sm:$0x1]
  %v952 = vld [vmem:[#allocation2 + $0x102] sm:$0x1]
  %v953 = vld [vmem:[#allocation2 + $0x112] sm:$0x1]
  %v954 = vld [vmem:[#allocation2 + $0x122] sm:$0x1]
  %v955 = vld [vmem:[#allocation2 + $0x132] sm:$0x1]
  %v956 = vld [vmem:[#allocation2 + $0x142] sm:$0x1]
  %v957 = vld [vmem:[#allocation2 + $0x152] sm:$0x1]
  %v958 = vld [vmem:[#allocation2 + $0x162] sm:$0x1]
  %v959 = vld [vmem:[#allocation2 + $0x172] sm:$0x1]
  %v960 = vld [vmem:[#allocation2 + $0x182] sm:$0x1]
  %v961 = vld [vmem:[#allocation2 + $0x192] sm:$0x1]
  %v962 = vld [vmem:[#allocation2 + $0x1a2] sm:$0x1]
  %v963 = vld [vmem:[#allocation2 + $0x1b2] sm:$0x1]
  %v964 = vld [vmem:[#allocation2 + $0x1c2] sm:$0x1]
  %v965 = vld [vmem:[#allocation2 + $0x1d2] sm:$0x1]
  %v966 = vld [vmem:[#allocation2 + $0x1e2] sm:$0x1]
  %v967 = vld [vmem:[#allocation2 + $0x1f2] sm:$0x1]
  %v968 = vmul.f32 %v936, 0.25
  %v969 = vmul.f32 %v937, 0.25
  %v970 = vmul.f32 %v938, 0.25
  %v971 = vmul.f32 %v939, 0.25
  %v972 = vmul.f32 %v940, 0.25
  %v973 = vmul.f32 %v941, 0.25
  %v974 = vmul.f32 %v942, 0.25
  %v975 = vmul.f32 %v943, 0.25
  %v976 = vmul.f32 %v944, 0.25
  %v977 = vmul.f32 %v945, 0.25
  %v978 = vmul.f32 %v946, 0.25
  %v979 = vmul.f32 %v947, 0.25
  %v980 = vmul.f32 %v948, 0.25
  %v981 = vmul.f32 %v949, 0.25
  %v982 = vmul.f32 %v950, 0.25
  %v983 = vmul.f32 %v951, 0.25
  %v984 = vmul.f32 %v952, 0.25
  %v985 = vmul.f32 %v953, 0.25
  %v986 = vmul.f32 %v954, 0.25
  %v987 = vmul.f32 %v955, 0.25
  %v988 = vmul.f32 %v956, 0.25
  %v989 = vmul.f32 %v957, 0.25
  %v990 = vmul.f32 %v958, 0.25
  %v991 = vmul.f32 %v959, 0.25
  %v992 = vmul.f32 %v960, 0.25
  %v993 = vmul.f32 %v961, 0.25
  %v994 = vmul.f32 %v962, 0.25
  %v995 = vmul.f32 %v963, 0.25
  %v996 = vmul.f32 %v964, 0.25
  %v997 = vmul.f32 %v965, 0.25
  %v998 = vmul.f32 %v966, 0.25
  %v999 = vmul.f32 %v967, 0.25
  %v1000 = vadd.f32 %v904, %v968
  %v1001 = vadd.f32 %v905, %v969
  %v1002 = vadd.f32 %v906, %v970
  %v1003 = vadd.f32 %v907, %v971
  %v1004 = vadd.f32 %v908, %v972
  %v1005 = vadd.f32 %v909, %v973
  %v1006 = vadd.f32 %v910, %v974
  %v1007 = vadd.f32 %v911, %v975
  %v1008 = vadd.f32 %v912, %v976
  %v1009 = vadd.f32 %v913, %v977
  %v1010 = vadd.f32 %v914, %v978
  %v1011 = vadd.f32 %v915, %v979
  %v1012 = vadd.f32 %v916, %v980
  %v1013 = vadd.f32 %v917, %v981
  %v1014 = vadd.f32 %v918, %v982
  %v1015 = vadd.f32 %v919, %v983
  %v1016 = vadd.f32 %v920, %v984
  %v1017 = vadd.f32 %v921, %v985
  %v1018 = vadd.f32 %v922, %v986
  %v1019 = vadd.f32 %v923, %v987
  %v1020 = vadd.f32 %v924, %v988
  %v1021 = vadd.f32 %v925, %v989
  %v1022 = vadd.f32 %v926, %v990
  %v1023 = vadd.f32 %v927, %v991
  %v1024 = vadd.f32 %v928, %v992
  %v1025 = vadd.f32 %v929, %v993
  %v1026 = vadd.f32 %v930, %v994
  %v1027 = vadd.f32 %v931, %v995
  %v1028 = vadd.f32 %v932, %v996
  %v1029 = vadd.f32 %v933, %v997
  %v1030 = vadd.f32 %v934, %v998
  %v1031 = vadd.f32 %v935, %v999
  %1032 = vst.msk [vmem:[%s1 + $0x3] sm:$0x1] %vm455, %v1000
  %1033 = vst.msk [vmem:[%s1 + $0x23] sm:$0x1] %vm455, %v1001
  %1034 = vst.msk [vmem:[%s1 + $0x43] sm:$0x1] %vm455, %v1002
  %1035 = vst.msk [vmem:[%s1 + $0x63] sm:$0x1] %vm455, %v1003
  %1036 = vst.msk [vmem:[%s1 + $0x83] sm:$0x1] %vm455, %v1004
  %1037 = vst.msk [vmem:[%s1 + $0xa3] sm:$0x1] %vm455, %v1005
  %1038 = vst.msk [vmem:[%s1 + $0xc3] sm:$0x1] %vm455, %v1006
  %1039 = vst.msk [vmem:[%s1 + $0xe3] sm:$0x1] %vm455, %v1007
  %1040 = vst.msk [vmem:[%s1 + $0x103] sm:$0x1] %vm455, %v1008
  %1041 = vst.msk [vmem:[%s1 + $0x123] sm:$0x1] %vm455, %v1009
  %1042 = vst.msk [vmem:[%s1 + $0x143] sm:$0x1] %vm455, %v1010
  %1043 = vst.msk [vmem:[%s1 + $0x163] sm:$0x1] %vm455, %v1011
  %1044 = vst.msk [vmem:[%s1 + $0x183] sm:$0x1] %vm455, %v1012
  %1045 = vst.msk [vmem:[%s1 + $0x1a3] sm:$0x1] %vm455, %v1013
  %1046 = vst.msk [vmem:[%s1 + $0x1c3] sm:$0x1] %vm455, %v1014
  %1047 = vst.msk [vmem:[%s1 + $0x1e3] sm:$0x1] %vm455, %v1015
  %1048 = vst.msk [vmem:[%s1 + $0x203] sm:$0x1] %vm455, %v1016
  %1049 = vst.msk [vmem:[%s1 + $0x223] sm:$0x1] %vm455, %v1017
  %1050 = vst.msk [vmem:[%s1 + $0x243] sm:$0x1] %vm455, %v1018
  %1051 = vst.msk [vmem:[%s1 + $0x263] sm:$0x1] %vm455, %v1019
  %1052 = vst.msk [vmem:[%s1 + $0x283] sm:$0x1] %vm455, %v1020
  %1053 = vst.msk [vmem:[%s1 + $0x2a3] sm:$0x1] %vm455, %v1021
  %1054 = vst.msk [vmem:[%s1 + $0x2c3] sm:$0x1] %vm455, %v1022
  %1055 = vst.msk [vmem:[%s1 + $0x2e3] sm:$0x1] %vm455, %v1023
  %1056 = vst.msk [vmem:[%s1 + $0x303] sm:$0x1] %vm455, %v1024
  %1057 = vst.msk [vmem:[%s1 + $0x323] sm:$0x1] %vm455, %v1025
  %1058 = vst.msk [vmem:[%s1 + $0x343] sm:$0x1] %vm455, %v1026
  %1059 = vst.msk [vmem:[%s1 + $0x363] sm:$0x1] %vm455, %v1027
  %1060 = vst.msk [vmem:[%s1 + $0x383] sm:$0x1] %vm455, %v1028
  %1061 = vst.msk [vmem:[%s1 + $0x3a3] sm:$0x1] %vm455, %v1029
  %1062 = vst.msk [vmem:[%s1 + $0x3c3] sm:$0x1] %vm455, %v1030
  %1063 = vst.msk [vmem:[%s1 + $0x3e3] sm:$0x1] %vm455, %v1031
  %v1064 = vld [vmem:[#allocation2 + $0x1] sm:$0x1]
  %v1065 = vld [vmem:[#allocation2 + $0x11] sm:$0x1]
  %v1066 = vld [vmem:[#allocation2 + $0x21] sm:$0x1]
  %v1067 = vld [vmem:[#allocation2 + $0x31] sm:$0x1]
  %v1068 = vld [vmem:[#allocation2 + $0x41] sm:$0x1]
  %v1069 = vld [vmem:[#allocation2 + $0x51] sm:$0x1]
  %v1070 = vld [vmem:[#allocation2 + $0x61] sm:$0x1]
  %v1071 = vld [vmem:[#allocation2 + $0x71] sm:$0x1]
  %v1072 = vld [vmem:[#allocation2 + $0x81] sm:$0x1]
  %v1073 = vld [vmem:[#allocation2 + $0x91] sm:$0x1]
  %v1074 = vld [vmem:[#allocation2 + $0xa1] sm:$0x1]
  %v1075 = vld [vmem:[#allocation2 + $0xb1] sm:$0x1]
  %v1076 = vld [vmem:[#allocation2 + $0xc1] sm:$0x1]
  %v1077 = vld [vmem:[#allocation2 + $0xd1] sm:$0x1]
  %v1078 = vld [vmem:[#allocation2 + $0xe1] sm:$0x1]
  %v1079 = vld [vmem:[#allocation2 + $0xf1] sm:$0x1]
  %v1080 = vld [vmem:[#allocation2 + $0x101] sm:$0x1]
  %v1081 = vld [vmem:[#allocation2 + $0x111] sm:$0x1]
  %v1082 = vld [vmem:[#allocation2 + $0x121] sm:$0x1]
  %v1083 = vld [vmem:[#allocation2 + $0x131] sm:$0x1]
  %v1084 = vld [vmem:[#allocation2 + $0x141] sm:$0x1]
  %v1085 = vld [vmem:[#allocation2 + $0x151] sm:$0x1]
  %v1086 = vld [vmem:[#allocation2 + $0x161] sm:$0x1]
  %v1087 = vld [vmem:[#allocation2 + $0x171] sm:$0x1]
  %v1088 = vld [vmem:[#allocation2 + $0x181] sm:$0x1]
  %v1089 = vld [vmem:[#allocation2 + $0x191] sm:$0x1]
  %v1090 = vld [vmem:[#allocation2 + $0x1a1] sm:$0x1]
  %v1091 = vld [vmem:[#allocation2 + $0x1b1] sm:$0x1]
  %v1092 = vld [vmem:[#allocation2 + $0x1c1] sm:$0x1]
  %v1093 = vld [vmem:[#allocation2 + $0x1d1] sm:$0x1]
  %v1094 = vld [vmem:[#allocation2 + $0x1e1] sm:$0x1]
  %v1095 = vld [vmem:[#allocation2 + $0x1f1] sm:$0x1]
  %v1096 = vmul.f32 %v1064, 0.25
  %v1097 = vmul.f32 %v1065, 0.25
  %v1098 = vmul.f32 %v1066, 0.25
  %v1099 = vmul.f32 %v1067, 0.25
  %v1100 = vmul.f32 %v1068, 0.25
  %v1101 = vmul.f32 %v1069, 0.25
  %v1102 = vmul.f32 %v1070, 0.25
  %v1103 = vmul.f32 %v1071, 0.25
  %v1104 = vmul.f32 %v1072, 0.25
  %v1105 = vmul.f32 %v1073, 0.25
  %v1106 = vmul.f32 %v1074, 0.25
  %v1107 = vmul.f32 %v1075, 0.25
  %v1108 = vmul.f32 %v1076, 0.25
  %v1109 = vmul.f32 %v1077, 0.25
  %v1110 = vmul.f32 %v1078, 0.25
  %v1111 = vmul.f32 %v1079, 0.25
  %v1112 = vmul.f32 %v1080, 0.25
  %v1113 = vmul.f32 %v1081, 0.25
  %v1114 = vmul.f32 %v1082, 0.25
  %v1115 = vmul.f32 %v1083, 0.25
  %v1116 = vmul.f32 %v1084, 0.25
  %v1117 = vmul.f32 %v1085, 0.25
  %v1118 = vmul.f32 %v1086, 0.25
  %v1119 = vmul.f32 %v1087, 0.25
  %v1120 = vmul.f32 %v1088, 0.25
  %v1121 = vmul.f32 %v1089, 0.25
  %v1122 = vmul.f32 %v1090, 0.25
  %v1123 = vmul.f32 %v1091, 0.25
  %v1124 = vmul.f32 %v1092, 0.25
  %v1125 = vmul.f32 %v1093, 0.25
  %v1126 = vmul.f32 %v1094, 0.25
  %v1127 = vmul.f32 %v1095, 0.25
  %v1128 = vld [vmem:[#allocation2 + $0x2] sm:$0x1]
  %v1129 = vld [vmem:[#allocation2 + $0x12] sm:$0x1]
  %v1130 = vld [vmem:[#allocation2 + $0x22] sm:$0x1]
  %v1131 = vld [vmem:[#allocation2 + $0x32] sm:$0x1]
  %v1132 = vld [vmem:[#allocation2 + $0x42] sm:$0x1]
  %v1133 = vld [vmem:[#allocation2 + $0x52] sm:$0x1]
  %v1134 = vld [vmem:[#allocation2 + $0x62] sm:$0x1]
  %v1135 = vld [vmem:[#allocation2 + $0x72] sm:$0x1]
  %v1136 = vld [vmem:[#allocation2 + $0x82] sm:$0x1]
  %v1137 = vld [vmem:[#allocation2 + $0x92] sm:$0x1]
  %v1138 = vld [vmem:[#allocation2 + $0xa2] sm:$0x1]
  %v1139 = vld [vmem:[#allocation2 + $0xb2] sm:$0x1]
  %v1140 = vld [vmem:[#allocation2 + $0xc2] sm:$0x1]
  %v1141 = vld [vmem:[#allocation2 + $0xd2] sm:$0x1]
  %v1142 = vld [vmem:[#allocation2 + $0xe2] sm:$0x1]
  %v1143 = vld [vmem:[#allocation2 + $0xf2] sm:$0x1]
  %v1144 = vld [vmem:[#allocation2 + $0x102] sm:$0x1]
  %v1145 = vld [vmem:[#allocation2 + $0x112] sm:$0x1]
  %v1146 = vld [vmem:[#allocation2 + $0x122] sm:$0x1]
  %v1147 = vld [vmem:[#allocation2 + $0x132] sm:$0x1]
  %v1148 = vld [vmem:[#allocation2 + $0x142] sm:$0x1]
  %v1149 = vld [vmem:[#allocation2 + $0x152] sm:$0x1]
  %v1150 = vld [vmem:[#allocation2 + $0x162] sm:$0x1]
  %v1151 = vld [vmem:[#allocation2 + $0x172] sm:$0x1]
  %v1152 = vld [vmem:[#allocation2 + $0x182] sm:$0x1]
  %v1153 = vld [vmem:[#allocation2 + $0x192] sm:$0x1]
  %v1154 = vld [vmem:[#allocation2 + $0x1a2] sm:$0x1]
  %v1155 = vld [vmem:[#allocation2 + $0x1b2] sm:$0x1]
  %v1156 = vld [vmem:[#allocation2 + $0x1c2] sm:$0x1]
  %v1157 = vld [vmem:[#allocation2 + $0x1d2] sm:$0x1]
  %v1158 = vld [vmem:[#allocation2 + $0x1e2] sm:$0x1]
  %v1159 = vld [vmem:[#allocation2 + $0x1f2] sm:$0x1]
  %v1160 = vmul.f32 %v1128, 0.75
  %v1161 = vmul.f32 %v1129, 0.75
  %v1162 = vmul.f32 %v1130, 0.75
  %v1163 = vmul.f32 %v1131, 0.75
  %v1164 = vmul.f32 %v1132, 0.75
  %v1165 = vmul.f32 %v1133, 0.75
  %v1166 = vmul.f32 %v1134, 0.75
  %v1167 = vmul.f32 %v1135, 0.75
  %v1168 = vmul.f32 %v1136, 0.75
  %v1169 = vmul.f32 %v1137, 0.75
  %v1170 = vmul.f32 %v1138, 0.75
  %v1171 = vmul.f32 %v1139, 0.75
  %v1172 = vmul.f32 %v1140, 0.75
  %v1173 = vmul.f32 %v1141, 0.75
  %v1174 = vmul.f32 %v1142, 0.75
  %v1175 = vmul.f32 %v1143, 0.75
  %v1176 = vmul.f32 %v1144, 0.75
  %v1177 = vmul.f32 %v1145, 0.75
  %v1178 = vmul.f32 %v1146, 0.75
  %v1179 = vmul.f32 %v1147, 0.75
  %v1180 = vmul.f32 %v1148, 0.75
  %v1181 = vmul.f32 %v1149, 0.75
  %v1182 = vmul.f32 %v1150, 0.75
  %v1183 = vmul.f32 %v1151, 0.75
  %v1184 = vmul.f32 %v1152, 0.75
  %v1185 = vmul.f32 %v1153, 0.75
  %v1186 = vmul.f32 %v1154, 0.75
  %v1187 = vmul.f32 %v1155, 0.75
  %v1188 = vmul.f32 %v1156, 0.75
  %v1189 = vmul.f32 %v1157, 0.75
  %v1190 = vmul.f32 %v1158, 0.75
  %v1191 = vmul.f32 %v1159, 0.75
  %v1192 = vadd.f32 %v1096, %v1160
  %v1193 = vadd.f32 %v1097, %v1161
  %v1194 = vadd.f32 %v1098, %v1162
  %v1195 = vadd.f32 %v1099, %v1163
  %v1196 = vadd.f32 %v1100, %v1164
  %v1197 = vadd.f32 %v1101, %v1165
  %v1198 = vadd.f32 %v1102, %v1166
  %v1199 = vadd.f32 %v1103, %v1167
  %v1200 = vadd.f32 %v1104, %v1168
  %v1201 = vadd.f32 %v1105, %v1169
  %v1202 = vadd.f32 %v1106, %v1170
  %v1203 = vadd.f32 %v1107, %v1171
  %v1204 = vadd.f32 %v1108, %v1172
  %v1205 = vadd.f32 %v1109, %v1173
  %v1206 = vadd.f32 %v1110, %v1174
  %v1207 = vadd.f32 %v1111, %v1175
  %v1208 = vadd.f32 %v1112, %v1176
  %v1209 = vadd.f32 %v1113, %v1177
  %v1210 = vadd.f32 %v1114, %v1178
  %v1211 = vadd.f32 %v1115, %v1179
  %v1212 = vadd.f32 %v1116, %v1180
  %v1213 = vadd.f32 %v1117, %v1181
  %v1214 = vadd.f32 %v1118, %v1182
  %v1215 = vadd.f32 %v1119, %v1183
  %v1216 = vadd.f32 %v1120, %v1184
  %v1217 = vadd.f32 %v1121, %v1185
  %v1218 = vadd.f32 %v1122, %v1186
  %v1219 = vadd.f32 %v1123, %v1187
  %v1220 = vadd.f32 %v1124, %v1188
  %v1221 = vadd.f32 %v1125, %v1189
  %v1222 = vadd.f32 %v1126, %v1190
  %v1223 = vadd.f32 %v1127, %v1191
  %1224 = vst.msk [vmem:[%s1 + $0x4] sm:$0x1] %vm455, %v1192
  %1225 = vst.msk [vmem:[%s1 + $0x24] sm:$0x1] %vm455, %v1193
  %1226 = vst.msk [vmem:[%s1 + $0x44] sm:$0x1] %vm455, %v1194
  %1227 = vst.msk [vmem:[%s1 + $0x64] sm:$0x1] %vm455, %v1195
  %1228 = vst.msk [vmem:[%s1 + $0x84] sm:$0x1] %vm455, %v1196
  %1229 = vst.msk [vmem:[%s1 + $0xa4] sm:$0x1] %vm455, %v1197
  %1230 = vst.msk [vmem:[%s1 + $0xc4] sm:$0x1] %vm455, %v1198
  %1231 = vst.msk [vmem:[%s1 + $0xe4] sm:$0x1] %vm455, %v1199
  %1232 = vst.msk [vmem:[%s1 + $0x104] sm:$0x1] %vm455, %v1200
  %1233 = vst.msk [vmem:[%s1 + $0x124] sm:$0x1] %vm455, %v1201
  %1234 = vst.msk [vmem:[%s1 + $0x144] sm:$0x1] %vm455, %v1202
  %1235 = vst.msk [vmem:[%s1 + $0x164] sm:$0x1] %vm455, %v1203
  %1236 = vst.msk [vmem:[%s1 + $0x184] sm:$0x1] %vm455, %v1204
  %1237 = vst.msk [vmem:[%s1 + $0x1a4] sm:$0x1] %vm455, %v1205
  %1238 = vst.msk [vmem:[%s1 + $0x1c4] sm:$0x1] %vm455, %v1206
  %1239 = vst.msk [vmem:[%s1 + $0x1e4] sm:$0x1] %vm455, %v1207
  %1240 = vst.msk [vmem:[%s1 + $0x204] sm:$0x1] %vm455, %v1208
  %1241 = vst.msk [vmem:[%s1 + $0x224] sm:$0x1] %vm455, %v1209
  %1242 = vst.msk [vmem:[%s1 + $0x244] sm:$0x1] %vm455, %v1210
  %1243 = vst.msk [vmem:[%s1 + $0x264] sm:$0x1] %vm455, %v1211
  %1244 = vst.msk [vmem:[%s1 + $0x284] sm:$0x1] %vm455, %v1212
  %1245 = vst.msk [vmem:[%s1 + $0x2a4] sm:$0x1] %vm455, %v1213
  %1246 = vst.msk [vmem:[%s1 + $0x2c4] sm:$0x1] %vm455, %v1214
  %1247 = vst.msk [vmem:[%s1 + $0x2e4] sm:$0x1] %vm455, %v1215
  %1248 = vst.msk [vmem:[%s1 + $0x304] sm:$0x1] %vm455, %v1216
  %1249 = vst.msk [vmem:[%s1 + $0x324] sm:$0x1] %vm455, %v1217
  %1250 = vst.msk [vmem:[%s1 + $0x344] sm:$0x1] %vm455, %v1218
  %1251 = vst.msk [vmem:[%s1 + $0x364] sm:$0x1] %vm455, %v1219
  %1252 = vst.msk [vmem:[%s1 + $0x384] sm:$0x1] %vm455, %v1220
  %1253 = vst.msk [vmem:[%s1 + $0x3a4] sm:$0x1] %vm455, %v1221
  %1254 = vst.msk [vmem:[%s1 + $0x3c4] sm:$0x1] %vm455, %v1222
  %1255 = vst.msk [vmem:[%s1 + $0x3e4] sm:$0x1] %vm455, %v1223
  %v1256 = vld [vmem:[#allocation2 + $0x2] sm:$0x1]
  %v1257 = vld [vmem:[#allocation2 + $0x12] sm:$0x1]
  %v1258 = vld [vmem:[#allocation2 + $0x22] sm:$0x1]
  %v1259 = vld [vmem:[#allocation2 + $0x32] sm:$0x1]
  %v1260 = vld [vmem:[#allocation2 + $0x42] sm:$0x1]
  %v1261 = vld [vmem:[#allocation2 + $0x52] sm:$0x1]
  %v1262 = vld [vmem:[#allocation2 + $0x62] sm:$0x1]
  %v1263 = vld [vmem:[#allocation2 + $0x72] sm:$0x1]
  %v1264 = vld [vmem:[#allocation2 + $0x82] sm:$0x1]
  %v1265 = vld [vmem:[#allocation2 + $0x92] sm:$0x1]
  %v1266 = vld [vmem:[#allocation2 + $0xa2] sm:$0x1]
  %v1267 = vld [vmem:[#allocation2 + $0xb2] sm:$0x1]
  %v1268 = vld [vmem:[#allocation2 + $0xc2] sm:$0x1]
  %v1269 = vld [vmem:[#allocation2 + $0xd2] sm:$0x1]
  %v1270 = vld [vmem:[#allocation2 + $0xe2] sm:$0x1]
  %v1271 = vld [vmem:[#allocation2 + $0xf2] sm:$0x1]
  %v1272 = vld [vmem:[#allocation2 + $0x102] sm:$0x1]
  %v1273 = vld [vmem:[#allocation2 + $0x112] sm:$0x1]
  %v1274 = vld [vmem:[#allocation2 + $0x122] sm:$0x1]
  %v1275 = vld [vmem:[#allocation2 + $0x132] sm:$0x1]
  %v1276 = vld [vmem:[#allocation2 + $0x142] sm:$0x1]
  %v1277 = vld [vmem:[#allocation2 + $0x152] sm:$0x1]
  %v1278 = vld [vmem:[#allocation2 + $0x162] sm:$0x1]
  %v1279 = vld [vmem:[#allocation2 + $0x172] sm:$0x1]
  %v1280 = vld [vmem:[#allocation2 + $0x182] sm:$0x1]
  %v1281 = vld [vmem:[#allocation2 + $0x192] sm:$0x1]
  %v1282 = vld [vmem:[#allocation2 + $0x1a2] sm:$0x1]
  %v1283 = vld [vmem:[#allocation2 + $0x1b2] sm:$0x1]
  %v1284 = vld [vmem:[#allocation2 + $0x1c2] sm:$0x1]
  %v1285 = vld [vmem:[#allocation2 + $0x1d2] sm:$0x1]
  %v1286 = vld [vmem:[#allocation2 + $0x1e2] sm:$0x1]
  %v1287 = vld [vmem:[#allocation2 + $0x1f2] sm:$0x1]
  %v1288 = vmul.f32 %v1256, 0.75
  %v1289 = vmul.f32 %v1257, 0.75
  %v1290 = vmul.f32 %v1258, 0.75
  %v1291 = vmul.f32 %v1259, 0.75
  %v1292 = vmul.f32 %v1260, 0.75
  %v1293 = vmul.f32 %v1261, 0.75
  %v1294 = vmul.f32 %v1262, 0.75
  %v1295 = vmul.f32 %v1263, 0.75
  %v1296 = vmul.f32 %v1264, 0.75
  %v1297 = vmul.f32 %v1265, 0.75
  %v1298 = vmul.f32 %v1266, 0.75
  %v1299 = vmul.f32 %v1267, 0.75
  %v1300 = vmul.f32 %v1268, 0.75
  %v1301 = vmul.f32 %v1269, 0.75
  %v1302 = vmul.f32 %v1270, 0.75
  %v1303 = vmul.f32 %v1271, 0.75
  %v1304 = vmul.f32 %v1272, 0.75
  %v1305 = vmul.f32 %v1273, 0.75
  %v1306 = vmul.f32 %v1274, 0.75
  %v1307 = vmul.f32 %v1275, 0.75
  %v1308 = vmul.f32 %v1276, 0.75
  %v1309 = vmul.f32 %v1277, 0.75
  %v1310 = vmul.f32 %v1278, 0.75
  %v1311 = vmul.f32 %v1279, 0.75
  %v1312 = vmul.f32 %v1280, 0.75
  %v1313 = vmul.f32 %v1281, 0.75
  %v1314 = vmul.f32 %v1282, 0.75
  %v1315 = vmul.f32 %v1283, 0.75
  %v1316 = vmul.f32 %v1284, 0.75
  %v1317 = vmul.f32 %v1285, 0.75
  %v1318 = vmul.f32 %v1286, 0.75
  %v1319 = vmul.f32 %v1287, 0.75
  %v1320 = vld [vmem:[#allocation2 + $0x3] sm:$0x1]
  %v1321 = vld [vmem:[#allocation2 + $0x13] sm:$0x1]
  %v1322 = vld [vmem:[#allocation2 + $0x23] sm:$0x1]
  %v1323 = vld [vmem:[#allocation2 + $0x33] sm:$0x1]
  %v1324 = vld [vmem:[#allocation2 + $0x43] sm:$0x1]
  %v1325 = vld [vmem:[#allocation2 + $0x53] sm:$0x1]
  %v1326 = vld [vmem:[#allocation2 + $0x63] sm:$0x1]
  %v1327 = vld [vmem:[#allocation2 + $0x73] sm:$0x1]
  %v1328 = vld [vmem:[#allocation2 + $0x83] sm:$0x1]
  %v1329 = vld [vmem:[#allocation2 + $0x93] sm:$0x1]
  %v1330 = vld [vmem:[#allocation2 + $0xa3] sm:$0x1]
  %v1331 = vld [vmem:[#allocation2 + $0xb3] sm:$0x1]
  %v1332 = vld [vmem:[#allocation2 + $0xc3] sm:$0x1]
  %v1333 = vld [vmem:[#allocation2 + $0xd3] sm:$0x1]
  %v1334 = vld [vmem:[#allocation2 + $0xe3] sm:$0x1]
  %v1335 = vld [vmem:[#allocation2 + $0xf3] sm:$0x1]
  %v1336 = vld [vmem:[#allocation2 + $0x103] sm:$0x1]
  %v1337 = vld [vmem:[#allocation2 + $0x113] sm:$0x1]
  %v1338 = vld [vmem:[#allocation2 + $0x123] sm:$0x1]
  %v1339 = vld [vmem:[#allocation2 + $0x133] sm:$0x1]
  %v1340 = vld [vmem:[#allocation2 + $0x143] sm:$0x1]
  %v1341 = vld [vmem:[#allocation2 + $0x153] sm:$0x1]
  %v1342 = vld [vmem:[#allocation2 + $0x163] sm:$0x1]
  %v1343 = vld [vmem:[#allocation2 + $0x173] sm:$0x1]
  %v1344 = vld [vmem:[#allocation2 + $0x183] sm:$0x1]
  %v1345 = vld [vmem:[#allocation2 + $0x193] sm:$0x1]
  %v1346 = vld [vmem:[#allocation2 + $0x1a3] sm:$0x1]
  %v1347 = vld [vmem:[#allocation2 + $0x1b3] sm:$0x1]
  %v1348 = vld [vmem:[#allocation2 + $0x1c3] sm:$0x1]
  %v1349 = vld [vmem:[#allocation2 + $0x1d3] sm:$0x1]
  %v1350 = vld [vmem:[#allocation2 + $0x1e3] sm:$0x1]
  %v1351 = vld [vmem:[#allocation2 + $0x1f3] sm:$0x1]
  %v1352 = vmul.f32 %v1320, 0.25
  %v1353 = vmul.f32 %v1321, 0.25
  %v1354 = vmul.f32 %v1322, 0.25
  %v1355 = vmul.f32 %v1323, 0.25
  %v1356 = vmul.f32 %v1324, 0.25
  %v1357 = vmul.f32 %v1325, 0.25
  %v1358 = vmul.f32 %v1326, 0.25
  %v1359 = vmul.f32 %v1327, 0.25
  %v1360 = vmul.f32 %v1328, 0.25
  %v1361 = vmul.f32 %v1329, 0.25
  %v1362 = vmul.f32 %v1330, 0.25
  %v1363 = vmul.f32 %v1331, 0.25
  %v1364 = vmul.f32 %v1332, 0.25
  %v1365 = vmul.f32 %v1333, 0.25
  %v1366 = vmul.f32 %v1334, 0.25
  %v1367 = vmul.f32 %v1335, 0.25
  %v1368 = vmul.f32 %v1336, 0.25
  %v1369 = vmul.f32 %v1337, 0.25
  %v1370 = vmul.f32 %v1338, 0.25
  %v1371 = vmul.f32 %v1339, 0.25
  %v1372 = vmul.f32 %v1340, 0.25
  %v1373 = vmul.f32 %v1341, 0.25
  %v1374 = vmul.f32 %v1342, 0.25
  %v1375 = vmul.f32 %v1343, 0.25
  %v1376 = vmul.f32 %v1344, 0.25
  %v1377 = vmul.f32 %v1345, 0.25
  %v1378 = vmul.f32 %v1346, 0.25
  %v1379 = vmul.f32 %v1347, 0.25
  %v1380 = vmul.f32 %v1348, 0.25
  %v1381 = vmul.f32 %v1349, 0.25
  %v1382 = vmul.f32 %v1350, 0.25
  %v1383 = vmul.f32 %v1351, 0.25
  %v1384 = vadd.f32 %v1288, %v1352
  %v1385 = vadd.f32 %v1289, %v1353
  %v1386 = vadd.f32 %v1290, %v1354
  %v1387 = vadd.f32 %v1291, %v1355
  %v1388 = vadd.f32 %v1292, %v1356
  %v1389 = vadd.f32 %v1293, %v1357
  %v1390 = vadd.f32 %v1294, %v1358
  %v1391 = vadd.f32 %v1295, %v1359
  %v1392 = vadd.f32 %v1296, %v1360
  %v1393 = vadd.f32 %v1297, %v1361
  %v1394 = vadd.f32 %v1298, %v1362
  %v1395 = vadd.f32 %v1299, %v1363
  %v1396 = vadd.f32 %v1300, %v1364
  %v1397 = vadd.f32 %v1301, %v1365
  %v1398 = vadd.f32 %v1302, %v1366
  %v1399 = vadd.f32 %v1303, %v1367
  %v1400 = vadd.f32 %v1304, %v1368
  %v1401 = vadd.f32 %v1305, %v1369
  %v1402 = vadd.f32 %v1306, %v1370
  %v1403 = vadd.f32 %v1307, %v1371
  %v1404 = vadd.f32 %v1308, %v1372
  %v1405 = vadd.f32 %v1309, %v1373
  %v1406 = vadd.f32 %v1310, %v1374
  %v1407 = vadd.f32 %v1311, %v1375
  %v1408 = vadd.f32 %v1312, %v1376
  %v1409 = vadd.f32 %v1313, %v1377
  %v1410 = vadd.f32 %v1314, %v1378
  %v1411 = vadd.f32 %v1315, %v1379
  %v1412 = vadd.f32 %v1316, %v1380
  %v1413 = vadd.f32 %v1317, %v1381
  %v1414 = vadd.f32 %v1318, %v1382
  %v1415 = vadd.f32 %v1319, %v1383
  %1416 = vst.msk [vmem:[%s1 + $0x5] sm:$0x1] %vm455, %v1384
  %1417 = vst.msk [vmem:[%s1 + $0x25] sm:$0x1] %vm455, %v1385
  %1418 = vst.msk [vmem:[%s1 + $0x45] sm:$0x1] %vm455, %v1386
  %1419 = vst.msk [vmem:[%s1 + $0x65] sm:$0x1] %vm455, %v1387
  %1420 = vst.msk [vmem:[%s1 + $0x85] sm:$0x1] %vm455, %v1388
  %1421 = vst.msk [vmem:[%s1 + $0xa5] sm:$0x1] %vm455, %v1389
  %1422 = vst.msk [vmem:[%s1 + $0xc5] sm:$0x1] %vm455, %v1390
  %1423 = vst.msk [vmem:[%s1 + $0xe5] sm:$0x1] %vm455, %v1391
  %1424 = vst.msk [vmem:[%s1 + $0x105] sm:$0x1] %vm455, %v1392
  %1425 = vst.msk [vmem:[%s1 + $0x125] sm:$0x1] %vm455, %v1393
  %1426 = vst.msk [vmem:[%s1 + $0x145] sm:$0x1] %vm455, %v1394
  %1427 = vst.msk [vmem:[%s1 + $0x165] sm:$0x1] %vm455, %v1395
  %1428 = vst.msk [vmem:[%s1 + $0x185] sm:$0x1] %vm455, %v1396
  %1429 = vst.msk [vmem:[%s1 + $0x1a5] sm:$0x1] %vm455, %v1397
  %1430 = vst.msk [vmem:[%s1 + $0x1c5] sm:$0x1] %vm455, %v1398
  %1431 = vst.msk [vmem:[%s1 + $0x1e5] sm:$0x1] %vm455, %v1399
  %1432 = vst.msk [vmem:[%s1 + $0x205] sm:$0x1] %vm455, %v1400
  %1433 = vst.msk [vmem:[%s1 + $0x225] sm:$0x1] %vm455, %v1401
  %1434 = vst.msk [vmem:[%s1 + $0x245] sm:$0x1] %vm455, %v1402
  %1435 = vst.msk [vmem:[%s1 + $0x265] sm:$0x1] %vm455, %v1403
  %1436 = vst.msk [vmem:[%s1 + $0x285] sm:$0x1] %vm455, %v1404
  %1437 = vst.msk [vmem:[%s1 + $0x2a5] sm:$0x1] %vm455, %v1405
  %1438 = vst.msk [vmem:[%s1 + $0x2c5] sm:$0x1] %vm455, %v1406
  %1439 = vst.msk [vmem:[%s1 + $0x2e5] sm:$0x1] %vm455, %v1407
  %1440 = vst.msk [vmem:[%s1 + $0x305] sm:$0x1] %vm455, %v1408
  %1441 = vst.msk [vmem:[%s1 + $0x325] sm:$0x1] %vm455, %v1409
  %1442 = vst.msk [vmem:[%s1 + $0x345] sm:$0x1] %vm455, %v1410
  %1443 = vst.msk [vmem:[%s1 + $0x365] sm:$0x1] %vm455, %v1411
  %1444 = vst.msk [vmem:[%s1 + $0x385] sm:$0x1] %vm455, %v1412
  %1445 = vst.msk [vmem:[%s1 + $0x3a5] sm:$0x1] %vm455, %v1413
  %1446 = vst.msk [vmem:[%s1 + $0x3c5] sm:$0x1] %vm455, %v1414
  %1447 = vst.msk [vmem:[%s1 + $0x3e5] sm:$0x1] %vm455, %v1415
  %v1448 = vld [vmem:[#allocation2 + $0x2] sm:$0x1]
  %v1449 = vld [vmem:[#allocation2 + $0x12] sm:$0x1]
  %v1450 = vld [vmem:[#allocation2 + $0x22] sm:$0x1]
  %v1451 = vld [vmem:[#allocation2 + $0x32] sm:$0x1]
  %v1452 = vld [vmem:[#allocation2 + $0x42] sm:$0x1]
  %v1453 = vld [vmem:[#allocation2 + $0x52] sm:$0x1]
  %v1454 = vld [vmem:[#allocation2 + $0x62] sm:$0x1]
  %v1455 = vld [vmem:[#allocation2 + $0x72] sm:$0x1]
  %v1456 = vld [vmem:[#allocation2 + $0x82] sm:$0x1]
  %v1457 = vld [vmem:[#allocation2 + $0x92] sm:$0x1]
  %v1458 = vld [vmem:[#allocation2 + $0xa2] sm:$0x1]
  %v1459 = vld [vmem:[#allocation2 + $0xb2] sm:$0x1]
  %v1460 = vld [vmem:[#allocation2 + $0xc2] sm:$0x1]
  %v1461 = vld [vmem:[#allocation2 + $0xd2] sm:$0x1]
  %v1462 = vld [vmem:[#allocation2 + $0xe2] sm:$0x1]
  %v1463 = vld [vmem:[#allocation2 + $0xf2] sm:$0x1]
  %v1464 = vld [vmem:[#allocation2 + $0x102] sm:$0x1]
  %v1465 = vld [vmem:[#allocation2 + $0x112] sm:$0x1]
  %v1466 = vld [vmem:[#allocation2 + $0x122] sm:$0x1]
  %v1467 = vld [vmem:[#allocation2 + $0x132] sm:$0x1]
  %v1468 = vld [vmem:[#allocation2 + $0x142] sm:$0x1]
  %v1469 = vld [vmem:[#allocation2 + $0x152] sm:$0x1]
  %v1470 = vld [vmem:[#allocation2 + $0x162] sm:$0x1]
  %v1471 = vld [vmem:[#allocation2 + $0x172] sm:$0x1]
  %v1472 = vld [vmem:[#allocation2 + $0x182] sm:$0x1]
  %v1473 = vld [vmem:[#allocation2 + $0x192] sm:$0x1]
  %v1474 = vld [vmem:[#allocation2 + $0x1a2] sm:$0x1]
  %v1475 = vld [vmem:[#allocation2 + $0x1b2] sm:$0x1]
  %v1476 = vld [vmem:[#allocation2 + $0x1c2] sm:$0x1]
  %v1477 = vld [vmem:[#allocation2 + $0x1d2] sm:$0x1]
  %v1478 = vld [vmem:[#allocation2 + $0x1e2] sm:$0x1]
  %v1479 = vld [vmem:[#allocation2 + $0x1f2] sm:$0x1]
  %v1480 = vmul.f32 %v1448, 0.25
  %v1481 = vmul.f32 %v1449, 0.25
  %v1482 = vmul.f32 %v1450, 0.25
  %v1483 = vmul.f32 %v1451, 0.25
  %v1484 = vmul.f32 %v1452, 0.25
  %v1485 = vmul.f32 %v1453, 0.25
  %v1486 = vmul.f32 %v1454, 0.25
  %v1487 = vmul.f32 %v1455, 0.25
  %v1488 = vmul.f32 %v1456, 0.25
  %v1489 = vmul.f32 %v1457, 0.25
  %v1490 = vmul.f32 %v1458, 0.25
  %v1491 = vmul.f32 %v1459, 0.25
  %v1492 = vmul.f32 %v1460, 0.25
  %v1493 = vmul.f32 %v1461, 0.25
  %v1494 = vmul.f32 %v1462, 0.25
  %v1495 = vmul.f32 %v1463, 0.25
  %v1496 = vmul.f32 %v1464, 0.25
  %v1497 = vmul.f32 %v1465, 0.25
  %v1498 = vmul.f32 %v1466, 0.25
  %v1499 = vmul.f32 %v1467, 0.25
  %v1500 = vmul.f32 %v1468, 0.25
  %v1501 = vmul.f32 %v1469, 0.25
  %v1502 = vmul.f32 %v1470, 0.25
  %v1503 = vmul.f32 %v1471, 0.25
  %v1504 = vmul.f32 %v1472, 0.25
  %v1505 = vmul.f32 %v1473, 0.25
  %v1506 = vmul.f32 %v1474, 0.25
  %v1507 = vmul.f32 %v1475, 0.25
  %v1508 = vmul.f32 %v1476, 0.25
  %v1509 = vmul.f32 %v1477, 0.25
  %v1510 = vmul.f32 %v1478, 0.25
  %v1511 = vmul.f32 %v1479, 0.25
  %v1512 = vld [vmem:[#allocation2 + $0x3] sm:$0x1]
  %v1513 = vld [vmem:[#allocation2 + $0x13] sm:$0x1]
  %v1514 = vld [vmem:[#allocation2 + $0x23] sm:$0x1]
  %v1515 = vld [vmem:[#allocation2 + $0x33] sm:$0x1]
  %v1516 = vld [vmem:[#allocation2 + $0x43] sm:$0x1]
  %v1517 = vld [vmem:[#allocation2 + $0x53] sm:$0x1]
  %v1518 = vld [vmem:[#allocation2 + $0x63] sm:$0x1]
  %v1519 = vld [vmem:[#allocation2 + $0x73] sm:$0x1]
  %v1520 = vld [vmem:[#allocation2 + $0x83] sm:$0x1]
  %v1521 = vld [vmem:[#allocation2 + $0x93] sm:$0x1]
  %v1522 = vld [vmem:[#allocation2 + $0xa3] sm:$0x1]
  %v1523 = vld [vmem:[#allocation2 + $0xb3] sm:$0x1]
  %v1524 = vld [vmem:[#allocation2 + $0xc3] sm:$0x1]
  %v1525 = vld [vmem:[#allocation2 + $0xd3] sm:$0x1]
  %v1526 = vld [vmem:[#allocation2 + $0xe3] sm:$0x1]
  %v1527 = vld [vmem:[#allocation2 + $0xf3] sm:$0x1]
  %v1528 = vld [vmem:[#allocation2 + $0x103] sm:$0x1]
  %v1529 = vld [vmem:[#allocation2 + $0x113] sm:$0x1]
  %v1530 = vld [vmem:[#allocation2 + $0x123] sm:$0x1]
  %v1531 = vld [vmem:[#allocation2 + $0x133] sm:$0x1]
  %v1532 = vld [vmem:[#allocation2 + $0x143] sm:$0x1]
  %v1533 = vld [vmem:[#allocation2 + $0x153] sm:$0x1]
  %v1534 = vld [vmem:[#allocation2 + $0x163] sm:$0x1]
  %v1535 = vld [vmem:[#allocation2 + $0x173] sm:$0x1]
  %v1536 = vld [vmem:[#allocation2 + $0x183] sm:$0x1]
  %v1537 = vld [vmem:[#allocation2 + $0x193] sm:$0x1]
  %v1538 = vld [vmem:[#allocation2 + $0x1a3] sm:$0x1]
  %v1539 = vld [vmem:[#allocation2 + $0x1b3] sm:$0x1]
  %v1540 = vld [vmem:[#allocation2 + $0x1c3] sm:$0x1]
  %v1541 = vld [vmem:[#allocation2 + $0x1d3] sm:$0x1]
  %v1542 = vld [vmem:[#allocation2 + $0x1e3] sm:$0x1]
  %v1543 = vld [vmem:[#allocation2 + $0x1f3] sm:$0x1]
  %v1544 = vmul.f32 %v1512, 0.75
  %v1545 = vmul.f32 %v1513, 0.75
  %v1546 = vmul.f32 %v1514, 0.75
  %v1547 = vmul.f32 %v1515, 0.75
  %v1548 = vmul.f32 %v1516, 0.75
  %v1549 = vmul.f32 %v1517, 0.75
  %v1550 = vmul.f32 %v1518, 0.75
  %v1551 = vmul.f32 %v1519, 0.75
  %v1552 = vmul.f32 %v1520, 0.75
  %v1553 = vmul.f32 %v1521, 0.75
  %v1554 = vmul.f32 %v1522, 0.75
  %v1555 = vmul.f32 %v1523, 0.75
  %v1556 = vmul.f32 %v1524, 0.75
  %v1557 = vmul.f32 %v1525, 0.75
  %v1558 = vmul.f32 %v1526, 0.75
  %v1559 = vmul.f32 %v1527, 0.75
  %v1560 = vmul.f32 %v1528, 0.75
  %v1561 = vmul.f32 %v1529, 0.75
  %v1562 = vmul.f32 %v1530, 0.75
  %v1563 = vmul.f32 %v1531, 0.75
  %v1564 = vmul.f32 %v1532, 0.75
  %v1565 = vmul.f32 %v1533, 0.75
  %v1566 = vmul.f32 %v1534, 0.75
  %v1567 = vmul.f32 %v1535, 0.75
  %v1568 = vmul.f32 %v1536, 0.75
  %v1569 = vmul.f32 %v1537, 0.75
  %v1570 = vmul.f32 %v1538, 0.75
  %v1571 = vmul.f32 %v1539, 0.75
  %v1572 = vmul.f32 %v1540, 0.75
  %v1573 = vmul.f32 %v1541, 0.75
  %v1574 = vmul.f32 %v1542, 0.75
  %v1575 = vmul.f32 %v1543, 0.75
  %v1576 = vadd.f32 %v1480, %v1544
  %v1577 = vadd.f32 %v1481, %v1545
  %v1578 = vadd.f32 %v1482, %v1546
  %v1579 = vadd.f32 %v1483, %v1547
  %v1580 = vadd.f32 %v1484, %v1548
  %v1581 = vadd.f32 %v1485, %v1549
  %v1582 = vadd.f32 %v1486, %v1550
  %v1583 = vadd.f32 %v1487, %v1551
  %v1584 = vadd.f32 %v1488, %v1552
  %v1585 = vadd.f32 %v1489, %v1553
  %v1586 = vadd.f32 %v1490, %v1554
  %v1587 = vadd.f32 %v1491, %v1555
  %v1588 = vadd.f32 %v1492, %v1556
  %v1589 = vadd.f32 %v1493, %v1557
  %v1590 = vadd.f32 %v1494, %v1558
  %v1591 = vadd.f32 %v1495, %v1559
  %v1592 = vadd.f32 %v1496, %v1560
  %v1593 = vadd.f32 %v1497, %v1561
  %v1594 = vadd.f32 %v1498, %v1562
  %v1595 = vadd.f32 %v1499, %v1563
  %v1596 = vadd.f32 %v1500, %v1564
  %v1597 = vadd.f32 %v1501, %v1565
  %v1598 = vadd.f32 %v1502, %v1566
  %v1599 = vadd.f32 %v1503, %v1567
  %v1600 = vadd.f32 %v1504, %v1568
  %v1601 = vadd.f32 %v1505, %v1569
  %v1602 = vadd.f32 %v1506, %v1570
  %v1603 = vadd.f32 %v1507, %v1571
  %v1604 = vadd.f32 %v1508, %v1572
  %v1605 = vadd.f32 %v1509, %v1573
  %v1606 = vadd.f32 %v1510, %v1574
  %v1607 = vadd.f32 %v1511, %v1575
  %1608 = vst.msk [vmem:[%s1 + $0x6] sm:$0x1] %vm455, %v1576
  %1609 = vst.msk [vmem:[%s1 + $0x26] sm:$0x1] %vm455, %v1577
  %1610 = vst.msk [vmem:[%s1 + $0x46] sm:$0x1] %vm455, %v1578
  %1611 = vst.msk [vmem:[%s1 + $0x66] sm:$0x1] %vm455, %v1579
  %1612 = vst.msk [vmem:[%s1 + $0x86] sm:$0x1] %vm455, %v1580
  %1613 = vst.msk [vmem:[%s1 + $0xa6] sm:$0x1] %vm455, %v1581
  %1614 = vst.msk [vmem:[%s1 + $0xc6] sm:$0x1] %vm455, %v1582
  %1615 = vst.msk [vmem:[%s1 + $0xe6] sm:$0x1] %vm455, %v1583
  %1616 = vst.msk [vmem:[%s1 + $0x106] sm:$0x1] %vm455, %v1584
  %1617 = vst.msk [vmem:[%s1 + $0x126] sm:$0x1] %vm455, %v1585
  %1618 = vst.msk [vmem:[%s1 + $0x146] sm:$0x1] %vm455, %v1586
  %1619 = vst.msk [vmem:[%s1 + $0x166] sm:$0x1] %vm455, %v1587
  %1620 = vst.msk [vmem:[%s1 + $0x186] sm:$0x1] %vm455, %v1588
  %1621 = vst.msk [vmem:[%s1 + $0x1a6] sm:$0x1] %vm455, %v1589
  %1622 = vst.msk [vmem:[%s1 + $0x1c6] sm:$0x1] %vm455, %v1590
  %1623 = vst.msk [vmem:[%s1 + $0x1e6] sm:$0x1] %vm455, %v1591
  %1624 = vst.msk [vmem:[%s1 + $0x206] sm:$0x1] %vm455, %v1592
  %1625 = vst.msk [vmem:[%s1 + $0x226] sm:$0x1] %vm455, %v1593
  %1626 = vst.msk [vmem:[%s1 + $0x246] sm:$0x1] %vm455, %v1594
  %1627 = vst.msk [vmem:[%s1 + $0x266] sm:$0x1] %vm455, %v1595
  %1628 = vst.msk [vmem:[%s1 + $0x286] sm:$0x1] %vm455, %v1596
  %1629 = vst.msk [vmem:[%s1 + $0x2a6] sm:$0x1] %vm455, %v1597
  %1630 = vst.msk [vmem:[%s1 + $0x2c6] sm:$0x1] %vm455, %v1598
  %1631 = vst.msk [vmem:[%s1 + $0x2e6] sm:$0x1] %vm455, %v1599
  %1632 = vst.msk [vmem:[%s1 + $0x306] sm:$0x1] %vm455, %v1600
  %1633 = vst.msk [vmem:[%s1 + $0x326] sm:$0x1] %vm455, %v1601
  %1634 = vst.msk [vmem:[%s1 + $0x346] sm:$0x1] %vm455, %v1602
  %1635 = vst.msk [vmem:[%s1 + $0x366] sm:$0x1] %vm455, %v1603
  %1636 = vst.msk [vmem:[%s1 + $0x386] sm:$0x1] %vm455, %v1604
  %1637 = vst.msk [vmem:[%s1 + $0x3a6] sm:$0x1] %vm455, %v1605
  %1638 = vst.msk [vmem:[%s1 + $0x3c6] sm:$0x1] %vm455, %v1606
  %1639 = vst.msk [vmem:[%s1 + $0x3e6] sm:$0x1] %vm455, %v1607
  %v1640 = vld [vmem:[#allocation2 + $0x3] sm:$0x1]
  %v1641 = vld [vmem:[#allocation2 + $0x13] sm:$0x1]
  %v1642 = vld [vmem:[#allocation2 + $0x23] sm:$0x1]
  %v1643 = vld [vmem:[#allocation2 + $0x33] sm:$0x1]
  %v1644 = vld [vmem:[#allocation2 + $0x43] sm:$0x1]
  %v1645 = vld [vmem:[#allocation2 + $0x53] sm:$0x1]
  %v1646 = vld [vmem:[#allocation2 + $0x63] sm:$0x1]
  %v1647 = vld [vmem:[#allocation2 + $0x73] sm:$0x1]
  %v1648 = vld [vmem:[#allocation2 + $0x83] sm:$0x1]
  %v1649 = vld [vmem:[#allocation2 + $0x93] sm:$0x1]
  %v1650 = vld [vmem:[#allocation2 + $0xa3] sm:$0x1]
  %v1651 = vld [vmem:[#allocation2 + $0xb3] sm:$0x1]
  %v1652 = vld [vmem:[#allocation2 + $0xc3] sm:$0x1]
  %v1653 = vld [vmem:[#allocation2 + $0xd3] sm:$0x1]
  %v1654 = vld [vmem:[#allocation2 + $0xe3] sm:$0x1]
  %v1655 = vld [vmem:[#allocation2 + $0xf3] sm:$0x1]
  %v1656 = vld [vmem:[#allocation2 + $0x103] sm:$0x1]
  %v1657 = vld [vmem:[#allocation2 + $0x113] sm:$0x1]
  %v1658 = vld [vmem:[#allocation2 + $0x123] sm:$0x1]
  %v1659 = vld [vmem:[#allocation2 + $0x133] sm:$0x1]
  %v1660 = vld [vmem:[#allocation2 + $0x143] sm:$0x1]
  %v1661 = vld [vmem:[#allocation2 + $0x153] sm:$0x1]
  %v1662 = vld [vmem:[#allocation2 + $0x163] sm:$0x1]
  %v1663 = vld [vmem:[#allocation2 + $0x173] sm:$0x1]
  %v1664 = vld [vmem:[#allocation2 + $0x183] sm:$0x1]
  %v1665 = vld [vmem:[#allocation2 + $0x193] sm:$0x1]
  %v1666 = vld [vmem:[#allocation2 + $0x1a3] sm:$0x1]
  %v1667 = vld [vmem:[#allocation2 + $0x1b3] sm:$0x1]
  %v1668 = vld [vmem:[#allocation2 + $0x1c3] sm:$0x1]
  %v1669 = vld [vmem:[#allocation2 + $0x1d3] sm:$0x1]
  %v1670 = vld [vmem:[#allocation2 + $0x1e3] sm:$0x1]
  %v1671 = vld [vmem:[#allocation2 + $0x1f3] sm:$0x1]
  %v1672 = vmul.f32 %v1640, 0.75
  %v1673 = vmul.f32 %v1641, 0.75
  %v1674 = vmul.f32 %v1642, 0.75
  %v1675 = vmul.f32 %v1643, 0.75
  %v1676 = vmul.f32 %v1644, 0.75
  %v1677 = vmul.f32 %v1645, 0.75
  %v1678 = vmul.f32 %v1646, 0.75
  %v1679 = vmul.f32 %v1647, 0.75
  %v1680 = vmul.f32 %v1648, 0.75
  %v1681 = vmul.f32 %v1649, 0.75
  %v1682 = vmul.f32 %v1650, 0.75
  %v1683 = vmul.f32 %v1651, 0.75
  %v1684 = vmul.f32 %v1652, 0.75
  %v1685 = vmul.f32 %v1653, 0.75
  %v1686 = vmul.f32 %v1654, 0.75
  %v1687 = vmul.f32 %v1655, 0.75
  %v1688 = vmul.f32 %v1656, 0.75
  %v1689 = vmul.f32 %v1657, 0.75
  %v1690 = vmul.f32 %v1658, 0.75
  %v1691 = vmul.f32 %v1659, 0.75
  %v1692 = vmul.f32 %v1660, 0.75
  %v1693 = vmul.f32 %v1661, 0.75
  %v1694 = vmul.f32 %v1662, 0.75
  %v1695 = vmul.f32 %v1663, 0.75
  %v1696 = vmul.f32 %v1664, 0.75
  %v1697 = vmul.f32 %v1665, 0.75
  %v1698 = vmul.f32 %v1666, 0.75
  %v1699 = vmul.f32 %v1667, 0.75
  %v1700 = vmul.f32 %v1668, 0.75
  %v1701 = vmul.f32 %v1669, 0.75
  %v1702 = vmul.f32 %v1670, 0.75
  %v1703 = vmul.f32 %v1671, 0.75
  %v1704 = vld [vmem:[#allocation2 + $0x4] sm:$0x1]
  %v1705 = vld [vmem:[#allocation2 + $0x14] sm:$0x1]
  %v1706 = vld [vmem:[#allocation2 + $0x24] sm:$0x1]
  %v1707 = vld [vmem:[#allocation2 + $0x34] sm:$0x1]
  %v1708 = vld [vmem:[#allocation2 + $0x44] sm:$0x1]
  %v1709 = vld [vmem:[#allocation2 + $0x54] sm:$0x1]
  %v1710 = vld [vmem:[#allocation2 + $0x64] sm:$0x1]
  %v1711 = vld [vmem:[#allocation2 + $0x74] sm:$0x1]
  %v1712 = vld [vmem:[#allocation2 + $0x84] sm:$0x1]
  %v1713 = vld [vmem:[#allocation2 + $0x94] sm:$0x1]
  %v1714 = vld [vmem:[#allocation2 + $0xa4] sm:$0x1]
  %v1715 = vld [vmem:[#allocation2 + $0xb4] sm:$0x1]
  %v1716 = vld [vmem:[#allocation2 + $0xc4] sm:$0x1]
  %v1717 = vld [vmem:[#allocation2 + $0xd4] sm:$0x1]
  %v1718 = vld [vmem:[#allocation2 + $0xe4] sm:$0x1]
  %v1719 = vld [vmem:[#allocation2 + $0xf4] sm:$0x1]
  %v1720 = vld [vmem:[#allocation2 + $0x104] sm:$0x1]
  %v1721 = vld [vmem:[#allocation2 + $0x114] sm:$0x1]
  %v1722 = vld [vmem:[#allocation2 + $0x124] sm:$0x1]
  %v1723 = vld [vmem:[#allocation2 + $0x134] sm:$0x1]
  %v1724 = vld [vmem:[#allocation2 + $0x144] sm:$0x1]
  %v1725 = vld [vmem:[#allocation2 + $0x154] sm:$0x1]
  %v1726 = vld [vmem:[#allocation2 + $0x164] sm:$0x1]
  %v1727 = vld [vmem:[#allocation2 + $0x174] sm:$0x1]
  %v1728 = vld [vmem:[#allocation2 + $0x184] sm:$0x1]
  %v1729 = vld [vmem:[#allocation2 + $0x194] sm:$0x1]
  %v1730 = vld [vmem:[#allocation2 + $0x1a4] sm:$0x1]
  %v1731 = vld [vmem:[#allocation2 + $0x1b4] sm:$0x1]
  %v1732 = vld [vmem:[#allocation2 + $0x1c4] sm:$0x1]
  %v1733 = vld [vmem:[#allocation2 + $0x1d4] sm:$0x1]
  %v1734 = vld [vmem:[#allocation2 + $0x1e4] sm:$0x1]
  %v1735 = vld [vmem:[#allocation2 + $0x1f4] sm:$0x1]
  %v1736 = vmul.f32 %v1704, 0.25
  %v1737 = vmul.f32 %v1705, 0.25
  %v1738 = vmul.f32 %v1706, 0.25
  %v1739 = vmul.f32 %v1707, 0.25
  %v1740 = vmul.f32 %v1708, 0.25
  %v1741 = vmul.f32 %v1709, 0.25
  %v1742 = vmul.f32 %v1710, 0.25
  %v1743 = vmul.f32 %v1711, 0.25
  %v1744 = vmul.f32 %v1712, 0.25
  %v1745 = vmul.f32 %v1713, 0.25
  %v1746 = vmul.f32 %v1714, 0.25
  %v1747 = vmul.f32 %v1715, 0.25
  %v1748 = vmul.f32 %v1716, 0.25
  %v1749 = vmul.f32 %v1717, 0.25
  %v1750 = vmul.f32 %v1718, 0.25
  %v1751 = vmul.f32 %v1719, 0.25
  %v1752 = vmul.f32 %v1720, 0.25
  %v1753 = vmul.f32 %v1721, 0.25
  %v1754 = vmul.f32 %v1722, 0.25
  %v1755 = vmul.f32 %v1723, 0.25
  %v1756 = vmul.f32 %v1724, 0.25
  %v1757 = vmul.f32 %v1725, 0.25
  %v1758 = vmul.f32 %v1726, 0.25
  %v1759 = vmul.f32 %v1727, 0.25
  %v1760 = vmul.f32 %v1728, 0.25
  %v1761 = vmul.f32 %v1729, 0.25
  %v1762 = vmul.f32 %v1730, 0.25
  %v1763 = vmul.f32 %v1731, 0.25
  %v1764 = vmul.f32 %v1732, 0.25
  %v1765 = vmul.f32 %v1733, 0.25
  %v1766 = vmul.f32 %v1734, 0.25
  %v1767 = vmul.f32 %v1735, 0.25
  %v1768 = vadd.f32 %v1672, %v1736
  %v1769 = vadd.f32 %v1673, %v1737
  %v1770 = vadd.f32 %v1674, %v1738
  %v1771 = vadd.f32 %v1675, %v1739
  %v1772 = vadd.f32 %v1676, %v1740
  %v1773 = vadd.f32 %v1677, %v1741
  %v1774 = vadd.f32 %v1678, %v1742
  %v1775 = vadd.f32 %v1679, %v1743
  %v1776 = vadd.f32 %v1680, %v1744
  %v1777 = vadd.f32 %v1681, %v1745
  %v1778 = vadd.f32 %v1682, %v1746
  %v1779 = vadd.f32 %v1683, %v1747
  %v1780 = vadd.f32 %v1684, %v1748
  %v1781 = vadd.f32 %v1685, %v1749
  %v1782 = vadd.f32 %v1686, %v1750
  %v1783 = vadd.f32 %v1687, %v1751
  %v1784 = vadd.f32 %v1688, %v1752
  %v1785 = vadd.f32 %v1689, %v1753
  %v1786 = vadd.f32 %v1690, %v1754
  %v1787 = vadd.f32 %v1691, %v1755
  %v1788 = vadd.f32 %v1692, %v1756
  %v1789 = vadd.f32 %v1693, %v1757
  %v1790 = vadd.f32 %v1694, %v1758
  %v1791 = vadd.f32 %v1695, %v1759
  %v1792 = vadd.f32 %v1696, %v1760
  %v1793 = vadd.f32 %v1697, %v1761
  %v1794 = vadd.f32 %v1698, %v1762
  %v1795 = vadd.f32 %v1699, %v1763
  %v1796 = vadd.f32 %v1700, %v1764
  %v1797 = vadd.f32 %v1701, %v1765
  %v1798 = vadd.f32 %v1702, %v1766
  %v1799 = vadd.f32 %v1703, %v1767
  %1800 = vst.msk [vmem:[%s1 + $0x7] sm:$0x1] %vm455, %v1768
  %1801 = vst.msk [vmem:[%s1 + $0x27] sm:$0x1] %vm455, %v1769
  %1802 = vst.msk [vmem:[%s1 + $0x47] sm:$0x1] %vm455, %v1770
  %1803 = vst.msk [vmem:[%s1 + $0x67] sm:$0x1] %vm455, %v1771
  %1804 = vst.msk [vmem:[%s1 + $0x87] sm:$0x1] %vm455, %v1772
  %1805 = vst.msk [vmem:[%s1 + $0xa7] sm:$0x1] %vm455, %v1773
  %1806 = vst.msk [vmem:[%s1 + $0xc7] sm:$0x1] %vm455, %v1774
  %1807 = vst.msk [vmem:[%s1 + $0xe7] sm:$0x1] %vm455, %v1775
  %1808 = vst.msk [vmem:[%s1 + $0x107] sm:$0x1] %vm455, %v1776
  %1809 = vst.msk [vmem:[%s1 + $0x127] sm:$0x1] %vm455, %v1777
  %1810 = vst.msk [vmem:[%s1 + $0x147] sm:$0x1] %vm455, %v1778
  %1811 = vst.msk [vmem:[%s1 + $0x167] sm:$0x1] %vm455, %v1779
  %1812 = vst.msk [vmem:[%s1 + $0x187] sm:$0x1] %vm455, %v1780
  %1813 = vst.msk [vmem:[%s1 + $0x1a7] sm:$0x1] %vm455, %v1781
  %1814 = vst.msk [vmem:[%s1 + $0x1c7] sm:$0x1] %vm455, %v1782
  %1815 = vst.msk [vmem:[%s1 + $0x1e7] sm:$0x1] %vm455, %v1783
  %1816 = vst.msk [vmem:[%s1 + $0x207] sm:$0x1] %vm455, %v1784
  %1817 = vst.msk [vmem:[%s1 + $0x227] sm:$0x1] %vm455, %v1785
  %1818 = vst.msk [vmem:[%s1 + $0x247] sm:$0x1] %vm455, %v1786
  %1819 = vst.msk [vmem:[%s1 + $0x267] sm:$0x1] %vm455, %v1787
  %1820 = vst.msk [vmem:[%s1 + $0x287] sm:$0x1] %vm455, %v1788
  %1821 = vst.msk [vmem:[%s1 + $0x2a7] sm:$0x1] %vm455, %v1789
  %1822 = vst.msk [vmem:[%s1 + $0x2c7] sm:$0x1] %vm455, %v1790
  %1823 = vst.msk [vmem:[%s1 + $0x2e7] sm:$0x1] %vm455, %v1791
  %1824 = vst.msk [vmem:[%s1 + $0x307] sm:$0x1] %vm455, %v1792
  %1825 = vst.msk [vmem:[%s1 + $0x327] sm:$0x1] %vm455, %v1793
  %1826 = vst.msk [vmem:[%s1 + $0x347] sm:$0x1] %vm455, %v1794
  %1827 = vst.msk [vmem:[%s1 + $0x367] sm:$0x1] %vm455, %v1795
  %1828 = vst.msk [vmem:[%s1 + $0x387] sm:$0x1] %vm455, %v1796
  %1829 = vst.msk [vmem:[%s1 + $0x3a7] sm:$0x1] %vm455, %v1797
  %1830 = vst.msk [vmem:[%s1 + $0x3c7] sm:$0x1] %vm455, %v1798
  %1831 = vst.msk [vmem:[%s1 + $0x3e7] sm:$0x1] %vm455, %v1799
  %v1832 = vld [vmem:[#allocation2 + $0x3] sm:$0x1]
  %v1833 = vld [vmem:[#allocation2 + $0x13] sm:$0x1]
  %v1834 = vld [vmem:[#allocation2 + $0x23] sm:$0x1]
  %v1835 = vld [vmem:[#allocation2 + $0x33] sm:$0x1]
  %v1836 = vld [vmem:[#allocation2 + $0x43] sm:$0x1]
  %v1837 = vld [vmem:[#allocation2 + $0x53] sm:$0x1]
  %v1838 = vld [vmem:[#allocation2 + $0x63] sm:$0x1]
  %v1839 = vld [vmem:[#allocation2 + $0x73] sm:$0x1]
  %v1840 = vld [vmem:[#allocation2 + $0x83] sm:$0x1]
  %v1841 = vld [vmem:[#allocation2 + $0x93] sm:$0x1]
  %v1842 = vld [vmem:[#allocation2 + $0xa3] sm:$0x1]
  %v1843 = vld [vmem:[#allocation2 + $0xb3] sm:$0x1]
  %v1844 = vld [vmem:[#allocation2 + $0xc3] sm:$0x1]
  %v1845 = vld [vmem:[#allocation2 + $0xd3] sm:$0x1]
  %v1846 = vld [vmem:[#allocation2 + $0xe3] sm:$0x1]
  %v1847 = vld [vmem:[#allocation2 + $0xf3] sm:$0x1]
  %v1848 = vld [vmem:[#allocation2 + $0x103] sm:$0x1]
  %v1849 = vld [vmem:[#allocation2 + $0x113] sm:$0x1]
  %v1850 = vld [vmem:[#allocation2 + $0x123] sm:$0x1]
  %v1851 = vld [vmem:[#allocation2 + $0x133] sm:$0x1]
  %v1852 = vld [vmem:[#allocation2 + $0x143] sm:$0x1]
  %v1853 = vld [vmem:[#allocation2 + $0x153] sm:$0x1]
  %v1854 = vld [vmem:[#allocation2 + $0x163] sm:$0x1]
  %v1855 = vld [vmem:[#allocation2 + $0x173] sm:$0x1]
  %v1856 = vld [vmem:[#allocation2 + $0x183] sm:$0x1]
  %v1857 = vld [vmem:[#allocation2 + $0x193] sm:$0x1]
  %v1858 = vld [vmem:[#allocation2 + $0x1a3] sm:$0x1]
  %v1859 = vld [vmem:[#allocation2 + $0x1b3] sm:$0x1]
  %v1860 = vld [vmem:[#allocation2 + $0x1c3] sm:$0x1]
  %v1861 = vld [vmem:[#allocation2 + $0x1d3] sm:$0x1]
  %v1862 = vld [vmem:[#allocation2 + $0x1e3] sm:$0x1]
  %v1863 = vld [vmem:[#allocation2 + $0x1f3] sm:$0x1]
  %v1864 = vmul.f32 %v1832, 0.25
  %v1865 = vmul.f32 %v1833, 0.25
  %v1866 = vmul.f32 %v1834, 0.25
  %v1867 = vmul.f32 %v1835, 0.25
  %v1868 = vmul.f32 %v1836, 0.25
  %v1869 = vmul.f32 %v1837, 0.25
  %v1870 = vmul.f32 %v1838, 0.25
  %v1871 = vmul.f32 %v1839, 0.25
  %v1872 = vmul.f32 %v1840, 0.25
  %v1873 = vmul.f32 %v1841, 0.25
  %v1874 = vmul.f32 %v1842, 0.25
  %v1875 = vmul.f32 %v1843, 0.25
  %v1876 = vmul.f32 %v1844, 0.25
  %v1877 = vmul.f32 %v1845, 0.25
  %v1878 = vmul.f32 %v1846, 0.25
  %v1879 = vmul.f32 %v1847, 0.25
  %v1880 = vmul.f32 %v1848, 0.25
  %v1881 = vmul.f32 %v1849, 0.25
  %v1882 = vmul.f32 %v1850, 0.25
  %v1883 = vmul.f32 %v1851, 0.25
  %v1884 = vmul.f32 %v1852, 0.25
  %v1885 = vmul.f32 %v1853, 0.25
  %v1886 = vmul.f32 %v1854, 0.25
  %v1887 = vmul.f32 %v1855, 0.25
  %v1888 = vmul.f32 %v1856, 0.25
  %v1889 = vmul.f32 %v1857, 0.25
  %v1890 = vmul.f32 %v1858, 0.25
  %v1891 = vmul.f32 %v1859, 0.25
  %v1892 = vmul.f32 %v1860, 0.25
  %v1893 = vmul.f32 %v1861, 0.25
  %v1894 = vmul.f32 %v1862, 0.25
  %v1895 = vmul.f32 %v1863, 0.25
  %v1896 = vld [vmem:[#allocation2 + $0x4] sm:$0x1]
  %v1897 = vld [vmem:[#allocation2 + $0x14] sm:$0x1]
  %v1898 = vld [vmem:[#allocation2 + $0x24] sm:$0x1]
  %v1899 = vld [vmem:[#allocation2 + $0x34] sm:$0x1]
  %v1900 = vld [vmem:[#allocation2 + $0x44] sm:$0x1]
  %v1901 = vld [vmem:[#allocation2 + $0x54] sm:$0x1]
  %v1902 = vld [vmem:[#allocation2 + $0x64] sm:$0x1]
  %v1903 = vld [vmem:[#allocation2 + $0x74] sm:$0x1]
  %v1904 = vld [vmem:[#allocation2 + $0x84] sm:$0x1]
  %v1905 = vld [vmem:[#allocation2 + $0x94] sm:$0x1]
  %v1906 = vld [vmem:[#allocation2 + $0xa4] sm:$0x1]
  %v1907 = vld [vmem:[#allocation2 + $0xb4] sm:$0x1]
  %v1908 = vld [vmem:[#allocation2 + $0xc4] sm:$0x1]
  %v1909 = vld [vmem:[#allocation2 + $0xd4] sm:$0x1]
  %v1910 = vld [vmem:[#allocation2 + $0xe4] sm:$0x1]
  %v1911 = vld [vmem:[#allocation2 + $0xf4] sm:$0x1]
  %v1912 = vld [vmem:[#allocation2 + $0x104] sm:$0x1]
  %v1913 = vld [vmem:[#allocation2 + $0x114] sm:$0x1]
  %v1914 = vld [vmem:[#allocation2 + $0x124] sm:$0x1]
  %v1915 = vld [vmem:[#allocation2 + $0x134] sm:$0x1]
  %v1916 = vld [vmem:[#allocation2 + $0x144] sm:$0x1]
  %v1917 = vld [vmem:[#allocation2 + $0x154] sm:$0x1]
  %v1918 = vld [vmem:[#allocation2 + $0x164] sm:$0x1]
  %v1919 = vld [vmem:[#allocation2 + $0x174] sm:$0x1]
  %v1920 = vld [vmem:[#allocation2 + $0x184] sm:$0x1]
  %v1921 = vld [vmem:[#allocation2 + $0x194] sm:$0x1]
  %v1922 = vld [vmem:[#allocation2 + $0x1a4] sm:$0x1]
  %v1923 = vld [vmem:[#allocation2 + $0x1b4] sm:$0x1]
  %v1924 = vld [vmem:[#allocation2 + $0x1c4] sm:$0x1]
  %v1925 = vld [vmem:[#allocation2 + $0x1d4] sm:$0x1]
  %v1926 = vld [vmem:[#allocation2 + $0x1e4] sm:$0x1]
  %v1927 = vld [vmem:[#allocation2 + $0x1f4] sm:$0x1]
  %v1928 = vmul.f32 %v1896, 0.75
  %v1929 = vmul.f32 %v1897, 0.75
  %v1930 = vmul.f32 %v1898, 0.75
  %v1931 = vmul.f32 %v1899, 0.75
  %v1932 = vmul.f32 %v1900, 0.75
  %v1933 = vmul.f32 %v1901, 0.75
  %v1934 = vmul.f32 %v1902, 0.75
  %v1935 = vmul.f32 %v1903, 0.75
  %v1936 = vmul.f32 %v1904, 0.75
  %v1937 = vmul.f32 %v1905, 0.75
  %v1938 = vmul.f32 %v1906, 0.75
  %v1939 = vmul.f32 %v1907, 0.75
  %v1940 = vmul.f32 %v1908, 0.75
  %v1941 = vmul.f32 %v1909, 0.75
  %v1942 = vmul.f32 %v1910, 0.75
  %v1943 = vmul.f32 %v1911, 0.75
  %v1944 = vmul.f32 %v1912, 0.75
  %v1945 = vmul.f32 %v1913, 0.75
  %v1946 = vmul.f32 %v1914, 0.75
  %v1947 = vmul.f32 %v1915, 0.75
  %v1948 = vmul.f32 %v1916, 0.75
  %v1949 = vmul.f32 %v1917, 0.75
  %v1950 = vmul.f32 %v1918, 0.75
  %v1951 = vmul.f32 %v1919, 0.75
  %v1952 = vmul.f32 %v1920, 0.75
  %v1953 = vmul.f32 %v1921, 0.75
  %v1954 = vmul.f32 %v1922, 0.75
  %v1955 = vmul.f32 %v1923, 0.75
  %v1956 = vmul.f32 %v1924, 0.75
  %v1957 = vmul.f32 %v1925, 0.75
  %v1958 = vmul.f32 %v1926, 0.75
  %v1959 = vmul.f32 %v1927, 0.75
  %v1960 = vadd.f32 %v1864, %v1928
  %v1961 = vadd.f32 %v1865, %v1929
  %v1962 = vadd.f32 %v1866, %v1930
  %v1963 = vadd.f32 %v1867, %v1931
  %v1964 = vadd.f32 %v1868, %v1932
  %v1965 = vadd.f32 %v1869, %v1933
  %v1966 = vadd.f32 %v1870, %v1934
  %v1967 = vadd.f32 %v1871, %v1935
  %v1968 = vadd.f32 %v1872, %v1936
  %v1969 = vadd.f32 %v1873, %v1937
  %v1970 = vadd.f32 %v1874, %v1938
  %v1971 = vadd.f32 %v1875, %v1939
  %v1972 = vadd.f32 %v1876, %v1940
  %v1973 = vadd.f32 %v1877, %v1941
  %v1974 = vadd.f32 %v1878, %v1942
  %v1975 = vadd.f32 %v1879, %v1943
  %v1976 = vadd.f32 %v1880, %v1944
  %v1977 = vadd.f32 %v1881, %v1945
  %v1978 = vadd.f32 %v1882, %v1946
  %v1979 = vadd.f32 %v1883, %v1947
  %v1980 = vadd.f32 %v1884, %v1948
  %v1981 = vadd.f32 %v1885, %v1949
  %v1982 = vadd.f32 %v1886, %v1950
  %v1983 = vadd.f32 %v1887, %v1951
  %v1984 = vadd.f32 %v1888, %v1952
  %v1985 = vadd.f32 %v1889, %v1953
  %v1986 = vadd.f32 %v1890, %v1954
  %v1987 = vadd.f32 %v1891, %v1955
  %v1988 = vadd.f32 %v1892, %v1956
  %v1989 = vadd.f32 %v1893, %v1957
  %v1990 = vadd.f32 %v1894, %v1958
  %v1991 = vadd.f32 %v1895, %v1959
  %1992 = vst.msk [vmem:[%s1 + $0x8] sm:$0x1] %vm455, %v1960
  %1993 = vst.msk [vmem:[%s1 + $0x28] sm:$0x1] %vm455, %v1961
  %1994 = vst.msk [vmem:[%s1 + $0x48] sm:$0x1] %vm455, %v1962
  %1995 = vst.msk [vmem:[%s1 + $0x68] sm:$0x1] %vm455, %v1963
  %1996 = vst.msk [vmem:[%s1 + $0x88] sm:$0x1] %vm455, %v1964
  %1997 = vst.msk [vmem:[%s1 + $0xa8] sm:$0x1] %vm455, %v1965
  %1998 = vst.msk [vmem:[%s1 + $0xc8] sm:$0x1] %vm455, %v1966
  %1999 = vst.msk [vmem:[%s1 + $0xe8] sm:$0x1] %vm455, %v1967
  %2000 = vst.msk [vmem:[%s1 + $0x108] sm:$0x1] %vm455, %v1968
  %2001 = vst.msk [vmem:[%s1 + $0x128] sm:$0x1] %vm455, %v1969
  %2002 = vst.msk [vmem:[%s1 + $0x148] sm:$0x1] %vm455, %v1970
  %2003 = vst.msk [vmem:[%s1 + $0x168] sm:$0x1] %vm455, %v1971
  %2004 = vst.msk [vmem:[%s1 + $0x188] sm:$0x1] %vm455, %v1972
  %2005 = vst.msk [vmem:[%s1 + $0x1a8] sm:$0x1] %vm455, %v1973
  %2006 = vst.msk [vmem:[%s1 + $0x1c8] sm:$0x1] %vm455, %v1974
  %2007 = vst.msk [vmem:[%s1 + $0x1e8] sm:$0x1] %vm455, %v1975
  %2008 = vst.msk [vmem:[%s1 + $0x208] sm:$0x1] %vm455, %v1976
  %2009 = vst.msk [vmem:[%s1 + $0x228] sm:$0x1] %vm455, %v1977
  %2010 = vst.msk [vmem:[%s1 + $0x248] sm:$0x1] %vm455, %v1978
  %2011 = vst.msk [vmem:[%s1 + $0x268] sm:$0x1] %vm455, %v1979
  %2012 = vst.msk [vmem:[%s1 + $0x288] sm:$0x1] %vm455, %v1980
  %2013 = vst.msk [vmem:[%s1 + $0x2a8] sm:$0x1] %vm455, %v1981
  %2014 = vst.msk [vmem:[%s1 + $0x2c8] sm:$0x1] %vm455, %v1982
  %2015 = vst.msk [vmem:[%s1 + $0x2e8] sm:$0x1] %vm455, %v1983
  %2016 = vst.msk [vmem:[%s1 + $0x308] sm:$0x1] %vm455, %v1984
  %2017 = vst.msk [vmem:[%s1 + $0x328] sm:$0x1] %vm455, %v1985
  %2018 = vst.msk [vmem:[%s1 + $0x348] sm:$0x1] %vm455, %v1986
  %2019 = vst.msk [vmem:[%s1 + $0x368] sm:$0x1] %vm455, %v1987
  %2020 = vst.msk [vmem:[%s1 + $0x388] sm:$0x1] %vm455, %v1988
  %2021 = vst.msk [vmem:[%s1 + $0x3a8] sm:$0x1] %vm455, %v1989
  %2022 = vst.msk [vmem:[%s1 + $0x3c8] sm:$0x1] %vm455, %v1990
  %2023 = vst.msk [vmem:[%s1 + $0x3e8] sm:$0x1] %vm455, %v1991
  %v2024 = vld [vmem:[#allocation2 + $0x4] sm:$0x1]
  %v2025 = vld [vmem:[#allocation2 + $0x14] sm:$0x1]
  %v2026 = vld [vmem:[#allocation2 + $0x24] sm:$0x1]
  %v2027 = vld [vmem:[#allocation2 + $0x34] sm:$0x1]
  %v2028 = vld [vmem:[#allocation2 + $0x44] sm:$0x1]
  %v2029 = vld [vmem:[#allocation2 + $0x54] sm:$0x1]
  %v2030 = vld [vmem:[#allocation2 + $0x64] sm:$0x1]
  %v2031 = vld [vmem:[#allocation2 + $0x74] sm:$0x1]
  %v2032 = vld [vmem:[#allocation2 + $0x84] sm:$0x1]
  %v2033 = vld [vmem:[#allocation2 + $0x94] sm:$0x1]
  %v2034 = vld [vmem:[#allocation2 + $0xa4] sm:$0x1]
  %v2035 = vld [vmem:[#allocation2 + $0xb4] sm:$0x1]
  %v2036 = vld [vmem:[#allocation2 + $0xc4] sm:$0x1]
  %v2037 = vld [vmem:[#allocation2 + $0xd4] sm:$0x1]
  %v2038 = vld [vmem:[#allocation2 + $0xe4] sm:$0x1]
  %v2039 = vld [vmem:[#allocation2 + $0xf4] sm:$0x1]
  %v2040 = vld [vmem:[#allocation2 + $0x104] sm:$0x1]
  %v2041 = vld [vmem:[#allocation2 + $0x114] sm:$0x1]
  %v2042 = vld [vmem:[#allocation2 + $0x124] sm:$0x1]
  %v2043 = vld [vmem:[#allocation2 + $0x134] sm:$0x1]
  %v2044 = vld [vmem:[#allocation2 + $0x144] sm:$0x1]
  %v2045 = vld [vmem:[#allocation2 + $0x154] sm:$0x1]
  %v2046 = vld [vmem:[#allocation2 + $0x164] sm:$0x1]
  %v2047 = vld [vmem:[#allocation2 + $0x174] sm:$0x1]
  %v2048 = vld [vmem:[#allocation2 + $0x184] sm:$0x1]
  %v2049 = vld [vmem:[#allocation2 + $0x194] sm:$0x1]
  %v2050 = vld [vmem:[#allocation2 + $0x1a4] sm:$0x1]
  %v2051 = vld [vmem:[#allocation2 + $0x1b4] sm:$0x1]
  %v2052 = vld [vmem:[#allocation2 + $0x1c4] sm:$0x1]
  %v2053 = vld [vmem:[#allocation2 + $0x1d4] sm:$0x1]
  %v2054 = vld [vmem:[#allocation2 + $0x1e4] sm:$0x1]
  %v2055 = vld [vmem:[#allocation2 + $0x1f4] sm:$0x1]
  %v2056 = vmul.f32 %v2024, 0.75
  %v2057 = vmul.f32 %v2025, 0.75
  %v2058 = vmul.f32 %v2026, 0.75
  %v2059 = vmul.f32 %v2027, 0.75
  %v2060 = vmul.f32 %v2028, 0.75
  %v2061 = vmul.f32 %v2029, 0.75
  %v2062 = vmul.f32 %v2030, 0.75
  %v2063 = vmul.f32 %v2031, 0.75
  %v2064 = vmul.f32 %v2032, 0.75
  %v2065 = vmul.f32 %v2033, 0.75
  %v2066 = vmul.f32 %v2034, 0.75
  %v2067 = vmul.f32 %v2035, 0.75
  %v2068 = vmul.f32 %v2036, 0.75
  %v2069 = vmul.f32 %v2037, 0.75
  %v2070 = vmul.f32 %v2038, 0.75
  %v2071 = vmul.f32 %v2039, 0.75
  %v2072 = vmul.f32 %v2040, 0.75
  %v2073 = vmul.f32 %v2041, 0.75
  %v2074 = vmul.f32 %v2042, 0.75
  %v2075 = vmul.f32 %v2043, 0.75
  %v2076 = vmul.f32 %v2044, 0.75
  %v2077 = vmul.f32 %v2045, 0.75
  %v2078 = vmul.f32 %v2046, 0.75
  %v2079 = vmul.f32 %v2047, 0.75
  %v2080 = vmul.f32 %v2048, 0.75
  %v2081 = vmul.f32 %v2049, 0.75
  %v2082 = vmul.f32 %v2050, 0.75
  %v2083 = vmul.f32 %v2051, 0.75
  %v2084 = vmul.f32 %v2052, 0.75
  %v2085 = vmul.f32 %v2053, 0.75
  %v2086 = vmul.f32 %v2054, 0.75
  %v2087 = vmul.f32 %v2055, 0.75
  %v2088 = vld [vmem:[#allocation2 + $0x5] sm:$0x1]
  %v2089 = vld [vmem:[#allocation2 + $0x15] sm:$0x1]
  %v2090 = vld [vmem:[#allocation2 + $0x25] sm:$0x1]
  %v2091 = vld [vmem:[#allocation2 + $0x35] sm:$0x1]
  %v2092 = vld [vmem:[#allocation2 + $0x45] sm:$0x1]
  %v2093 = vld [vmem:[#allocation2 + $0x55] sm:$0x1]
  %v2094 = vld [vmem:[#allocation2 + $0x65] sm:$0x1]
  %v2095 = vld [vmem:[#allocation2 + $0x75] sm:$0x1]
  %v2096 = vld [vmem:[#allocation2 + $0x85] sm:$0x1]
  %v2097 = vld [vmem:[#allocation2 + $0x95] sm:$0x1]
  %v2098 = vld [vmem:[#allocation2 + $0xa5] sm:$0x1]
  %v2099 = vld [vmem:[#allocation2 + $0xb5] sm:$0x1]
  %v2100 = vld [vmem:[#allocation2 + $0xc5] sm:$0x1]
  %v2101 = vld [vmem:[#allocation2 + $0xd5] sm:$0x1]
  %v2102 = vld [vmem:[#allocation2 + $0xe5] sm:$0x1]
  %v2103 = vld [vmem:[#allocation2 + $0xf5] sm:$0x1]
  %v2104 = vld [vmem:[#allocation2 + $0x105] sm:$0x1]
  %v2105 = vld [vmem:[#allocation2 + $0x115] sm:$0x1]
  %v2106 = vld [vmem:[#allocation2 + $0x125] sm:$0x1]
  %v2107 = vld [vmem:[#allocation2 + $0x135] sm:$0x1]
  %v2108 = vld [vmem:[#allocation2 + $0x145] sm:$0x1]
  %v2109 = vld [vmem:[#allocation2 + $0x155] sm:$0x1]
  %v2110 = vld [vmem:[#allocation2 + $0x165] sm:$0x1]
  %v2111 = vld [vmem:[#allocation2 + $0x175] sm:$0x1]
  %v2112 = vld [vmem:[#allocation2 + $0x185] sm:$0x1]
  %v2113 = vld [vmem:[#allocation2 + $0x195] sm:$0x1]
  %v2114 = vld [vmem:[#allocation2 + $0x1a5] sm:$0x1]
  %v2115 = vld [vmem:[#allocation2 + $0x1b5] sm:$0x1]
  %v2116 = vld [vmem:[#allocation2 + $0x1c5] sm:$0x1]
  %v2117 = vld [vmem:[#allocation2 + $0x1d5] sm:$0x1]
  %v2118 = vld [vmem:[#allocation2 + $0x1e5] sm:$0x1]
  %v2119 = vld [vmem:[#allocation2 + $0x1f5] sm:$0x1]
  %v2120 = vmul.f32 %v2088, 0.25
  %v2121 = vmul.f32 %v2089, 0.25
  %v2122 = vmul.f32 %v2090, 0.25
  %v2123 = vmul.f32 %v2091, 0.25
  %v2124 = vmul.f32 %v2092, 0.25
  %v2125 = vmul.f32 %v2093, 0.25
  %v2126 = vmul.f32 %v2094, 0.25
  %v2127 = vmul.f32 %v2095, 0.25
  %v2128 = vmul.f32 %v2096, 0.25
  %v2129 = vmul.f32 %v2097, 0.25
  %v2130 = vmul.f32 %v2098, 0.25
  %v2131 = vmul.f32 %v2099, 0.25
  %v2132 = vmul.f32 %v2100, 0.25
  %v2133 = vmul.f32 %v2101, 0.25
  %v2134 = vmul.f32 %v2102, 0.25
  %v2135 = vmul.f32 %v2103, 0.25
  %v2136 = vmul.f32 %v2104, 0.25
  %v2137 = vmul.f32 %v2105, 0.25
  %v2138 = vmul.f32 %v2106, 0.25
  %v2139 = vmul.f32 %v2107, 0.25
  %v2140 = vmul.f32 %v2108, 0.25
  %v2141 = vmul.f32 %v2109, 0.25
  %v2142 = vmul.f32 %v2110, 0.25
  %v2143 = vmul.f32 %v2111, 0.25
  %v2144 = vmul.f32 %v2112, 0.25
  %v2145 = vmul.f32 %v2113, 0.25
  %v2146 = vmul.f32 %v2114, 0.25
  %v2147 = vmul.f32 %v2115, 0.25
  %v2148 = vmul.f32 %v2116, 0.25
  %v2149 = vmul.f32 %v2117, 0.25
  %v2150 = vmul.f32 %v2118, 0.25
  %v2151 = vmul.f32 %v2119, 0.25
  %v2152 = vadd.f32 %v2056, %v2120
  %v2153 = vadd.f32 %v2057, %v2121
  %v2154 = vadd.f32 %v2058, %v2122
  %v2155 = vadd.f32 %v2059, %v2123
  %v2156 = vadd.f32 %v2060, %v2124
  %v2157 = vadd.f32 %v2061, %v2125
  %v2158 = vadd.f32 %v2062, %v2126
  %v2159 = vadd.f32 %v2063, %v2127
  %v2160 = vadd.f32 %v2064, %v2128
  %v2161 = vadd.f32 %v2065, %v2129
  %v2162 = vadd.f32 %v2066, %v2130
  %v2163 = vadd.f32 %v2067, %v2131
  %v2164 = vadd.f32 %v2068, %v2132
  %v2165 = vadd.f32 %v2069, %v2133
  %v2166 = vadd.f32 %v2070, %v2134
  %v2167 = vadd.f32 %v2071, %v2135
  %v2168 = vadd.f32 %v2072, %v2136
  %v2169 = vadd.f32 %v2073, %v2137
  %v2170 = vadd.f32 %v2074, %v2138
  %v2171 = vadd.f32 %v2075, %v2139
  %v2172 = vadd.f32 %v2076, %v2140
  %v2173 = vadd.f32 %v2077, %v2141
  %v2174 = vadd.f32 %v2078, %v2142
  %v2175 = vadd.f32 %v2079, %v2143
  %v2176 = vadd.f32 %v2080, %v2144
  %v2177 = vadd.f32 %v2081, %v2145
  %v2178 = vadd.f32 %v2082, %v2146
  %v2179 = vadd.f32 %v2083, %v2147
  %v2180 = vadd.f32 %v2084, %v2148
  %v2181 = vadd.f32 %v2085, %v2149
  %v2182 = vadd.f32 %v2086, %v2150
  %v2183 = vadd.f32 %v2087, %v2151
  %2184 = vst.msk [vmem:[%s1 + $0x9] sm:$0x1] %vm455, %v2152
  %2185 = vst.msk [vmem:[%s1 + $0x29] sm:$0x1] %vm455, %v2153
  %2186 = vst.msk [vmem:[%s1 + $0x49] sm:$0x1] %vm455, %v2154
  %2187 = vst.msk [vmem:[%s1 + $0x69] sm:$0x1] %vm455, %v2155
  %2188 = vst.msk [vmem:[%s1 + $0x89] sm:$0x1] %vm455, %v2156
  %2189 = vst.msk [vmem:[%s1 + $0xa9] sm:$0x1] %vm455, %v2157
  %2190 = vst.msk [vmem:[%s1 + $0xc9] sm:$0x1] %vm455, %v2158
  %2191 = vst.msk [vmem:[%s1 + $0xe9] sm:$0x1] %vm455, %v2159
  %2192 = vst.msk [vmem:[%s1 + $0x109] sm:$0x1] %vm455, %v2160
  %2193 = vst.msk [vmem:[%s1 + $0x129] sm:$0x1] %vm455, %v2161
  %2194 = vst.msk [vmem:[%s1 + $0x149] sm:$0x1] %vm455, %v2162
  %2195 = vst.msk [vmem:[%s1 + $0x169] sm:$0x1] %vm455, %v2163
  %2196 = vst.msk [vmem:[%s1 + $0x189] sm:$0x1] %vm455, %v2164
  %2197 = vst.msk [vmem:[%s1 + $0x1a9] sm:$0x1] %vm455, %v2165
  %2198 = vst.msk [vmem:[%s1 + $0x1c9] sm:$0x1] %vm455, %v2166
  %2199 = vst.msk [vmem:[%s1 + $0x1e9] sm:$0x1] %vm455, %v2167
  %2200 = vst.msk [vmem:[%s1 + $0x209] sm:$0x1] %vm455, %v2168
  %2201 = vst.msk [vmem:[%s1 + $0x229] sm:$0x1] %vm455, %v2169
  %2202 = vst.msk [vmem:[%s1 + $0x249] sm:$0x1] %vm455, %v2170
  %2203 = vst.msk [vmem:[%s1 + $0x269] sm:$0x1] %vm455, %v2171
  %2204 = vst.msk [vmem:[%s1 + $0x289] sm:$0x1] %vm455, %v2172
  %2205 = vst.msk [vmem:[%s1 + $0x2a9] sm:$0x1] %vm455, %v2173
  %2206 = vst.msk [vmem:[%s1 + $0x2c9] sm:$0x1] %vm455, %v2174
  %2207 = vst.msk [vmem:[%s1 + $0x2e9] sm:$0x1] %vm455, %v2175
  %2208 = vst.msk [vmem:[%s1 + $0x309] sm:$0x1] %vm455, %v2176
  %2209 = vst.msk [vmem:[%s1 + $0x329] sm:$0x1] %vm455, %v2177
  %2210 = vst.msk [vmem:[%s1 + $0x349] sm:$0x1] %vm455, %v2178
  %2211 = vst.msk [vmem:[%s1 + $0x369] sm:$0x1] %vm455, %v2179
  %2212 = vst.msk [vmem:[%s1 + $0x389] sm:$0x1] %vm455, %v2180
  %2213 = vst.msk [vmem:[%s1 + $0x3a9] sm:$0x1] %vm455, %v2181
  %2214 = vst.msk [vmem:[%s1 + $0x3c9] sm:$0x1] %vm455, %v2182
  %2215 = vst.msk [vmem:[%s1 + $0x3e9] sm:$0x1] %vm455, %v2183
  %v2216 = vld [vmem:[#allocation2 + $0x4] sm:$0x1]
  %v2217 = vld [vmem:[#allocation2 + $0x14] sm:$0x1]
  %v2218 = vld [vmem:[#allocation2 + $0x24] sm:$0x1]
  %v2219 = vld [vmem:[#allocation2 + $0x34] sm:$0x1]
  %v2220 = vld [vmem:[#allocation2 + $0x44] sm:$0x1]
  %v2221 = vld [vmem:[#allocation2 + $0x54] sm:$0x1]
  %v2222 = vld [vmem:[#allocation2 + $0x64] sm:$0x1]
  %v2223 = vld [vmem:[#allocation2 + $0x74] sm:$0x1]
  %v2224 = vld [vmem:[#allocation2 + $0x84] sm:$0x1]
  %v2225 = vld [vmem:[#allocation2 + $0x94] sm:$0x1]
  %v2226 = vld [vmem:[#allocation2 + $0xa4] sm:$0x1]
  %v2227 = vld [vmem:[#allocation2 + $0xb4] sm:$0x1]
  %v2228 = vld [vmem:[#allocation2 + $0xc4] sm:$0x1]
  %v2229 = vld [vmem:[#allocation2 + $0xd4] sm:$0x1]
  %v2230 = vld [vmem:[#allocation2 + $0xe4] sm:$0x1]
  %v2231 = vld [vmem:[#allocation2 + $0xf4] sm:$0x1]
  %v2232 = vld [vmem:[#allocation2 + $0x104] sm:$0x1]
  %v2233 = vld [vmem:[#allocation2 + $0x114] sm:$0x1]
  %v2234 = vld [vmem:[#allocation2 + $0x124] sm:$0x1]
  %v2235 = vld [vmem:[#allocation2 + $0x134] sm:$0x1]
  %v2236 = vld [vmem:[#allocation2 + $0x144] sm:$0x1]
  %v2237 = vld [vmem:[#allocation2 + $0x154] sm:$0x1]
  %v2238 = vld [vmem:[#allocation2 + $0x164] sm:$0x1]
  %v2239 = vld [vmem:[#allocation2 + $0x174] sm:$0x1]
  %v2240 = vld [vmem:[#allocation2 + $0x184] sm:$0x1]
  %v2241 = vld [vmem:[#allocation2 + $0x194] sm:$0x1]
  %v2242 = vld [vmem:[#allocation2 + $0x1a4] sm:$0x1]
  %v2243 = vld [vmem:[#allocation2 + $0x1b4] sm:$0x1]
  %v2244 = vld [vmem:[#allocation2 + $0x1c4] sm:$0x1]
  %v2245 = vld [vmem:[#allocation2 + $0x1d4] sm:$0x1]
  %v2246 = vld [vmem:[#allocation2 + $0x1e4] sm:$0x1]
  %v2247 = vld [vmem:[#allocation2 + $0x1f4] sm:$0x1]
  %v2248 = vmul.f32 %v2216, 0.25
  %v2249 = vmul.f32 %v2217, 0.25
  %v2250 = vmul.f32 %v2218, 0.25
  %v2251 = vmul.f32 %v2219, 0.25
  %v2252 = vmul.f32 %v2220, 0.25
  %v2253 = vmul.f32 %v2221, 0.25
  %v2254 = vmul.f32 %v2222, 0.25
  %v2255 = vmul.f32 %v2223, 0.25
  %v2256 = vmul.f32 %v2224, 0.25
  %v2257 = vmul.f32 %v2225, 0.25
  %v2258 = vmul.f32 %v2226, 0.25
  %v2259 = vmul.f32 %v2227, 0.25
  %v2260 = vmul.f32 %v2228, 0.25
  %v2261 = vmul.f32 %v2229, 0.25
  %v2262 = vmul.f32 %v2230, 0.25
  %v2263 = vmul.f32 %v2231, 0.25
  %v2264 = vmul.f32 %v2232, 0.25
  %v2265 = vmul.f32 %v2233, 0.25
  %v2266 = vmul.f32 %v2234, 0.25
  %v2267 = vmul.f32 %v2235, 0.25
  %v2268 = vmul.f32 %v2236, 0.25
  %v2269 = vmul.f32 %v2237, 0.25
  %v2270 = vmul.f32 %v2238, 0.25
  %v2271 = vmul.f32 %v2239, 0.25
  %v2272 = vmul.f32 %v2240, 0.25
  %v2273 = vmul.f32 %v2241, 0.25
  %v2274 = vmul.f32 %v2242, 0.25
  %v2275 = vmul.f32 %v2243, 0.25
  %v2276 = vmul.f32 %v2244, 0.25
  %v2277 = vmul.f32 %v2245, 0.25
  %v2278 = vmul.f32 %v2246, 0.25
  %v2279 = vmul.f32 %v2247, 0.25
  %v2280 = vld [vmem:[#allocation2 + $0x5] sm:$0x1]
  %v2281 = vld [vmem:[#allocation2 + $0x15] sm:$0x1]
  %v2282 = vld [vmem:[#allocation2 + $0x25] sm:$0x1]
  %v2283 = vld [vmem:[#allocation2 + $0x35] sm:$0x1]
  %v2284 = vld [vmem:[#allocation2 + $0x45] sm:$0x1]
  %v2285 = vld [vmem:[#allocation2 + $0x55] sm:$0x1]
  %v2286 = vld [vmem:[#allocation2 + $0x65] sm:$0x1]
  %v2287 = vld [vmem:[#allocation2 + $0x75] sm:$0x1]
  %v2288 = vld [vmem:[#allocation2 + $0x85] sm:$0x1]
  %v2289 = vld [vmem:[#allocation2 + $0x95] sm:$0x1]
  %v2290 = vld [vmem:[#allocation2 + $0xa5] sm:$0x1]
  %v2291 = vld [vmem:[#allocation2 + $0xb5] sm:$0x1]
  %v2292 = vld [vmem:[#allocation2 + $0xc5] sm:$0x1]
  %v2293 = vld [vmem:[#allocation2 + $0xd5] sm:$0x1]
  %v2294 = vld [vmem:[#allocation2 + $0xe5] sm:$0x1]
  %v2295 = vld [vmem:[#allocation2 + $0xf5] sm:$0x1]
  %v2296 = vld [vmem:[#allocation2 + $0x105] sm:$0x1]
  %v2297 = vld [vmem:[#allocation2 + $0x115] sm:$0x1]
  %v2298 = vld [vmem:[#allocation2 + $0x125] sm:$0x1]
  %v2299 = vld [vmem:[#allocation2 + $0x135] sm:$0x1]
  %v2300 = vld [vmem:[#allocation2 + $0x145] sm:$0x1]
  %v2301 = vld [vmem:[#allocation2 + $0x155] sm:$0x1]
  %v2302 = vld [vmem:[#allocation2 + $0x165] sm:$0x1]
  %v2303 = vld [vmem:[#allocation2 + $0x175] sm:$0x1]
  %v2304 = vld [vmem:[#allocation2 + $0x185] sm:$0x1]
  %v2305 = vld [vmem:[#allocation2 + $0x195] sm:$0x1]
  %v2306 = vld [vmem:[#allocation2 + $0x1a5] sm:$0x1]
  %v2307 = vld [vmem:[#allocation2 + $0x1b5] sm:$0x1]
  %v2308 = vld [vmem:[#allocation2 + $0x1c5] sm:$0x1]
  %v2309 = vld [vmem:[#allocation2 + $0x1d5] sm:$0x1]
  %v2310 = vld [vmem:[#allocation2 + $0x1e5] sm:$0x1]
  %v2311 = vld [vmem:[#allocation2 + $0x1f5] sm:$0x1]
  %v2312 = vmul.f32 %v2280, 0.75
  %v2313 = vmul.f32 %v2281, 0.75
  %v2314 = vmul.f32 %v2282, 0.75
  %v2315 = vmul.f32 %v2283, 0.75
  %v2316 = vmul.f32 %v2284, 0.75
  %v2317 = vmul.f32 %v2285, 0.75
  %v2318 = vmul.f32 %v2286, 0.75
  %v2319 = vmul.f32 %v2287, 0.75
  %v2320 = vmul.f32 %v2288, 0.75
  %v2321 = vmul.f32 %v2289, 0.75
  %v2322 = vmul.f32 %v2290, 0.75
  %v2323 = vmul.f32 %v2291, 0.75
  %v2324 = vmul.f32 %v2292, 0.75
  %v2325 = vmul.f32 %v2293, 0.75
  %v2326 = vmul.f32 %v2294, 0.75
  %v2327 = vmul.f32 %v2295, 0.75
  %v2328 = vmul.f32 %v2296, 0.75
  %v2329 = vmul.f32 %v2297, 0.75
  %v2330 = vmul.f32 %v2298, 0.75
  %v2331 = vmul.f32 %v2299, 0.75
  %v2332 = vmul.f32 %v2300, 0.75
  %v2333 = vmul.f32 %v2301, 0.75
  %v2334 = vmul.f32 %v2302, 0.75
  %v2335 = vmul.f32 %v2303, 0.75
  %v2336 = vmul.f32 %v2304, 0.75
  %v2337 = vmul.f32 %v2305, 0.75
  %v2338 = vmul.f32 %v2306, 0.75
  %v2339 = vmul.f32 %v2307, 0.75
  %v2340 = vmul.f32 %v2308, 0.75
  %v2341 = vmul.f32 %v2309, 0.75
  %v2342 = vmul.f32 %v2310, 0.75
  %v2343 = vmul.f32 %v2311, 0.75
  %v2344 = vadd.f32 %v2248, %v2312
  %v2345 = vadd.f32 %v2249, %v2313
  %v2346 = vadd.f32 %v2250, %v2314
  %v2347 = vadd.f32 %v2251, %v2315
  %v2348 = vadd.f32 %v2252, %v2316
  %v2349 = vadd.f32 %v2253, %v2317
  %v2350 = vadd.f32 %v2254, %v2318
  %v2351 = vadd.f32 %v2255, %v2319
  %v2352 = vadd.f32 %v2256, %v2320
  %v2353 = vadd.f32 %v2257, %v2321
  %v2354 = vadd.f32 %v2258, %v2322
  %v2355 = vadd.f32 %v2259, %v2323
  %v2356 = vadd.f32 %v2260, %v2324
  %v2357 = vadd.f32 %v2261, %v2325
  %v2358 = vadd.f32 %v2262, %v2326
  %v2359 = vadd.f32 %v2263, %v2327
  %v2360 = vadd.f32 %v2264, %v2328
  %v2361 = vadd.f32 %v2265, %v2329
  %v2362 = vadd.f32 %v2266, %v2330
  %v2363 = vadd.f32 %v2267, %v2331
  %v2364 = vadd.f32 %v2268, %v2332
  %v2365 = vadd.f32 %v2269, %v2333
  %v2366 = vadd.f32 %v2270, %v2334
  %v2367 = vadd.f32 %v2271, %v2335
  %v2368 = vadd.f32 %v2272, %v2336
  %v2369 = vadd.f32 %v2273, %v2337
  %v2370 = vadd.f32 %v2274, %v2338
  %v2371 = vadd.f32 %v2275, %v2339
  %v2372 = vadd.f32 %v2276, %v2340
  %v2373 = vadd.f32 %v2277, %v2341
  %v2374 = vadd.f32 %v2278, %v2342
  %v2375 = vadd.f32 %v2279, %v2343
  %2376 = vst.msk [vmem:[%s1 + $0xa] sm:$0x1] %vm455, %v2344
  %2377 = vst.msk [vmem:[%s1 + $0x2a] sm:$0x1] %vm455, %v2345
  %2378 = vst.msk [vmem:[%s1 + $0x4a] sm:$0x1] %vm455, %v2346
  %2379 = vst.msk [vmem:[%s1 + $0x6a] sm:$0x1] %vm455, %v2347
  %2380 = vst.msk [vmem:[%s1 + $0x8a] sm:$0x1] %vm455, %v2348
  %2381 = vst.msk [vmem:[%s1 + $0xaa] sm:$0x1] %vm455, %v2349
  %2382 = vst.msk [vmem:[%s1 + $0xca] sm:$0x1] %vm455, %v2350
  %2383 = vst.msk [vmem:[%s1 + $0xea] sm:$0x1] %vm455, %v2351
  %2384 = vst.msk [vmem:[%s1 + $0x10a] sm:$0x1] %vm455, %v2352
  %2385 = vst.msk [vmem:[%s1 + $0x12a] sm:$0x1] %vm455, %v2353
  %2386 = vst.msk [vmem:[%s1 + $0x14a] sm:$0x1] %vm455, %v2354
  %2387 = vst.msk [vmem:[%s1 + $0x16a] sm:$0x1] %vm455, %v2355
  %2388 = vst.msk [vmem:[%s1 + $0x18a] sm:$0x1] %vm455, %v2356
  %2389 = vst.msk [vmem:[%s1 + $0x1aa] sm:$0x1] %vm455, %v2357
  %2390 = vst.msk [vmem:[%s1 + $0x1ca] sm:$0x1] %vm455, %v2358
  %2391 = vst.msk [vmem:[%s1 + $0x1ea] sm:$0x1] %vm455, %v2359
  %2392 = vst.msk [vmem:[%s1 + $0x20a] sm:$0x1] %vm455, %v2360
  %2393 = vst.msk [vmem:[%s1 + $0x22a] sm:$0x1] %vm455, %v2361
  %2394 = vst.msk [vmem:[%s1 + $0x24a] sm:$0x1] %vm455, %v2362
  %2395 = vst.msk [vmem:[%s1 + $0x26a] sm:$0x1] %vm455, %v2363
  %2396 = vst.msk [vmem:[%s1 + $0x28a] sm:$0x1] %vm455, %v2364
  %2397 = vst.msk [vmem:[%s1 + $0x2aa] sm:$0x1] %vm455, %v2365
  %2398 = vst.msk [vmem:[%s1 + $0x2ca] sm:$0x1] %vm455, %v2366
  %2399 = vst.msk [vmem:[%s1 + $0x2ea] sm:$0x1] %vm455, %v2367
  %2400 = vst.msk [vmem:[%s1 + $0x30a] sm:$0x1] %vm455, %v2368
  %2401 = vst.msk [vmem:[%s1 + $0x32a] sm:$0x1] %vm455, %v2369
  %2402 = vst.msk [vmem:[%s1 + $0x34a] sm:$0x1] %vm455, %v2370
  %2403 = vst.msk [vmem:[%s1 + $0x36a] sm:$0x1] %vm455, %v2371
  %2404 = vst.msk [vmem:[%s1 + $0x38a] sm:$0x1] %vm455, %v2372
  %2405 = vst.msk [vmem:[%s1 + $0x3aa] sm:$0x1] %vm455, %v2373
  %2406 = vst.msk [vmem:[%s1 + $0x3ca] sm:$0x1] %vm455, %v2374
  %2407 = vst.msk [vmem:[%s1 + $0x3ea] sm:$0x1] %vm455, %v2375
  %v2408 = vld [vmem:[#allocation2 + $0x5] sm:$0x1]
  %v2409 = vld [vmem:[#allocation2 + $0x15] sm:$0x1]
  %v2410 = vld [vmem:[#allocation2 + $0x25] sm:$0x1]
  %v2411 = vld [vmem:[#allocation2 + $0x35] sm:$0x1]
  %v2412 = vld [vmem:[#allocation2 + $0x45] sm:$0x1]
  %v2413 = vld [vmem:[#allocation2 + $0x55] sm:$0x1]
  %v2414 = vld [vmem:[#allocation2 + $0x65] sm:$0x1]
  %v2415 = vld [vmem:[#allocation2 + $0x75] sm:$0x1]
  %v2416 = vld [vmem:[#allocation2 + $0x85] sm:$0x1]
  %v2417 = vld [vmem:[#allocation2 + $0x95] sm:$0x1]
  %v2418 = vld [vmem:[#allocation2 + $0xa5] sm:$0x1]
  %v2419 = vld [vmem:[#allocation2 + $0xb5] sm:$0x1]
  %v2420 = vld [vmem:[#allocation2 + $0xc5] sm:$0x1]
  %v2421 = vld [vmem:[#allocation2 + $0xd5] sm:$0x1]
  %v2422 = vld [vmem:[#allocation2 + $0xe5] sm:$0x1]
  %v2423 = vld [vmem:[#allocation2 + $0xf5] sm:$0x1]
  %v2424 = vld [vmem:[#allocation2 + $0x105] sm:$0x1]
  %v2425 = vld [vmem:[#allocation2 + $0x115] sm:$0x1]
  %v2426 = vld [vmem:[#allocation2 + $0x125] sm:$0x1]
  %v2427 = vld [vmem:[#allocation2 + $0x135] sm:$0x1]
  %v2428 = vld [vmem:[#allocation2 + $0x145] sm:$0x1]
  %v2429 = vld [vmem:[#allocation2 + $0x155] sm:$0x1]
  %v2430 = vld [vmem:[#allocation2 + $0x165] sm:$0x1]
  %v2431 = vld [vmem:[#allocation2 + $0x175] sm:$0x1]
  %v2432 = vld [vmem:[#allocation2 + $0x185] sm:$0x1]
  %v2433 = vld [vmem:[#allocation2 + $0x195] sm:$0x1]
  %v2434 = vld [vmem:[#allocation2 + $0x1a5] sm:$0x1]
  %v2435 = vld [vmem:[#allocation2 + $0x1b5] sm:$0x1]
  %v2436 = vld [vmem:[#allocation2 + $0x1c5] sm:$0x1]
  %v2437 = vld [vmem:[#allocation2 + $0x1d5] sm:$0x1]
  %v2438 = vld [vmem:[#allocation2 + $0x1e5] sm:$0x1]
  %v2439 = vld [vmem:[#allocation2 + $0x1f5] sm:$0x1]
  %v2440 = vmul.f32 %v2408, 0.75
  %v2441 = vmul.f32 %v2409, 0.75
  %v2442 = vmul.f32 %v2410, 0.75
  %v2443 = vmul.f32 %v2411, 0.75
  %v2444 = vmul.f32 %v2412, 0.75
  %v2445 = vmul.f32 %v2413, 0.75
  %v2446 = vmul.f32 %v2414, 0.75
  %v2447 = vmul.f32 %v2415, 0.75
  %v2448 = vmul.f32 %v2416, 0.75
  %v2449 = vmul.f32 %v2417, 0.75
  %v2450 = vmul.f32 %v2418, 0.75
  %v2451 = vmul.f32 %v2419, 0.75
  %v2452 = vmul.f32 %v2420, 0.75
  %v2453 = vmul.f32 %v2421, 0.75
  %v2454 = vmul.f32 %v2422, 0.75
  %v2455 = vmul.f32 %v2423, 0.75
  %v2456 = vmul.f32 %v2424, 0.75
  %v2457 = vmul.f32 %v2425, 0.75
  %v2458 = vmul.f32 %v2426, 0.75
  %v2459 = vmul.f32 %v2427, 0.75
  %v2460 = vmul.f32 %v2428, 0.75
  %v2461 = vmul.f32 %v2429, 0.75
  %v2462 = vmul.f32 %v2430, 0.75
  %v2463 = vmul.f32 %v2431, 0.75
  %v2464 = vmul.f32 %v2432, 0.75
  %v2465 = vmul.f32 %v2433, 0.75
  %v2466 = vmul.f32 %v2434, 0.75
  %v2467 = vmul.f32 %v2435, 0.75
  %v2468 = vmul.f32 %v2436, 0.75
  %v2469 = vmul.f32 %v2437, 0.75
  %v2470 = vmul.f32 %v2438, 0.75
  %v2471 = vmul.f32 %v2439, 0.75
  %v2472 = vld [vmem:[#allocation2 + $0x6] sm:$0x1]
  %v2473 = vld [vmem:[#allocation2 + $0x16] sm:$0x1]
  %v2474 = vld [vmem:[#allocation2 + $0x26] sm:$0x1]
  %v2475 = vld [vmem:[#allocation2 + $0x36] sm:$0x1]
  %v2476 = vld [vmem:[#allocation2 + $0x46] sm:$0x1]
  %v2477 = vld [vmem:[#allocation2 + $0x56] sm:$0x1]
  %v2478 = vld [vmem:[#allocation2 + $0x66] sm:$0x1]
  %v2479 = vld [vmem:[#allocation2 + $0x76] sm:$0x1]
  %v2480 = vld [vmem:[#allocation2 + $0x86] sm:$0x1]
  %v2481 = vld [vmem:[#allocation2 + $0x96] sm:$0x1]
  %v2482 = vld [vmem:[#allocation2 + $0xa6] sm:$0x1]
  %v2483 = vld [vmem:[#allocation2 + $0xb6] sm:$0x1]
  %v2484 = vld [vmem:[#allocation2 + $0xc6] sm:$0x1]
  %v2485 = vld [vmem:[#allocation2 + $0xd6] sm:$0x1]
  %v2486 = vld [vmem:[#allocation2 + $0xe6] sm:$0x1]
  %v2487 = vld [vmem:[#allocation2 + $0xf6] sm:$0x1]
  %v2488 = vld [vmem:[#allocation2 + $0x106] sm:$0x1]
  %v2489 = vld [vmem:[#allocation2 + $0x116] sm:$0x1]
  %v2490 = vld [vmem:[#allocation2 + $0x126] sm:$0x1]
  %v2491 = vld [vmem:[#allocation2 + $0x136] sm:$0x1]
  %v2492 = vld [vmem:[#allocation2 + $0x146] sm:$0x1]
  %v2493 = vld [vmem:[#allocation2 + $0x156] sm:$0x1]
  %v2494 = vld [vmem:[#allocation2 + $0x166] sm:$0x1]
  %v2495 = vld [vmem:[#allocation2 + $0x176] sm:$0x1]
  %v2496 = vld [vmem:[#allocation2 + $0x186] sm:$0x1]
  %v2497 = vld [vmem:[#allocation2 + $0x196] sm:$0x1]
  %v2498 = vld [vmem:[#allocation2 + $0x1a6] sm:$0x1]
  %v2499 = vld [vmem:[#allocation2 + $0x1b6] sm:$0x1]
  %v2500 = vld [vmem:[#allocation2 + $0x1c6] sm:$0x1]
  %v2501 = vld [vmem:[#allocation2 + $0x1d6] sm:$0x1]
  %v2502 = vld [vmem:[#allocation2 + $0x1e6] sm:$0x1]
  %v2503 = vld [vmem:[#allocation2 + $0x1f6] sm:$0x1]
  %v2504 = vmul.f32 %v2472, 0.25
  %v2505 = vmul.f32 %v2473, 0.25
  %v2506 = vmul.f32 %v2474, 0.25
  %v2507 = vmul.f32 %v2475, 0.25
  %v2508 = vmul.f32 %v2476, 0.25
  %v2509 = vmul.f32 %v2477, 0.25
  %v2510 = vmul.f32 %v2478, 0.25
  %v2511 = vmul.f32 %v2479, 0.25
  %v2512 = vmul.f32 %v2480, 0.25
  %v2513 = vmul.f32 %v2481, 0.25
  %v2514 = vmul.f32 %v2482, 0.25
  %v2515 = vmul.f32 %v2483, 0.25
  %v2516 = vmul.f32 %v2484, 0.25
  %v2517 = vmul.f32 %v2485, 0.25
  %v2518 = vmul.f32 %v2486, 0.25
  %v2519 = vmul.f32 %v2487, 0.25
  %v2520 = vmul.f32 %v2488, 0.25
  %v2521 = vmul.f32 %v2489, 0.25
  %v2522 = vmul.f32 %v2490, 0.25
  %v2523 = vmul.f32 %v2491, 0.25
  %v2524 = vmul.f32 %v2492, 0.25
  %v2525 = vmul.f32 %v2493, 0.25
  %v2526 = vmul.f32 %v2494, 0.25
  %v2527 = vmul.f32 %v2495, 0.25
  %v2528 = vmul.f32 %v2496, 0.25
  %v2529 = vmul.f32 %v2497, 0.25
  %v2530 = vmul.f32 %v2498, 0.25
  %v2531 = vmul.f32 %v2499, 0.25
  %v2532 = vmul.f32 %v2500, 0.25
  %v2533 = vmul.f32 %v2501, 0.25
  %v2534 = vmul.f32 %v2502, 0.25
  %v2535 = vmul.f32 %v2503, 0.25
  %v2536 = vadd.f32 %v2440, %v2504
  %v2537 = vadd.f32 %v2441, %v2505
  %v2538 = vadd.f32 %v2442, %v2506
  %v2539 = vadd.f32 %v2443, %v2507
  %v2540 = vadd.f32 %v2444, %v2508
  %v2541 = vadd.f32 %v2445, %v2509
  %v2542 = vadd.f32 %v2446, %v2510
  %v2543 = vadd.f32 %v2447, %v2511
  %v2544 = vadd.f32 %v2448, %v2512
  %v2545 = vadd.f32 %v2449, %v2513
  %v2546 = vadd.f32 %v2450, %v2514
  %v2547 = vadd.f32 %v2451, %v2515
  %v2548 = vadd.f32 %v2452, %v2516
  %v2549 = vadd.f32 %v2453, %v2517
  %v2550 = vadd.f32 %v2454, %v2518
  %v2551 = vadd.f32 %v2455, %v2519
  %v2552 = vadd.f32 %v2456, %v2520
  %v2553 = vadd.f32 %v2457, %v2521
  %v2554 = vadd.f32 %v2458, %v2522
  %v2555 = vadd.f32 %v2459, %v2523
  %v2556 = vadd.f32 %v2460, %v2524
  %v2557 = vadd.f32 %v2461, %v2525
  %v2558 = vadd.f32 %v2462, %v2526
  %v2559 = vadd.f32 %v2463, %v2527
  %v2560 = vadd.f32 %v2464, %v2528
  %v2561 = vadd.f32 %v2465, %v2529
  %v2562 = vadd.f32 %v2466, %v2530
  %v2563 = vadd.f32 %v2467, %v2531
  %v2564 = vadd.f32 %v2468, %v2532
  %v2565 = vadd.f32 %v2469, %v2533
  %v2566 = vadd.f32 %v2470, %v2534
  %v2567 = vadd.f32 %v2471, %v2535
  %2568 = vst.msk [vmem:[%s1 + $0xb] sm:$0x1] %vm455, %v2536
  %2569 = vst.msk [vmem:[%s1 + $0x2b] sm:$0x1] %vm455, %v2537
  %2570 = vst.msk [vmem:[%s1 + $0x4b] sm:$0x1] %vm455, %v2538
  %2571 = vst.msk [vmem:[%s1 + $0x6b] sm:$0x1] %vm455, %v2539
  %2572 = vst.msk [vmem:[%s1 + $0x8b] sm:$0x1] %vm455, %v2540
  %2573 = vst.msk [vmem:[%s1 + $0xab] sm:$0x1] %vm455, %v2541
  %2574 = vst.msk [vmem:[%s1 + $0xcb] sm:$0x1] %vm455, %v2542
  %2575 = vst.msk [vmem:[%s1 + $0xeb] sm:$0x1] %vm455, %v2543
  %2576 = vst.msk [vmem:[%s1 + $0x10b] sm:$0x1] %vm455, %v2544
  %2577 = vst.msk [vmem:[%s1 + $0x12b] sm:$0x1] %vm455, %v2545
  %2578 = vst.msk [vmem:[%s1 + $0x14b] sm:$0x1] %vm455, %v2546
  %2579 = vst.msk [vmem:[%s1 + $0x16b] sm:$0x1] %vm455, %v2547
  %2580 = vst.msk [vmem:[%s1 + $0x18b] sm:$0x1] %vm455, %v2548
  %2581 = vst.msk [vmem:[%s1 + $0x1ab] sm:$0x1] %vm455, %v2549
  %2582 = vst.msk [vmem:[%s1 + $0x1cb] sm:$0x1] %vm455, %v2550
  %2583 = vst.msk [vmem:[%s1 + $0x1eb] sm:$0x1] %vm455, %v2551
  %2584 = vst.msk [vmem:[%s1 + $0x20b] sm:$0x1] %vm455, %v2552
  %2585 = vst.msk [vmem:[%s1 + $0x22b] sm:$0x1] %vm455, %v2553
  %2586 = vst.msk [vmem:[%s1 + $0x24b] sm:$0x1] %vm455, %v2554
  %2587 = vst.msk [vmem:[%s1 + $0x26b] sm:$0x1] %vm455, %v2555
  %2588 = vst.msk [vmem:[%s1 + $0x28b] sm:$0x1] %vm455, %v2556
  %2589 = vst.msk [vmem:[%s1 + $0x2ab] sm:$0x1] %vm455, %v2557
  %2590 = vst.msk [vmem:[%s1 + $0x2cb] sm:$0x1] %vm455, %v2558
  %2591 = vst.msk [vmem:[%s1 + $0x2eb] sm:$0x1] %vm455, %v2559
  %2592 = vst.msk [vmem:[%s1 + $0x30b] sm:$0x1] %vm455, %v2560
  %2593 = vst.msk [vmem:[%s1 + $0x32b] sm:$0x1] %vm455, %v2561
  %2594 = vst.msk [vmem:[%s1 + $0x34b] sm:$0x1] %vm455, %v2562
  %2595 = vst.msk [vmem:[%s1 + $0x36b] sm:$0x1] %vm455, %v2563
  %2596 = vst.msk [vmem:[%s1 + $0x38b] sm:$0x1] %vm455, %v2564
  %2597 = vst.msk [vmem:[%s1 + $0x3ab] sm:$0x1] %vm455, %v2565
  %2598 = vst.msk [vmem:[%s1 + $0x3cb] sm:$0x1] %vm455, %v2566
  %2599 = vst.msk [vmem:[%s1 + $0x3eb] sm:$0x1] %vm455, %v2567
  %v2600 = vld [vmem:[#allocation2 + $0x5] sm:$0x1]
  %v2601 = vld [vmem:[#allocation2 + $0x15] sm:$0x1]
  %v2602 = vld [vmem:[#allocation2 + $0x25] sm:$0x1]
  %v2603 = vld [vmem:[#allocation2 + $0x35] sm:$0x1]
  %v2604 = vld [vmem:[#allocation2 + $0x45] sm:$0x1]
  %v2605 = vld [vmem:[#allocation2 + $0x55] sm:$0x1]
  %v2606 = vld [vmem:[#allocation2 + $0x65] sm:$0x1]
  %v2607 = vld [vmem:[#allocation2 + $0x75] sm:$0x1]
  %v2608 = vld [vmem:[#allocation2 + $0x85] sm:$0x1]
  %v2609 = vld [vmem:[#allocation2 + $0x95] sm:$0x1]
  %v2610 = vld [vmem:[#allocation2 + $0xa5] sm:$0x1]
  %v2611 = vld [vmem:[#allocation2 + $0xb5] sm:$0x1]
  %v2612 = vld [vmem:[#allocation2 + $0xc5] sm:$0x1]
  %v2613 = vld [vmem:[#allocation2 + $0xd5] sm:$0x1]
  %v2614 = vld [vmem:[#allocation2 + $0xe5] sm:$0x1]
  %v2615 = vld [vmem:[#allocation2 + $0xf5] sm:$0x1]
  %v2616 = vld [vmem:[#allocation2 + $0x105] sm:$0x1]
  %v2617 = vld [vmem:[#allocation2 + $0x115] sm:$0x1]
  %v2618 = vld [vmem:[#allocation2 + $0x125] sm:$0x1]
  %v2619 = vld [vmem:[#allocation2 + $0x135] sm:$0x1]
  %v2620 = vld [vmem:[#allocation2 + $0x145] sm:$0x1]
  %v2621 = vld [vmem:[#allocation2 + $0x155] sm:$0x1]
  %v2622 = vld [vmem:[#allocation2 + $0x165] sm:$0x1]
  %v2623 = vld [vmem:[#allocation2 + $0x175] sm:$0x1]
  %v2624 = vld [vmem:[#allocation2 + $0x185] sm:$0x1]
  %v2625 = vld [vmem:[#allocation2 + $0x195] sm:$0x1]
  %v2626 = vld [vmem:[#allocation2 + $0x1a5] sm:$0x1]
  %v2627 = vld [vmem:[#allocation2 + $0x1b5] sm:$0x1]
  %v2628 = vld [vmem:[#allocation2 + $0x1c5] sm:$0x1]
  %v2629 = vld [vmem:[#allocation2 + $0x1d5] sm:$0x1]
  %v2630 = vld [vmem:[#allocation2 + $0x1e5] sm:$0x1]
  %v2631 = vld [vmem:[#allocation2 + $0x1f5] sm:$0x1]
  %v2632 = vmul.f32 %v2600, 0.25
  %v2633 = vmul.f32 %v2601, 0.25
  %v2634 = vmul.f32 %v2602, 0.25
  %v2635 = vmul.f32 %v2603, 0.25
  %v2636 = vmul.f32 %v2604, 0.25
  %v2637 = vmul.f32 %v2605, 0.25
  %v2638 = vmul.f32 %v2606, 0.25
  %v2639 = vmul.f32 %v2607, 0.25
  %v2640 = vmul.f32 %v2608, 0.25
  %v2641 = vmul.f32 %v2609, 0.25
  %v2642 = vmul.f32 %v2610, 0.25
  %v2643 = vmul.f32 %v2611, 0.25
  %v2644 = vmul.f32 %v2612, 0.25
  %v2645 = vmul.f32 %v2613, 0.25
  %v2646 = vmul.f32 %v2614, 0.25
  %v2647 = vmul.f32 %v2615, 0.25
  %v2648 = vmul.f32 %v2616, 0.25
  %v2649 = vmul.f32 %v2617, 0.25
  %v2650 = vmul.f32 %v2618, 0.25
  %v2651 = vmul.f32 %v2619, 0.25
  %v2652 = vmul.f32 %v2620, 0.25
  %v2653 = vmul.f32 %v2621, 0.25
  %v2654 = vmul.f32 %v2622, 0.25
  %v2655 = vmul.f32 %v2623, 0.25
  %v2656 = vmul.f32 %v2624, 0.25
  %v2657 = vmul.f32 %v2625, 0.25
  %v2658 = vmul.f32 %v2626, 0.25
  %v2659 = vmul.f32 %v2627, 0.25
  %v2660 = vmul.f32 %v2628, 0.25
  %v2661 = vmul.f32 %v2629, 0.25
  %v2662 = vmul.f32 %v2630, 0.25
  %v2663 = vmul.f32 %v2631, 0.25
  %v2664 = vld [vmem:[#allocation2 + $0x6] sm:$0x1]
  %v2665 = vld [vmem:[#allocation2 + $0x16] sm:$0x1]
  %v2666 = vld [vmem:[#allocation2 + $0x26] sm:$0x1]
  %v2667 = vld [vmem:[#allocation2 + $0x36] sm:$0x1]
  %v2668 = vld [vmem:[#allocation2 + $0x46] sm:$0x1]
  %v2669 = vld [vmem:[#allocation2 + $0x56] sm:$0x1]
  %v2670 = vld [vmem:[#allocation2 + $0x66] sm:$0x1]
  %v2671 = vld [vmem:[#allocation2 + $0x76] sm:$0x1]
  %v2672 = vld [vmem:[#allocation2 + $0x86] sm:$0x1]
  %v2673 = vld [vmem:[#allocation2 + $0x96] sm:$0x1]
  %v2674 = vld [vmem:[#allocation2 + $0xa6] sm:$0x1]
  %v2675 = vld [vmem:[#allocation2 + $0xb6] sm:$0x1]
  %v2676 = vld [vmem:[#allocation2 + $0xc6] sm:$0x1]
  %v2677 = vld [vmem:[#allocation2 + $0xd6] sm:$0x1]
  %v2678 = vld [vmem:[#allocation2 + $0xe6] sm:$0x1]
  %v2679 = vld [vmem:[#allocation2 + $0xf6] sm:$0x1]
  %v2680 = vld [vmem:[#allocation2 + $0x106] sm:$0x1]
  %v2681 = vld [vmem:[#allocation2 + $0x116] sm:$0x1]
  %v2682 = vld [vmem:[#allocation2 + $0x126] sm:$0x1]
  %v2683 = vld [vmem:[#allocation2 + $0x136] sm:$0x1]
  %v2684 = vld [vmem:[#allocation2 + $0x146] sm:$0x1]
  %v2685 = vld [vmem:[#allocation2 + $0x156] sm:$0x1]
  %v2686 = vld [vmem:[#allocation2 + $0x166] sm:$0x1]
  %v2687 = vld [vmem:[#allocation2 + $0x176] sm:$0x1]
  %v2688 = vld [vmem:[#allocation2 + $0x186] sm:$0x1]
  %v2689 = vld [vmem:[#allocation2 + $0x196] sm:$0x1]
  %v2690 = vld [vmem:[#allocation2 + $0x1a6] sm:$0x1]
  %v2691 = vld [vmem:[#allocation2 + $0x1b6] sm:$0x1]
  %v2692 = vld [vmem:[#allocation2 + $0x1c6] sm:$0x1]
  %v2693 = vld [vmem:[#allocation2 + $0x1d6] sm:$0x1]
  %v2694 = vld [vmem:[#allocation2 + $0x1e6] sm:$0x1]
  %v2695 = vld [vmem:[#allocation2 + $0x1f6] sm:$0x1]
  %v2696 = vmul.f32 %v2664, 0.75
  %v2697 = vmul.f32 %v2665, 0.75
  %v2698 = vmul.f32 %v2666, 0.75
  %v2699 = vmul.f32 %v2667, 0.75
  %v2700 = vmul.f32 %v2668, 0.75
  %v2701 = vmul.f32 %v2669, 0.75
  %v2702 = vmul.f32 %v2670, 0.75
  %v2703 = vmul.f32 %v2671, 0.75
  %v2704 = vmul.f32 %v2672, 0.75
  %v2705 = vmul.f32 %v2673, 0.75
  %v2706 = vmul.f32 %v2674, 0.75
  %v2707 = vmul.f32 %v2675, 0.75
  %v2708 = vmul.f32 %v2676, 0.75
  %v2709 = vmul.f32 %v2677, 0.75
  %v2710 = vmul.f32 %v2678, 0.75
  %v2711 = vmul.f32 %v2679, 0.75
  %v2712 = vmul.f32 %v2680, 0.75
  %v2713 = vmul.f32 %v2681, 0.75
  %v2714 = vmul.f32 %v2682, 0.75
  %v2715 = vmul.f32 %v2683, 0.75
  %v2716 = vmul.f32 %v2684, 0.75
  %v2717 = vmul.f32 %v2685, 0.75
  %v2718 = vmul.f32 %v2686, 0.75
  %v2719 = vmul.f32 %v2687, 0.75
  %v2720 = vmul.f32 %v2688, 0.75
  %v2721 = vmul.f32 %v2689, 0.75
  %v2722 = vmul.f32 %v2690, 0.75
  %v2723 = vmul.f32 %v2691, 0.75
  %v2724 = vmul.f32 %v2692, 0.75
  %v2725 = vmul.f32 %v2693, 0.75
  %v2726 = vmul.f32 %v2694, 0.75
  %v2727 = vmul.f32 %v2695, 0.75
  %v2728 = vadd.f32 %v2632, %v2696
  %v2729 = vadd.f32 %v2633, %v2697
  %v2730 = vadd.f32 %v2634, %v2698
  %v2731 = vadd.f32 %v2635, %v2699
  %v2732 = vadd.f32 %v2636, %v2700
  %v2733 = vadd.f32 %v2637, %v2701
  %v2734 = vadd.f32 %v2638, %v2702
  %v2735 = vadd.f32 %v2639, %v2703
  %v2736 = vadd.f32 %v2640, %v2704
  %v2737 = vadd.f32 %v2641, %v2705
  %v2738 = vadd.f32 %v2642, %v2706
  %v2739 = vadd.f32 %v2643, %v2707
  %v2740 = vadd.f32 %v2644, %v2708
  %v2741 = vadd.f32 %v2645, %v2709
  %v2742 = vadd.f32 %v2646, %v2710
  %v2743 = vadd.f32 %v2647, %v2711
  %v2744 = vadd.f32 %v2648, %v2712
  %v2745 = vadd.f32 %v2649, %v2713
  %v2746 = vadd.f32 %v2650, %v2714
  %v2747 = vadd.f32 %v2651, %v2715
  %v2748 = vadd.f32 %v2652, %v2716
  %v2749 = vadd.f32 %v2653, %v2717
  %v2750 = vadd.f32 %v2654, %v2718
  %v2751 = vadd.f32 %v2655, %v2719
  %v2752 = vadd.f32 %v2656, %v2720
  %v2753 = vadd.f32 %v2657, %v2721
  %v2754 = vadd.f32 %v2658, %v2722
  %v2755 = vadd.f32 %v2659, %v2723
  %v2756 = vadd.f32 %v2660, %v2724
  %v2757 = vadd.f32 %v2661, %v2725
  %v2758 = vadd.f32 %v2662, %v2726
  %v2759 = vadd.f32 %v2663, %v2727
  %2760 = vst.msk [vmem:[%s1 + $0xc] sm:$0x1] %vm455, %v2728
  %2761 = vst.msk [vmem:[%s1 + $0x2c] sm:$0x1] %vm455, %v2729
  %2762 = vst.msk [vmem:[%s1 + $0x4c] sm:$0x1] %vm455, %v2730
  %2763 = vst.msk [vmem:[%s1 + $0x6c] sm:$0x1] %vm455, %v2731
  %2764 = vst.msk [vmem:[%s1 + $0x8c] sm:$0x1] %vm455, %v2732
  %2765 = vst.msk [vmem:[%s1 + $0xac] sm:$0x1] %vm455, %v2733
  %2766 = vst.msk [vmem:[%s1 + $0xcc] sm:$0x1] %vm455, %v2734
  %2767 = vst.msk [vmem:[%s1 + $0xec] sm:$0x1] %vm455, %v2735
  %2768 = vst.msk [vmem:[%s1 + $0x10c] sm:$0x1] %vm455, %v2736
  %2769 = vst.msk [vmem:[%s1 + $0x12c] sm:$0x1] %vm455, %v2737
  %2770 = vst.msk [vmem:[%s1 + $0x14c] sm:$0x1] %vm455, %v2738
  %2771 = vst.msk [vmem:[%s1 + $0x16c] sm:$0x1] %vm455, %v2739
  %2772 = vst.msk [vmem:[%s1 + $0x18c] sm:$0x1] %vm455, %v2740
  %2773 = vst.msk [vmem:[%s1 + $0x1ac] sm:$0x1] %vm455, %v2741
  %2774 = vst.msk [vmem:[%s1 + $0x1cc] sm:$0x1] %vm455, %v2742
  %2775 = vst.msk [vmem:[%s1 + $0x1ec] sm:$0x1] %vm455, %v2743
  %2776 = vst.msk [vmem:[%s1 + $0x20c] sm:$0x1] %vm455, %v2744
  %2777 = vst.msk [vmem:[%s1 + $0x22c] sm:$0x1] %vm455, %v2745
  %2778 = vst.msk [vmem:[%s1 + $0x24c] sm:$0x1] %vm455, %v2746
  %2779 = vst.msk [vmem:[%s1 + $0x26c] sm:$0x1] %vm455, %v2747
  %2780 = vst.msk [vmem:[%s1 + $0x28c] sm:$0x1] %vm455, %v2748
  %2781 = vst.msk [vmem:[%s1 + $0x2ac] sm:$0x1] %vm455, %v2749
  %2782 = vst.msk [vmem:[%s1 + $0x2cc] sm:$0x1] %vm455, %v2750
  %2783 = vst.msk [vmem:[%s1 + $0x2ec] sm:$0x1] %vm455, %v2751
  %2784 = vst.msk [vmem:[%s1 + $0x30c] sm:$0x1] %vm455, %v2752
  %2785 = vst.msk [vmem:[%s1 + $0x32c] sm:$0x1] %vm455, %v2753
  %2786 = vst.msk [vmem:[%s1 + $0x34c] sm:$0x1] %vm455, %v2754
  %2787 = vst.msk [vmem:[%s1 + $0x36c] sm:$0x1] %vm455, %v2755
  %2788 = vst.msk [vmem:[%s1 + $0x38c] sm:$0x1] %vm455, %v2756
  %2789 = vst.msk [vmem:[%s1 + $0x3ac] sm:$0x1] %vm455, %v2757
  %2790 = vst.msk [vmem:[%s1 + $0x3cc] sm:$0x1] %vm455, %v2758
  %2791 = vst.msk [vmem:[%s1 + $0x3ec] sm:$0x1] %vm455, %v2759
  %v2792 = vld [vmem:[#allocation2 + $0x6] sm:$0x1]
  %v2793 = vld [vmem:[#allocation2 + $0x16] sm:$0x1]
  %v2794 = vld [vmem:[#allocation2 + $0x26] sm:$0x1]
  %v2795 = vld [vmem:[#allocation2 + $0x36] sm:$0x1]
  %v2796 = vld [vmem:[#allocation2 + $0x46] sm:$0x1]
  %v2797 = vld [vmem:[#allocation2 + $0x56] sm:$0x1]
  %v2798 = vld [vmem:[#allocation2 + $0x66] sm:$0x1]
  %v2799 = vld [vmem:[#allocation2 + $0x76] sm:$0x1]
  %v2800 = vld [vmem:[#allocation2 + $0x86] sm:$0x1]
  %v2801 = vld [vmem:[#allocation2 + $0x96] sm:$0x1]
  %v2802 = vld [vmem:[#allocation2 + $0xa6] sm:$0x1]
  %v2803 = vld [vmem:[#allocation2 + $0xb6] sm:$0x1]
  %v2804 = vld [vmem:[#allocation2 + $0xc6] sm:$0x1]
  %v2805 = vld [vmem:[#allocation2 + $0xd6] sm:$0x1]
  %v2806 = vld [vmem:[#allocation2 + $0xe6] sm:$0x1]
  %v2807 = vld [vmem:[#allocation2 + $0xf6] sm:$0x1]
  %v2808 = vld [vmem:[#allocation2 + $0x106] sm:$0x1]
  %v2809 = vld [vmem:[#allocation2 + $0x116] sm:$0x1]
  %v2810 = vld [vmem:[#allocation2 + $0x126] sm:$0x1]
  %v2811 = vld [vmem:[#allocation2 + $0x136] sm:$0x1]
  %v2812 = vld [vmem:[#allocation2 + $0x146] sm:$0x1]
  %v2813 = vld [vmem:[#allocation2 + $0x156] sm:$0x1]
  %v2814 = vld [vmem:[#allocation2 + $0x166] sm:$0x1]
  %v2815 = vld [vmem:[#allocation2 + $0x176] sm:$0x1]
  %v2816 = vld [vmem:[#allocation2 + $0x186] sm:$0x1]
  %v2817 = vld [vmem:[#allocation2 + $0x196] sm:$0x1]
  %v2818 = vld [vmem:[#allocation2 + $0x1a6] sm:$0x1]
  %v2819 = vld [vmem:[#allocation2 + $0x1b6] sm:$0x1]
  %v2820 = vld [vmem:[#allocation2 + $0x1c6] sm:$0x1]
  %v2821 = vld [vmem:[#allocation2 + $0x1d6] sm:$0x1]
  %v2822 = vld [vmem:[#allocation2 + $0x1e6] sm:$0x1]
  %v2823 = vld [vmem:[#allocation2 + $0x1f6] sm:$0x1]
  %v2824 = vmul.f32 %v2792, 0.75
  %v2825 = vmul.f32 %v2793, 0.75
  %v2826 = vmul.f32 %v2794, 0.75
  %v2827 = vmul.f32 %v2795, 0.75
  %v2828 = vmul.f32 %v2796, 0.75
  %v2829 = vmul.f32 %v2797, 0.75
  %v2830 = vmul.f32 %v2798, 0.75
  %v2831 = vmul.f32 %v2799, 0.75
  %v2832 = vmul.f32 %v2800, 0.75
  %v2833 = vmul.f32 %v2801, 0.75
  %v2834 = vmul.f32 %v2802, 0.75
  %v2835 = vmul.f32 %v2803, 0.75
  %v2836 = vmul.f32 %v2804, 0.75
  %v2837 = vmul.f32 %v2805, 0.75
  %v2838 = vmul.f32 %v2806, 0.75
  %v2839 = vmul.f32 %v2807, 0.75
  %v2840 = vmul.f32 %v2808, 0.75
  %v2841 = vmul.f32 %v2809, 0.75
  %v2842 = vmul.f32 %v2810, 0.75
  %v2843 = vmul.f32 %v2811, 0.75
  %v2844 = vmul.f32 %v2812, 0.75
  %v2845 = vmul.f32 %v2813, 0.75
  %v2846 = vmul.f32 %v2814, 0.75
  %v2847 = vmul.f32 %v2815, 0.75
  %v2848 = vmul.f32 %v2816, 0.75
  %v2849 = vmul.f32 %v2817, 0.75
  %v2850 = vmul.f32 %v2818, 0.75
  %v2851 = vmul.f32 %v2819, 0.75
  %v2852 = vmul.f32 %v2820, 0.75
  %v2853 = vmul.f32 %v2821, 0.75
  %v2854 = vmul.f32 %v2822, 0.75
  %v2855 = vmul.f32 %v2823, 0.75
  %v2856 = vld [vmem:[#allocation2 + $0x7] sm:$0x1]
  %v2857 = vld [vmem:[#allocation2 + $0x17] sm:$0x1]
  %v2858 = vld [vmem:[#allocation2 + $0x27] sm:$0x1]
  %v2859 = vld [vmem:[#allocation2 + $0x37] sm:$0x1]
  %v2860 = vld [vmem:[#allocation2 + $0x47] sm:$0x1]
  %v2861 = vld [vmem:[#allocation2 + $0x57] sm:$0x1]
  %v2862 = vld [vmem:[#allocation2 + $0x67] sm:$0x1]
  %v2863 = vld [vmem:[#allocation2 + $0x77] sm:$0x1]
  %v2864 = vld [vmem:[#allocation2 + $0x87] sm:$0x1]
  %v2865 = vld [vmem:[#allocation2 + $0x97] sm:$0x1]
  %v2866 = vld [vmem:[#allocation2 + $0xa7] sm:$0x1]
  %v2867 = vld [vmem:[#allocation2 + $0xb7] sm:$0x1]
  %v2868 = vld [vmem:[#allocation2 + $0xc7] sm:$0x1]
  %v2869 = vld [vmem:[#allocation2 + $0xd7] sm:$0x1]
  %v2870 = vld [vmem:[#allocation2 + $0xe7] sm:$0x1]
  %v2871 = vld [vmem:[#allocation2 + $0xf7] sm:$0x1]
  %v2872 = vld [vmem:[#allocation2 + $0x107] sm:$0x1]
  %v2873 = vld [vmem:[#allocation2 + $0x117] sm:$0x1]
  %v2874 = vld [vmem:[#allocation2 + $0x127] sm:$0x1]
  %v2875 = vld [vmem:[#allocation2 + $0x137] sm:$0x1]
  %v2876 = vld [vmem:[#allocation2 + $0x147] sm:$0x1]
  %v2877 = vld [vmem:[#allocation2 + $0x157] sm:$0x1]
  %v2878 = vld [vmem:[#allocation2 + $0x167] sm:$0x1]
  %v2879 = vld [vmem:[#allocation2 + $0x177] sm:$0x1]
  %v2880 = vld [vmem:[#allocation2 + $0x187] sm:$0x1]
  %v2881 = vld [vmem:[#allocation2 + $0x197] sm:$0x1]
  %v2882 = vld [vmem:[#allocation2 + $0x1a7] sm:$0x1]
  %v2883 = vld [vmem:[#allocation2 + $0x1b7] sm:$0x1]
  %v2884 = vld [vmem:[#allocation2 + $0x1c7] sm:$0x1]
  %v2885 = vld [vmem:[#allocation2 + $0x1d7] sm:$0x1]
  %v2886 = vld [vmem:[#allocation2 + $0x1e7] sm:$0x1]
  %v2887 = vld [vmem:[#allocation2 + $0x1f7] sm:$0x1]
  %v2888 = vmul.f32 %v2856, 0.25
  %v2889 = vmul.f32 %v2857, 0.25
  %v2890 = vmul.f32 %v2858, 0.25
  %v2891 = vmul.f32 %v2859, 0.25
  %v2892 = vmul.f32 %v2860, 0.25
  %v2893 = vmul.f32 %v2861, 0.25
  %v2894 = vmul.f32 %v2862, 0.25
  %v2895 = vmul.f32 %v2863, 0.25
  %v2896 = vmul.f32 %v2864, 0.25
  %v2897 = vmul.f32 %v2865, 0.25
  %v2898 = vmul.f32 %v2866, 0.25
  %v2899 = vmul.f32 %v2867, 0.25
  %v2900 = vmul.f32 %v2868, 0.25
  %v2901 = vmul.f32 %v2869, 0.25
  %v2902 = vmul.f32 %v2870, 0.25
  %v2903 = vmul.f32 %v2871, 0.25
  %v2904 = vmul.f32 %v2872, 0.25
  %v2905 = vmul.f32 %v2873, 0.25
  %v2906 = vmul.f32 %v2874, 0.25
  %v2907 = vmul.f32 %v2875, 0.25
  %v2908 = vmul.f32 %v2876, 0.25
  %v2909 = vmul.f32 %v2877, 0.25
  %v2910 = vmul.f32 %v2878, 0.25
  %v2911 = vmul.f32 %v2879, 0.25
  %v2912 = vmul.f32 %v2880, 0.25
  %v2913 = vmul.f32 %v2881, 0.25
  %v2914 = vmul.f32 %v2882, 0.25
  %v2915 = vmul.f32 %v2883, 0.25
  %v2916 = vmul.f32 %v2884, 0.25
  %v2917 = vmul.f32 %v2885, 0.25
  %v2918 = vmul.f32 %v2886, 0.25
  %v2919 = vmul.f32 %v2887, 0.25
  %v2920 = vadd.f32 %v2824, %v2888
  %v2921 = vadd.f32 %v2825, %v2889
  %v2922 = vadd.f32 %v2826, %v2890
  %v2923 = vadd.f32 %v2827, %v2891
  %v2924 = vadd.f32 %v2828, %v2892
  %v2925 = vadd.f32 %v2829, %v2893
  %v2926 = vadd.f32 %v2830, %v2894
  %v2927 = vadd.f32 %v2831, %v2895
  %v2928 = vadd.f32 %v2832, %v2896
  %v2929 = vadd.f32 %v2833, %v2897
  %v2930 = vadd.f32 %v2834, %v2898
  %v2931 = vadd.f32 %v2835, %v2899
  %v2932 = vadd.f32 %v2836, %v2900
  %v2933 = vadd.f32 %v2837, %v2901
  %v2934 = vadd.f32 %v2838, %v2902
  %v2935 = vadd.f32 %v2839, %v2903
  %v2936 = vadd.f32 %v2840, %v2904
  %v2937 = vadd.f32 %v2841, %v2905
  %v2938 = vadd.f32 %v2842, %v2906
  %v2939 = vadd.f32 %v2843, %v2907
  %v2940 = vadd.f32 %v2844, %v2908
  %v2941 = vadd.f32 %v2845, %v2909
  %v2942 = vadd.f32 %v2846, %v2910
  %v2943 = vadd.f32 %v2847, %v2911
  %v2944 = vadd.f32 %v2848, %v2912
  %v2945 = vadd.f32 %v2849, %v2913
  %v2946 = vadd.f32 %v2850, %v2914
  %v2947 = vadd.f32 %v2851, %v2915
  %v2948 = vadd.f32 %v2852, %v2916
  %v2949 = vadd.f32 %v2853, %v2917
  %v2950 = vadd.f32 %v2854, %v2918
  %v2951 = vadd.f32 %v2855, %v2919
  %2952 = vst.msk [vmem:[%s1 + $0xd] sm:$0x1] %vm455, %v2920
  %2953 = vst.msk [vmem:[%s1 + $0x2d] sm:$0x1] %vm455, %v2921
  %2954 = vst.msk [vmem:[%s1 + $0x4d] sm:$0x1] %vm455, %v2922
  %2955 = vst.msk [vmem:[%s1 + $0x6d] sm:$0x1] %vm455, %v2923
  %2956 = vst.msk [vmem:[%s1 + $0x8d] sm:$0x1] %vm455, %v2924
  %2957 = vst.msk [vmem:[%s1 + $0xad] sm:$0x1] %vm455, %v2925
  %2958 = vst.msk [vmem:[%s1 + $0xcd] sm:$0x1] %vm455, %v2926
  %2959 = vst.msk [vmem:[%s1 + $0xed] sm:$0x1] %vm455, %v2927
  %2960 = vst.msk [vmem:[%s1 + $0x10d] sm:$0x1] %vm455, %v2928
  %2961 = vst.msk [vmem:[%s1 + $0x12d] sm:$0x1] %vm455, %v2929
  %2962 = vst.msk [vmem:[%s1 + $0x14d] sm:$0x1] %vm455, %v2930
  %2963 = vst.msk [vmem:[%s1 + $0x16d] sm:$0x1] %vm455, %v2931
  %2964 = vst.msk [vmem:[%s1 + $0x18d] sm:$0x1] %vm455, %v2932
  %2965 = vst.msk [vmem:[%s1 + $0x1ad] sm:$0x1] %vm455, %v2933
  %2966 = vst.msk [vmem:[%s1 + $0x1cd] sm:$0x1] %vm455, %v2934
  %2967 = vst.msk [vmem:[%s1 + $0x1ed] sm:$0x1] %vm455, %v2935
  %2968 = vst.msk [vmem:[%s1 + $0x20d] sm:$0x1] %vm455, %v2936
  %2969 = vst.msk [vmem:[%s1 + $0x22d] sm:$0x1] %vm455, %v2937
  %2970 = vst.msk [vmem:[%s1 + $0x24d] sm:$0x1] %vm455, %v2938
  %2971 = vst.msk [vmem:[%s1 + $0x26d] sm:$0x1] %vm455, %v2939
  %2972 = vst.msk [vmem:[%s1 + $0x28d] sm:$0x1] %vm455, %v2940
  %2973 = vst.msk [vmem:[%s1 + $0x2ad] sm:$0x1] %vm455, %v2941
  %2974 = vst.msk [vmem:[%s1 + $0x2cd] sm:$0x1] %vm455, %v2942
  %2975 = vst.msk [vmem:[%s1 + $0x2ed] sm:$0x1] %vm455, %v2943
  %2976 = vst.msk [vmem:[%s1 + $0x30d] sm:$0x1] %vm455, %v2944
  %2977 = vst.msk [vmem:[%s1 + $0x32d] sm:$0x1] %vm455, %v2945
  %2978 = vst.msk [vmem:[%s1 + $0x34d] sm:$0x1] %vm455, %v2946
  %2979 = vst.msk [vmem:[%s1 + $0x36d] sm:$0x1] %vm455, %v2947
  %2980 = vst.msk [vmem:[%s1 + $0x38d] sm:$0x1] %vm455, %v2948
  %2981 = vst.msk [vmem:[%s1 + $0x3ad] sm:$0x1] %vm455, %v2949
  %2982 = vst.msk [vmem:[%s1 + $0x3cd] sm:$0x1] %vm455, %v2950
  %2983 = vst.msk [vmem:[%s1 + $0x3ed] sm:$0x1] %vm455, %v2951
  %v2984 = vld [vmem:[#allocation2 + $0x6] sm:$0x1]
  %v2985 = vld [vmem:[#allocation2 + $0x16] sm:$0x1]
  %v2986 = vld [vmem:[#allocation2 + $0x26] sm:$0x1]
  %v2987 = vld [vmem:[#allocation2 + $0x36] sm:$0x1]
  %v2988 = vld [vmem:[#allocation2 + $0x46] sm:$0x1]
  %v2989 = vld [vmem:[#allocation2 + $0x56] sm:$0x1]
  %v2990 = vld [vmem:[#allocation2 + $0x66] sm:$0x1]
  %v2991 = vld [vmem:[#allocation2 + $0x76] sm:$0x1]
  %v2992 = vld [vmem:[#allocation2 + $0x86] sm:$0x1]
  %v2993 = vld [vmem:[#allocation2 + $0x96] sm:$0x1]
  %v2994 = vld [vmem:[#allocation2 + $0xa6] sm:$0x1]
  %v2995 = vld [vmem:[#allocation2 + $0xb6] sm:$0x1]
  %v2996 = vld [vmem:[#allocation2 + $0xc6] sm:$0x1]
  %v2997 = vld [vmem:[#allocation2 + $0xd6] sm:$0x1]
  %v2998 = vld [vmem:[#allocation2 + $0xe6] sm:$0x1]
  %v2999 = vld [vmem:[#allocation2 + $0xf6] sm:$0x1]
  %v3000 = vld [vmem:[#allocation2 + $0x106] sm:$0x1]
  %v3001 = vld [vmem:[#allocation2 + $0x116] sm:$0x1]
  %v3002 = vld [vmem:[#allocation2 + $0x126] sm:$0x1]
  %v3003 = vld [vmem:[#allocation2 + $0x136] sm:$0x1]
  %v3004 = vld [vmem:[#allocation2 + $0x146] sm:$0x1]
  %v3005 = vld [vmem:[#allocation2 + $0x156] sm:$0x1]
  %v3006 = vld [vmem:[#allocation2 + $0x166] sm:$0x1]
  %v3007 = vld [vmem:[#allocation2 + $0x176] sm:$0x1]
  %v3008 = vld [vmem:[#allocation2 + $0x186] sm:$0x1]
  %v3009 = vld [vmem:[#allocation2 + $0x196] sm:$0x1]
  %v3010 = vld [vmem:[#allocation2 + $0x1a6] sm:$0x1]
  %v3011 = vld [vmem:[#allocation2 + $0x1b6] sm:$0x1]
  %v3012 = vld [vmem:[#allocation2 + $0x1c6] sm:$0x1]
  %v3013 = vld [vmem:[#allocation2 + $0x1d6] sm:$0x1]
  %v3014 = vld [vmem:[#allocation2 + $0x1e6] sm:$0x1]
  %v3015 = vld [vmem:[#allocation2 + $0x1f6] sm:$0x1]
  %v3016 = vmul.f32 %v2984, 0.25
  %v3017 = vmul.f32 %v2985, 0.25
  %v3018 = vmul.f32 %v2986, 0.25
  %v3019 = vmul.f32 %v2987, 0.25
  %v3020 = vmul.f32 %v2988, 0.25
  %v3021 = vmul.f32 %v2989, 0.25
  %v3022 = vmul.f32 %v2990, 0.25
  %v3023 = vmul.f32 %v2991, 0.25
  %v3024 = vmul.f32 %v2992, 0.25
  %v3025 = vmul.f32 %v2993, 0.25
  %v3026 = vmul.f32 %v2994, 0.25
  %v3027 = vmul.f32 %v2995, 0.25
  %v3028 = vmul.f32 %v2996, 0.25
  %v3029 = vmul.f32 %v2997, 0.25
  %v3030 = vmul.f32 %v2998, 0.25
  %v3031 = vmul.f32 %v2999, 0.25
  %v3032 = vmul.f32 %v3000, 0.25
  %v3033 = vmul.f32 %v3001, 0.25
  %v3034 = vmul.f32 %v3002, 0.25
  %v3035 = vmul.f32 %v3003, 0.25
  %v3036 = vmul.f32 %v3004, 0.25
  %v3037 = vmul.f32 %v3005, 0.25
  %v3038 = vmul.f32 %v3006, 0.25
  %v3039 = vmul.f32 %v3007, 0.25
  %v3040 = vmul.f32 %v3008, 0.25
  %v3041 = vmul.f32 %v3009, 0.25
  %v3042 = vmul.f32 %v3010, 0.25
  %v3043 = vmul.f32 %v3011, 0.25
  %v3044 = vmul.f32 %v3012, 0.25
  %v3045 = vmul.f32 %v3013, 0.25
  %v3046 = vmul.f32 %v3014, 0.25
  %v3047 = vmul.f32 %v3015, 0.25
  %v3048 = vld [vmem:[#allocation2 + $0x7] sm:$0x1]
  %v3049 = vld [vmem:[#allocation2 + $0x17] sm:$0x1]
  %v3050 = vld [vmem:[#allocation2 + $0x27] sm:$0x1]
  %v3051 = vld [vmem:[#allocation2 + $0x37] sm:$0x1]
  %v3052 = vld [vmem:[#allocation2 + $0x47] sm:$0x1]
  %v3053 = vld [vmem:[#allocation2 + $0x57] sm:$0x1]
  %v3054 = vld [vmem:[#allocation2 + $0x67] sm:$0x1]
  %v3055 = vld [vmem:[#allocation2 + $0x77] sm:$0x1]
  %v3056 = vld [vmem:[#allocation2 + $0x87] sm:$0x1]
  %v3057 = vld [vmem:[#allocation2 + $0x97] sm:$0x1]
  %v3058 = vld [vmem:[#allocation2 + $0xa7] sm:$0x1]
  %v3059 = vld [vmem:[#allocation2 + $0xb7] sm:$0x1]
  %v3060 = vld [vmem:[#allocation2 + $0xc7] sm:$0x1]
  %v3061 = vld [vmem:[#allocation2 + $0xd7] sm:$0x1]
  %v3062 = vld [vmem:[#allocation2 + $0xe7] sm:$0x1]
  %v3063 = vld [vmem:[#allocation2 + $0xf7] sm:$0x1]
  %v3064 = vld [vmem:[#allocation2 + $0x107] sm:$0x1]
  %v3065 = vld [vmem:[#allocation2 + $0x117] sm:$0x1]
  %v3066 = vld [vmem:[#allocation2 + $0x127] sm:$0x1]
  %v3067 = vld [vmem:[#allocation2 + $0x137] sm:$0x1]
  %v3068 = vld [vmem:[#allocation2 + $0x147] sm:$0x1]
  %v3069 = vld [vmem:[#allocation2 + $0x157] sm:$0x1]
  %v3070 = vld [vmem:[#allocation2 + $0x167] sm:$0x1]
  %v3071 = vld [vmem:[#allocation2 + $0x177] sm:$0x1]
  %v3072 = vld [vmem:[#allocation2 + $0x187] sm:$0x1]
  %v3073 = vld [vmem:[#allocation2 + $0x197] sm:$0x1]
  %v3074 = vld [vmem:[#allocation2 + $0x1a7] sm:$0x1]
  %v3075 = vld [vmem:[#allocation2 + $0x1b7] sm:$0x1]
  %v3076 = vld [vmem:[#allocation2 + $0x1c7] sm:$0x1]
  %v3077 = vld [vmem:[#allocation2 + $0x1d7] sm:$0x1]
  %v3078 = vld [vmem:[#allocation2 + $0x1e7] sm:$0x1]
  %v3079 = vld [vmem:[#allocation2 + $0x1f7] sm:$0x1]
  %v3080 = vmul.f32 %v3048, 0.75
  %v3081 = vmul.f32 %v3049, 0.75
  %v3082 = vmul.f32 %v3050, 0.75
  %v3083 = vmul.f32 %v3051, 0.75
  %v3084 = vmul.f32 %v3052, 0.75
  %v3085 = vmul.f32 %v3053, 0.75
  %v3086 = vmul.f32 %v3054, 0.75
  %v3087 = vmul.f32 %v3055, 0.75
  %v3088 = vmul.f32 %v3056, 0.75
  %v3089 = vmul.f32 %v3057, 0.75
  %v3090 = vmul.f32 %v3058, 0.75
  %v3091 = vmul.f32 %v3059, 0.75
  %v3092 = vmul.f32 %v3060, 0.75
  %v3093 = vmul.f32 %v3061, 0.75
  %v3094 = vmul.f32 %v3062, 0.75
  %v3095 = vmul.f32 %v3063, 0.75
  %v3096 = vmul.f32 %v3064, 0.75
  %v3097 = vmul.f32 %v3065, 0.75
  %v3098 = vmul.f32 %v3066, 0.75
  %v3099 = vmul.f32 %v3067, 0.75
  %v3100 = vmul.f32 %v3068, 0.75
  %v3101 = vmul.f32 %v3069, 0.75
  %v3102 = vmul.f32 %v3070, 0.75
  %v3103 = vmul.f32 %v3071, 0.75
  %v3104 = vmul.f32 %v3072, 0.75
  %v3105 = vmul.f32 %v3073, 0.75
  %v3106 = vmul.f32 %v3074, 0.75
  %v3107 = vmul.f32 %v3075, 0.75
  %v3108 = vmul.f32 %v3076, 0.75
  %v3109 = vmul.f32 %v3077, 0.75
  %v3110 = vmul.f32 %v3078, 0.75
  %v3111 = vmul.f32 %v3079, 0.75
  %v3112 = vadd.f32 %v3016, %v3080
  %v3113 = vadd.f32 %v3017, %v3081
  %v3114 = vadd.f32 %v3018, %v3082
  %v3115 = vadd.f32 %v3019, %v3083
  %v3116 = vadd.f32 %v3020, %v3084
  %v3117 = vadd.f32 %v3021, %v3085
  %v3118 = vadd.f32 %v3022, %v3086
  %v3119 = vadd.f32 %v3023, %v3087
  %v3120 = vadd.f32 %v3024, %v3088
  %v3121 = vadd.f32 %v3025, %v3089
  %v3122 = vadd.f32 %v3026, %v3090
  %v3123 = vadd.f32 %v3027, %v3091
  %v3124 = vadd.f32 %v3028, %v3092
  %v3125 = vadd.f32 %v3029, %v3093
  %v3126 = vadd.f32 %v3030, %v3094
  %v3127 = vadd.f32 %v3031, %v3095
  %v3128 = vadd.f32 %v3032, %v3096
  %v3129 = vadd.f32 %v3033, %v3097
  %v3130 = vadd.f32 %v3034, %v3098
  %v3131 = vadd.f32 %v3035, %v3099
  %v3132 = vadd.f32 %v3036, %v3100
  %v3133 = vadd.f32 %v3037, %v3101
  %v3134 = vadd.f32 %v3038, %v3102
  %v3135 = vadd.f32 %v3039, %v3103
  %v3136 = vadd.f32 %v3040, %v3104
  %v3137 = vadd.f32 %v3041, %v3105
  %v3138 = vadd.f32 %v3042, %v3106
  %v3139 = vadd.f32 %v3043, %v3107
  %v3140 = vadd.f32 %v3044, %v3108
  %v3141 = vadd.f32 %v3045, %v3109
  %v3142 = vadd.f32 %v3046, %v3110
  %v3143 = vadd.f32 %v3047, %v3111
  %3144 = vst.msk [vmem:[%s1 + $0xe] sm:$0x1] %vm455, %v3112
  %3145 = vst.msk [vmem:[%s1 + $0x2e] sm:$0x1] %vm455, %v3113
  %3146 = vst.msk [vmem:[%s1 + $0x4e] sm:$0x1] %vm455, %v3114
  %3147 = vst.msk [vmem:[%s1 + $0x6e] sm:$0x1] %vm455, %v3115
  %3148 = vst.msk [vmem:[%s1 + $0x8e] sm:$0x1] %vm455, %v3116
  %3149 = vst.msk [vmem:[%s1 + $0xae] sm:$0x1] %vm455, %v3117
  %3150 = vst.msk [vmem:[%s1 + $0xce] sm:$0x1] %vm455, %v3118
  %3151 = vst.msk [vmem:[%s1 + $0xee] sm:$0x1] %vm455, %v3119
  %3152 = vst.msk [vmem:[%s1 + $0x10e] sm:$0x1] %vm455, %v3120
  %3153 = vst.msk [vmem:[%s1 + $0x12e] sm:$0x1] %vm455, %v3121
  %3154 = vst.msk [vmem:[%s1 + $0x14e] sm:$0x1] %vm455, %v3122
  %3155 = vst.msk [vmem:[%s1 + $0x16e] sm:$0x1] %vm455, %v3123
  %3156 = vst.msk [vmem:[%s1 + $0x18e] sm:$0x1] %vm455, %v3124
  %3157 = vst.msk [vmem:[%s1 + $0x1ae] sm:$0x1] %vm455, %v3125
  %3158 = vst.msk [vmem:[%s1 + $0x1ce] sm:$0x1] %vm455, %v3126
  %3159 = vst.msk [vmem:[%s1 + $0x1ee] sm:$0x1] %vm455, %v3127
  %3160 = vst.msk [vmem:[%s1 + $0x20e] sm:$0x1] %vm455, %v3128
  %3161 = vst.msk [vmem:[%s1 + $0x22e] sm:$0x1] %vm455, %v3129
  %3162 = vst.msk [vmem:[%s1 + $0x24e] sm:$0x1] %vm455, %v3130
  %3163 = vst.msk [vmem:[%s1 + $0x26e] sm:$0x1] %vm455, %v3131
  %3164 = vst.msk [vmem:[%s1 + $0x28e] sm:$0x1] %vm455, %v3132
  %3165 = vst.msk [vmem:[%s1 + $0x2ae] sm:$0x1] %vm455, %v3133
  %3166 = vst.msk [vmem:[%s1 + $0x2ce] sm:$0x1] %vm455, %v3134
  %3167 = vst.msk [vmem:[%s1 + $0x2ee] sm:$0x1] %vm455, %v3135
  %3168 = vst.msk [vmem:[%s1 + $0x30e] sm:$0x1] %vm455, %v3136
  %3169 = vst.msk [vmem:[%s1 + $0x32e] sm:$0x1] %vm455, %v3137
  %3170 = vst.msk [vmem:[%s1 + $0x34e] sm:$0x1] %vm455, %v3138
  %3171 = vst.msk [vmem:[%s1 + $0x36e] sm:$0x1] %vm455, %v3139
  %3172 = vst.msk [vmem:[%s1 + $0x38e] sm:$0x1] %vm455, %v3140
  %3173 = vst.msk [vmem:[%s1 + $0x3ae] sm:$0x1] %vm455, %v3141
  %3174 = vst.msk [vmem:[%s1 + $0x3ce] sm:$0x1] %vm455, %v3142
  %3175 = vst.msk [vmem:[%s1 + $0x3ee] sm:$0x1] %vm455, %v3143
  %v3176 = vld [vmem:[#allocation2 + $0x7] sm:$0x1]
  %v3177 = vld [vmem:[#allocation2 + $0x17] sm:$0x1]
  %v3178 = vld [vmem:[#allocation2 + $0x27] sm:$0x1]
  %v3179 = vld [vmem:[#allocation2 + $0x37] sm:$0x1]
  %v3180 = vld [vmem:[#allocation2 + $0x47] sm:$0x1]
  %v3181 = vld [vmem:[#allocation2 + $0x57] sm:$0x1]
  %v3182 = vld [vmem:[#allocation2 + $0x67] sm:$0x1]
  %v3183 = vld [vmem:[#allocation2 + $0x77] sm:$0x1]
  %v3184 = vld [vmem:[#allocation2 + $0x87] sm:$0x1]
  %v3185 = vld [vmem:[#allocation2 + $0x97] sm:$0x1]
  %v3186 = vld [vmem:[#allocation2 + $0xa7] sm:$0x1]
  %v3187 = vld [vmem:[#allocation2 + $0xb7] sm:$0x1]
  %v3188 = vld [vmem:[#allocation2 + $0xc7] sm:$0x1]
  %v3189 = vld [vmem:[#allocation2 + $0xd7] sm:$0x1]
  %v3190 = vld [vmem:[#allocation2 + $0xe7] sm:$0x1]
  %v3191 = vld [vmem:[#allocation2 + $0xf7] sm:$0x1]
  %v3192 = vld [vmem:[#allocation2 + $0x107] sm:$0x1]
  %v3193 = vld [vmem:[#allocation2 + $0x117] sm:$0x1]
  %v3194 = vld [vmem:[#allocation2 + $0x127] sm:$0x1]
  %v3195 = vld [vmem:[#allocation2 + $0x137] sm:$0x1]
  %v3196 = vld [vmem:[#allocation2 + $0x147] sm:$0x1]
  %v3197 = vld [vmem:[#allocation2 + $0x157] sm:$0x1]
  %v3198 = vld [vmem:[#allocation2 + $0x167] sm:$0x1]
  %v3199 = vld [vmem:[#allocation2 + $0x177] sm:$0x1]
  %v3200 = vld [vmem:[#allocation2 + $0x187] sm:$0x1]
  %v3201 = vld [vmem:[#allocation2 + $0x197] sm:$0x1]
  %v3202 = vld [vmem:[#allocation2 + $0x1a7] sm:$0x1]
  %v3203 = vld [vmem:[#allocation2 + $0x1b7] sm:$0x1]
  %v3204 = vld [vmem:[#allocation2 + $0x1c7] sm:$0x1]
  %v3205 = vld [vmem:[#allocation2 + $0x1d7] sm:$0x1]
  %v3206 = vld [vmem:[#allocation2 + $0x1e7] sm:$0x1]
  %v3207 = vld [vmem:[#allocation2 + $0x1f7] sm:$0x1]
  %v3208 = vmul.f32 %v3176, 0.75
  %v3209 = vmul.f32 %v3177, 0.75
  %v3210 = vmul.f32 %v3178, 0.75
  %v3211 = vmul.f32 %v3179, 0.75
  %v3212 = vmul.f32 %v3180, 0.75
  %v3213 = vmul.f32 %v3181, 0.75
  %v3214 = vmul.f32 %v3182, 0.75
  %v3215 = vmul.f32 %v3183, 0.75
  %v3216 = vmul.f32 %v3184, 0.75
  %v3217 = vmul.f32 %v3185, 0.75
  %v3218 = vmul.f32 %v3186, 0.75
  %v3219 = vmul.f32 %v3187, 0.75
  %v3220 = vmul.f32 %v3188, 0.75
  %v3221 = vmul.f32 %v3189, 0.75
  %v3222 = vmul.f32 %v3190, 0.75
  %v3223 = vmul.f32 %v3191, 0.75
  %v3224 = vmul.f32 %v3192, 0.75
  %v3225 = vmul.f32 %v3193, 0.75
  %v3226 = vmul.f32 %v3194, 0.75
  %v3227 = vmul.f32 %v3195, 0.75
  %v3228 = vmul.f32 %v3196, 0.75
  %v3229 = vmul.f32 %v3197, 0.75
  %v3230 = vmul.f32 %v3198, 0.75
  %v3231 = vmul.f32 %v3199, 0.75
  %v3232 = vmul.f32 %v3200, 0.75
  %v3233 = vmul.f32 %v3201, 0.75
  %v3234 = vmul.f32 %v3202, 0.75
  %v3235 = vmul.f32 %v3203, 0.75
  %v3236 = vmul.f32 %v3204, 0.75
  %v3237 = vmul.f32 %v3205, 0.75
  %v3238 = vmul.f32 %v3206, 0.75
  %v3239 = vmul.f32 %v3207, 0.75
  %v3240 = vld [vmem:[#allocation2 + $0x8] sm:$0x1]
  %v3241 = vld [vmem:[#allocation2 + $0x18] sm:$0x1]
  %v3242 = vld [vmem:[#allocation2 + $0x28] sm:$0x1]
  %v3243 = vld [vmem:[#allocation2 + $0x38] sm:$0x1]
  %v3244 = vld [vmem:[#allocation2 + $0x48] sm:$0x1]
  %v3245 = vld [vmem:[#allocation2 + $0x58] sm:$0x1]
  %v3246 = vld [vmem:[#allocation2 + $0x68] sm:$0x1]
  %v3247 = vld [vmem:[#allocation2 + $0x78] sm:$0x1]
  %v3248 = vld [vmem:[#allocation2 + $0x88] sm:$0x1]
  %v3249 = vld [vmem:[#allocation2 + $0x98] sm:$0x1]
  %v3250 = vld [vmem:[#allocation2 + $0xa8] sm:$0x1]
  %v3251 = vld [vmem:[#allocation2 + $0xb8] sm:$0x1]
  %v3252 = vld [vmem:[#allocation2 + $0xc8] sm:$0x1]
  %v3253 = vld [vmem:[#allocation2 + $0xd8] sm:$0x1]
  %v3254 = vld [vmem:[#allocation2 + $0xe8] sm:$0x1]
  %v3255 = vld [vmem:[#allocation2 + $0xf8] sm:$0x1]
  %v3256 = vld [vmem:[#allocation2 + $0x108] sm:$0x1]
  %v3257 = vld [vmem:[#allocation2 + $0x118] sm:$0x1]
  %v3258 = vld [vmem:[#allocation2 + $0x128] sm:$0x1]
  %v3259 = vld [vmem:[#allocation2 + $0x138] sm:$0x1]
  %v3260 = vld [vmem:[#allocation2 + $0x148] sm:$0x1]
  %v3261 = vld [vmem:[#allocation2 + $0x158] sm:$0x1]
  %v3262 = vld [vmem:[#allocation2 + $0x168] sm:$0x1]
  %v3263 = vld [vmem:[#allocation2 + $0x178] sm:$0x1]
  %v3264 = vld [vmem:[#allocation2 + $0x188] sm:$0x1]
  %v3265 = vld [vmem:[#allocation2 + $0x198] sm:$0x1]
  %v3266 = vld [vmem:[#allocation2 + $0x1a8] sm:$0x1]
  %v3267 = vld [vmem:[#allocation2 + $0x1b8] sm:$0x1]
  %v3268 = vld [vmem:[#allocation2 + $0x1c8] sm:$0x1]
  %v3269 = vld [vmem:[#allocation2 + $0x1d8] sm:$0x1]
  %v3270 = vld [vmem:[#allocation2 + $0x1e8] sm:$0x1]
  %v3271 = vld [vmem:[#allocation2 + $0x1f8] sm:$0x1]
  %v3272 = vmul.f32 %v3240, 0.25
  %v3273 = vmul.f32 %v3241, 0.25
  %v3274 = vmul.f32 %v3242, 0.25
  %v3275 = vmul.f32 %v3243, 0.25
  %v3276 = vmul.f32 %v3244, 0.25
  %v3277 = vmul.f32 %v3245, 0.25
  %v3278 = vmul.f32 %v3246, 0.25
  %v3279 = vmul.f32 %v3247, 0.25
  %v3280 = vmul.f32 %v3248, 0.25
  %v3281 = vmul.f32 %v3249, 0.25
  %v3282 = vmul.f32 %v3250, 0.25
  %v3283 = vmul.f32 %v3251, 0.25
  %v3284 = vmul.f32 %v3252, 0.25
  %v3285 = vmul.f32 %v3253, 0.25
  %v3286 = vmul.f32 %v3254, 0.25
  %v3287 = vmul.f32 %v3255, 0.25
  %v3288 = vmul.f32 %v3256, 0.25
  %v3289 = vmul.f32 %v3257, 0.25
  %v3290 = vmul.f32 %v3258, 0.25
  %v3291 = vmul.f32 %v3259, 0.25
  %v3292 = vmul.f32 %v3260, 0.25
  %v3293 = vmul.f32 %v3261, 0.25
  %v3294 = vmul.f32 %v3262, 0.25
  %v3295 = vmul.f32 %v3263, 0.25
  %v3296 = vmul.f32 %v3264, 0.25
  %v3297 = vmul.f32 %v3265, 0.25
  %v3298 = vmul.f32 %v3266, 0.25
  %v3299 = vmul.f32 %v3267, 0.25
  %v3300 = vmul.f32 %v3268, 0.25
  %v3301 = vmul.f32 %v3269, 0.25
  %v3302 = vmul.f32 %v3270, 0.25
  %v3303 = vmul.f32 %v3271, 0.25
  %v3304 = vadd.f32 %v3208, %v3272
  %v3305 = vadd.f32 %v3209, %v3273
  %v3306 = vadd.f32 %v3210, %v3274
  %v3307 = vadd.f32 %v3211, %v3275
  %v3308 = vadd.f32 %v3212, %v3276
  %v3309 = vadd.f32 %v3213, %v3277
  %v3310 = vadd.f32 %v3214, %v3278
  %v3311 = vadd.f32 %v3215, %v3279
  %v3312 = vadd.f32 %v3216, %v3280
  %v3313 = vadd.f32 %v3217, %v3281
  %v3314 = vadd.f32 %v3218, %v3282
  %v3315 = vadd.f32 %v3219, %v3283
  %v3316 = vadd.f32 %v3220, %v3284
  %v3317 = vadd.f32 %v3221, %v3285
  %v3318 = vadd.f32 %v3222, %v3286
  %v3319 = vadd.f32 %v3223, %v3287
  %v3320 = vadd.f32 %v3224, %v3288
  %v3321 = vadd.f32 %v3225, %v3289
  %v3322 = vadd.f32 %v3226, %v3290
  %v3323 = vadd.f32 %v3227, %v3291
  %v3324 = vadd.f32 %v3228, %v3292
  %v3325 = vadd.f32 %v3229, %v3293
  %v3326 = vadd.f32 %v3230, %v3294
  %v3327 = vadd.f32 %v3231, %v3295
  %v3328 = vadd.f32 %v3232, %v3296
  %v3329 = vadd.f32 %v3233, %v3297
  %v3330 = vadd.f32 %v3234, %v3298
  %v3331 = vadd.f32 %v3235, %v3299
  %v3332 = vadd.f32 %v3236, %v3300
  %v3333 = vadd.f32 %v3237, %v3301
  %v3334 = vadd.f32 %v3238, %v3302
  %v3335 = vadd.f32 %v3239, %v3303
  %3336 = vst.msk [vmem:[%s1 + $0xf] sm:$0x1] %vm455, %v3304
  %3337 = vst.msk [vmem:[%s1 + $0x2f] sm:$0x1] %vm455, %v3305
  %3338 = vst.msk [vmem:[%s1 + $0x4f] sm:$0x1] %vm455, %v3306
  %3339 = vst.msk [vmem:[%s1 + $0x6f] sm:$0x1] %vm455, %v3307
  %3340 = vst.msk [vmem:[%s1 + $0x8f] sm:$0x1] %vm455, %v3308
  %3341 = vst.msk [vmem:[%s1 + $0xaf] sm:$0x1] %vm455, %v3309
  %3342 = vst.msk [vmem:[%s1 + $0xcf] sm:$0x1] %vm455, %v3310
  %3343 = vst.msk [vmem:[%s1 + $0xef] sm:$0x1] %vm455, %v3311
  %3344 = vst.msk [vmem:[%s1 + $0x10f] sm:$0x1] %vm455, %v3312
  %3345 = vst.msk [vmem:[%s1 + $0x12f] sm:$0x1] %vm455, %v3313
  %3346 = vst.msk [vmem:[%s1 + $0x14f] sm:$0x1] %vm455, %v3314
  %3347 = vst.msk [vmem:[%s1 + $0x16f] sm:$0x1] %vm455, %v3315
  %3348 = vst.msk [vmem:[%s1 + $0x18f] sm:$0x1] %vm455, %v3316
  %3349 = vst.msk [vmem:[%s1 + $0x1af] sm:$0x1] %vm455, %v3317
  %3350 = vst.msk [vmem:[%s1 + $0x1cf] sm:$0x1] %vm455, %v3318
  %3351 = vst.msk [vmem:[%s1 + $0x1ef] sm:$0x1] %vm455, %v3319
  %3352 = vst.msk [vmem:[%s1 + $0x20f] sm:$0x1] %vm455, %v3320
  %3353 = vst.msk [vmem:[%s1 + $0x22f] sm:$0x1] %vm455, %v3321
  %3354 = vst.msk [vmem:[%s1 + $0x24f] sm:$0x1] %vm455, %v3322
  %3355 = vst.msk [vmem:[%s1 + $0x26f] sm:$0x1] %vm455, %v3323
  %3356 = vst.msk [vmem:[%s1 + $0x28f] sm:$0x1] %vm455, %v3324
  %3357 = vst.msk [vmem:[%s1 + $0x2af] sm:$0x1] %vm455, %v3325
  %3358 = vst.msk [vmem:[%s1 + $0x2cf] sm:$0x1] %vm455, %v3326
  %3359 = vst.msk [vmem:[%s1 + $0x2ef] sm:$0x1] %vm455, %v3327
  %3360 = vst.msk [vmem:[%s1 + $0x30f] sm:$0x1] %vm455, %v3328
  %3361 = vst.msk [vmem:[%s1 + $0x32f] sm:$0x1] %vm455, %v3329
  %3362 = vst.msk [vmem:[%s1 + $0x34f] sm:$0x1] %vm455, %v3330
  %3363 = vst.msk [vmem:[%s1 + $0x36f] sm:$0x1] %vm455, %v3331
  %3364 = vst.msk [vmem:[%s1 + $0x38f] sm:$0x1] %vm455, %v3332
  %3365 = vst.msk [vmem:[%s1 + $0x3af] sm:$0x1] %vm455, %v3333
  %3366 = vst.msk [vmem:[%s1 + $0x3cf] sm:$0x1] %vm455, %v3334
  %3367 = vst.msk [vmem:[%s1 + $0x3ef] sm:$0x1] %vm455, %v3335
  %v3368 = vld [vmem:[#allocation2 + $0x7] sm:$0x1]
  %v3369 = vld [vmem:[#allocation2 + $0x17] sm:$0x1]
  %v3370 = vld [vmem:[#allocation2 + $0x27] sm:$0x1]
  %v3371 = vld [vmem:[#allocation2 + $0x37] sm:$0x1]
  %v3372 = vld [vmem:[#allocation2 + $0x47] sm:$0x1]
  %v3373 = vld [vmem:[#allocation2 + $0x57] sm:$0x1]
  %v3374 = vld [vmem:[#allocation2 + $0x67] sm:$0x1]
  %v3375 = vld [vmem:[#allocation2 + $0x77] sm:$0x1]
  %v3376 = vld [vmem:[#allocation2 + $0x87] sm:$0x1]
  %v3377 = vld [vmem:[#allocation2 + $0x97] sm:$0x1]
  %v3378 = vld [vmem:[#allocation2 + $0xa7] sm:$0x1]
  %v3379 = vld [vmem:[#allocation2 + $0xb7] sm:$0x1]
  %v3380 = vld [vmem:[#allocation2 + $0xc7] sm:$0x1]
  %v3381 = vld [vmem:[#allocation2 + $0xd7] sm:$0x1]
  %v3382 = vld [vmem:[#allocation2 + $0xe7] sm:$0x1]
  %v3383 = vld [vmem:[#allocation2 + $0xf7] sm:$0x1]
  %v3384 = vld [vmem:[#allocation2 + $0x107] sm:$0x1]
  %v3385 = vld [vmem:[#allocation2 + $0x117] sm:$0x1]
  %v3386 = vld [vmem:[#allocation2 + $0x127] sm:$0x1]
  %v3387 = vld [vmem:[#allocation2 + $0x137] sm:$0x1]
  %v3388 = vld [vmem:[#allocation2 + $0x147] sm:$0x1]
  %v3389 = vld [vmem:[#allocation2 + $0x157] sm:$0x1]
  %v3390 = vld [vmem:[#allocation2 + $0x167] sm:$0x1]
  %v3391 = vld [vmem:[#allocation2 + $0x177] sm:$0x1]
  %v3392 = vld [vmem:[#allocation2 + $0x187] sm:$0x1]
  %v3393 = vld [vmem:[#allocation2 + $0x197] sm:$0x1]
  %v3394 = vld [vmem:[#allocation2 + $0x1a7] sm:$0x1]
  %v3395 = vld [vmem:[#allocation2 + $0x1b7] sm:$0x1]
  %v3396 = vld [vmem:[#allocation2 + $0x1c7] sm:$0x1]
  %v3397 = vld [vmem:[#allocation2 + $0x1d7] sm:$0x1]
  %v3398 = vld [vmem:[#allocation2 + $0x1e7] sm:$0x1]
  %v3399 = vld [vmem:[#allocation2 + $0x1f7] sm:$0x1]
  %v3400 = vmul.f32 %v3368, 0.25
  %v3401 = vmul.f32 %v3369, 0.25
  %v3402 = vmul.f32 %v3370, 0.25
  %v3403 = vmul.f32 %v3371, 0.25
  %v3404 = vmul.f32 %v3372, 0.25
  %v3405 = vmul.f32 %v3373, 0.25
  %v3406 = vmul.f32 %v3374, 0.25
  %v3407 = vmul.f32 %v3375, 0.25
  %v3408 = vmul.f32 %v3376, 0.25
  %v3409 = vmul.f32 %v3377, 0.25
  %v3410 = vmul.f32 %v3378, 0.25
  %v3411 = vmul.f32 %v3379, 0.25
  %v3412 = vmul.f32 %v3380, 0.25
  %v3413 = vmul.f32 %v3381, 0.25
  %v3414 = vmul.f32 %v3382, 0.25
  %v3415 = vmul.f32 %v3383, 0.25
  %v3416 = vmul.f32 %v3384, 0.25
  %v3417 = vmul.f32 %v3385, 0.25
  %v3418 = vmul.f32 %v3386, 0.25
  %v3419 = vmul.f32 %v3387, 0.25
  %v3420 = vmul.f32 %v3388, 0.25
  %v3421 = vmul.f32 %v3389, 0.25
  %v3422 = vmul.f32 %v3390, 0.25
  %v3423 = vmul.f32 %v3391, 0.25
  %v3424 = vmul.f32 %v3392, 0.25
  %v3425 = vmul.f32 %v3393, 0.25
  %v3426 = vmul.f32 %v3394, 0.25
  %v3427 = vmul.f32 %v3395, 0.25
  %v3428 = vmul.f32 %v3396, 0.25
  %v3429 = vmul.f32 %v3397, 0.25
  %v3430 = vmul.f32 %v3398, 0.25
  %v3431 = vmul.f32 %v3399, 0.25
  %v3432 = vld [vmem:[#allocation2 + $0x8] sm:$0x1]
  %v3433 = vld [vmem:[#allocation2 + $0x18] sm:$0x1]
  %v3434 = vld [vmem:[#allocation2 + $0x28] sm:$0x1]
  %v3435 = vld [vmem:[#allocation2 + $0x38] sm:$0x1]
  %v3436 = vld [vmem:[#allocation2 + $0x48] sm:$0x1]
  %v3437 = vld [vmem:[#allocation2 + $0x58] sm:$0x1]
  %v3438 = vld [vmem:[#allocation2 + $0x68] sm:$0x1]
  %v3439 = vld [vmem:[#allocation2 + $0x78] sm:$0x1]
  %v3440 = vld [vmem:[#allocation2 + $0x88] sm:$0x1]
  %v3441 = vld [vmem:[#allocation2 + $0x98] sm:$0x1]
  %v3442 = vld [vmem:[#allocation2 + $0xa8] sm:$0x1]
  %v3443 = vld [vmem:[#allocation2 + $0xb8] sm:$0x1]
  %v3444 = vld [vmem:[#allocation2 + $0xc8] sm:$0x1]
  %v3445 = vld [vmem:[#allocation2 + $0xd8] sm:$0x1]
  %v3446 = vld [vmem:[#allocation2 + $0xe8] sm:$0x1]
  %v3447 = vld [vmem:[#allocation2 + $0xf8] sm:$0x1]
  %v3448 = vld [vmem:[#allocation2 + $0x108] sm:$0x1]
  %v3449 = vld [vmem:[#allocation2 + $0x118] sm:$0x1]
  %v3450 = vld [vmem:[#allocation2 + $0x128] sm:$0x1]
  %v3451 = vld [vmem:[#allocation2 + $0x138] sm:$0x1]
  %v3452 = vld [vmem:[#allocation2 + $0x148] sm:$0x1]
  %v3453 = vld [vmem:[#allocation2 + $0x158] sm:$0x1]
  %v3454 = vld [vmem:[#allocation2 + $0x168] sm:$0x1]
  %v3455 = vld [vmem:[#allocation2 + $0x178] sm:$0x1]
  %v3456 = vld [vmem:[#allocation2 + $0x188] sm:$0x1]
  %v3457 = vld [vmem:[#allocation2 + $0x198] sm:$0x1]
  %v3458 = vld [vmem:[#allocation2 + $0x1a8] sm:$0x1]
  %v3459 = vld [vmem:[#allocation2 + $0x1b8] sm:$0x1]
  %v3460 = vld [vmem:[#allocation2 + $0x1c8] sm:$0x1]
  %v3461 = vld [vmem:[#allocation2 + $0x1d8] sm:$0x1]
  %v3462 = vld [vmem:[#allocation2 + $0x1e8] sm:$0x1]
  %v3463 = vld [vmem:[#allocation2 + $0x1f8] sm:$0x1]
  %v3464 = vmul.f32 %v3432, 0.75
  %v3465 = vmul.f32 %v3433, 0.75
  %v3466 = vmul.f32 %v3434, 0.75
  %v3467 = vmul.f32 %v3435, 0.75
  %v3468 = vmul.f32 %v3436, 0.75
  %v3469 = vmul.f32 %v3437, 0.75
  %v3470 = vmul.f32 %v3438, 0.75
  %v3471 = vmul.f32 %v3439, 0.75
  %v3472 = vmul.f32 %v3440, 0.75
  %v3473 = vmul.f32 %v3441, 0.75
  %v3474 = vmul.f32 %v3442, 0.75
  %v3475 = vmul.f32 %v3443, 0.75
  %v3476 = vmul.f32 %v3444, 0.75
  %v3477 = vmul.f32 %v3445, 0.75
  %v3478 = vmul.f32 %v3446, 0.75
  %v3479 = vmul.f32 %v3447, 0.75
  %v3480 = vmul.f32 %v3448, 0.75
  %v3481 = vmul.f32 %v3449, 0.75
  %v3482 = vmul.f32 %v3450, 0.75
  %v3483 = vmul.f32 %v3451, 0.75
  %v3484 = vmul.f32 %v3452, 0.75
  %v3485 = vmul.f32 %v3453, 0.75
  %v3486 = vmul.f32 %v3454, 0.75
  %v3487 = vmul.f32 %v3455, 0.75
  %v3488 = vmul.f32 %v3456, 0.75
  %v3489 = vmul.f32 %v3457, 0.75
  %v3490 = vmul.f32 %v3458, 0.75
  %v3491 = vmul.f32 %v3459, 0.75
  %v3492 = vmul.f32 %v3460, 0.75
  %v3493 = vmul.f32 %v3461, 0.75
  %v3494 = vmul.f32 %v3462, 0.75
  %v3495 = vmul.f32 %v3463, 0.75
  %v3496 = vadd.f32 %v3400, %v3464
  %v3497 = vadd.f32 %v3401, %v3465
  %v3498 = vadd.f32 %v3402, %v3466
  %v3499 = vadd.f32 %v3403, %v3467
  %v3500 = vadd.f32 %v3404, %v3468
  %v3501 = vadd.f32 %v3405, %v3469
  %v3502 = vadd.f32 %v3406, %v3470
  %v3503 = vadd.f32 %v3407, %v3471
  %v3504 = vadd.f32 %v3408, %v3472
  %v3505 = vadd.f32 %v3409, %v3473
  %v3506 = vadd.f32 %v3410, %v3474
  %v3507 = vadd.f32 %v3411, %v3475
  %v3508 = vadd.f32 %v3412, %v3476
  %v3509 = vadd.f32 %v3413, %v3477
  %v3510 = vadd.f32 %v3414, %v3478
  %v3511 = vadd.f32 %v3415, %v3479
  %v3512 = vadd.f32 %v3416, %v3480
  %v3513 = vadd.f32 %v3417, %v3481
  %v3514 = vadd.f32 %v3418, %v3482
  %v3515 = vadd.f32 %v3419, %v3483
  %v3516 = vadd.f32 %v3420, %v3484
  %v3517 = vadd.f32 %v3421, %v3485
  %v3518 = vadd.f32 %v3422, %v3486
  %v3519 = vadd.f32 %v3423, %v3487
  %v3520 = vadd.f32 %v3424, %v3488
  %v3521 = vadd.f32 %v3425, %v3489
  %v3522 = vadd.f32 %v3426, %v3490
  %v3523 = vadd.f32 %v3427, %v3491
  %v3524 = vadd.f32 %v3428, %v3492
  %v3525 = vadd.f32 %v3429, %v3493
  %v3526 = vadd.f32 %v3430, %v3494
  %v3527 = vadd.f32 %v3431, %v3495
  %3528 = vst.msk [vmem:[%s1 + $0x10] sm:$0x1] %vm455, %v3496
  %3529 = vst.msk [vmem:[%s1 + $0x30] sm:$0x1] %vm455, %v3497
  %3530 = vst.msk [vmem:[%s1 + $0x50] sm:$0x1] %vm455, %v3498
  %3531 = vst.msk [vmem:[%s1 + $0x70] sm:$0x1] %vm455, %v3499
  %3532 = vst.msk [vmem:[%s1 + $0x90] sm:$0x1] %vm455, %v3500
  %3533 = vst.msk [vmem:[%s1 + $0xb0] sm:$0x1] %vm455, %v3501
  %3534 = vst.msk [vmem:[%s1 + $0xd0] sm:$0x1] %vm455, %v3502
  %3535 = vst.msk [vmem:[%s1 + $0xf0] sm:$0x1] %vm455, %v3503
  %3536 = vst.msk [vmem:[%s1 + $0x110] sm:$0x1] %vm455, %v3504
  %3537 = vst.msk [vmem:[%s1 + $0x130] sm:$0x1] %vm455, %v3505
  %3538 = vst.msk [vmem:[%s1 + $0x150] sm:$0x1] %vm455, %v3506
  %3539 = vst.msk [vmem:[%s1 + $0x170] sm:$0x1] %vm455, %v3507
  %3540 = vst.msk [vmem:[%s1 + $0x190] sm:$0x1] %vm455, %v3508
  %3541 = vst.msk [vmem:[%s1 + $0x1b0] sm:$0x1] %vm455, %v3509
  %3542 = vst.msk [vmem:[%s1 + $0x1d0] sm:$0x1] %vm455, %v3510
  %3543 = vst.msk [vmem:[%s1 + $0x1f0] sm:$0x1] %vm455, %v3511
  %3544 = vst.msk [vmem:[%s1 + $0x210] sm:$0x1] %vm455, %v3512
  %3545 = vst.msk [vmem:[%s1 + $0x230] sm:$0x1] %vm455, %v3513
  %3546 = vst.msk [vmem:[%s1 + $0x250] sm:$0x1] %vm455, %v3514
  %3547 = vst.msk [vmem:[%s1 + $0x270] sm:$0x1] %vm455, %v3515
  %3548 = vst.msk [vmem:[%s1 + $0x290] sm:$0x1] %vm455, %v3516
  %3549 = vst.msk [vmem:[%s1 + $0x2b0] sm:$0x1] %vm455, %v3517
  %3550 = vst.msk [vmem:[%s1 + $0x2d0] sm:$0x1] %vm455, %v3518
  %3551 = vst.msk [vmem:[%s1 + $0x2f0] sm:$0x1] %vm455, %v3519
  %3552 = vst.msk [vmem:[%s1 + $0x310] sm:$0x1] %vm455, %v3520
  %3553 = vst.msk [vmem:[%s1 + $0x330] sm:$0x1] %vm455, %v3521
  %3554 = vst.msk [vmem:[%s1 + $0x350] sm:$0x1] %vm455, %v3522
  %3555 = vst.msk [vmem:[%s1 + $0x370] sm:$0x1] %vm455, %v3523
  %3556 = vst.msk [vmem:[%s1 + $0x390] sm:$0x1] %vm455, %v3524
  %3557 = vst.msk [vmem:[%s1 + $0x3b0] sm:$0x1] %vm455, %v3525
  %3558 = vst.msk [vmem:[%s1 + $0x3d0] sm:$0x1] %vm455, %v3526
  %3559 = vst.msk [vmem:[%s1 + $0x3f0] sm:$0x1] %vm455, %v3527
  %v3560 = vld [vmem:[#allocation2 + $0x8] sm:$0x1]
  %v3561 = vld [vmem:[#allocation2 + $0x18] sm:$0x1]
  %v3562 = vld [vmem:[#allocation2 + $0x28] sm:$0x1]
  %v3563 = vld [vmem:[#allocation2 + $0x38] sm:$0x1]
  %v3564 = vld [vmem:[#allocation2 + $0x48] sm:$0x1]
  %v3565 = vld [vmem:[#allocation2 + $0x58] sm:$0x1]
  %v3566 = vld [vmem:[#allocation2 + $0x68] sm:$0x1]
  %v3567 = vld [vmem:[#allocation2 + $0x78] sm:$0x1]
  %v3568 = vld [vmem:[#allocation2 + $0x88] sm:$0x1]
  %v3569 = vld [vmem:[#allocation2 + $0x98] sm:$0x1]
  %v3570 = vld [vmem:[#allocation2 + $0xa8] sm:$0x1]
  %v3571 = vld [vmem:[#allocation2 + $0xb8] sm:$0x1]
  %v3572 = vld [vmem:[#allocation2 + $0xc8] sm:$0x1]
  %v3573 = vld [vmem:[#allocation2 + $0xd8] sm:$0x1]
  %v3574 = vld [vmem:[#allocation2 + $0xe8] sm:$0x1]
  %v3575 = vld [vmem:[#allocation2 + $0xf8] sm:$0x1]
  %v3576 = vld [vmem:[#allocation2 + $0x108] sm:$0x1]
  %v3577 = vld [vmem:[#allocation2 + $0x118] sm:$0x1]
  %v3578 = vld [vmem:[#allocation2 + $0x128] sm:$0x1]
  %v3579 = vld [vmem:[#allocation2 + $0x138] sm:$0x1]
  %v3580 = vld [vmem:[#allocation2 + $0x148] sm:$0x1]
  %v3581 = vld [vmem:[#allocation2 + $0x158] sm:$0x1]
  %v3582 = vld [vmem:[#allocation2 + $0x168] sm:$0x1]
  %v3583 = vld [vmem:[#allocation2 + $0x178] sm:$0x1]
  %v3584 = vld [vmem:[#allocation2 + $0x188] sm:$0x1]
  %v3585 = vld [vmem:[#allocation2 + $0x198] sm:$0x1]
  %v3586 = vld [vmem:[#allocation2 + $0x1a8] sm:$0x1]
  %v3587 = vld [vmem:[#allocation2 + $0x1b8] sm:$0x1]
  %v3588 = vld [vmem:[#allocation2 + $0x1c8] sm:$0x1]
  %v3589 = vld [vmem:[#allocation2 + $0x1d8] sm:$0x1]
  %v3590 = vld [vmem:[#allocation2 + $0x1e8] sm:$0x1]
  %v3591 = vld [vmem:[#allocation2 + $0x1f8] sm:$0x1]
  %v3592 = vmul.f32 %v3560, 0.75
  %v3593 = vmul.f32 %v3561, 0.75
  %v3594 = vmul.f32 %v3562, 0.75
  %v3595 = vmul.f32 %v3563, 0.75
  %v3596 = vmul.f32 %v3564, 0.75
  %v3597 = vmul.f32 %v3565, 0.75
  %v3598 = vmul.f32 %v3566, 0.75
  %v3599 = vmul.f32 %v3567, 0.75
  %v3600 = vmul.f32 %v3568, 0.75
  %v3601 = vmul.f32 %v3569, 0.75
  %v3602 = vmul.f32 %v3570, 0.75
  %v3603 = vmul.f32 %v3571, 0.75
  %v3604 = vmul.f32 %v3572, 0.75
  %v3605 = vmul.f32 %v3573, 0.75
  %v3606 = vmul.f32 %v3574, 0.75
  %v3607 = vmul.f32 %v3575, 0.75
  %v3608 = vmul.f32 %v3576, 0.75
  %v3609 = vmul.f32 %v3577, 0.75
  %v3610 = vmul.f32 %v3578, 0.75
  %v3611 = vmul.f32 %v3579, 0.75
  %v3612 = vmul.f32 %v3580, 0.75
  %v3613 = vmul.f32 %v3581, 0.75
  %v3614 = vmul.f32 %v3582, 0.75
  %v3615 = vmul.f32 %v3583, 0.75
  %v3616 = vmul.f32 %v3584, 0.75
  %v3617 = vmul.f32 %v3585, 0.75
  %v3618 = vmul.f32 %v3586, 0.75
  %v3619 = vmul.f32 %v3587, 0.75
  %v3620 = vmul.f32 %v3588, 0.75
  %v3621 = vmul.f32 %v3589, 0.75
  %v3622 = vmul.f32 %v3590, 0.75
  %v3623 = vmul.f32 %v3591, 0.75
  %v3624 = vld [vmem:[#allocation2 + $0x9] sm:$0x1]
  %v3625 = vld [vmem:[#allocation2 + $0x19] sm:$0x1]
  %v3626 = vld [vmem:[#allocation2 + $0x29] sm:$0x1]
  %v3627 = vld [vmem:[#allocation2 + $0x39] sm:$0x1]
  %v3628 = vld [vmem:[#allocation2 + $0x49] sm:$0x1]
  %v3629 = vld [vmem:[#allocation2 + $0x59] sm:$0x1]
  %v3630 = vld [vmem:[#allocation2 + $0x69] sm:$0x1]
  %v3631 = vld [vmem:[#allocation2 + $0x79] sm:$0x1]
  %v3632 = vld [vmem:[#allocation2 + $0x89] sm:$0x1]
  %v3633 = vld [vmem:[#allocation2 + $0x99] sm:$0x1]
  %v3634 = vld [vmem:[#allocation2 + $0xa9] sm:$0x1]
  %v3635 = vld [vmem:[#allocation2 + $0xb9] sm:$0x1]
  %v3636 = vld [vmem:[#allocation2 + $0xc9] sm:$0x1]
  %v3637 = vld [vmem:[#allocation2 + $0xd9] sm:$0x1]
  %v3638 = vld [vmem:[#allocation2 + $0xe9] sm:$0x1]
  %v3639 = vld [vmem:[#allocation2 + $0xf9] sm:$0x1]
  %v3640 = vld [vmem:[#allocation2 + $0x109] sm:$0x1]
  %v3641 = vld [vmem:[#allocation2 + $0x119] sm:$0x1]
  %v3642 = vld [vmem:[#allocation2 + $0x129] sm:$0x1]
  %v3643 = vld [vmem:[#allocation2 + $0x139] sm:$0x1]
  %v3644 = vld [vmem:[#allocation2 + $0x149] sm:$0x1]
  %v3645 = vld [vmem:[#allocation2 + $0x159] sm:$0x1]
  %v3646 = vld [vmem:[#allocation2 + $0x169] sm:$0x1]
  %v3647 = vld [vmem:[#allocation2 + $0x179] sm:$0x1]
  %v3648 = vld [vmem:[#allocation2 + $0x189] sm:$0x1]
  %v3649 = vld [vmem:[#allocation2 + $0x199] sm:$0x1]
  %v3650 = vld [vmem:[#allocation2 + $0x1a9] sm:$0x1]
  %v3651 = vld [vmem:[#allocation2 + $0x1b9] sm:$0x1]
  %v3652 = vld [vmem:[#allocation2 + $0x1c9] sm:$0x1]
  %v3653 = vld [vmem:[#allocation2 + $0x1d9] sm:$0x1]
  %v3654 = vld [vmem:[#allocation2 + $0x1e9] sm:$0x1]
  %v3655 = vld [vmem:[#allocation2 + $0x1f9] sm:$0x1]
  %v3656 = vmul.f32 %v3624, 0.25
  %v3657 = vmul.f32 %v3625, 0.25
  %v3658 = vmul.f32 %v3626, 0.25
  %v3659 = vmul.f32 %v3627, 0.25
  %v3660 = vmul.f32 %v3628, 0.25
  %v3661 = vmul.f32 %v3629, 0.25
  %v3662 = vmul.f32 %v3630, 0.25
  %v3663 = vmul.f32 %v3631, 0.25
  %v3664 = vmul.f32 %v3632, 0.25
  %v3665 = vmul.f32 %v3633, 0.25
  %v3666 = vmul.f32 %v3634, 0.25
  %v3667 = vmul.f32 %v3635, 0.25
  %v3668 = vmul.f32 %v3636, 0.25
  %v3669 = vmul.f32 %v3637, 0.25
  %v3670 = vmul.f32 %v3638, 0.25
  %v3671 = vmul.f32 %v3639, 0.25
  %v3672 = vmul.f32 %v3640, 0.25
  %v3673 = vmul.f32 %v3641, 0.25
  %v3674 = vmul.f32 %v3642, 0.25
  %v3675 = vmul.f32 %v3643, 0.25
  %v3676 = vmul.f32 %v3644, 0.25
  %v3677 = vmul.f32 %v3645, 0.25
  %v3678 = vmul.f32 %v3646, 0.25
  %v3679 = vmul.f32 %v3647, 0.25
  %v3680 = vmul.f32 %v3648, 0.25
  %v3681 = vmul.f32 %v3649, 0.25
  %v3682 = vmul.f32 %v3650, 0.25
  %v3683 = vmul.f32 %v3651, 0.25
  %v3684 = vmul.f32 %v3652, 0.25
  %v3685 = vmul.f32 %v3653, 0.25
  %v3686 = vmul.f32 %v3654, 0.25
  %v3687 = vmul.f32 %v3655, 0.25
  %v3688 = vadd.f32 %v3592, %v3656
  %v3689 = vadd.f32 %v3593, %v3657
  %v3690 = vadd.f32 %v3594, %v3658
  %v3691 = vadd.f32 %v3595, %v3659
  %v3692 = vadd.f32 %v3596, %v3660
  %v3693 = vadd.f32 %v3597, %v3661
  %v3694 = vadd.f32 %v3598, %v3662
  %v3695 = vadd.f32 %v3599, %v3663
  %v3696 = vadd.f32 %v3600, %v3664
  %v3697 = vadd.f32 %v3601, %v3665
  %v3698 = vadd.f32 %v3602, %v3666
  %v3699 = vadd.f32 %v3603, %v3667
  %v3700 = vadd.f32 %v3604, %v3668
  %v3701 = vadd.f32 %v3605, %v3669
  %v3702 = vadd.f32 %v3606, %v3670
  %v3703 = vadd.f32 %v3607, %v3671
  %v3704 = vadd.f32 %v3608, %v3672
  %v3705 = vadd.f32 %v3609, %v3673
  %v3706 = vadd.f32 %v3610, %v3674
  %v3707 = vadd.f32 %v3611, %v3675
  %v3708 = vadd.f32 %v3612, %v3676
  %v3709 = vadd.f32 %v3613, %v3677
  %v3710 = vadd.f32 %v3614, %v3678
  %v3711 = vadd.f32 %v3615, %v3679
  %v3712 = vadd.f32 %v3616, %v3680
  %v3713 = vadd.f32 %v3617, %v3681
  %v3714 = vadd.f32 %v3618, %v3682
  %v3715 = vadd.f32 %v3619, %v3683
  %v3716 = vadd.f32 %v3620, %v3684
  %v3717 = vadd.f32 %v3621, %v3685
  %v3718 = vadd.f32 %v3622, %v3686
  %v3719 = vadd.f32 %v3623, %v3687
  %3720 = vst.msk [vmem:[%s1 + $0x11] sm:$0x1] %vm455, %v3688
  %3721 = vst.msk [vmem:[%s1 + $0x31] sm:$0x1] %vm455, %v3689
  %3722 = vst.msk [vmem:[%s1 + $0x51] sm:$0x1] %vm455, %v3690
  %3723 = vst.msk [vmem:[%s1 + $0x71] sm:$0x1] %vm455, %v3691
  %3724 = vst.msk [vmem:[%s1 + $0x91] sm:$0x1] %vm455, %v3692
  %3725 = vst.msk [vmem:[%s1 + $0xb1] sm:$0x1] %vm455, %v3693
  %3726 = vst.msk [vmem:[%s1 + $0xd1] sm:$0x1] %vm455, %v3694
  %3727 = vst.msk [vmem:[%s1 + $0xf1] sm:$0x1] %vm455, %v3695
  %3728 = vst.msk [vmem:[%s1 + $0x111] sm:$0x1] %vm455, %v3696
  %3729 = vst.msk [vmem:[%s1 + $0x131] sm:$0x1] %vm455, %v3697
  %3730 = vst.msk [vmem:[%s1 + $0x151] sm:$0x1] %vm455, %v3698
  %3731 = vst.msk [vmem:[%s1 + $0x171] sm:$0x1] %vm455, %v3699
  %3732 = vst.msk [vmem:[%s1 + $0x191] sm:$0x1] %vm455, %v3700
  %3733 = vst.msk [vmem:[%s1 + $0x1b1] sm:$0x1] %vm455, %v3701
  %3734 = vst.msk [vmem:[%s1 + $0x1d1] sm:$0x1] %vm455, %v3702
  %3735 = vst.msk [vmem:[%s1 + $0x1f1] sm:$0x1] %vm455, %v3703
  %3736 = vst.msk [vmem:[%s1 + $0x211] sm:$0x1] %vm455, %v3704
  %3737 = vst.msk [vmem:[%s1 + $0x231] sm:$0x1] %vm455, %v3705
  %3738 = vst.msk [vmem:[%s1 + $0x251] sm:$0x1] %vm455, %v3706
  %3739 = vst.msk [vmem:[%s1 + $0x271] sm:$0x1] %vm455, %v3707
  %3740 = vst.msk [vmem:[%s1 + $0x291] sm:$0x1] %vm455, %v3708
  %3741 = vst.msk [vmem:[%s1 + $0x2b1] sm:$0x1] %vm455, %v3709
  %3742 = vst.msk [vmem:[%s1 + $0x2d1] sm:$0x1] %vm455, %v3710
  %3743 = vst.msk [vmem:[%s1 + $0x2f1] sm:$0x1] %vm455, %v3711
  %3744 = vst.msk [vmem:[%s1 + $0x311] sm:$0x1] %vm455, %v3712
  %3745 = vst.msk [vmem:[%s1 + $0x331] sm:$0x1] %vm455, %v3713
  %3746 = vst.msk [vmem:[%s1 + $0x351] sm:$0x1] %vm455, %v3714
  %3747 = vst.msk [vmem:[%s1 + $0x371] sm:$0x1] %vm455, %v3715
  %3748 = vst.msk [vmem:[%s1 + $0x391] sm:$0x1] %vm455, %v3716
  %3749 = vst.msk [vmem:[%s1 + $0x3b1] sm:$0x1] %vm455, %v3717
  %3750 = vst.msk [vmem:[%s1 + $0x3d1] sm:$0x1] %vm455, %v3718
  %3751 = vst.msk [vmem:[%s1 + $0x3f1] sm:$0x1] %vm455, %v3719
  %v3752 = vld [vmem:[#allocation2 + $0x8] sm:$0x1]
  %v3753 = vld [vmem:[#allocation2 + $0x18] sm:$0x1]
  %v3754 = vld [vmem:[#allocation2 + $0x28] sm:$0x1]
  %v3755 = vld [vmem:[#allocation2 + $0x38] sm:$0x1]
  %v3756 = vld [vmem:[#allocation2 + $0x48] sm:$0x1]
  %v3757 = vld [vmem:[#allocation2 + $0x58] sm:$0x1]
  %v3758 = vld [vmem:[#allocation2 + $0x68] sm:$0x1]
  %v3759 = vld [vmem:[#allocation2 + $0x78] sm:$0x1]
  %v3760 = vld [vmem:[#allocation2 + $0x88] sm:$0x1]
  %v3761 = vld [vmem:[#allocation2 + $0x98] sm:$0x1]
  %v3762 = vld [vmem:[#allocation2 + $0xa8] sm:$0x1]
  %v3763 = vld [vmem:[#allocation2 + $0xb8] sm:$0x1]
  %v3764 = vld [vmem:[#allocation2 + $0xc8] sm:$0x1]
  %v3765 = vld [vmem:[#allocation2 + $0xd8] sm:$0x1]
  %v3766 = vld [vmem:[#allocation2 + $0xe8] sm:$0x1]
  %v3767 = vld [vmem:[#allocation2 + $0xf8] sm:$0x1]
  %v3768 = vld [vmem:[#allocation2 + $0x108] sm:$0x1]
  %v3769 = vld [vmem:[#allocation2 + $0x118] sm:$0x1]
  %v3770 = vld [vmem:[#allocation2 + $0x128] sm:$0x1]
  %v3771 = vld [vmem:[#allocation2 + $0x138] sm:$0x1]
  %v3772 = vld [vmem:[#allocation2 + $0x148] sm:$0x1]
  %v3773 = vld [vmem:[#allocation2 + $0x158] sm:$0x1]
  %v3774 = vld [vmem:[#allocation2 + $0x168] sm:$0x1]
  %v3775 = vld [vmem:[#allocation2 + $0x178] sm:$0x1]
  %v3776 = vld [vmem:[#allocation2 + $0x188] sm:$0x1]
  %v3777 = vld [vmem:[#allocation2 + $0x198] sm:$0x1]
  %v3778 = vld [vmem:[#allocation2 + $0x1a8] sm:$0x1]
  %v3779 = vld [vmem:[#allocation2 + $0x1b8] sm:$0x1]
  %v3780 = vld [vmem:[#allocation2 + $0x1c8] sm:$0x1]
  %v3781 = vld [vmem:[#allocation2 + $0x1d8] sm:$0x1]
  %v3782 = vld [vmem:[#allocation2 + $0x1e8] sm:$0x1]
  %v3783 = vld [vmem:[#allocation2 + $0x1f8] sm:$0x1]
  %v3784 = vmul.f32 %v3752, 0.25
  %v3785 = vmul.f32 %v3753, 0.25
  %v3786 = vmul.f32 %v3754, 0.25
  %v3787 = vmul.f32 %v3755, 0.25
  %v3788 = vmul.f32 %v3756, 0.25
  %v3789 = vmul.f32 %v3757, 0.25
  %v3790 = vmul.f32 %v3758, 0.25
  %v3791 = vmul.f32 %v3759, 0.25
  %v3792 = vmul.f32 %v3760, 0.25
  %v3793 = vmul.f32 %v3761, 0.25
  %v3794 = vmul.f32 %v3762, 0.25
  %v3795 = vmul.f32 %v3763, 0.25
  %v3796 = vmul.f32 %v3764, 0.25
  %v3797 = vmul.f32 %v3765, 0.25
  %v3798 = vmul.f32 %v3766, 0.25
  %v3799 = vmul.f32 %v3767, 0.25
  %v3800 = vmul.f32 %v3768, 0.25
  %v3801 = vmul.f32 %v3769, 0.25
  %v3802 = vmul.f32 %v3770, 0.25
  %v3803 = vmul.f32 %v3771, 0.25
  %v3804 = vmul.f32 %v3772, 0.25
  %v3805 = vmul.f32 %v3773, 0.25
  %v3806 = vmul.f32 %v3774, 0.25
  %v3807 = vmul.f32 %v3775, 0.25
  %v3808 = vmul.f32 %v3776, 0.25
  %v3809 = vmul.f32 %v3777, 0.25
  %v3810 = vmul.f32 %v3778, 0.25
  %v3811 = vmul.f32 %v3779, 0.25
  %v3812 = vmul.f32 %v3780, 0.25
  %v3813 = vmul.f32 %v3781, 0.25
  %v3814 = vmul.f32 %v3782, 0.25
  %v3815 = vmul.f32 %v3783, 0.25
  %v3816 = vld [vmem:[#allocation2 + $0x9] sm:$0x1]
  %v3817 = vld [vmem:[#allocation2 + $0x19] sm:$0x1]
  %v3818 = vld [vmem:[#allocation2 + $0x29] sm:$0x1]
  %v3819 = vld [vmem:[#allocation2 + $0x39] sm:$0x1]
  %v3820 = vld [vmem:[#allocation2 + $0x49] sm:$0x1]
  %v3821 = vld [vmem:[#allocation2 + $0x59] sm:$0x1]
  %v3822 = vld [vmem:[#allocation2 + $0x69] sm:$0x1]
  %v3823 = vld [vmem:[#allocation2 + $0x79] sm:$0x1]
  %v3824 = vld [vmem:[#allocation2 + $0x89] sm:$0x1]
  %v3825 = vld [vmem:[#allocation2 + $0x99] sm:$0x1]
  %v3826 = vld [vmem:[#allocation2 + $0xa9] sm:$0x1]
  %v3827 = vld [vmem:[#allocation2 + $0xb9] sm:$0x1]
  %v3828 = vld [vmem:[#allocation2 + $0xc9] sm:$0x1]
  %v3829 = vld [vmem:[#allocation2 + $0xd9] sm:$0x1]
  %v3830 = vld [vmem:[#allocation2 + $0xe9] sm:$0x1]
  %v3831 = vld [vmem:[#allocation2 + $0xf9] sm:$0x1]
  %v3832 = vld [vmem:[#allocation2 + $0x109] sm:$0x1]
  %v3833 = vld [vmem:[#allocation2 + $0x119] sm:$0x1]
  %v3834 = vld [vmem:[#allocation2 + $0x129] sm:$0x1]
  %v3835 = vld [vmem:[#allocation2 + $0x139] sm:$0x1]
  %v3836 = vld [vmem:[#allocation2 + $0x149] sm:$0x1]
  %v3837 = vld [vmem:[#allocation2 + $0x159] sm:$0x1]
  %v3838 = vld [vmem:[#allocation2 + $0x169] sm:$0x1]
  %v3839 = vld [vmem:[#allocation2 + $0x179] sm:$0x1]
  %v3840 = vld [vmem:[#allocation2 + $0x189] sm:$0x1]
  %v3841 = vld [vmem:[#allocation2 + $0x199] sm:$0x1]
  %v3842 = vld [vmem:[#allocation2 + $0x1a9] sm:$0x1]
  %v3843 = vld [vmem:[#allocation2 + $0x1b9] sm:$0x1]
  %v3844 = vld [vmem:[#allocation2 + $0x1c9] sm:$0x1]
  %v3845 = vld [vmem:[#allocation2 + $0x1d9] sm:$0x1]
  %v3846 = vld [vmem:[#allocation2 + $0x1e9] sm:$0x1]
  %v3847 = vld [vmem:[#allocation2 + $0x1f9] sm:$0x1]
  %v3848 = vmul.f32 %v3816, 0.75
  %v3849 = vmul.f32 %v3817, 0.75
  %v3850 = vmul.f32 %v3818, 0.75
  %v3851 = vmul.f32 %v3819, 0.75
  %v3852 = vmul.f32 %v3820, 0.75
  %v3853 = vmul.f32 %v3821, 0.75
  %v3854 = vmul.f32 %v3822, 0.75
  %v3855 = vmul.f32 %v3823, 0.75
  %v3856 = vmul.f32 %v3824, 0.75
  %v3857 = vmul.f32 %v3825, 0.75
  %v3858 = vmul.f32 %v3826, 0.75
  %v3859 = vmul.f32 %v3827, 0.75
  %v3860 = vmul.f32 %v3828, 0.75
  %v3861 = vmul.f32 %v3829, 0.75
  %v3862 = vmul.f32 %v3830, 0.75
  %v3863 = vmul.f32 %v3831, 0.75
  %v3864 = vmul.f32 %v3832, 0.75
  %v3865 = vmul.f32 %v3833, 0.75
  %v3866 = vmul.f32 %v3834, 0.75
  %v3867 = vmul.f32 %v3835, 0.75
  %v3868 = vmul.f32 %v3836, 0.75
  %v3869 = vmul.f32 %v3837, 0.75
  %v3870 = vmul.f32 %v3838, 0.75
  %v3871 = vmul.f32 %v3839, 0.75
  %v3872 = vmul.f32 %v3840, 0.75
  %v3873 = vmul.f32 %v3841, 0.75
  %v3874 = vmul.f32 %v3842, 0.75
  %v3875 = vmul.f32 %v3843, 0.75
  %v3876 = vmul.f32 %v3844, 0.75
  %v3877 = vmul.f32 %v3845, 0.75
  %v3878 = vmul.f32 %v3846, 0.75
  %v3879 = vmul.f32 %v3847, 0.75
  %v3880 = vadd.f32 %v3784, %v3848
  %v3881 = vadd.f32 %v3785, %v3849
  %v3882 = vadd.f32 %v3786, %v3850
  %v3883 = vadd.f32 %v3787, %v3851
  %v3884 = vadd.f32 %v3788, %v3852
  %v3885 = vadd.f32 %v3789, %v3853
  %v3886 = vadd.f32 %v3790, %v3854
  %v3887 = vadd.f32 %v3791, %v3855
  %v3888 = vadd.f32 %v3792, %v3856
  %v3889 = vadd.f32 %v3793, %v3857
  %v3890 = vadd.f32 %v3794, %v3858
  %v3891 = vadd.f32 %v3795, %v3859
  %v3892 = vadd.f32 %v3796, %v3860
  %v3893 = vadd.f32 %v3797, %v3861
  %v3894 = vadd.f32 %v3798, %v3862
  %v3895 = vadd.f32 %v3799, %v3863
  %v3896 = vadd.f32 %v3800, %v3864
  %v3897 = vadd.f32 %v3801, %v3865
  %v3898 = vadd.f32 %v3802, %v3866
  %v3899 = vadd.f32 %v3803, %v3867
  %v3900 = vadd.f32 %v3804, %v3868
  %v3901 = vadd.f32 %v3805, %v3869
  %v3902 = vadd.f32 %v3806, %v3870
  %v3903 = vadd.f32 %v3807, %v3871
  %v3904 = vadd.f32 %v3808, %v3872
  %v3905 = vadd.f32 %v3809, %v3873
  %v3906 = vadd.f32 %v3810, %v3874
  %v3907 = vadd.f32 %v3811, %v3875
  %v3908 = vadd.f32 %v3812, %v3876
  %v3909 = vadd.f32 %v3813, %v3877
  %v3910 = vadd.f32 %v3814, %v3878
  %v3911 = vadd.f32 %v3815, %v3879
  %3912 = vst.msk [vmem:[%s1 + $0x12] sm:$0x1] %vm455, %v3880
  %3913 = vst.msk [vmem:[%s1 + $0x32] sm:$0x1] %vm455, %v3881
  %3914 = vst.msk [vmem:[%s1 + $0x52] sm:$0x1] %vm455, %v3882
  %3915 = vst.msk [vmem:[%s1 + $0x72] sm:$0x1] %vm455, %v3883
  %3916 = vst.msk [vmem:[%s1 + $0x92] sm:$0x1] %vm455, %v3884
  %3917 = vst.msk [vmem:[%s1 + $0xb2] sm:$0x1] %vm455, %v3885
  %3918 = vst.msk [vmem:[%s1 + $0xd2] sm:$0x1] %vm455, %v3886
  %3919 = vst.msk [vmem:[%s1 + $0xf2] sm:$0x1] %vm455, %v3887
  %3920 = vst.msk [vmem:[%s1 + $0x112] sm:$0x1] %vm455, %v3888
  %3921 = vst.msk [vmem:[%s1 + $0x132] sm:$0x1] %vm455, %v3889
  %3922 = vst.msk [vmem:[%s1 + $0x152] sm:$0x1] %vm455, %v3890
  %3923 = vst.msk [vmem:[%s1 + $0x172] sm:$0x1] %vm455, %v3891
  %3924 = vst.msk [vmem:[%s1 + $0x192] sm:$0x1] %vm455, %v3892
  %3925 = vst.msk [vmem:[%s1 + $0x1b2] sm:$0x1] %vm455, %v3893
  %3926 = vst.msk [vmem:[%s1 + $0x1d2] sm:$0x1] %vm455, %v3894
  %3927 = vst.msk [vmem:[%s1 + $0x1f2] sm:$0x1] %vm455, %v3895
  %3928 = vst.msk [vmem:[%s1 + $0x212] sm:$0x1] %vm455, %v3896
  %3929 = vst.msk [vmem:[%s1 + $0x232] sm:$0x1] %vm455, %v3897
  %3930 = vst.msk [vmem:[%s1 + $0x252] sm:$0x1] %vm455, %v3898
  %3931 = vst.msk [vmem:[%s1 + $0x272] sm:$0x1] %vm455, %v3899
  %3932 = vst.msk [vmem:[%s1 + $0x292] sm:$0x1] %vm455, %v3900
  %3933 = vst.msk [vmem:[%s1 + $0x2b2] sm:$0x1] %vm455, %v3901
  %3934 = vst.msk [vmem:[%s1 + $0x2d2] sm:$0x1] %vm455, %v3902
  %3935 = vst.msk [vmem:[%s1 + $0x2f2] sm:$0x1] %vm455, %v3903
  %3936 = vst.msk [vmem:[%s1 + $0x312] sm:$0x1] %vm455, %v3904
  %3937 = vst.msk [vmem:[%s1 + $0x332] sm:$0x1] %vm455, %v3905
  %3938 = vst.msk [vmem:[%s1 + $0x352] sm:$0x1] %vm455, %v3906
  %3939 = vst.msk [vmem:[%s1 + $0x372] sm:$0x1] %vm455, %v3907
  %3940 = vst.msk [vmem:[%s1 + $0x392] sm:$0x1] %vm455, %v3908
  %3941 = vst.msk [vmem:[%s1 + $0x3b2] sm:$0x1] %vm455, %v3909
  %3942 = vst.msk [vmem:[%s1 + $0x3d2] sm:$0x1] %vm455, %v3910
  %3943 = vst.msk [vmem:[%s1 + $0x3f2] sm:$0x1] %vm455, %v3911
  %v3944 = vld [vmem:[#allocation2 + $0x9] sm:$0x1]
  %v3945 = vld [vmem:[#allocation2 + $0x19] sm:$0x1]
  %v3946 = vld [vmem:[#allocation2 + $0x29] sm:$0x1]
  %v3947 = vld [vmem:[#allocation2 + $0x39] sm:$0x1]
  %v3948 = vld [vmem:[#allocation2 + $0x49] sm:$0x1]
  %v3949 = vld [vmem:[#allocation2 + $0x59] sm:$0x1]
  %v3950 = vld [vmem:[#allocation2 + $0x69] sm:$0x1]
  %v3951 = vld [vmem:[#allocation2 + $0x79] sm:$0x1]
  %v3952 = vld [vmem:[#allocation2 + $0x89] sm:$0x1]
  %v3953 = vld [vmem:[#allocation2 + $0x99] sm:$0x1]
  %v3954 = vld [vmem:[#allocation2 + $0xa9] sm:$0x1]
  %v3955 = vld [vmem:[#allocation2 + $0xb9] sm:$0x1]
  %v3956 = vld [vmem:[#allocation2 + $0xc9] sm:$0x1]
  %v3957 = vld [vmem:[#allocation2 + $0xd9] sm:$0x1]
  %v3958 = vld [vmem:[#allocation2 + $0xe9] sm:$0x1]
  %v3959 = vld [vmem:[#allocation2 + $0xf9] sm:$0x1]
  %v3960 = vld [vmem:[#allocation2 + $0x109] sm:$0x1]
  %v3961 = vld [vmem:[#allocation2 + $0x119] sm:$0x1]
  %v3962 = vld [vmem:[#allocation2 + $0x129] sm:$0x1]
  %v3963 = vld [vmem:[#allocation2 + $0x139] sm:$0x1]
  %v3964 = vld [vmem:[#allocation2 + $0x149] sm:$0x1]
  %v3965 = vld [vmem:[#allocation2 + $0x159] sm:$0x1]
  %v3966 = vld [vmem:[#allocation2 + $0x169] sm:$0x1]
  %v3967 = vld [vmem:[#allocation2 + $0x179] sm:$0x1]
  %v3968 = vld [vmem:[#allocation2 + $0x189] sm:$0x1]
  %v3969 = vld [vmem:[#allocation2 + $0x199] sm:$0x1]
  %v3970 = vld [vmem:[#allocation2 + $0x1a9] sm:$0x1]
  %v3971 = vld [vmem:[#allocation2 + $0x1b9] sm:$0x1]
  %v3972 = vld [vmem:[#allocation2 + $0x1c9] sm:$0x1]
  %v3973 = vld [vmem:[#allocation2 + $0x1d9] sm:$0x1]
  %v3974 = vld [vmem:[#allocation2 + $0x1e9] sm:$0x1]
  %v3975 = vld [vmem:[#allocation2 + $0x1f9] sm:$0x1]
  %v3976 = vmul.f32 %v3944, 0.75
  %v3977 = vmul.f32 %v3945, 0.75
  %v3978 = vmul.f32 %v3946, 0.75
  %v3979 = vmul.f32 %v3947, 0.75
  %v3980 = vmul.f32 %v3948, 0.75
  %v3981 = vmul.f32 %v3949, 0.75
  %v3982 = vmul.f32 %v3950, 0.75
  %v3983 = vmul.f32 %v3951, 0.75
  %v3984 = vmul.f32 %v3952, 0.75
  %v3985 = vmul.f32 %v3953, 0.75
  %v3986 = vmul.f32 %v3954, 0.75
  %v3987 = vmul.f32 %v3955, 0.75
  %v3988 = vmul.f32 %v3956, 0.75
  %v3989 = vmul.f32 %v3957, 0.75
  %v3990 = vmul.f32 %v3958, 0.75
  %v3991 = vmul.f32 %v3959, 0.75
  %v3992 = vmul.f32 %v3960, 0.75
  %v3993 = vmul.f32 %v3961, 0.75
  %v3994 = vmul.f32 %v3962, 0.75
  %v3995 = vmul.f32 %v3963, 0.75
  %v3996 = vmul.f32 %v3964, 0.75
  %v3997 = vmul.f32 %v3965, 0.75
  %v3998 = vmul.f32 %v3966, 0.75
  %v3999 = vmul.f32 %v3967, 0.75
  %v4000 = vmul.f32 %v3968, 0.75
  %v4001 = vmul.f32 %v3969, 0.75
  %v4002 = vmul.f32 %v3970, 0.75
  %v4003 = vmul.f32 %v3971, 0.75
  %v4004 = vmul.f32 %v3972, 0.75
  %v4005 = vmul.f32 %v3973, 0.75
  %v4006 = vmul.f32 %v3974, 0.75
  %v4007 = vmul.f32 %v3975, 0.75
  %v4008 = vld [vmem:[#allocation2 + $0xa] sm:$0x1]
  %v4009 = vld [vmem:[#allocation2 + $0x1a] sm:$0x1]
  %v4010 = vld [vmem:[#allocation2 + $0x2a] sm:$0x1]
  %v4011 = vld [vmem:[#allocation2 + $0x3a] sm:$0x1]
  %v4012 = vld [vmem:[#allocation2 + $0x4a] sm:$0x1]
  %v4013 = vld [vmem:[#allocation2 + $0x5a] sm:$0x1]
  %v4014 = vld [vmem:[#allocation2 + $0x6a] sm:$0x1]
  %v4015 = vld [vmem:[#allocation2 + $0x7a] sm:$0x1]
  %v4016 = vld [vmem:[#allocation2 + $0x8a] sm:$0x1]
  %v4017 = vld [vmem:[#allocation2 + $0x9a] sm:$0x1]
  %v4018 = vld [vmem:[#allocation2 + $0xaa] sm:$0x1]
  %v4019 = vld [vmem:[#allocation2 + $0xba] sm:$0x1]
  %v4020 = vld [vmem:[#allocation2 + $0xca] sm:$0x1]
  %v4021 = vld [vmem:[#allocation2 + $0xda] sm:$0x1]
  %v4022 = vld [vmem:[#allocation2 + $0xea] sm:$0x1]
  %v4023 = vld [vmem:[#allocation2 + $0xfa] sm:$0x1]
  %v4024 = vld [vmem:[#allocation2 + $0x10a] sm:$0x1]
  %v4025 = vld [vmem:[#allocation2 + $0x11a] sm:$0x1]
  %v4026 = vld [vmem:[#allocation2 + $0x12a] sm:$0x1]
  %v4027 = vld [vmem:[#allocation2 + $0x13a] sm:$0x1]
  %v4028 = vld [vmem:[#allocation2 + $0x14a] sm:$0x1]
  %v4029 = vld [vmem:[#allocation2 + $0x15a] sm:$0x1]
  %v4030 = vld [vmem:[#allocation2 + $0x16a] sm:$0x1]
  %v4031 = vld [vmem:[#allocation2 + $0x17a] sm:$0x1]
  %v4032 = vld [vmem:[#allocation2 + $0x18a] sm:$0x1]
  %v4033 = vld [vmem:[#allocation2 + $0x19a] sm:$0x1]
  %v4034 = vld [vmem:[#allocation2 + $0x1aa] sm:$0x1]
  %v4035 = vld [vmem:[#allocation2 + $0x1ba] sm:$0x1]
  %v4036 = vld [vmem:[#allocation2 + $0x1ca] sm:$0x1]
  %v4037 = vld [vmem:[#allocation2 + $0x1da] sm:$0x1]
  %v4038 = vld [vmem:[#allocation2 + $0x1ea] sm:$0x1]
  %v4039 = vld [vmem:[#allocation2 + $0x1fa] sm:$0x1]
  %v4040 = vmul.f32 %v4008, 0.25
  %v4041 = vmul.f32 %v4009, 0.25
  %v4042 = vmul.f32 %v4010, 0.25
  %v4043 = vmul.f32 %v4011, 0.25
  %v4044 = vmul.f32 %v4012, 0.25
  %v4045 = vmul.f32 %v4013, 0.25
  %v4046 = vmul.f32 %v4014, 0.25
  %v4047 = vmul.f32 %v4015, 0.25
  %v4048 = vmul.f32 %v4016, 0.25
  %v4049 = vmul.f32 %v4017, 0.25
  %v4050 = vmul.f32 %v4018, 0.25
  %v4051 = vmul.f32 %v4019, 0.25
  %v4052 = vmul.f32 %v4020, 0.25
  %v4053 = vmul.f32 %v4021, 0.25
  %v4054 = vmul.f32 %v4022, 0.25
  %v4055 = vmul.f32 %v4023, 0.25
  %v4056 = vmul.f32 %v4024, 0.25
  %v4057 = vmul.f32 %v4025, 0.25
  %v4058 = vmul.f32 %v4026, 0.25
  %v4059 = vmul.f32 %v4027, 0.25
  %v4060 = vmul.f32 %v4028, 0.25
  %v4061 = vmul.f32 %v4029, 0.25
  %v4062 = vmul.f32 %v4030, 0.25
  %v4063 = vmul.f32 %v4031, 0.25
  %v4064 = vmul.f32 %v4032, 0.25
  %v4065 = vmul.f32 %v4033, 0.25
  %v4066 = vmul.f32 %v4034, 0.25
  %v4067 = vmul.f32 %v4035, 0.25
  %v4068 = vmul.f32 %v4036, 0.25
  %v4069 = vmul.f32 %v4037, 0.25
  %v4070 = vmul.f32 %v4038, 0.25
  %v4071 = vmul.f32 %v4039, 0.25
  %v4072 = vadd.f32 %v3976, %v4040
  %v4073 = vadd.f32 %v3977, %v4041
  %v4074 = vadd.f32 %v3978, %v4042
  %v4075 = vadd.f32 %v3979, %v4043
  %v4076 = vadd.f32 %v3980, %v4044
  %v4077 = vadd.f32 %v3981, %v4045
  %v4078 = vadd.f32 %v3982, %v4046
  %v4079 = vadd.f32 %v3983, %v4047
  %v4080 = vadd.f32 %v3984, %v4048
  %v4081 = vadd.f32 %v3985, %v4049
  %v4082 = vadd.f32 %v3986, %v4050
  %v4083 = vadd.f32 %v3987, %v4051
  %v4084 = vadd.f32 %v3988, %v4052
  %v4085 = vadd.f32 %v3989, %v4053
  %v4086 = vadd.f32 %v3990, %v4054
  %v4087 = vadd.f32 %v3991, %v4055
  %v4088 = vadd.f32 %v3992, %v4056
  %v4089 = vadd.f32 %v3993, %v4057
  %v4090 = vadd.f32 %v3994, %v4058
  %v4091 = vadd.f32 %v3995, %v4059
  %v4092 = vadd.f32 %v3996, %v4060
  %v4093 = vadd.f32 %v3997, %v4061
  %v4094 = vadd.f32 %v3998, %v4062
  %v4095 = vadd.f32 %v3999, %v4063
  %v4096 = vadd.f32 %v4000, %v4064
  %v4097 = vadd.f32 %v4001, %v4065
  %v4098 = vadd.f32 %v4002, %v4066
  %v4099 = vadd.f32 %v4003, %v4067
  %v4100 = vadd.f32 %v4004, %v4068
  %v4101 = vadd.f32 %v4005, %v4069
  %v4102 = vadd.f32 %v4006, %v4070
  %v4103 = vadd.f32 %v4007, %v4071
  %4104 = vst.msk [vmem:[%s1 + $0x13] sm:$0x1] %vm455, %v4072
  %4105 = vst.msk [vmem:[%s1 + $0x33] sm:$0x1] %vm455, %v4073
  %4106 = vst.msk [vmem:[%s1 + $0x53] sm:$0x1] %vm455, %v4074
  %4107 = vst.msk [vmem:[%s1 + $0x73] sm:$0x1] %vm455, %v4075
  %4108 = vst.msk [vmem:[%s1 + $0x93] sm:$0x1] %vm455, %v4076
  %4109 = vst.msk [vmem:[%s1 + $0xb3] sm:$0x1] %vm455, %v4077
  %4110 = vst.msk [vmem:[%s1 + $0xd3] sm:$0x1] %vm455, %v4078
  %4111 = vst.msk [vmem:[%s1 + $0xf3] sm:$0x1] %vm455, %v4079
  %4112 = vst.msk [vmem:[%s1 + $0x113] sm:$0x1] %vm455, %v4080
  %4113 = vst.msk [vmem:[%s1 + $0x133] sm:$0x1] %vm455, %v4081
  %4114 = vst.msk [vmem:[%s1 + $0x153] sm:$0x1] %vm455, %v4082
  %4115 = vst.msk [vmem:[%s1 + $0x173] sm:$0x1] %vm455, %v4083
  %4116 = vst.msk [vmem:[%s1 + $0x193] sm:$0x1] %vm455, %v4084
  %4117 = vst.msk [vmem:[%s1 + $0x1b3] sm:$0x1] %vm455, %v4085
  %4118 = vst.msk [vmem:[%s1 + $0x1d3] sm:$0x1] %vm455, %v4086
  %4119 = vst.msk [vmem:[%s1 + $0x1f3] sm:$0x1] %vm455, %v4087
  %4120 = vst.msk [vmem:[%s1 + $0x213] sm:$0x1] %vm455, %v4088
  %4121 = vst.msk [vmem:[%s1 + $0x233] sm:$0x1] %vm455, %v4089
  %4122 = vst.msk [vmem:[%s1 + $0x253] sm:$0x1] %vm455, %v4090
  %4123 = vst.msk [vmem:[%s1 + $0x273] sm:$0x1] %vm455, %v4091
  %4124 = vst.msk [vmem:[%s1 + $0x293] sm:$0x1] %vm455, %v4092
  %4125 = vst.msk [vmem:[%s1 + $0x2b3] sm:$0x1] %vm455, %v4093
  %4126 = vst.msk [vmem:[%s1 + $0x2d3] sm:$0x1] %vm455, %v4094
  %4127 = vst.msk [vmem:[%s1 + $0x2f3] sm:$0x1] %vm455, %v4095
  %4128 = vst.msk [vmem:[%s1 + $0x313] sm:$0x1] %vm455, %v4096
  %4129 = vst.msk [vmem:[%s1 + $0x333] sm:$0x1] %vm455, %v4097
  %4130 = vst.msk [vmem:[%s1 + $0x353] sm:$0x1] %vm455, %v4098
  %4131 = vst.msk [vmem:[%s1 + $0x373] sm:$0x1] %vm455, %v4099
  %4132 = vst.msk [vmem:[%s1 + $0x393] sm:$0x1] %vm455, %v4100
  %4133 = vst.msk [vmem:[%s1 + $0x3b3] sm:$0x1] %vm455, %v4101
  %4134 = vst.msk [vmem:[%s1 + $0x3d3] sm:$0x1] %vm455, %v4102
  %4135 = vst.msk [vmem:[%s1 + $0x3f3] sm:$0x1] %vm455, %v4103
  %v4136 = vld [vmem:[#allocation2 + $0x9] sm:$0x1]
  %v4137 = vld [vmem:[#allocation2 + $0x19] sm:$0x1]
  %v4138 = vld [vmem:[#allocation2 + $0x29] sm:$0x1]
  %v4139 = vld [vmem:[#allocation2 + $0x39] sm:$0x1]
  %v4140 = vld [vmem:[#allocation2 + $0x49] sm:$0x1]
  %v4141 = vld [vmem:[#allocation2 + $0x59] sm:$0x1]
  %v4142 = vld [vmem:[#allocation2 + $0x69] sm:$0x1]
  %v4143 = vld [vmem:[#allocation2 + $0x79] sm:$0x1]
  %v4144 = vld [vmem:[#allocation2 + $0x89] sm:$0x1]
  %v4145 = vld [vmem:[#allocation2 + $0x99] sm:$0x1]
  %v4146 = vld [vmem:[#allocation2 + $0xa9] sm:$0x1]
  %v4147 = vld [vmem:[#allocation2 + $0xb9] sm:$0x1]
  %v4148 = vld [vmem:[#allocation2 + $0xc9] sm:$0x1]
  %v4149 = vld [vmem:[#allocation2 + $0xd9] sm:$0x1]
  %v4150 = vld [vmem:[#allocation2 + $0xe9] sm:$0x1]
  %v4151 = vld [vmem:[#allocation2 + $0xf9] sm:$0x1]
  %v4152 = vld [vmem:[#allocation2 + $0x109] sm:$0x1]
  %v4153 = vld [vmem:[#allocation2 + $0x119] sm:$0x1]
  %v4154 = vld [vmem:[#allocation2 + $0x129] sm:$0x1]
  %v4155 = vld [vmem:[#allocation2 + $0x139] sm:$0x1]
  %v4156 = vld [vmem:[#allocation2 + $0x149] sm:$0x1]
  %v4157 = vld [vmem:[#allocation2 + $0x159] sm:$0x1]
  %v4158 = vld [vmem:[#allocation2 + $0x169] sm:$0x1]
  %v4159 = vld [vmem:[#allocation2 + $0x179] sm:$0x1]
  %v4160 = vld [vmem:[#allocation2 + $0x189] sm:$0x1]
  %v4161 = vld [vmem:[#allocation2 + $0x199] sm:$0x1]
  %v4162 = vld [vmem:[#allocation2 + $0x1a9] sm:$0x1]
  %v4163 = vld [vmem:[#allocation2 + $0x1b9] sm:$0x1]
  %v4164 = vld [vmem:[#allocation2 + $0x1c9] sm:$0x1]
  %v4165 = vld [vmem:[#allocation2 + $0x1d9] sm:$0x1]
  %v4166 = vld [vmem:[#allocation2 + $0x1e9] sm:$0x1]
  %v4167 = vld [vmem:[#allocation2 + $0x1f9] sm:$0x1]
  %v4168 = vmul.f32 %v4136, 0.25
  %v4169 = vmul.f32 %v4137, 0.25
  %v4170 = vmul.f32 %v4138, 0.25
  %v4171 = vmul.f32 %v4139, 0.25
  %v4172 = vmul.f32 %v4140, 0.25
  %v4173 = vmul.f32 %v4141, 0.25
  %v4174 = vmul.f32 %v4142, 0.25
  %v4175 = vmul.f32 %v4143, 0.25
  %v4176 = vmul.f32 %v4144, 0.25
  %v4177 = vmul.f32 %v4145, 0.25
  %v4178 = vmul.f32 %v4146, 0.25
  %v4179 = vmul.f32 %v4147, 0.25
  %v4180 = vmul.f32 %v4148, 0.25
  %v4181 = vmul.f32 %v4149, 0.25
  %v4182 = vmul.f32 %v4150, 0.25
  %v4183 = vmul.f32 %v4151, 0.25
  %v4184 = vmul.f32 %v4152, 0.25
  %v4185 = vmul.f32 %v4153, 0.25
  %v4186 = vmul.f32 %v4154, 0.25
  %v4187 = vmul.f32 %v4155, 0.25
  %v4188 = vmul.f32 %v4156, 0.25
  %v4189 = vmul.f32 %v4157, 0.25
  %v4190 = vmul.f32 %v4158, 0.25
  %v4191 = vmul.f32 %v4159, 0.25
  %v4192 = vmul.f32 %v4160, 0.25
  %v4193 = vmul.f32 %v4161, 0.25
  %v4194 = vmul.f32 %v4162, 0.25
  %v4195 = vmul.f32 %v4163, 0.25
  %v4196 = vmul.f32 %v4164, 0.25
  %v4197 = vmul.f32 %v4165, 0.25
  %v4198 = vmul.f32 %v4166, 0.25
  %v4199 = vmul.f32 %v4167, 0.25
  %v4200 = vld [vmem:[#allocation2 + $0xa] sm:$0x1]
  %v4201 = vld [vmem:[#allocation2 + $0x1a] sm:$0x1]
  %v4202 = vld [vmem:[#allocation2 + $0x2a] sm:$0x1]
  %v4203 = vld [vmem:[#allocation2 + $0x3a] sm:$0x1]
  %v4204 = vld [vmem:[#allocation2 + $0x4a] sm:$0x1]
  %v4205 = vld [vmem:[#allocation2 + $0x5a] sm:$0x1]
  %v4206 = vld [vmem:[#allocation2 + $0x6a] sm:$0x1]
  %v4207 = vld [vmem:[#allocation2 + $0x7a] sm:$0x1]
  %v4208 = vld [vmem:[#allocation2 + $0x8a] sm:$0x1]
  %v4209 = vld [vmem:[#allocation2 + $0x9a] sm:$0x1]
  %v4210 = vld [vmem:[#allocation2 + $0xaa] sm:$0x1]
  %v4211 = vld [vmem:[#allocation2 + $0xba] sm:$0x1]
  %v4212 = vld [vmem:[#allocation2 + $0xca] sm:$0x1]
  %v4213 = vld [vmem:[#allocation2 + $0xda] sm:$0x1]
  %v4214 = vld [vmem:[#allocation2 + $0xea] sm:$0x1]
  %v4215 = vld [vmem:[#allocation2 + $0xfa] sm:$0x1]
  %v4216 = vld [vmem:[#allocation2 + $0x10a] sm:$0x1]
  %v4217 = vld [vmem:[#allocation2 + $0x11a] sm:$0x1]
  %v4218 = vld [vmem:[#allocation2 + $0x12a] sm:$0x1]
  %v4219 = vld [vmem:[#allocation2 + $0x13a] sm:$0x1]
  %v4220 = vld [vmem:[#allocation2 + $0x14a] sm:$0x1]
  %v4221 = vld [vmem:[#allocation2 + $0x15a] sm:$0x1]
  %v4222 = vld [vmem:[#allocation2 + $0x16a] sm:$0x1]
  %v4223 = vld [vmem:[#allocation2 + $0x17a] sm:$0x1]
  %v4224 = vld [vmem:[#allocation2 + $0x18a] sm:$0x1]
  %v4225 = vld [vmem:[#allocation2 + $0x19a] sm:$0x1]
  %v4226 = vld [vmem:[#allocation2 + $0x1aa] sm:$0x1]
  %v4227 = vld [vmem:[#allocation2 + $0x1ba] sm:$0x1]
  %v4228 = vld [vmem:[#allocation2 + $0x1ca] sm:$0x1]
  %v4229 = vld [vmem:[#allocation2 + $0x1da] sm:$0x1]
  %v4230 = vld [vmem:[#allocation2 + $0x1ea] sm:$0x1]
  %v4231 = vld [vmem:[#allocation2 + $0x1fa] sm:$0x1]
  %v4232 = vmul.f32 %v4200, 0.75
  %v4233 = vmul.f32 %v4201, 0.75
  %v4234 = vmul.f32 %v4202, 0.75
  %v4235 = vmul.f32 %v4203, 0.75
  %v4236 = vmul.f32 %v4204, 0.75
  %v4237 = vmul.f32 %v4205, 0.75
  %v4238 = vmul.f32 %v4206, 0.75
  %v4239 = vmul.f32 %v4207, 0.75
  %v4240 = vmul.f32 %v4208, 0.75
  %v4241 = vmul.f32 %v4209, 0.75
  %v4242 = vmul.f32 %v4210, 0.75
  %v4243 = vmul.f32 %v4211, 0.75
  %v4244 = vmul.f32 %v4212, 0.75
  %v4245 = vmul.f32 %v4213, 0.75
  %v4246 = vmul.f32 %v4214, 0.75
  %v4247 = vmul.f32 %v4215, 0.75
  %v4248 = vmul.f32 %v4216, 0.75
  %v4249 = vmul.f32 %v4217, 0.75
  %v4250 = vmul.f32 %v4218, 0.75
  %v4251 = vmul.f32 %v4219, 0.75
  %v4252 = vmul.f32 %v4220, 0.75
  %v4253 = vmul.f32 %v4221, 0.75
  %v4254 = vmul.f32 %v4222, 0.75
  %v4255 = vmul.f32 %v4223, 0.75
  %v4256 = vmul.f32 %v4224, 0.75
  %v4257 = vmul.f32 %v4225, 0.75
  %v4258 = vmul.f32 %v4226, 0.75
  %v4259 = vmul.f32 %v4227, 0.75
  %v4260 = vmul.f32 %v4228, 0.75
  %v4261 = vmul.f32 %v4229, 0.75
  %v4262 = vmul.f32 %v4230, 0.75
  %v4263 = vmul.f32 %v4231, 0.75
  %v4264 = vadd.f32 %v4168, %v4232
  %v4265 = vadd.f32 %v4169, %v4233
  %v4266 = vadd.f32 %v4170, %v4234
  %v4267 = vadd.f32 %v4171, %v4235
  %v4268 = vadd.f32 %v4172, %v4236
  %v4269 = vadd.f32 %v4173, %v4237
  %v4270 = vadd.f32 %v4174, %v4238
  %v4271 = vadd.f32 %v4175, %v4239
  %v4272 = vadd.f32 %v4176, %v4240
  %v4273 = vadd.f32 %v4177, %v4241
  %v4274 = vadd.f32 %v4178, %v4242
  %v4275 = vadd.f32 %v4179, %v4243
  %v4276 = vadd.f32 %v4180, %v4244
  %v4277 = vadd.f32 %v4181, %v4245
  %v4278 = vadd.f32 %v4182, %v4246
  %v4279 = vadd.f32 %v4183, %v4247
  %v4280 = vadd.f32 %v4184, %v4248
  %v4281 = vadd.f32 %v4185, %v4249
  %v4282 = vadd.f32 %v4186, %v4250
  %v4283 = vadd.f32 %v4187, %v4251
  %v4284 = vadd.f32 %v4188, %v4252
  %v4285 = vadd.f32 %v4189, %v4253
  %v4286 = vadd.f32 %v4190, %v4254
  %v4287 = vadd.f32 %v4191, %v4255
  %v4288 = vadd.f32 %v4192, %v4256
  %v4289 = vadd.f32 %v4193, %v4257
  %v4290 = vadd.f32 %v4194, %v4258
  %v4291 = vadd.f32 %v4195, %v4259
  %v4292 = vadd.f32 %v4196, %v4260
  %v4293 = vadd.f32 %v4197, %v4261
  %v4294 = vadd.f32 %v4198, %v4262
  %v4295 = vadd.f32 %v4199, %v4263
  %4296 = vst.msk [vmem:[%s1 + $0x14] sm:$0x1] %vm455, %v4264
  %4297 = vst.msk [vmem:[%s1 + $0x34] sm:$0x1] %vm455, %v4265
  %4298 = vst.msk [vmem:[%s1 + $0x54] sm:$0x1] %vm455, %v4266
  %4299 = vst.msk [vmem:[%s1 + $0x74] sm:$0x1] %vm455, %v4267
  %4300 = vst.msk [vmem:[%s1 + $0x94] sm:$0x1] %vm455, %v4268
  %4301 = vst.msk [vmem:[%s1 + $0xb4] sm:$0x1] %vm455, %v4269
  %4302 = vst.msk [vmem:[%s1 + $0xd4] sm:$0x1] %vm455, %v4270
  %4303 = vst.msk [vmem:[%s1 + $0xf4] sm:$0x1] %vm455, %v4271
  %4304 = vst.msk [vmem:[%s1 + $0x114] sm:$0x1] %vm455, %v4272
  %4305 = vst.msk [vmem:[%s1 + $0x134] sm:$0x1] %vm455, %v4273
  %4306 = vst.msk [vmem:[%s1 + $0x154] sm:$0x1] %vm455, %v4274
  %4307 = vst.msk [vmem:[%s1 + $0x174] sm:$0x1] %vm455, %v4275
  %4308 = vst.msk [vmem:[%s1 + $0x194] sm:$0x1] %vm455, %v4276
  %4309 = vst.msk [vmem:[%s1 + $0x1b4] sm:$0x1] %vm455, %v4277
  %4310 = vst.msk [vmem:[%s1 + $0x1d4] sm:$0x1] %vm455, %v4278
  %4311 = vst.msk [vmem:[%s1 + $0x1f4] sm:$0x1] %vm455, %v4279
  %4312 = vst.msk [vmem:[%s1 + $0x214] sm:$0x1] %vm455, %v4280
  %4313 = vst.msk [vmem:[%s1 + $0x234] sm:$0x1] %vm455, %v4281
  %4314 = vst.msk [vmem:[%s1 + $0x254] sm:$0x1] %vm455, %v4282
  %4315 = vst.msk [vmem:[%s1 + $0x274] sm:$0x1] %vm455, %v4283
  %4316 = vst.msk [vmem:[%s1 + $0x294] sm:$0x1] %vm455, %v4284
  %4317 = vst.msk [vmem:[%s1 + $0x2b4] sm:$0x1] %vm455, %v4285
  %4318 = vst.msk [vmem:[%s1 + $0x2d4] sm:$0x1] %vm455, %v4286
  %4319 = vst.msk [vmem:[%s1 + $0x2f4] sm:$0x1] %vm455, %v4287
  %4320 = vst.msk [vmem:[%s1 + $0x314] sm:$0x1] %vm455, %v4288
  %4321 = vst.msk [vmem:[%s1 + $0x334] sm:$0x1] %vm455, %v4289
  %4322 = vst.msk [vmem:[%s1 + $0x354] sm:$0x1] %vm455, %v4290
  %4323 = vst.msk [vmem:[%s1 + $0x374] sm:$0x1] %vm455, %v4291
  %4324 = vst.msk [vmem:[%s1 + $0x394] sm:$0x1] %vm455, %v4292
  %4325 = vst.msk [vmem:[%s1 + $0x3b4] sm:$0x1] %vm455, %v4293
  %4326 = vst.msk [vmem:[%s1 + $0x3d4] sm:$0x1] %vm455, %v4294
  %4327 = vst.msk [vmem:[%s1 + $0x3f4] sm:$0x1] %vm455, %v4295
  %v4328 = vld [vmem:[#allocation2 + $0xa] sm:$0x1]
  %v4329 = vld [vmem:[#allocation2 + $0x1a] sm:$0x1]
  %v4330 = vld [vmem:[#allocation2 + $0x2a] sm:$0x1]
  %v4331 = vld [vmem:[#allocation2 + $0x3a] sm:$0x1]
  %v4332 = vld [vmem:[#allocation2 + $0x4a] sm:$0x1]
  %v4333 = vld [vmem:[#allocation2 + $0x5a] sm:$0x1]
  %v4334 = vld [vmem:[#allocation2 + $0x6a] sm:$0x1]
  %v4335 = vld [vmem:[#allocation2 + $0x7a] sm:$0x1]
  %v4336 = vld [vmem:[#allocation2 + $0x8a] sm:$0x1]
  %v4337 = vld [vmem:[#allocation2 + $0x9a] sm:$0x1]
  %v4338 = vld [vmem:[#allocation2 + $0xaa] sm:$0x1]
  %v4339 = vld [vmem:[#allocation2 + $0xba] sm:$0x1]
  %v4340 = vld [vmem:[#allocation2 + $0xca] sm:$0x1]
  %v4341 = vld [vmem:[#allocation2 + $0xda] sm:$0x1]
  %v4342 = vld [vmem:[#allocation2 + $0xea] sm:$0x1]
  %v4343 = vld [vmem:[#allocation2 + $0xfa] sm:$0x1]
  %v4344 = vld [vmem:[#allocation2 + $0x10a] sm:$0x1]
  %v4345 = vld [vmem:[#allocation2 + $0x11a] sm:$0x1]
  %v4346 = vld [vmem:[#allocation2 + $0x12a] sm:$0x1]
  %v4347 = vld [vmem:[#allocation2 + $0x13a] sm:$0x1]
  %v4348 = vld [vmem:[#allocation2 + $0x14a] sm:$0x1]
  %v4349 = vld [vmem:[#allocation2 + $0x15a] sm:$0x1]
  %v4350 = vld [vmem:[#allocation2 + $0x16a] sm:$0x1]
  %v4351 = vld [vmem:[#allocation2 + $0x17a] sm:$0x1]
  %v4352 = vld [vmem:[#allocation2 + $0x18a] sm:$0x1]
  %v4353 = vld [vmem:[#allocation2 + $0x19a] sm:$0x1]
  %v4354 = vld [vmem:[#allocation2 + $0x1aa] sm:$0x1]
  %v4355 = vld [vmem:[#allocation2 + $0x1ba] sm:$0x1]
  %v4356 = vld [vmem:[#allocation2 + $0x1ca] sm:$0x1]
  %v4357 = vld [vmem:[#allocation2 + $0x1da] sm:$0x1]
  %v4358 = vld [vmem:[#allocation2 + $0x1ea] sm:$0x1]
  %v4359 = vld [vmem:[#allocation2 + $0x1fa] sm:$0x1]
  %v4360 = vmul.f32 %v4328, 0.75
  %v4361 = vmul.f32 %v4329, 0.75
  %v4362 = vmul.f32 %v4330, 0.75
  %v4363 = vmul.f32 %v4331, 0.75
  %v4364 = vmul.f32 %v4332, 0.75
  %v4365 = vmul.f32 %v4333, 0.75
  %v4366 = vmul.f32 %v4334, 0.75
  %v4367 = vmul.f32 %v4335, 0.75
  %v4368 = vmul.f32 %v4336, 0.75
  %v4369 = vmul.f32 %v4337, 0.75
  %v4370 = vmul.f32 %v4338, 0.75
  %v4371 = vmul.f32 %v4339, 0.75
  %v4372 = vmul.f32 %v4340, 0.75
  %v4373 = vmul.f32 %v4341, 0.75
  %v4374 = vmul.f32 %v4342, 0.75
  %v4375 = vmul.f32 %v4343, 0.75
  %v4376 = vmul.f32 %v4344, 0.75
  %v4377 = vmul.f32 %v4345, 0.75
  %v4378 = vmul.f32 %v4346, 0.75
  %v4379 = vmul.f32 %v4347, 0.75
  %v4380 = vmul.f32 %v4348, 0.75
  %v4381 = vmul.f32 %v4349, 0.75
  %v4382 = vmul.f32 %v4350, 0.75
  %v4383 = vmul.f32 %v4351, 0.75
  %v4384 = vmul.f32 %v4352, 0.75
  %v4385 = vmul.f32 %v4353, 0.75
  %v4386 = vmul.f32 %v4354, 0.75
  %v4387 = vmul.f32 %v4355, 0.75
  %v4388 = vmul.f32 %v4356, 0.75
  %v4389 = vmul.f32 %v4357, 0.75
  %v4390 = vmul.f32 %v4358, 0.75
  %v4391 = vmul.f32 %v4359, 0.75
  %v4392 = vld [vmem:[#allocation2 + $0xb] sm:$0x1]
  %v4393 = vld [vmem:[#allocation2 + $0x1b] sm:$0x1]
  %v4394 = vld [vmem:[#allocation2 + $0x2b] sm:$0x1]
  %v4395 = vld [vmem:[#allocation2 + $0x3b] sm:$0x1]
  %v4396 = vld [vmem:[#allocation2 + $0x4b] sm:$0x1]
  %v4397 = vld [vmem:[#allocation2 + $0x5b] sm:$0x1]
  %v4398 = vld [vmem:[#allocation2 + $0x6b] sm:$0x1]
  %v4399 = vld [vmem:[#allocation2 + $0x7b] sm:$0x1]
  %v4400 = vld [vmem:[#allocation2 + $0x8b] sm:$0x1]
  %v4401 = vld [vmem:[#allocation2 + $0x9b] sm:$0x1]
  %v4402 = vld [vmem:[#allocation2 + $0xab] sm:$0x1]
  %v4403 = vld [vmem:[#allocation2 + $0xbb] sm:$0x1]
  %v4404 = vld [vmem:[#allocation2 + $0xcb] sm:$0x1]
  %v4405 = vld [vmem:[#allocation2 + $0xdb] sm:$0x1]
  %v4406 = vld [vmem:[#allocation2 + $0xeb] sm:$0x1]
  %v4407 = vld [vmem:[#allocation2 + $0xfb] sm:$0x1]
  %v4408 = vld [vmem:[#allocation2 + $0x10b] sm:$0x1]
  %v4409 = vld [vmem:[#allocation2 + $0x11b] sm:$0x1]
  %v4410 = vld [vmem:[#allocation2 + $0x12b] sm:$0x1]
  %v4411 = vld [vmem:[#allocation2 + $0x13b] sm:$0x1]
  %v4412 = vld [vmem:[#allocation2 + $0x14b] sm:$0x1]
  %v4413 = vld [vmem:[#allocation2 + $0x15b] sm:$0x1]
  %v4414 = vld [vmem:[#allocation2 + $0x16b] sm:$0x1]
  %v4415 = vld [vmem:[#allocation2 + $0x17b] sm:$0x1]
  %v4416 = vld [vmem:[#allocation2 + $0x18b] sm:$0x1]
  %v4417 = vld [vmem:[#allocation2 + $0x19b] sm:$0x1]
  %v4418 = vld [vmem:[#allocation2 + $0x1ab] sm:$0x1]
  %v4419 = vld [vmem:[#allocation2 + $0x1bb] sm:$0x1]
  %v4420 = vld [vmem:[#allocation2 + $0x1cb] sm:$0x1]
  %v4421 = vld [vmem:[#allocation2 + $0x1db] sm:$0x1]
  %v4422 = vld [vmem:[#allocation2 + $0x1eb] sm:$0x1]
  %v4423 = vld [vmem:[#allocation2 + $0x1fb] sm:$0x1]
  %v4424 = vmul.f32 %v4392, 0.25
  %v4425 = vmul.f32 %v4393, 0.25
  %v4426 = vmul.f32 %v4394, 0.25
  %v4427 = vmul.f32 %v4395, 0.25
  %v4428 = vmul.f32 %v4396, 0.25
  %v4429 = vmul.f32 %v4397, 0.25
  %v4430 = vmul.f32 %v4398, 0.25
  %v4431 = vmul.f32 %v4399, 0.25
  %v4432 = vmul.f32 %v4400, 0.25
  %v4433 = vmul.f32 %v4401, 0.25
  %v4434 = vmul.f32 %v4402, 0.25
  %v4435 = vmul.f32 %v4403, 0.25
  %v4436 = vmul.f32 %v4404, 0.25
  %v4437 = vmul.f32 %v4405, 0.25
  %v4438 = vmul.f32 %v4406, 0.25
  %v4439 = vmul.f32 %v4407, 0.25
  %v4440 = vmul.f32 %v4408, 0.25
  %v4441 = vmul.f32 %v4409, 0.25
  %v4442 = vmul.f32 %v4410, 0.25
  %v4443 = vmul.f32 %v4411, 0.25
  %v4444 = vmul.f32 %v4412, 0.25
  %v4445 = vmul.f32 %v4413, 0.25
  %v4446 = vmul.f32 %v4414, 0.25
  %v4447 = vmul.f32 %v4415, 0.25
  %v4448 = vmul.f32 %v4416, 0.25
  %v4449 = vmul.f32 %v4417, 0.25
  %v4450 = vmul.f32 %v4418, 0.25
  %v4451 = vmul.f32 %v4419, 0.25
  %v4452 = vmul.f32 %v4420, 0.25
  %v4453 = vmul.f32 %v4421, 0.25
  %v4454 = vmul.f32 %v4422, 0.25
  %v4455 = vmul.f32 %v4423, 0.25
  %v4456 = vadd.f32 %v4360, %v4424
  %v4457 = vadd.f32 %v4361, %v4425
  %v4458 = vadd.f32 %v4362, %v4426
  %v4459 = vadd.f32 %v4363, %v4427
  %v4460 = vadd.f32 %v4364, %v4428
  %v4461 = vadd.f32 %v4365, %v4429
  %v4462 = vadd.f32 %v4366, %v4430
  %v4463 = vadd.f32 %v4367, %v4431
  %v4464 = vadd.f32 %v4368, %v4432
  %v4465 = vadd.f32 %v4369, %v4433
  %v4466 = vadd.f32 %v4370, %v4434
  %v4467 = vadd.f32 %v4371, %v4435
  %v4468 = vadd.f32 %v4372, %v4436
  %v4469 = vadd.f32 %v4373, %v4437
  %v4470 = vadd.f32 %v4374, %v4438
  %v4471 = vadd.f32 %v4375, %v4439
  %v4472 = vadd.f32 %v4376, %v4440
  %v4473 = vadd.f32 %v4377, %v4441
  %v4474 = vadd.f32 %v4378, %v4442
  %v4475 = vadd.f32 %v4379, %v4443
  %v4476 = vadd.f32 %v4380, %v4444
  %v4477 = vadd.f32 %v4381, %v4445
  %v4478 = vadd.f32 %v4382, %v4446
  %v4479 = vadd.f32 %v4383, %v4447
  %v4480 = vadd.f32 %v4384, %v4448
  %v4481 = vadd.f32 %v4385, %v4449
  %v4482 = vadd.f32 %v4386, %v4450
  %v4483 = vadd.f32 %v4387, %v4451
  %v4484 = vadd.f32 %v4388, %v4452
  %v4485 = vadd.f32 %v4389, %v4453
  %v4486 = vadd.f32 %v4390, %v4454
  %v4487 = vadd.f32 %v4391, %v4455
  %4488 = vst.msk [vmem:[%s1 + $0x15] sm:$0x1] %vm455, %v4456
  %4489 = vst.msk [vmem:[%s1 + $0x35] sm:$0x1] %vm455, %v4457
  %4490 = vst.msk [vmem:[%s1 + $0x55] sm:$0x1] %vm455, %v4458
  %4491 = vst.msk [vmem:[%s1 + $0x75] sm:$0x1] %vm455, %v4459
  %4492 = vst.msk [vmem:[%s1 + $0x95] sm:$0x1] %vm455, %v4460
  %4493 = vst.msk [vmem:[%s1 + $0xb5] sm:$0x1] %vm455, %v4461
  %4494 = vst.msk [vmem:[%s1 + $0xd5] sm:$0x1] %vm455, %v4462
  %4495 = vst.msk [vmem:[%s1 + $0xf5] sm:$0x1] %vm455, %v4463
  %4496 = vst.msk [vmem:[%s1 + $0x115] sm:$0x1] %vm455, %v4464
  %4497 = vst.msk [vmem:[%s1 + $0x135] sm:$0x1] %vm455, %v4465
  %4498 = vst.msk [vmem:[%s1 + $0x155] sm:$0x1] %vm455, %v4466
  %4499 = vst.msk [vmem:[%s1 + $0x175] sm:$0x1] %vm455, %v4467
  %4500 = vst.msk [vmem:[%s1 + $0x195] sm:$0x1] %vm455, %v4468
  %4501 = vst.msk [vmem:[%s1 + $0x1b5] sm:$0x1] %vm455, %v4469
  %4502 = vst.msk [vmem:[%s1 + $0x1d5] sm:$0x1] %vm455, %v4470
  %4503 = vst.msk [vmem:[%s1 + $0x1f5] sm:$0x1] %vm455, %v4471
  %4504 = vst.msk [vmem:[%s1 + $0x215] sm:$0x1] %vm455, %v4472
  %4505 = vst.msk [vmem:[%s1 + $0x235] sm:$0x1] %vm455, %v4473
  %4506 = vst.msk [vmem:[%s1 + $0x255] sm:$0x1] %vm455, %v4474
  %4507 = vst.msk [vmem:[%s1 + $0x275] sm:$0x1] %vm455, %v4475
  %4508 = vst.msk [vmem:[%s1 + $0x295] sm:$0x1] %vm455, %v4476
  %4509 = vst.msk [vmem:[%s1 + $0x2b5] sm:$0x1] %vm455, %v4477
  %4510 = vst.msk [vmem:[%s1 + $0x2d5] sm:$0x1] %vm455, %v4478
  %4511 = vst.msk [vmem:[%s1 + $0x2f5] sm:$0x1] %vm455, %v4479
  %4512 = vst.msk [vmem:[%s1 + $0x315] sm:$0x1] %vm455, %v4480
  %4513 = vst.msk [vmem:[%s1 + $0x335] sm:$0x1] %vm455, %v4481
  %4514 = vst.msk [vmem:[%s1 + $0x355] sm:$0x1] %vm455, %v4482
  %4515 = vst.msk [vmem:[%s1 + $0x375] sm:$0x1] %vm455, %v4483
  %4516 = vst.msk [vmem:[%s1 + $0x395] sm:$0x1] %vm455, %v4484
  %4517 = vst.msk [vmem:[%s1 + $0x3b5] sm:$0x1] %vm455, %v4485
  %4518 = vst.msk [vmem:[%s1 + $0x3d5] sm:$0x1] %vm455, %v4486
  %4519 = vst.msk [vmem:[%s1 + $0x3f5] sm:$0x1] %vm455, %v4487
  %v4520 = vld [vmem:[#allocation2 + $0xa] sm:$0x1]
  %v4521 = vld [vmem:[#allocation2 + $0x1a] sm:$0x1]
  %v4522 = vld [vmem:[#allocation2 + $0x2a] sm:$0x1]
  %v4523 = vld [vmem:[#allocation2 + $0x3a] sm:$0x1]
  %v4524 = vld [vmem:[#allocation2 + $0x4a] sm:$0x1]
  %v4525 = vld [vmem:[#allocation2 + $0x5a] sm:$0x1]
  %v4526 = vld [vmem:[#allocation2 + $0x6a] sm:$0x1]
  %v4527 = vld [vmem:[#allocation2 + $0x7a] sm:$0x1]
  %v4528 = vld [vmem:[#allocation2 + $0x8a] sm:$0x1]
  %v4529 = vld [vmem:[#allocation2 + $0x9a] sm:$0x1]
  %v4530 = vld [vmem:[#allocation2 + $0xaa] sm:$0x1]
  %v4531 = vld [vmem:[#allocation2 + $0xba] sm:$0x1]
  %v4532 = vld [vmem:[#allocation2 + $0xca] sm:$0x1]
  %v4533 = vld [vmem:[#allocation2 + $0xda] sm:$0x1]
  %v4534 = vld [vmem:[#allocation2 + $0xea] sm:$0x1]
  %v4535 = vld [vmem:[#allocation2 + $0xfa] sm:$0x1]
  %v4536 = vld [vmem:[#allocation2 + $0x10a] sm:$0x1]
  %v4537 = vld [vmem:[#allocation2 + $0x11a] sm:$0x1]
  %v4538 = vld [vmem:[#allocation2 + $0x12a] sm:$0x1]
  %v4539 = vld [vmem:[#allocation2 + $0x13a] sm:$0x1]
  %v4540 = vld [vmem:[#allocation2 + $0x14a] sm:$0x1]
  %v4541 = vld [vmem:[#allocation2 + $0x15a] sm:$0x1]
  %v4542 = vld [vmem:[#allocation2 + $0x16a] sm:$0x1]
  %v4543 = vld [vmem:[#allocation2 + $0x17a] sm:$0x1]
  %v4544 = vld [vmem:[#allocation2 + $0x18a] sm:$0x1]
  %v4545 = vld [vmem:[#allocation2 + $0x19a] sm:$0x1]
  %v4546 = vld [vmem:[#allocation2 + $0x1aa] sm:$0x1]
  %v4547 = vld [vmem:[#allocation2 + $0x1ba] sm:$0x1]
  %v4548 = vld [vmem:[#allocation2 + $0x1ca] sm:$0x1]
  %v4549 = vld [vmem:[#allocation2 + $0x1da] sm:$0x1]
  %v4550 = vld [vmem:[#allocation2 + $0x1ea] sm:$0x1]
  %v4551 = vld [vmem:[#allocation2 + $0x1fa] sm:$0x1]
  %v4552 = vmul.f32 %v4520, 0.25
  %v4553 = vmul.f32 %v4521, 0.25
  %v4554 = vmul.f32 %v4522, 0.25
  %v4555 = vmul.f32 %v4523, 0.25
  %v4556 = vmul.f32 %v4524, 0.25
  %v4557 = vmul.f32 %v4525, 0.25
  %v4558 = vmul.f32 %v4526, 0.25
  %v4559 = vmul.f32 %v4527, 0.25
  %v4560 = vmul.f32 %v4528, 0.25
  %v4561 = vmul.f32 %v4529, 0.25
  %v4562 = vmul.f32 %v4530, 0.25
  %v4563 = vmul.f32 %v4531, 0.25
  %v4564 = vmul.f32 %v4532, 0.25
  %v4565 = vmul.f32 %v4533, 0.25
  %v4566 = vmul.f32 %v4534, 0.25
  %v4567 = vmul.f32 %v4535, 0.25
  %v4568 = vmul.f32 %v4536, 0.25
  %v4569 = vmul.f32 %v4537, 0.25
  %v4570 = vmul.f32 %v4538, 0.25
  %v4571 = vmul.f32 %v4539, 0.25
  %v4572 = vmul.f32 %v4540, 0.25
  %v4573 = vmul.f32 %v4541, 0.25
  %v4574 = vmul.f32 %v4542, 0.25
  %v4575 = vmul.f32 %v4543, 0.25
  %v4576 = vmul.f32 %v4544, 0.25
  %v4577 = vmul.f32 %v4545, 0.25
  %v4578 = vmul.f32 %v4546, 0.25
  %v4579 = vmul.f32 %v4547, 0.25
  %v4580 = vmul.f32 %v4548, 0.25
  %v4581 = vmul.f32 %v4549, 0.25
  %v4582 = vmul.f32 %v4550, 0.25
  %v4583 = vmul.f32 %v4551, 0.25
  %v4584 = vld [vmem:[#allocation2 + $0xb] sm:$0x1]
  %v4585 = vld [vmem:[#allocation2 + $0x1b] sm:$0x1]
  %v4586 = vld [vmem:[#allocation2 + $0x2b] sm:$0x1]
  %v4587 = vld [vmem:[#allocation2 + $0x3b] sm:$0x1]
  %v4588 = vld [vmem:[#allocation2 + $0x4b] sm:$0x1]
  %v4589 = vld [vmem:[#allocation2 + $0x5b] sm:$0x1]
  %v4590 = vld [vmem:[#allocation2 + $0x6b] sm:$0x1]
  %v4591 = vld [vmem:[#allocation2 + $0x7b] sm:$0x1]
  %v4592 = vld [vmem:[#allocation2 + $0x8b] sm:$0x1]
  %v4593 = vld [vmem:[#allocation2 + $0x9b] sm:$0x1]
  %v4594 = vld [vmem:[#allocation2 + $0xab] sm:$0x1]
  %v4595 = vld [vmem:[#allocation2 + $0xbb] sm:$0x1]
  %v4596 = vld [vmem:[#allocation2 + $0xcb] sm:$0x1]
  %v4597 = vld [vmem:[#allocation2 + $0xdb] sm:$0x1]
  %v4598 = vld [vmem:[#allocation2 + $0xeb] sm:$0x1]
  %v4599 = vld [vmem:[#allocation2 + $0xfb] sm:$0x1]
  %v4600 = vld [vmem:[#allocation2 + $0x10b] sm:$0x1]
  %v4601 = vld [vmem:[#allocation2 + $0x11b] sm:$0x1]
  %v4602 = vld [vmem:[#allocation2 + $0x12b] sm:$0x1]
  %v4603 = vld [vmem:[#allocation2 + $0x13b] sm:$0x1]
  %v4604 = vld [vmem:[#allocation2 + $0x14b] sm:$0x1]
  %v4605 = vld [vmem:[#allocation2 + $0x15b] sm:$0x1]
  %v4606 = vld [vmem:[#allocation2 + $0x16b] sm:$0x1]
  %v4607 = vld [vmem:[#allocation2 + $0x17b] sm:$0x1]
  %v4608 = vld [vmem:[#allocation2 + $0x18b] sm:$0x1]
  %v4609 = vld [vmem:[#allocation2 + $0x19b] sm:$0x1]
  %v4610 = vld [vmem:[#allocation2 + $0x1ab] sm:$0x1]
  %v4611 = vld [vmem:[#allocation2 + $0x1bb] sm:$0x1]
  %v4612 = vld [vmem:[#allocation2 + $0x1cb] sm:$0x1]
  %v4613 = vld [vmem:[#allocation2 + $0x1db] sm:$0x1]
  %v4614 = vld [vmem:[#allocation2 + $0x1eb] sm:$0x1]
  %v4615 = vld [vmem:[#allocation2 + $0x1fb] sm:$0x1]
  %v4616 = vmul.f32 %v4584, 0.75
  %v4617 = vmul.f32 %v4585, 0.75
  %v4618 = vmul.f32 %v4586, 0.75
  %v4619 = vmul.f32 %v4587, 0.75
  %v4620 = vmul.f32 %v4588, 0.75
  %v4621 = vmul.f32 %v4589, 0.75
  %v4622 = vmul.f32 %v4590, 0.75
  %v4623 = vmul.f32 %v4591, 0.75
  %v4624 = vmul.f32 %v4592, 0.75
  %v4625 = vmul.f32 %v4593, 0.75
  %v4626 = vmul.f32 %v4594, 0.75
  %v4627 = vmul.f32 %v4595, 0.75
  %v4628 = vmul.f32 %v4596, 0.75
  %v4629 = vmul.f32 %v4597, 0.75
  %v4630 = vmul.f32 %v4598, 0.75
  %v4631 = vmul.f32 %v4599, 0.75
  %v4632 = vmul.f32 %v4600, 0.75
  %v4633 = vmul.f32 %v4601, 0.75
  %v4634 = vmul.f32 %v4602, 0.75
  %v4635 = vmul.f32 %v4603, 0.75
  %v4636 = vmul.f32 %v4604, 0.75
  %v4637 = vmul.f32 %v4605, 0.75
  %v4638 = vmul.f32 %v4606, 0.75
  %v4639 = vmul.f32 %v4607, 0.75
  %v4640 = vmul.f32 %v4608, 0.75
  %v4641 = vmul.f32 %v4609, 0.75
  %v4642 = vmul.f32 %v4610, 0.75
  %v4643 = vmul.f32 %v4611, 0.75
  %v4644 = vmul.f32 %v4612, 0.75
  %v4645 = vmul.f32 %v4613, 0.75
  %v4646 = vmul.f32 %v4614, 0.75
  %v4647 = vmul.f32 %v4615, 0.75
  %v4648 = vadd.f32 %v4552, %v4616
  %v4649 = vadd.f32 %v4553, %v4617
  %v4650 = vadd.f32 %v4554, %v4618
  %v4651 = vadd.f32 %v4555, %v4619
  %v4652 = vadd.f32 %v4556, %v4620
  %v4653 = vadd.f32 %v4557, %v4621
  %v4654 = vadd.f32 %v4558, %v4622
  %v4655 = vadd.f32 %v4559, %v4623
  %v4656 = vadd.f32 %v4560, %v4624
  %v4657 = vadd.f32 %v4561, %v4625
  %v4658 = vadd.f32 %v4562, %v4626
  %v4659 = vadd.f32 %v4563, %v4627
  %v4660 = vadd.f32 %v4564, %v4628
  %v4661 = vadd.f32 %v4565, %v4629
  %v4662 = vadd.f32 %v4566, %v4630
  %v4663 = vadd.f32 %v4567, %v4631
  %v4664 = vadd.f32 %v4568, %v4632
  %v4665 = vadd.f32 %v4569, %v4633
  %v4666 = vadd.f32 %v4570, %v4634
  %v4667 = vadd.f32 %v4571, %v4635
  %v4668 = vadd.f32 %v4572, %v4636
  %v4669 = vadd.f32 %v4573, %v4637
  %v4670 = vadd.f32 %v4574, %v4638
  %v4671 = vadd.f32 %v4575, %v4639
  %v4672 = vadd.f32 %v4576, %v4640
  %v4673 = vadd.f32 %v4577, %v4641
  %v4674 = vadd.f32 %v4578, %v4642
  %v4675 = vadd.f32 %v4579, %v4643
  %v4676 = vadd.f32 %v4580, %v4644
  %v4677 = vadd.f32 %v4581, %v4645
  %v4678 = vadd.f32 %v4582, %v4646
  %v4679 = vadd.f32 %v4583, %v4647
  %4680 = vst.msk [vmem:[%s1 + $0x16] sm:$0x1] %vm455, %v4648
  %4681 = vst.msk [vmem:[%s1 + $0x36] sm:$0x1] %vm455, %v4649
  %4682 = vst.msk [vmem:[%s1 + $0x56] sm:$0x1] %vm455, %v4650
  %4683 = vst.msk [vmem:[%s1 + $0x76] sm:$0x1] %vm455, %v4651
  %4684 = vst.msk [vmem:[%s1 + $0x96] sm:$0x1] %vm455, %v4652
  %4685 = vst.msk [vmem:[%s1 + $0xb6] sm:$0x1] %vm455, %v4653
  %4686 = vst.msk [vmem:[%s1 + $0xd6] sm:$0x1] %vm455, %v4654
  %4687 = vst.msk [vmem:[%s1 + $0xf6] sm:$0x1] %vm455, %v4655
  %4688 = vst.msk [vmem:[%s1 + $0x116] sm:$0x1] %vm455, %v4656
  %4689 = vst.msk [vmem:[%s1 + $0x136] sm:$0x1] %vm455, %v4657
  %4690 = vst.msk [vmem:[%s1 + $0x156] sm:$0x1] %vm455, %v4658
  %4691 = vst.msk [vmem:[%s1 + $0x176] sm:$0x1] %vm455, %v4659
  %4692 = vst.msk [vmem:[%s1 + $0x196] sm:$0x1] %vm455, %v4660
  %4693 = vst.msk [vmem:[%s1 + $0x1b6] sm:$0x1] %vm455, %v4661
  %4694 = vst.msk [vmem:[%s1 + $0x1d6] sm:$0x1] %vm455, %v4662
  %4695 = vst.msk [vmem:[%s1 + $0x1f6] sm:$0x1] %vm455, %v4663
  %4696 = vst.msk [vmem:[%s1 + $0x216] sm:$0x1] %vm455, %v4664
  %4697 = vst.msk [vmem:[%s1 + $0x236] sm:$0x1] %vm455, %v4665
  %4698 = vst.msk [vmem:[%s1 + $0x256] sm:$0x1] %vm455, %v4666
  %4699 = vst.msk [vmem:[%s1 + $0x276] sm:$0x1] %vm455, %v4667
  %4700 = vst.msk [vmem:[%s1 + $0x296] sm:$0x1] %vm455, %v4668
  %4701 = vst.msk [vmem:[%s1 + $0x2b6] sm:$0x1] %vm455, %v4669
  %4702 = vst.msk [vmem:[%s1 + $0x2d6] sm:$0x1] %vm455, %v4670
  %4703 = vst.msk [vmem:[%s1 + $0x2f6] sm:$0x1] %vm455, %v4671
  %4704 = vst.msk [vmem:[%s1 + $0x316] sm:$0x1] %vm455, %v4672
  %4705 = vst.msk [vmem:[%s1 + $0x336] sm:$0x1] %vm455, %v4673
  %4706 = vst.msk [vmem:[%s1 + $0x356] sm:$0x1] %vm455, %v4674
  %4707 = vst.msk [vmem:[%s1 + $0x376] sm:$0x1] %vm455, %v4675
  %4708 = vst.msk [vmem:[%s1 + $0x396] sm:$0x1] %vm455, %v4676
  %4709 = vst.msk [vmem:[%s1 + $0x3b6] sm:$0x1] %vm455, %v4677
  %4710 = vst.msk [vmem:[%s1 + $0x3d6] sm:$0x1] %vm455, %v4678
  %4711 = vst.msk [vmem:[%s1 + $0x3f6] sm:$0x1] %vm455, %v4679
  %v4712 = vld [vmem:[#allocation2 + $0xb] sm:$0x1]
  %v4713 = vld [vmem:[#allocation2 + $0x1b] sm:$0x1]
  %v4714 = vld [vmem:[#allocation2 + $0x2b] sm:$0x1]
  %v4715 = vld [vmem:[#allocation2 + $0x3b] sm:$0x1]
  %v4716 = vld [vmem:[#allocation2 + $0x4b] sm:$0x1]
  %v4717 = vld [vmem:[#allocation2 + $0x5b] sm:$0x1]
  %v4718 = vld [vmem:[#allocation2 + $0x6b] sm:$0x1]
  %v4719 = vld [vmem:[#allocation2 + $0x7b] sm:$0x1]
  %v4720 = vld [vmem:[#allocation2 + $0x8b] sm:$0x1]
  %v4721 = vld [vmem:[#allocation2 + $0x9b] sm:$0x1]
  %v4722 = vld [vmem:[#allocation2 + $0xab] sm:$0x1]
  %v4723 = vld [vmem:[#allocation2 + $0xbb] sm:$0x1]
  %v4724 = vld [vmem:[#allocation2 + $0xcb] sm:$0x1]
  %v4725 = vld [vmem:[#allocation2 + $0xdb] sm:$0x1]
  %v4726 = vld [vmem:[#allocation2 + $0xeb] sm:$0x1]
  %v4727 = vld [vmem:[#allocation2 + $0xfb] sm:$0x1]
  %v4728 = vld [vmem:[#allocation2 + $0x10b] sm:$0x1]
  %v4729 = vld [vmem:[#allocation2 + $0x11b] sm:$0x1]
  %v4730 = vld [vmem:[#allocation2 + $0x12b] sm:$0x1]
  %v4731 = vld [vmem:[#allocation2 + $0x13b] sm:$0x1]
  %v4732 = vld [vmem:[#allocation2 + $0x14b] sm:$0x1]
  %v4733 = vld [vmem:[#allocation2 + $0x15b] sm:$0x1]
  %v4734 = vld [vmem:[#allocation2 + $0x16b] sm:$0x1]
  %v4735 = vld [vmem:[#allocation2 + $0x17b] sm:$0x1]
  %v4736 = vld [vmem:[#allocation2 + $0x18b] sm:$0x1]
  %v4737 = vld [vmem:[#allocation2 + $0x19b] sm:$0x1]
  %v4738 = vld [vmem:[#allocation2 + $0x1ab] sm:$0x1]
  %v4739 = vld [vmem:[#allocation2 + $0x1bb] sm:$0x1]
  %v4740 = vld [vmem:[#allocation2 + $0x1cb] sm:$0x1]
  %v4741 = vld [vmem:[#allocation2 + $0x1db] sm:$0x1]
  %v4742 = vld [vmem:[#allocation2 + $0x1eb] sm:$0x1]
  %v4743 = vld [vmem:[#allocation2 + $0x1fb] sm:$0x1]
  %v4744 = vmul.f32 %v4712, 0.75
  %v4745 = vmul.f32 %v4713, 0.75
  %v4746 = vmul.f32 %v4714, 0.75
  %v4747 = vmul.f32 %v4715, 0.75
  %v4748 = vmul.f32 %v4716, 0.75
  %v4749 = vmul.f32 %v4717, 0.75
  %v4750 = vmul.f32 %v4718, 0.75
  %v4751 = vmul.f32 %v4719, 0.75
  %v4752 = vmul.f32 %v4720, 0.75
  %v4753 = vmul.f32 %v4721, 0.75
  %v4754 = vmul.f32 %v4722, 0.75
  %v4755 = vmul.f32 %v4723, 0.75
  %v4756 = vmul.f32 %v4724, 0.75
  %v4757 = vmul.f32 %v4725, 0.75
  %v4758 = vmul.f32 %v4726, 0.75
  %v4759 = vmul.f32 %v4727, 0.75
  %v4760 = vmul.f32 %v4728, 0.75
  %v4761 = vmul.f32 %v4729, 0.75
  %v4762 = vmul.f32 %v4730, 0.75
  %v4763 = vmul.f32 %v4731, 0.75
  %v4764 = vmul.f32 %v4732, 0.75
  %v4765 = vmul.f32 %v4733, 0.75
  %v4766 = vmul.f32 %v4734, 0.75
  %v4767 = vmul.f32 %v4735, 0.75
  %v4768 = vmul.f32 %v4736, 0.75
  %v4769 = vmul.f32 %v4737, 0.75
  %v4770 = vmul.f32 %v4738, 0.75
  %v4771 = vmul.f32 %v4739, 0.75
  %v4772 = vmul.f32 %v4740, 0.75
  %v4773 = vmul.f32 %v4741, 0.75
  %v4774 = vmul.f32 %v4742, 0.75
  %v4775 = vmul.f32 %v4743, 0.75
  %v4776 = vld [vmem:[#allocation2 + $0xc] sm:$0x1]
  %v4777 = vld [vmem:[#allocation2 + $0x1c] sm:$0x1]
  %v4778 = vld [vmem:[#allocation2 + $0x2c] sm:$0x1]
  %v4779 = vld [vmem:[#allocation2 + $0x3c] sm:$0x1]
  %v4780 = vld [vmem:[#allocation2 + $0x4c] sm:$0x1]
  %v4781 = vld [vmem:[#allocation2 + $0x5c] sm:$0x1]
  %v4782 = vld [vmem:[#allocation2 + $0x6c] sm:$0x1]
  %v4783 = vld [vmem:[#allocation2 + $0x7c] sm:$0x1]
  %v4784 = vld [vmem:[#allocation2 + $0x8c] sm:$0x1]
  %v4785 = vld [vmem:[#allocation2 + $0x9c] sm:$0x1]
  %v4786 = vld [vmem:[#allocation2 + $0xac] sm:$0x1]
  %v4787 = vld [vmem:[#allocation2 + $0xbc] sm:$0x1]
  %v4788 = vld [vmem:[#allocation2 + $0xcc] sm:$0x1]
  %v4789 = vld [vmem:[#allocation2 + $0xdc] sm:$0x1]
  %v4790 = vld [vmem:[#allocation2 + $0xec] sm:$0x1]
  %v4791 = vld [vmem:[#allocation2 + $0xfc] sm:$0x1]
  %v4792 = vld [vmem:[#allocation2 + $0x10c] sm:$0x1]
  %v4793 = vld [vmem:[#allocation2 + $0x11c] sm:$0x1]
  %v4794 = vld [vmem:[#allocation2 + $0x12c] sm:$0x1]
  %v4795 = vld [vmem:[#allocation2 + $0x13c] sm:$0x1]
  %v4796 = vld [vmem:[#allocation2 + $0x14c] sm:$0x1]
  %v4797 = vld [vmem:[#allocation2 + $0x15c] sm:$0x1]
  %v4798 = vld [vmem:[#allocation2 + $0x16c] sm:$0x1]
  %v4799 = vld [vmem:[#allocation2 + $0x17c] sm:$0x1]
  %v4800 = vld [vmem:[#allocation2 + $0x18c] sm:$0x1]
  %v4801 = vld [vmem:[#allocation2 + $0x19c] sm:$0x1]
  %v4802 = vld [vmem:[#allocation2 + $0x1ac] sm:$0x1]
  %v4803 = vld [vmem:[#allocation2 + $0x1bc] sm:$0x1]
  %v4804 = vld [vmem:[#allocation2 + $0x1cc] sm:$0x1]
  %v4805 = vld [vmem:[#allocation2 + $0x1dc] sm:$0x1]
  %v4806 = vld [vmem:[#allocation2 + $0x1ec] sm:$0x1]
  %v4807 = vld [vmem:[#allocation2 + $0x1fc] sm:$0x1]
  %v4808 = vmul.f32 %v4776, 0.25
  %v4809 = vmul.f32 %v4777, 0.25
  %v4810 = vmul.f32 %v4778, 0.25
  %v4811 = vmul.f32 %v4779, 0.25
  %v4812 = vmul.f32 %v4780, 0.25
  %v4813 = vmul.f32 %v4781, 0.25
  %v4814 = vmul.f32 %v4782, 0.25
  %v4815 = vmul.f32 %v4783, 0.25
  %v4816 = vmul.f32 %v4784, 0.25
  %v4817 = vmul.f32 %v4785, 0.25
  %v4818 = vmul.f32 %v4786, 0.25
  %v4819 = vmul.f32 %v4787, 0.25
  %v4820 = vmul.f32 %v4788, 0.25
  %v4821 = vmul.f32 %v4789, 0.25
  %v4822 = vmul.f32 %v4790, 0.25
  %v4823 = vmul.f32 %v4791, 0.25
  %v4824 = vmul.f32 %v4792, 0.25
  %v4825 = vmul.f32 %v4793, 0.25
  %v4826 = vmul.f32 %v4794, 0.25
  %v4827 = vmul.f32 %v4795, 0.25
  %v4828 = vmul.f32 %v4796, 0.25
  %v4829 = vmul.f32 %v4797, 0.25
  %v4830 = vmul.f32 %v4798, 0.25
  %v4831 = vmul.f32 %v4799, 0.25
  %v4832 = vmul.f32 %v4800, 0.25
  %v4833 = vmul.f32 %v4801, 0.25
  %v4834 = vmul.f32 %v4802, 0.25
  %v4835 = vmul.f32 %v4803, 0.25
  %v4836 = vmul.f32 %v4804, 0.25
  %v4837 = vmul.f32 %v4805, 0.25
  %v4838 = vmul.f32 %v4806, 0.25
  %v4839 = vmul.f32 %v4807, 0.25
  %v4840 = vadd.f32 %v4744, %v4808
  %v4841 = vadd.f32 %v4745, %v4809
  %v4842 = vadd.f32 %v4746, %v4810
  %v4843 = vadd.f32 %v4747, %v4811
  %v4844 = vadd.f32 %v4748, %v4812
  %v4845 = vadd.f32 %v4749, %v4813
  %v4846 = vadd.f32 %v4750, %v4814
  %v4847 = vadd.f32 %v4751, %v4815
  %v4848 = vadd.f32 %v4752, %v4816
  %v4849 = vadd.f32 %v4753, %v4817
  %v4850 = vadd.f32 %v4754, %v4818
  %v4851 = vadd.f32 %v4755, %v4819
  %v4852 = vadd.f32 %v4756, %v4820
  %v4853 = vadd.f32 %v4757, %v4821
  %v4854 = vadd.f32 %v4758, %v4822
  %v4855 = vadd.f32 %v4759, %v4823
  %v4856 = vadd.f32 %v4760, %v4824
  %v4857 = vadd.f32 %v4761, %v4825
  %v4858 = vadd.f32 %v4762, %v4826
  %v4859 = vadd.f32 %v4763, %v4827
  %v4860 = vadd.f32 %v4764, %v4828
  %v4861 = vadd.f32 %v4765, %v4829
  %v4862 = vadd.f32 %v4766, %v4830
  %v4863 = vadd.f32 %v4767, %v4831
  %v4864 = vadd.f32 %v4768, %v4832
  %v4865 = vadd.f32 %v4769, %v4833
  %v4866 = vadd.f32 %v4770, %v4834
  %v4867 = vadd.f32 %v4771, %v4835
  %v4868 = vadd.f32 %v4772, %v4836
  %v4869 = vadd.f32 %v4773, %v4837
  %v4870 = vadd.f32 %v4774, %v4838
  %v4871 = vadd.f32 %v4775, %v4839
  %4872 = vst.msk [vmem:[%s1 + $0x17] sm:$0x1] %vm455, %v4840
  %4873 = vst.msk [vmem:[%s1 + $0x37] sm:$0x1] %vm455, %v4841
  %4874 = vst.msk [vmem:[%s1 + $0x57] sm:$0x1] %vm455, %v4842
  %4875 = vst.msk [vmem:[%s1 + $0x77] sm:$0x1] %vm455, %v4843
  %4876 = vst.msk [vmem:[%s1 + $0x97] sm:$0x1] %vm455, %v4844
  %4877 = vst.msk [vmem:[%s1 + $0xb7] sm:$0x1] %vm455, %v4845
  %4878 = vst.msk [vmem:[%s1 + $0xd7] sm:$0x1] %vm455, %v4846
  %4879 = vst.msk [vmem:[%s1 + $0xf7] sm:$0x1] %vm455, %v4847
  %4880 = vst.msk [vmem:[%s1 + $0x117] sm:$0x1] %vm455, %v4848
  %4881 = vst.msk [vmem:[%s1 + $0x137] sm:$0x1] %vm455, %v4849
  %4882 = vst.msk [vmem:[%s1 + $0x157] sm:$0x1] %vm455, %v4850
  %4883 = vst.msk [vmem:[%s1 + $0x177] sm:$0x1] %vm455, %v4851
  %4884 = vst.msk [vmem:[%s1 + $0x197] sm:$0x1] %vm455, %v4852
  %4885 = vst.msk [vmem:[%s1 + $0x1b7] sm:$0x1] %vm455, %v4853
  %4886 = vst.msk [vmem:[%s1 + $0x1d7] sm:$0x1] %vm455, %v4854
  %4887 = vst.msk [vmem:[%s1 + $0x1f7] sm:$0x1] %vm455, %v4855
  %4888 = vst.msk [vmem:[%s1 + $0x217] sm:$0x1] %vm455, %v4856
  %4889 = vst.msk [vmem:[%s1 + $0x237] sm:$0x1] %vm455, %v4857
  %4890 = vst.msk [vmem:[%s1 + $0x257] sm:$0x1] %vm455, %v4858
  %4891 = vst.msk [vmem:[%s1 + $0x277] sm:$0x1] %vm455, %v4859
  %4892 = vst.msk [vmem:[%s1 + $0x297] sm:$0x1] %vm455, %v4860
  %4893 = vst.msk [vmem:[%s1 + $0x2b7] sm:$0x1] %vm455, %v4861
  %4894 = vst.msk [vmem:[%s1 + $0x2d7] sm:$0x1] %vm455, %v4862
  %4895 = vst.msk [vmem:[%s1 + $0x2f7] sm:$0x1] %vm455, %v4863
  %4896 = vst.msk [vmem:[%s1 + $0x317] sm:$0x1] %vm455, %v4864
  %4897 = vst.msk [vmem:[%s1 + $0x337] sm:$0x1] %vm455, %v4865
  %4898 = vst.msk [vmem:[%s1 + $0x357] sm:$0x1] %vm455, %v4866
  %4899 = vst.msk [vmem:[%s1 + $0x377] sm:$0x1] %vm455, %v4867
  %4900 = vst.msk [vmem:[%s1 + $0x397] sm:$0x1] %vm455, %v4868
  %4901 = vst.msk [vmem:[%s1 + $0x3b7] sm:$0x1] %vm455, %v4869
  %4902 = vst.msk [vmem:[%s1 + $0x3d7] sm:$0x1] %vm455, %v4870
  %4903 = vst.msk [vmem:[%s1 + $0x3f7] sm:$0x1] %vm455, %v4871
  %v4904 = vld [vmem:[#allocation2 + $0xb] sm:$0x1]
  %v4905 = vld [vmem:[#allocation2 + $0x1b] sm:$0x1]
  %v4906 = vld [vmem:[#allocation2 + $0x2b] sm:$0x1]
  %v4907 = vld [vmem:[#allocation2 + $0x3b] sm:$0x1]
  %v4908 = vld [vmem:[#allocation2 + $0x4b] sm:$0x1]
  %v4909 = vld [vmem:[#allocation2 + $0x5b] sm:$0x1]
  %v4910 = vld [vmem:[#allocation2 + $0x6b] sm:$0x1]
  %v4911 = vld [vmem:[#allocation2 + $0x7b] sm:$0x1]
  %v4912 = vld [vmem:[#allocation2 + $0x8b] sm:$0x1]
  %v4913 = vld [vmem:[#allocation2 + $0x9b] sm:$0x1]
  %v4914 = vld [vmem:[#allocation2 + $0xab] sm:$0x1]
  %v4915 = vld [vmem:[#allocation2 + $0xbb] sm:$0x1]
  %v4916 = vld [vmem:[#allocation2 + $0xcb] sm:$0x1]
  %v4917 = vld [vmem:[#allocation2 + $0xdb] sm:$0x1]
  %v4918 = vld [vmem:[#allocation2 + $0xeb] sm:$0x1]
  %v4919 = vld [vmem:[#allocation2 + $0xfb] sm:$0x1]
  %v4920 = vld [vmem:[#allocation2 + $0x10b] sm:$0x1]
  %v4921 = vld [vmem:[#allocation2 + $0x11b] sm:$0x1]
  %v4922 = vld [vmem:[#allocation2 + $0x12b] sm:$0x1]
  %v4923 = vld [vmem:[#allocation2 + $0x13b] sm:$0x1]
  %v4924 = vld [vmem:[#allocation2 + $0x14b] sm:$0x1]
  %v4925 = vld [vmem:[#allocation2 + $0x15b] sm:$0x1]
  %v4926 = vld [vmem:[#allocation2 + $0x16b] sm:$0x1]
  %v4927 = vld [vmem:[#allocation2 + $0x17b] sm:$0x1]
  %v4928 = vld [vmem:[#allocation2 + $0x18b] sm:$0x1]
  %v4929 = vld [vmem:[#allocation2 + $0x19b] sm:$0x1]
  %v4930 = vld [vmem:[#allocation2 + $0x1ab] sm:$0x1]
  %v4931 = vld [vmem:[#allocation2 + $0x1bb] sm:$0x1]
  %v4932 = vld [vmem:[#allocation2 + $0x1cb] sm:$0x1]
  %v4933 = vld [vmem:[#allocation2 + $0x1db] sm:$0x1]
  %v4934 = vld [vmem:[#allocation2 + $0x1eb] sm:$0x1]
  %v4935 = vld [vmem:[#allocation2 + $0x1fb] sm:$0x1]
  %v4936 = vmul.f32 %v4904, 0.25
  %v4937 = vmul.f32 %v4905, 0.25
  %v4938 = vmul.f32 %v4906, 0.25
  %v4939 = vmul.f32 %v4907, 0.25
  %v4940 = vmul.f32 %v4908, 0.25
  %v4941 = vmul.f32 %v4909, 0.25
  %v4942 = vmul.f32 %v4910, 0.25
  %v4943 = vmul.f32 %v4911, 0.25
  %v4944 = vmul.f32 %v4912, 0.25
  %v4945 = vmul.f32 %v4913, 0.25
  %v4946 = vmul.f32 %v4914, 0.25
  %v4947 = vmul.f32 %v4915, 0.25
  %v4948 = vmul.f32 %v4916, 0.25
  %v4949 = vmul.f32 %v4917, 0.25
  %v4950 = vmul.f32 %v4918, 0.25
  %v4951 = vmul.f32 %v4919, 0.25
  %v4952 = vmul.f32 %v4920, 0.25
  %v4953 = vmul.f32 %v4921, 0.25
  %v4954 = vmul.f32 %v4922, 0.25
  %v4955 = vmul.f32 %v4923, 0.25
  %v4956 = vmul.f32 %v4924, 0.25
  %v4957 = vmul.f32 %v4925, 0.25
  %v4958 = vmul.f32 %v4926, 0.25
  %v4959 = vmul.f32 %v4927, 0.25
  %v4960 = vmul.f32 %v4928, 0.25
  %v4961 = vmul.f32 %v4929, 0.25
  %v4962 = vmul.f32 %v4930, 0.25
  %v4963 = vmul.f32 %v4931, 0.25
  %v4964 = vmul.f32 %v4932, 0.25
  %v4965 = vmul.f32 %v4933, 0.25
  %v4966 = vmul.f32 %v4934, 0.25
  %v4967 = vmul.f32 %v4935, 0.25
  %v4968 = vld [vmem:[#allocation2 + $0xc] sm:$0x1]
  %v4969 = vld [vmem:[#allocation2 + $0x1c] sm:$0x1]
  %v4970 = vld [vmem:[#allocation2 + $0x2c] sm:$0x1]
  %v4971 = vld [vmem:[#allocation2 + $0x3c] sm:$0x1]
  %v4972 = vld [vmem:[#allocation2 + $0x4c] sm:$0x1]
  %v4973 = vld [vmem:[#allocation2 + $0x5c] sm:$0x1]
  %v4974 = vld [vmem:[#allocation2 + $0x6c] sm:$0x1]
  %v4975 = vld [vmem:[#allocation2 + $0x7c] sm:$0x1]
  %v4976 = vld [vmem:[#allocation2 + $0x8c] sm:$0x1]
  %v4977 = vld [vmem:[#allocation2 + $0x9c] sm:$0x1]
  %v4978 = vld [vmem:[#allocation2 + $0xac] sm:$0x1]
  %v4979 = vld [vmem:[#allocation2 + $0xbc] sm:$0x1]
  %v4980 = vld [vmem:[#allocation2 + $0xcc] sm:$0x1]
  %v4981 = vld [vmem:[#allocation2 + $0xdc] sm:$0x1]
  %v4982 = vld [vmem:[#allocation2 + $0xec] sm:$0x1]
  %v4983 = vld [vmem:[#allocation2 + $0xfc] sm:$0x1]
  %v4984 = vld [vmem:[#allocation2 + $0x10c] sm:$0x1]
  %v4985 = vld [vmem:[#allocation2 + $0x11c] sm:$0x1]
  %v4986 = vld [vmem:[#allocation2 + $0x12c] sm:$0x1]
  %v4987 = vld [vmem:[#allocation2 + $0x13c] sm:$0x1]
  %v4988 = vld [vmem:[#allocation2 + $0x14c] sm:$0x1]
  %v4989 = vld [vmem:[#allocation2 + $0x15c] sm:$0x1]
  %v4990 = vld [vmem:[#allocation2 + $0x16c] sm:$0x1]
  %v4991 = vld [vmem:[#allocation2 + $0x17c] sm:$0x1]
  %v4992 = vld [vmem:[#allocation2 + $0x18c] sm:$0x1]
  %v4993 = vld [vmem:[#allocation2 + $0x19c] sm:$0x1]
  %v4994 = vld [vmem:[#allocation2 + $0x1ac] sm:$0x1]
  %v4995 = vld [vmem:[#allocation2 + $0x1bc] sm:$0x1]
  %v4996 = vld [vmem:[#allocation2 + $0x1cc] sm:$0x1]
  %v4997 = vld [vmem:[#allocation2 + $0x1dc] sm:$0x1]
  %v4998 = vld [vmem:[#allocation2 + $0x1ec] sm:$0x1]
  %v4999 = vld [vmem:[#allocation2 + $0x1fc] sm:$0x1]
  %v5000 = vmul.f32 %v4968, 0.75
  %v5001 = vmul.f32 %v4969, 0.75
  %v5002 = vmul.f32 %v4970, 0.75
  %v5003 = vmul.f32 %v4971, 0.75
  %v5004 = vmul.f32 %v4972, 0.75
  %v5005 = vmul.f32 %v4973, 0.75
  %v5006 = vmul.f32 %v4974, 0.75
  %v5007 = vmul.f32 %v4975, 0.75
  %v5008 = vmul.f32 %v4976, 0.75
  %v5009 = vmul.f32 %v4977, 0.75
  %v5010 = vmul.f32 %v4978, 0.75
  %v5011 = vmul.f32 %v4979, 0.75
  %v5012 = vmul.f32 %v4980, 0.75
  %v5013 = vmul.f32 %v4981, 0.75
  %v5014 = vmul.f32 %v4982, 0.75
  %v5015 = vmul.f32 %v4983, 0.75
  %v5016 = vmul.f32 %v4984, 0.75
  %v5017 = vmul.f32 %v4985, 0.75
  %v5018 = vmul.f32 %v4986, 0.75
  %v5019 = vmul.f32 %v4987, 0.75
  %v5020 = vmul.f32 %v4988, 0.75
  %v5021 = vmul.f32 %v4989, 0.75
  %v5022 = vmul.f32 %v4990, 0.75
  %v5023 = vmul.f32 %v4991, 0.75
  %v5024 = vmul.f32 %v4992, 0.75
  %v5025 = vmul.f32 %v4993, 0.75
  %v5026 = vmul.f32 %v4994, 0.75
  %v5027 = vmul.f32 %v4995, 0.75
  %v5028 = vmul.f32 %v4996, 0.75
  %v5029 = vmul.f32 %v4997, 0.75
  %v5030 = vmul.f32 %v4998, 0.75
  %v5031 = vmul.f32 %v4999, 0.75
  %v5032 = vadd.f32 %v4936, %v5000
  %v5033 = vadd.f32 %v4937, %v5001
  %v5034 = vadd.f32 %v4938, %v5002
  %v5035 = vadd.f32 %v4939, %v5003
  %v5036 = vadd.f32 %v4940, %v5004
  %v5037 = vadd.f32 %v4941, %v5005
  %v5038 = vadd.f32 %v4942, %v5006
  %v5039 = vadd.f32 %v4943, %v5007
  %v5040 = vadd.f32 %v4944, %v5008
  %v5041 = vadd.f32 %v4945, %v5009
  %v5042 = vadd.f32 %v4946, %v5010
  %v5043 = vadd.f32 %v4947, %v5011
  %v5044 = vadd.f32 %v4948, %v5012
  %v5045 = vadd.f32 %v4949, %v5013
  %v5046 = vadd.f32 %v4950, %v5014
  %v5047 = vadd.f32 %v4951, %v5015
  %v5048 = vadd.f32 %v4952, %v5016
  %v5049 = vadd.f32 %v4953, %v5017
  %v5050 = vadd.f32 %v4954, %v5018
  %v5051 = vadd.f32 %v4955, %v5019
  %v5052 = vadd.f32 %v4956, %v5020
  %v5053 = vadd.f32 %v4957, %v5021
  %v5054 = vadd.f32 %v4958, %v5022
  %v5055 = vadd.f32 %v4959, %v5023
  %v5056 = vadd.f32 %v4960, %v5024
  %v5057 = vadd.f32 %v4961, %v5025
  %v5058 = vadd.f32 %v4962, %v5026
  %v5059 = vadd.f32 %v4963, %v5027
  %v5060 = vadd.f32 %v4964, %v5028
  %v5061 = vadd.f32 %v4965, %v5029
  %v5062 = vadd.f32 %v4966, %v5030
  %v5063 = vadd.f32 %v4967, %v5031
  %5064 = vst.msk [vmem:[%s1 + $0x18] sm:$0x1] %vm455, %v5032
  %5065 = vst.msk [vmem:[%s1 + $0x38] sm:$0x1] %vm455, %v5033
  %5066 = vst.msk [vmem:[%s1 + $0x58] sm:$0x1] %vm455, %v5034
  %5067 = vst.msk [vmem:[%s1 + $0x78] sm:$0x1] %vm455, %v5035
  %5068 = vst.msk [vmem:[%s1 + $0x98] sm:$0x1] %vm455, %v5036
  %5069 = vst.msk [vmem:[%s1 + $0xb8] sm:$0x1] %vm455, %v5037
  %5070 = vst.msk [vmem:[%s1 + $0xd8] sm:$0x1] %vm455, %v5038
  %5071 = vst.msk [vmem:[%s1 + $0xf8] sm:$0x1] %vm455, %v5039
  %5072 = vst.msk [vmem:[%s1 + $0x118] sm:$0x1] %vm455, %v5040
  %5073 = vst.msk [vmem:[%s1 + $0x138] sm:$0x1] %vm455, %v5041
  %5074 = vst.msk [vmem:[%s1 + $0x158] sm:$0x1] %vm455, %v5042
  %5075 = vst.msk [vmem:[%s1 + $0x178] sm:$0x1] %vm455, %v5043
  %5076 = vst.msk [vmem:[%s1 + $0x198] sm:$0x1] %vm455, %v5044
  %5077 = vst.msk [vmem:[%s1 + $0x1b8] sm:$0x1] %vm455, %v5045
  %5078 = vst.msk [vmem:[%s1 + $0x1d8] sm:$0x1] %vm455, %v5046
  %5079 = vst.msk [vmem:[%s1 + $0x1f8] sm:$0x1] %vm455, %v5047
  %5080 = vst.msk [vmem:[%s1 + $0x218] sm:$0x1] %vm455, %v5048
  %5081 = vst.msk [vmem:[%s1 + $0x238] sm:$0x1] %vm455, %v5049
  %5082 = vst.msk [vmem:[%s1 + $0x258] sm:$0x1] %vm455, %v5050
  %5083 = vst.msk [vmem:[%s1 + $0x278] sm:$0x1] %vm455, %v5051
  %5084 = vst.msk [vmem:[%s1 + $0x298] sm:$0x1] %vm455, %v5052
  %5085 = vst.msk [vmem:[%s1 + $0x2b8] sm:$0x1] %vm455, %v5053
  %5086 = vst.msk [vmem:[%s1 + $0x2d8] sm:$0x1] %vm455, %v5054
  %5087 = vst.msk [vmem:[%s1 + $0x2f8] sm:$0x1] %vm455, %v5055
  %5088 = vst.msk [vmem:[%s1 + $0x318] sm:$0x1] %vm455, %v5056
  %5089 = vst.msk [vmem:[%s1 + $0x338] sm:$0x1] %vm455, %v5057
  %5090 = vst.msk [vmem:[%s1 + $0x358] sm:$0x1] %vm455, %v5058
  %5091 = vst.msk [vmem:[%s1 + $0x378] sm:$0x1] %vm455, %v5059
  %5092 = vst.msk [vmem:[%s1 + $0x398] sm:$0x1] %vm455, %v5060
  %5093 = vst.msk [vmem:[%s1 + $0x3b8] sm:$0x1] %vm455, %v5061
  %5094 = vst.msk [vmem:[%s1 + $0x3d8] sm:$0x1] %vm455, %v5062
  %5095 = vst.msk [vmem:[%s1 + $0x3f8] sm:$0x1] %vm455, %v5063
  %v5096 = vld [vmem:[#allocation2 + $0xc] sm:$0x1]
  %v5097 = vld [vmem:[#allocation2 + $0x1c] sm:$0x1]
  %v5098 = vld [vmem:[#allocation2 + $0x2c] sm:$0x1]
  %v5099 = vld [vmem:[#allocation2 + $0x3c] sm:$0x1]
  %v5100 = vld [vmem:[#allocation2 + $0x4c] sm:$0x1]
  %v5101 = vld [vmem:[#allocation2 + $0x5c] sm:$0x1]
  %v5102 = vld [vmem:[#allocation2 + $0x6c] sm:$0x1]
  %v5103 = vld [vmem:[#allocation2 + $0x7c] sm:$0x1]
  %v5104 = vld [vmem:[#allocation2 + $0x8c] sm:$0x1]
  %v5105 = vld [vmem:[#allocation2 + $0x9c] sm:$0x1]
  %v5106 = vld [vmem:[#allocation2 + $0xac] sm:$0x1]
  %v5107 = vld [vmem:[#allocation2 + $0xbc] sm:$0x1]
  %v5108 = vld [vmem:[#allocation2 + $0xcc] sm:$0x1]
  %v5109 = vld [vmem:[#allocation2 + $0xdc] sm:$0x1]
  %v5110 = vld [vmem:[#allocation2 + $0xec] sm:$0x1]
  %v5111 = vld [vmem:[#allocation2 + $0xfc] sm:$0x1]
  %v5112 = vld [vmem:[#allocation2 + $0x10c] sm:$0x1]
  %v5113 = vld [vmem:[#allocation2 + $0x11c] sm:$0x1]
  %v5114 = vld [vmem:[#allocation2 + $0x12c] sm:$0x1]
  %v5115 = vld [vmem:[#allocation2 + $0x13c] sm:$0x1]
  %v5116 = vld [vmem:[#allocation2 + $0x14c] sm:$0x1]
  %v5117 = vld [vmem:[#allocation2 + $0x15c] sm:$0x1]
  %v5118 = vld [vmem:[#allocation2 + $0x16c] sm:$0x1]
  %v5119 = vld [vmem:[#allocation2 + $0x17c] sm:$0x1]
  %v5120 = vld [vmem:[#allocation2 + $0x18c] sm:$0x1]
  %v5121 = vld [vmem:[#allocation2 + $0x19c] sm:$0x1]
  %v5122 = vld [vmem:[#allocation2 + $0x1ac] sm:$0x1]
  %v5123 = vld [vmem:[#allocation2 + $0x1bc] sm:$0x1]
  %v5124 = vld [vmem:[#allocation2 + $0x1cc] sm:$0x1]
  %v5125 = vld [vmem:[#allocation2 + $0x1dc] sm:$0x1]
  %v5126 = vld [vmem:[#allocation2 + $0x1ec] sm:$0x1]
  %v5127 = vld [vmem:[#allocation2 + $0x1fc] sm:$0x1]
  %v5128 = vmul.f32 %v5096, 0.75
  %v5129 = vmul.f32 %v5097, 0.75
  %v5130 = vmul.f32 %v5098, 0.75
  %v5131 = vmul.f32 %v5099, 0.75
  %v5132 = vmul.f32 %v5100, 0.75
  %v5133 = vmul.f32 %v5101, 0.75
  %v5134 = vmul.f32 %v5102, 0.75
  %v5135 = vmul.f32 %v5103, 0.75
  %v5136 = vmul.f32 %v5104, 0.75
  %v5137 = vmul.f32 %v5105, 0.75
  %v5138 = vmul.f32 %v5106, 0.75
  %v5139 = vmul.f32 %v5107, 0.75
  %v5140 = vmul.f32 %v5108, 0.75
  %v5141 = vmul.f32 %v5109, 0.75
  %v5142 = vmul.f32 %v5110, 0.75
  %v5143 = vmul.f32 %v5111, 0.75
  %v5144 = vmul.f32 %v5112, 0.75
  %v5145 = vmul.f32 %v5113, 0.75
  %v5146 = vmul.f32 %v5114, 0.75
  %v5147 = vmul.f32 %v5115, 0.75
  %v5148 = vmul.f32 %v5116, 0.75
  %v5149 = vmul.f32 %v5117, 0.75
  %v5150 = vmul.f32 %v5118, 0.75
  %v5151 = vmul.f32 %v5119, 0.75
  %v5152 = vmul.f32 %v5120, 0.75
  %v5153 = vmul.f32 %v5121, 0.75
  %v5154 = vmul.f32 %v5122, 0.75
  %v5155 = vmul.f32 %v5123, 0.75
  %v5156 = vmul.f32 %v5124, 0.75
  %v5157 = vmul.f32 %v5125, 0.75
  %v5158 = vmul.f32 %v5126, 0.75
  %v5159 = vmul.f32 %v5127, 0.75
  %v5160 = vld [vmem:[#allocation2 + $0xd] sm:$0x1]
  %v5161 = vld [vmem:[#allocation2 + $0x1d] sm:$0x1]
  %v5162 = vld [vmem:[#allocation2 + $0x2d] sm:$0x1]
  %v5163 = vld [vmem:[#allocation2 + $0x3d] sm:$0x1]
  %v5164 = vld [vmem:[#allocation2 + $0x4d] sm:$0x1]
  %v5165 = vld [vmem:[#allocation2 + $0x5d] sm:$0x1]
  %v5166 = vld [vmem:[#allocation2 + $0x6d] sm:$0x1]
  %v5167 = vld [vmem:[#allocation2 + $0x7d] sm:$0x1]
  %v5168 = vld [vmem:[#allocation2 + $0x8d] sm:$0x1]
  %v5169 = vld [vmem:[#allocation2 + $0x9d] sm:$0x1]
  %v5170 = vld [vmem:[#allocation2 + $0xad] sm:$0x1]
  %v5171 = vld [vmem:[#allocation2 + $0xbd] sm:$0x1]
  %v5172 = vld [vmem:[#allocation2 + $0xcd] sm:$0x1]
  %v5173 = vld [vmem:[#allocation2 + $0xdd] sm:$0x1]
  %v5174 = vld [vmem:[#allocation2 + $0xed] sm:$0x1]
  %v5175 = vld [vmem:[#allocation2 + $0xfd] sm:$0x1]
  %v5176 = vld [vmem:[#allocation2 + $0x10d] sm:$0x1]
  %v5177 = vld [vmem:[#allocation2 + $0x11d] sm:$0x1]
  %v5178 = vld [vmem:[#allocation2 + $0x12d] sm:$0x1]
  %v5179 = vld [vmem:[#allocation2 + $0x13d] sm:$0x1]
  %v5180 = vld [vmem:[#allocation2 + $0x14d] sm:$0x1]
  %v5181 = vld [vmem:[#allocation2 + $0x15d] sm:$0x1]
  %v5182 = vld [vmem:[#allocation2 + $0x16d] sm:$0x1]
  %v5183 = vld [vmem:[#allocation2 + $0x17d] sm:$0x1]
  %v5184 = vld [vmem:[#allocation2 + $0x18d] sm:$0x1]
  %v5185 = vld [vmem:[#allocation2 + $0x19d] sm:$0x1]
  %v5186 = vld [vmem:[#allocation2 + $0x1ad] sm:$0x1]
  %v5187 = vld [vmem:[#allocation2 + $0x1bd] sm:$0x1]
  %v5188 = vld [vmem:[#allocation2 + $0x1cd] sm:$0x1]
  %v5189 = vld [vmem:[#allocation2 + $0x1dd] sm:$0x1]
  %v5190 = vld [vmem:[#allocation2 + $0x1ed] sm:$0x1]
  %v5191 = vld [vmem:[#allocation2 + $0x1fd] sm:$0x1]
  %v5192 = vmul.f32 %v5160, 0.25
  %v5193 = vmul.f32 %v5161, 0.25
  %v5194 = vmul.f32 %v5162, 0.25
  %v5195 = vmul.f32 %v5163, 0.25
  %v5196 = vmul.f32 %v5164, 0.25
  %v5197 = vmul.f32 %v5165, 0.25
  %v5198 = vmul.f32 %v5166, 0.25
  %v5199 = vmul.f32 %v5167, 0.25
  %v5200 = vmul.f32 %v5168, 0.25
  %v5201 = vmul.f32 %v5169, 0.25
  %v5202 = vmul.f32 %v5170, 0.25
  %v5203 = vmul.f32 %v5171, 0.25
  %v5204 = vmul.f32 %v5172, 0.25
  %v5205 = vmul.f32 %v5173, 0.25
  %v5206 = vmul.f32 %v5174, 0.25
  %v5207 = vmul.f32 %v5175, 0.25
  %v5208 = vmul.f32 %v5176, 0.25
  %v5209 = vmul.f32 %v5177, 0.25
  %v5210 = vmul.f32 %v5178, 0.25
  %v5211 = vmul.f32 %v5179, 0.25
  %v5212 = vmul.f32 %v5180, 0.25
  %v5213 = vmul.f32 %v5181, 0.25
  %v5214 = vmul.f32 %v5182, 0.25
  %v5215 = vmul.f32 %v5183, 0.25
  %v5216 = vmul.f32 %v5184, 0.25
  %v5217 = vmul.f32 %v5185, 0.25
  %v5218 = vmul.f32 %v5186, 0.25
  %v5219 = vmul.f32 %v5187, 0.25
  %v5220 = vmul.f32 %v5188, 0.25
  %v5221 = vmul.f32 %v5189, 0.25
  %v5222 = vmul.f32 %v5190, 0.25
  %v5223 = vmul.f32 %v5191, 0.25
  %v5224 = vadd.f32 %v5128, %v5192
  %v5225 = vadd.f32 %v5129, %v5193
  %v5226 = vadd.f32 %v5130, %v5194
  %v5227 = vadd.f32 %v5131, %v5195
  %v5228 = vadd.f32 %v5132, %v5196
  %v5229 = vadd.f32 %v5133, %v5197
  %v5230 = vadd.f32 %v5134, %v5198
  %v5231 = vadd.f32 %v5135, %v5199
  %v5232 = vadd.f32 %v5136, %v5200
  %v5233 = vadd.f32 %v5137, %v5201
  %v5234 = vadd.f32 %v5138, %v5202
  %v5235 = vadd.f32 %v5139, %v5203
  %v5236 = vadd.f32 %v5140, %v5204
  %v5237 = vadd.f32 %v5141, %v5205
  %v5238 = vadd.f32 %v5142, %v5206
  %v5239 = vadd.f32 %v5143, %v5207
  %v5240 = vadd.f32 %v5144, %v5208
  %v5241 = vadd.f32 %v5145, %v5209
  %v5242 = vadd.f32 %v5146, %v5210
  %v5243 = vadd.f32 %v5147, %v5211
  %v5244 = vadd.f32 %v5148, %v5212
  %v5245 = vadd.f32 %v5149, %v5213
  %v5246 = vadd.f32 %v5150, %v5214
  %v5247 = vadd.f32 %v5151, %v5215
  %v5248 = vadd.f32 %v5152, %v5216
  %v5249 = vadd.f32 %v5153, %v5217
  %v5250 = vadd.f32 %v5154, %v5218
  %v5251 = vadd.f32 %v5155, %v5219
  %v5252 = vadd.f32 %v5156, %v5220
  %v5253 = vadd.f32 %v5157, %v5221
  %v5254 = vadd.f32 %v5158, %v5222
  %v5255 = vadd.f32 %v5159, %v5223
  %5256 = vst.msk [vmem:[%s1 + $0x19] sm:$0x1] %vm455, %v5224
  %5257 = vst.msk [vmem:[%s1 + $0x39] sm:$0x1] %vm455, %v5225
  %5258 = vst.msk [vmem:[%s1 + $0x59] sm:$0x1] %vm455, %v5226
  %5259 = vst.msk [vmem:[%s1 + $0x79] sm:$0x1] %vm455, %v5227
  %5260 = vst.msk [vmem:[%s1 + $0x99] sm:$0x1] %vm455, %v5228
  %5261 = vst.msk [vmem:[%s1 + $0xb9] sm:$0x1] %vm455, %v5229
  %5262 = vst.msk [vmem:[%s1 + $0xd9] sm:$0x1] %vm455, %v5230
  %5263 = vst.msk [vmem:[%s1 + $0xf9] sm:$0x1] %vm455, %v5231
  %5264 = vst.msk [vmem:[%s1 + $0x119] sm:$0x1] %vm455, %v5232
  %5265 = vst.msk [vmem:[%s1 + $0x139] sm:$0x1] %vm455, %v5233
  %5266 = vst.msk [vmem:[%s1 + $0x159] sm:$0x1] %vm455, %v5234
  %5267 = vst.msk [vmem:[%s1 + $0x179] sm:$0x1] %vm455, %v5235
  %5268 = vst.msk [vmem:[%s1 + $0x199] sm:$0x1] %vm455, %v5236
  %5269 = vst.msk [vmem:[%s1 + $0x1b9] sm:$0x1] %vm455, %v5237
  %5270 = vst.msk [vmem:[%s1 + $0x1d9] sm:$0x1] %vm455, %v5238
  %5271 = vst.msk [vmem:[%s1 + $0x1f9] sm:$0x1] %vm455, %v5239
  %5272 = vst.msk [vmem:[%s1 + $0x219] sm:$0x1] %vm455, %v5240
  %5273 = vst.msk [vmem:[%s1 + $0x239] sm:$0x1] %vm455, %v5241
  %5274 = vst.msk [vmem:[%s1 + $0x259] sm:$0x1] %vm455, %v5242
  %5275 = vst.msk [vmem:[%s1 + $0x279] sm:$0x1] %vm455, %v5243
  %5276 = vst.msk [vmem:[%s1 + $0x299] sm:$0x1] %vm455, %v5244
  %5277 = vst.msk [vmem:[%s1 + $0x2b9] sm:$0x1] %vm455, %v5245
  %5278 = vst.msk [vmem:[%s1 + $0x2d9] sm:$0x1] %vm455, %v5246
  %5279 = vst.msk [vmem:[%s1 + $0x2f9] sm:$0x1] %vm455, %v5247
  %5280 = vst.msk [vmem:[%s1 + $0x319] sm:$0x1] %vm455, %v5248
  %5281 = vst.msk [vmem:[%s1 + $0x339] sm:$0x1] %vm455, %v5249
  %5282 = vst.msk [vmem:[%s1 + $0x359] sm:$0x1] %vm455, %v5250
  %5283 = vst.msk [vmem:[%s1 + $0x379] sm:$0x1] %vm455, %v5251
  %5284 = vst.msk [vmem:[%s1 + $0x399] sm:$0x1] %vm455, %v5252
  %5285 = vst.msk [vmem:[%s1 + $0x3b9] sm:$0x1] %vm455, %v5253
  %5286 = vst.msk [vmem:[%s1 + $0x3d9] sm:$0x1] %vm455, %v5254
  %5287 = vst.msk [vmem:[%s1 + $0x3f9] sm:$0x1] %vm455, %v5255
  %v5288 = vld [vmem:[#allocation2 + $0xc] sm:$0x1]
  %v5289 = vld [vmem:[#allocation2 + $0x1c] sm:$0x1]
  %v5290 = vld [vmem:[#allocation2 + $0x2c] sm:$0x1]
  %v5291 = vld [vmem:[#allocation2 + $0x3c] sm:$0x1]
  %v5292 = vld [vmem:[#allocation2 + $0x4c] sm:$0x1]
  %v5293 = vld [vmem:[#allocation2 + $0x5c] sm:$0x1]
  %v5294 = vld [vmem:[#allocation2 + $0x6c] sm:$0x1]
  %v5295 = vld [vmem:[#allocation2 + $0x7c] sm:$0x1]
  %v5296 = vld [vmem:[#allocation2 + $0x8c] sm:$0x1]
  %v5297 = vld [vmem:[#allocation2 + $0x9c] sm:$0x1]
  %v5298 = vld [vmem:[#allocation2 + $0xac] sm:$0x1]
  %v5299 = vld [vmem:[#allocation2 + $0xbc] sm:$0x1]
  %v5300 = vld [vmem:[#allocation2 + $0xcc] sm:$0x1]
  %v5301 = vld [vmem:[#allocation2 + $0xdc] sm:$0x1]
  %v5302 = vld [vmem:[#allocation2 + $0xec] sm:$0x1]
  %v5303 = vld [vmem:[#allocation2 + $0xfc] sm:$0x1]
  %v5304 = vld [vmem:[#allocation2 + $0x10c] sm:$0x1]
  %v5305 = vld [vmem:[#allocation2 + $0x11c] sm:$0x1]
  %v5306 = vld [vmem:[#allocation2 + $0x12c] sm:$0x1]
  %v5307 = vld [vmem:[#allocation2 + $0x13c] sm:$0x1]
  %v5308 = vld [vmem:[#allocation2 + $0x14c] sm:$0x1]
  %v5309 = vld [vmem:[#allocation2 + $0x15c] sm:$0x1]
  %v5310 = vld [vmem:[#allocation2 + $0x16c] sm:$0x1]
  %v5311 = vld [vmem:[#allocation2 + $0x17c] sm:$0x1]
  %v5312 = vld [vmem:[#allocation2 + $0x18c] sm:$0x1]
  %v5313 = vld [vmem:[#allocation2 + $0x19c] sm:$0x1]
  %v5314 = vld [vmem:[#allocation2 + $0x1ac] sm:$0x1]
  %v5315 = vld [vmem:[#allocation2 + $0x1bc] sm:$0x1]
  %v5316 = vld [vmem:[#allocation2 + $0x1cc] sm:$0x1]
  %v5317 = vld [vmem:[#allocation2 + $0x1dc] sm:$0x1]
  %v5318 = vld [vmem:[#allocation2 + $0x1ec] sm:$0x1]
  %v5319 = vld [vmem:[#allocation2 + $0x1fc] sm:$0x1]
  %v5320 = vmul.f32 %v5288, 0.25
  %v5321 = vmul.f32 %v5289, 0.25
  %v5322 = vmul.f32 %v5290, 0.25
  %v5323 = vmul.f32 %v5291, 0.25
  %v5324 = vmul.f32 %v5292, 0.25
  %v5325 = vmul.f32 %v5293, 0.25
  %v5326 = vmul.f32 %v5294, 0.25
  %v5327 = vmul.f32 %v5295, 0.25
  %v5328 = vmul.f32 %v5296, 0.25
  %v5329 = vmul.f32 %v5297, 0.25
  %v5330 = vmul.f32 %v5298, 0.25
  %v5331 = vmul.f32 %v5299, 0.25
  %v5332 = vmul.f32 %v5300, 0.25
  %v5333 = vmul.f32 %v5301, 0.25
  %v5334 = vmul.f32 %v5302, 0.25
  %v5335 = vmul.f32 %v5303, 0.25
  %v5336 = vmul.f32 %v5304, 0.25
  %v5337 = vmul.f32 %v5305, 0.25
  %v5338 = vmul.f32 %v5306, 0.25
  %v5339 = vmul.f32 %v5307, 0.25
  %v5340 = vmul.f32 %v5308, 0.25
  %v5341 = vmul.f32 %v5309, 0.25
  %v5342 = vmul.f32 %v5310, 0.25
  %v5343 = vmul.f32 %v5311, 0.25
  %v5344 = vmul.f32 %v5312, 0.25
  %v5345 = vmul.f32 %v5313, 0.25
  %v5346 = vmul.f32 %v5314, 0.25
  %v5347 = vmul.f32 %v5315, 0.25
  %v5348 = vmul.f32 %v5316, 0.25
  %v5349 = vmul.f32 %v5317, 0.25
  %v5350 = vmul.f32 %v5318, 0.25
  %v5351 = vmul.f32 %v5319, 0.25
  %v5352 = vld [vmem:[#allocation2 + $0xd] sm:$0x1]
  %v5353 = vld [vmem:[#allocation2 + $0x1d] sm:$0x1]
  %v5354 = vld [vmem:[#allocation2 + $0x2d] sm:$0x1]
  %v5355 = vld [vmem:[#allocation2 + $0x3d] sm:$0x1]
  %v5356 = vld [vmem:[#allocation2 + $0x4d] sm:$0x1]
  %v5357 = vld [vmem:[#allocation2 + $0x5d] sm:$0x1]
  %v5358 = vld [vmem:[#allocation2 + $0x6d] sm:$0x1]
  %v5359 = vld [vmem:[#allocation2 + $0x7d] sm:$0x1]
  %v5360 = vld [vmem:[#allocation2 + $0x8d] sm:$0x1]
  %v5361 = vld [vmem:[#allocation2 + $0x9d] sm:$0x1]
  %v5362 = vld [vmem:[#allocation2 + $0xad] sm:$0x1]
  %v5363 = vld [vmem:[#allocation2 + $0xbd] sm:$0x1]
  %v5364 = vld [vmem:[#allocation2 + $0xcd] sm:$0x1]
  %v5365 = vld [vmem:[#allocation2 + $0xdd] sm:$0x1]
  %v5366 = vld [vmem:[#allocation2 + $0xed] sm:$0x1]
  %v5367 = vld [vmem:[#allocation2 + $0xfd] sm:$0x1]
  %v5368 = vld [vmem:[#allocation2 + $0x10d] sm:$0x1]
  %v5369 = vld [vmem:[#allocation2 + $0x11d] sm:$0x1]
  %v5370 = vld [vmem:[#allocation2 + $0x12d] sm:$0x1]
  %v5371 = vld [vmem:[#allocation2 + $0x13d] sm:$0x1]
  %v5372 = vld [vmem:[#allocation2 + $0x14d] sm:$0x1]
  %v5373 = vld [vmem:[#allocation2 + $0x15d] sm:$0x1]
  %v5374 = vld [vmem:[#allocation2 + $0x16d] sm:$0x1]
  %v5375 = vld [vmem:[#allocation2 + $0x17d] sm:$0x1]
  %v5376 = vld [vmem:[#allocation2 + $0x18d] sm:$0x1]
  %v5377 = vld [vmem:[#allocation2 + $0x19d] sm:$0x1]
  %v5378 = vld [vmem:[#allocation2 + $0x1ad] sm:$0x1]
  %v5379 = vld [vmem:[#allocation2 + $0x1bd] sm:$0x1]
  %v5380 = vld [vmem:[#allocation2 + $0x1cd] sm:$0x1]
  %v5381 = vld [vmem:[#allocation2 + $0x1dd] sm:$0x1]
  %v5382 = vld [vmem:[#allocation2 + $0x1ed] sm:$0x1]
  %v5383 = vld [vmem:[#allocation2 + $0x1fd] sm:$0x1]
  %v5384 = vmul.f32 %v5352, 0.75
  %v5385 = vmul.f32 %v5353, 0.75
  %v5386 = vmul.f32 %v5354, 0.75
  %v5387 = vmul.f32 %v5355, 0.75
  %v5388 = vmul.f32 %v5356, 0.75
  %v5389 = vmul.f32 %v5357, 0.75
  %v5390 = vmul.f32 %v5358, 0.75
  %v5391 = vmul.f32 %v5359, 0.75
  %v5392 = vmul.f32 %v5360, 0.75
  %v5393 = vmul.f32 %v5361, 0.75
  %v5394 = vmul.f32 %v5362, 0.75
  %v5395 = vmul.f32 %v5363, 0.75
  %v5396 = vmul.f32 %v5364, 0.75
  %v5397 = vmul.f32 %v5365, 0.75
  %v5398 = vmul.f32 %v5366, 0.75
  %v5399 = vmul.f32 %v5367, 0.75
  %v5400 = vmul.f32 %v5368, 0.75
  %v5401 = vmul.f32 %v5369, 0.75
  %v5402 = vmul.f32 %v5370, 0.75
  %v5403 = vmul.f32 %v5371, 0.75
  %v5404 = vmul.f32 %v5372, 0.75
  %v5405 = vmul.f32 %v5373, 0.75
  %v5406 = vmul.f32 %v5374, 0.75
  %v5407 = vmul.f32 %v5375, 0.75
  %v5408 = vmul.f32 %v5376, 0.75
  %v5409 = vmul.f32 %v5377, 0.75
  %v5410 = vmul.f32 %v5378, 0.75
  %v5411 = vmul.f32 %v5379, 0.75
  %v5412 = vmul.f32 %v5380, 0.75
  %v5413 = vmul.f32 %v5381, 0.75
  %v5414 = vmul.f32 %v5382, 0.75
  %v5415 = vmul.f32 %v5383, 0.75
  %v5416 = vadd.f32 %v5320, %v5384
  %v5417 = vadd.f32 %v5321, %v5385
  %v5418 = vadd.f32 %v5322, %v5386
  %v5419 = vadd.f32 %v5323, %v5387
  %v5420 = vadd.f32 %v5324, %v5388
  %v5421 = vadd.f32 %v5325, %v5389
  %v5422 = vadd.f32 %v5326, %v5390
  %v5423 = vadd.f32 %v5327, %v5391
  %v5424 = vadd.f32 %v5328, %v5392
  %v5425 = vadd.f32 %v5329, %v5393
  %v5426 = vadd.f32 %v5330, %v5394
  %v5427 = vadd.f32 %v5331, %v5395
  %v5428 = vadd.f32 %v5332, %v5396
  %v5429 = vadd.f32 %v5333, %v5397
  %v5430 = vadd.f32 %v5334, %v5398
  %v5431 = vadd.f32 %v5335, %v5399
  %v5432 = vadd.f32 %v5336, %v5400
  %v5433 = vadd.f32 %v5337, %v5401
  %v5434 = vadd.f32 %v5338, %v5402
  %v5435 = vadd.f32 %v5339, %v5403
  %v5436 = vadd.f32 %v5340, %v5404
  %v5437 = vadd.f32 %v5341, %v5405
  %v5438 = vadd.f32 %v5342, %v5406
  %v5439 = vadd.f32 %v5343, %v5407
  %v5440 = vadd.f32 %v5344, %v5408
  %v5441 = vadd.f32 %v5345, %v5409
  %v5442 = vadd.f32 %v5346, %v5410
  %v5443 = vadd.f32 %v5347, %v5411
  %v5444 = vadd.f32 %v5348, %v5412
  %v5445 = vadd.f32 %v5349, %v5413
  %v5446 = vadd.f32 %v5350, %v5414
  %v5447 = vadd.f32 %v5351, %v5415
  %5448 = vst.msk [vmem:[%s1 + $0x1a] sm:$0x1] %vm455, %v5416
  %5449 = vst.msk [vmem:[%s1 + $0x3a] sm:$0x1] %vm455, %v5417
  %5450 = vst.msk [vmem:[%s1 + $0x5a] sm:$0x1] %vm455, %v5418
  %5451 = vst.msk [vmem:[%s1 + $0x7a] sm:$0x1] %vm455, %v5419
  %5452 = vst.msk [vmem:[%s1 + $0x9a] sm:$0x1] %vm455, %v5420
  %5453 = vst.msk [vmem:[%s1 + $0xba] sm:$0x1] %vm455, %v5421
  %5454 = vst.msk [vmem:[%s1 + $0xda] sm:$0x1] %vm455, %v5422
  %5455 = vst.msk [vmem:[%s1 + $0xfa] sm:$0x1] %vm455, %v5423
  %5456 = vst.msk [vmem:[%s1 + $0x11a] sm:$0x1] %vm455, %v5424
  %5457 = vst.msk [vmem:[%s1 + $0x13a] sm:$0x1] %vm455, %v5425
  %5458 = vst.msk [vmem:[%s1 + $0x15a] sm:$0x1] %vm455, %v5426
  %5459 = vst.msk [vmem:[%s1 + $0x17a] sm:$0x1] %vm455, %v5427
  %5460 = vst.msk [vmem:[%s1 + $0x19a] sm:$0x1] %vm455, %v5428
  %5461 = vst.msk [vmem:[%s1 + $0x1ba] sm:$0x1] %vm455, %v5429
  %5462 = vst.msk [vmem:[%s1 + $0x1da] sm:$0x1] %vm455, %v5430
  %5463 = vst.msk [vmem:[%s1 + $0x1fa] sm:$0x1] %vm455, %v5431
  %5464 = vst.msk [vmem:[%s1 + $0x21a] sm:$0x1] %vm455, %v5432
  %5465 = vst.msk [vmem:[%s1 + $0x23a] sm:$0x1] %vm455, %v5433
  %5466 = vst.msk [vmem:[%s1 + $0x25a] sm:$0x1] %vm455, %v5434
  %5467 = vst.msk [vmem:[%s1 + $0x27a] sm:$0x1] %vm455, %v5435
  %5468 = vst.msk [vmem:[%s1 + $0x29a] sm:$0x1] %vm455, %v5436
  %5469 = vst.msk [vmem:[%s1 + $0x2ba] sm:$0x1] %vm455, %v5437
  %5470 = vst.msk [vmem:[%s1 + $0x2da] sm:$0x1] %vm455, %v5438
  %5471 = vst.msk [vmem:[%s1 + $0x2fa] sm:$0x1] %vm455, %v5439
  %5472 = vst.msk [vmem:[%s1 + $0x31a] sm:$0x1] %vm455, %v5440
  %5473 = vst.msk [vmem:[%s1 + $0x33a] sm:$0x1] %vm455, %v5441
  %5474 = vst.msk [vmem:[%s1 + $0x35a] sm:$0x1] %vm455, %v5442
  %5475 = vst.msk [vmem:[%s1 + $0x37a] sm:$0x1] %vm455, %v5443
  %5476 = vst.msk [vmem:[%s1 + $0x39a] sm:$0x1] %vm455, %v5444
  %5477 = vst.msk [vmem:[%s1 + $0x3ba] sm:$0x1] %vm455, %v5445
  %5478 = vst.msk [vmem:[%s1 + $0x3da] sm:$0x1] %vm455, %v5446
  %5479 = vst.msk [vmem:[%s1 + $0x3fa] sm:$0x1] %vm455, %v5447
  %v5480 = vld [vmem:[#allocation2 + $0xd] sm:$0x1]
  %v5481 = vld [vmem:[#allocation2 + $0x1d] sm:$0x1]
  %v5482 = vld [vmem:[#allocation2 + $0x2d] sm:$0x1]
  %v5483 = vld [vmem:[#allocation2 + $0x3d] sm:$0x1]
  %v5484 = vld [vmem:[#allocation2 + $0x4d] sm:$0x1]
  %v5485 = vld [vmem:[#allocation2 + $0x5d] sm:$0x1]
  %v5486 = vld [vmem:[#allocation2 + $0x6d] sm:$0x1]
  %v5487 = vld [vmem:[#allocation2 + $0x7d] sm:$0x1]
  %v5488 = vld [vmem:[#allocation2 + $0x8d] sm:$0x1]
  %v5489 = vld [vmem:[#allocation2 + $0x9d] sm:$0x1]
  %v5490 = vld [vmem:[#allocation2 + $0xad] sm:$0x1]
  %v5491 = vld [vmem:[#allocation2 + $0xbd] sm:$0x1]
  %v5492 = vld [vmem:[#allocation2 + $0xcd] sm:$0x1]
  %v5493 = vld [vmem:[#allocation2 + $0xdd] sm:$0x1]
  %v5494 = vld [vmem:[#allocation2 + $0xed] sm:$0x1]
  %v5495 = vld [vmem:[#allocation2 + $0xfd] sm:$0x1]
  %v5496 = vld [vmem:[#allocation2 + $0x10d] sm:$0x1]
  %v5497 = vld [vmem:[#allocation2 + $0x11d] sm:$0x1]
  %v5498 = vld [vmem:[#allocation2 + $0x12d] sm:$0x1]
  %v5499 = vld [vmem:[#allocation2 + $0x13d] sm:$0x1]
  %v5500 = vld [vmem:[#allocation2 + $0x14d] sm:$0x1]
  %v5501 = vld [vmem:[#allocation2 + $0x15d] sm:$0x1]
  %v5502 = vld [vmem:[#allocation2 + $0x16d] sm:$0x1]
  %v5503 = vld [vmem:[#allocation2 + $0x17d] sm:$0x1]
  %v5504 = vld [vmem:[#allocation2 + $0x18d] sm:$0x1]
  %v5505 = vld [vmem:[#allocation2 + $0x19d] sm:$0x1]
  %v5506 = vld [vmem:[#allocation2 + $0x1ad] sm:$0x1]
  %v5507 = vld [vmem:[#allocation2 + $0x1bd] sm:$0x1]
  %v5508 = vld [vmem:[#allocation2 + $0x1cd] sm:$0x1]
  %v5509 = vld [vmem:[#allocation2 + $0x1dd] sm:$0x1]
  %v5510 = vld [vmem:[#allocation2 + $0x1ed] sm:$0x1]
  %v5511 = vld [vmem:[#allocation2 + $0x1fd] sm:$0x1]
  %v5512 = vmul.f32 %v5480, 0.75
  %v5513 = vmul.f32 %v5481, 0.75
  %v5514 = vmul.f32 %v5482, 0.75
  %v5515 = vmul.f32 %v5483, 0.75
  %v5516 = vmul.f32 %v5484, 0.75
  %v5517 = vmul.f32 %v5485, 0.75
  %v5518 = vmul.f32 %v5486, 0.75
  %v5519 = vmul.f32 %v5487, 0.75
  %v5520 = vmul.f32 %v5488, 0.75
  %v5521 = vmul.f32 %v5489, 0.75
  %v5522 = vmul.f32 %v5490, 0.75
  %v5523 = vmul.f32 %v5491, 0.75
  %v5524 = vmul.f32 %v5492, 0.75
  %v5525 = vmul.f32 %v5493, 0.75
  %v5526 = vmul.f32 %v5494, 0.75
  %v5527 = vmul.f32 %v5495, 0.75
  %v5528 = vmul.f32 %v5496, 0.75
  %v5529 = vmul.f32 %v5497, 0.75
  %v5530 = vmul.f32 %v5498, 0.75
  %v5531 = vmul.f32 %v5499, 0.75
  %v5532 = vmul.f32 %v5500, 0.75
  %v5533 = vmul.f32 %v5501, 0.75
  %v5534 = vmul.f32 %v5502, 0.75
  %v5535 = vmul.f32 %v5503, 0.75
  %v5536 = vmul.f32 %v5504, 0.75
  %v5537 = vmul.f32 %v5505, 0.75
  %v5538 = vmul.f32 %v5506, 0.75
  %v5539 = vmul.f32 %v5507, 0.75
  %v5540 = vmul.f32 %v5508, 0.75
  %v5541 = vmul.f32 %v5509, 0.75
  %v5542 = vmul.f32 %v5510, 0.75
  %v5543 = vmul.f32 %v5511, 0.75
  %v5544 = vld [vmem:[#allocation2 + $0xe] sm:$0x1]
  %v5545 = vld [vmem:[#allocation2 + $0x1e] sm:$0x1]
  %v5546 = vld [vmem:[#allocation2 + $0x2e] sm:$0x1]
  %v5547 = vld [vmem:[#allocation2 + $0x3e] sm:$0x1]
  %v5548 = vld [vmem:[#allocation2 + $0x4e] sm:$0x1]
  %v5549 = vld [vmem:[#allocation2 + $0x5e] sm:$0x1]
  %v5550 = vld [vmem:[#allocation2 + $0x6e] sm:$0x1]
  %v5551 = vld [vmem:[#allocation2 + $0x7e] sm:$0x1]
  %v5552 = vld [vmem:[#allocation2 + $0x8e] sm:$0x1]
  %v5553 = vld [vmem:[#allocation2 + $0x9e] sm:$0x1]
  %v5554 = vld [vmem:[#allocation2 + $0xae] sm:$0x1]
  %v5555 = vld [vmem:[#allocation2 + $0xbe] sm:$0x1]
  %v5556 = vld [vmem:[#allocation2 + $0xce] sm:$0x1]
  %v5557 = vld [vmem:[#allocation2 + $0xde] sm:$0x1]
  %v5558 = vld [vmem:[#allocation2 + $0xee] sm:$0x1]
  %v5559 = vld [vmem:[#allocation2 + $0xfe] sm:$0x1]
  %v5560 = vld [vmem:[#allocation2 + $0x10e] sm:$0x1]
  %v5561 = vld [vmem:[#allocation2 + $0x11e] sm:$0x1]
  %v5562 = vld [vmem:[#allocation2 + $0x12e] sm:$0x1]
  %v5563 = vld [vmem:[#allocation2 + $0x13e] sm:$0x1]
  %v5564 = vld [vmem:[#allocation2 + $0x14e] sm:$0x1]
  %v5565 = vld [vmem:[#allocation2 + $0x15e] sm:$0x1]
  %v5566 = vld [vmem:[#allocation2 + $0x16e] sm:$0x1]
  %v5567 = vld [vmem:[#allocation2 + $0x17e] sm:$0x1]
  %v5568 = vld [vmem:[#allocation2 + $0x18e] sm:$0x1]
  %v5569 = vld [vmem:[#allocation2 + $0x19e] sm:$0x1]
  %v5570 = vld [vmem:[#allocation2 + $0x1ae] sm:$0x1]
  %v5571 = vld [vmem:[#allocation2 + $0x1be] sm:$0x1]
  %v5572 = vld [vmem:[#allocation2 + $0x1ce] sm:$0x1]
  %v5573 = vld [vmem:[#allocation2 + $0x1de] sm:$0x1]
  %v5574 = vld [vmem:[#allocation2 + $0x1ee] sm:$0x1]
  %v5575 = vld [vmem:[#allocation2 + $0x1fe] sm:$0x1]
  %v5576 = vmul.f32 %v5544, 0.25
  %v5577 = vmul.f32 %v5545, 0.25
  %v5578 = vmul.f32 %v5546, 0.25
  %v5579 = vmul.f32 %v5547, 0.25
  %v5580 = vmul.f32 %v5548, 0.25
  %v5581 = vmul.f32 %v5549, 0.25
  %v5582 = vmul.f32 %v5550, 0.25
  %v5583 = vmul.f32 %v5551, 0.25
  %v5584 = vmul.f32 %v5552, 0.25
  %v5585 = vmul.f32 %v5553, 0.25
  %v5586 = vmul.f32 %v5554, 0.25
  %v5587 = vmul.f32 %v5555, 0.25
  %v5588 = vmul.f32 %v5556, 0.25
  %v5589 = vmul.f32 %v5557, 0.25
  %v5590 = vmul.f32 %v5558, 0.25
  %v5591 = vmul.f32 %v5559, 0.25
  %v5592 = vmul.f32 %v5560, 0.25
  %v5593 = vmul.f32 %v5561, 0.25
  %v5594 = vmul.f32 %v5562, 0.25
  %v5595 = vmul.f32 %v5563, 0.25
  %v5596 = vmul.f32 %v5564, 0.25
  %v5597 = vmul.f32 %v5565, 0.25
  %v5598 = vmul.f32 %v5566, 0.25
  %v5599 = vmul.f32 %v5567, 0.25
  %v5600 = vmul.f32 %v5568, 0.25
  %v5601 = vmul.f32 %v5569, 0.25
  %v5602 = vmul.f32 %v5570, 0.25
  %v5603 = vmul.f32 %v5571, 0.25
  %v5604 = vmul.f32 %v5572, 0.25
  %v5605 = vmul.f32 %v5573, 0.25
  %v5606 = vmul.f32 %v5574, 0.25
  %v5607 = vmul.f32 %v5575, 0.25
  %v5608 = vadd.f32 %v5512, %v5576
  %v5609 = vadd.f32 %v5513, %v5577
  %v5610 = vadd.f32 %v5514, %v5578
  %v5611 = vadd.f32 %v5515, %v5579
  %v5612 = vadd.f32 %v5516, %v5580
  %v5613 = vadd.f32 %v5517, %v5581
  %v5614 = vadd.f32 %v5518, %v5582
  %v5615 = vadd.f32 %v5519, %v5583
  %v5616 = vadd.f32 %v5520, %v5584
  %v5617 = vadd.f32 %v5521, %v5585
  %v5618 = vadd.f32 %v5522, %v5586
  %v5619 = vadd.f32 %v5523, %v5587
  %v5620 = vadd.f32 %v5524, %v5588
  %v5621 = vadd.f32 %v5525, %v5589
  %v5622 = vadd.f32 %v5526, %v5590
  %v5623 = vadd.f32 %v5527, %v5591
  %v5624 = vadd.f32 %v5528, %v5592
  %v5625 = vadd.f32 %v5529, %v5593
  %v5626 = vadd.f32 %v5530, %v5594
  %v5627 = vadd.f32 %v5531, %v5595
  %v5628 = vadd.f32 %v5532, %v5596
  %v5629 = vadd.f32 %v5533, %v5597
  %v5630 = vadd.f32 %v5534, %v5598
  %v5631 = vadd.f32 %v5535, %v5599
  %v5632 = vadd.f32 %v5536, %v5600
  %v5633 = vadd.f32 %v5537, %v5601
  %v5634 = vadd.f32 %v5538, %v5602
  %v5635 = vadd.f32 %v5539, %v5603
  %v5636 = vadd.f32 %v5540, %v5604
  %v5637 = vadd.f32 %v5541, %v5605
  %v5638 = vadd.f32 %v5542, %v5606
  %v5639 = vadd.f32 %v5543, %v5607
  %5640 = vst.msk [vmem:[%s1 + $0x1b] sm:$0x1] %vm455, %v5608
  %5641 = vst.msk [vmem:[%s1 + $0x3b] sm:$0x1] %vm455, %v5609
  %5642 = vst.msk [vmem:[%s1 + $0x5b] sm:$0x1] %vm455, %v5610
  %5643 = vst.msk [vmem:[%s1 + $0x7b] sm:$0x1] %vm455, %v5611
  %5644 = vst.msk [vmem:[%s1 + $0x9b] sm:$0x1] %vm455, %v5612
  %5645 = vst.msk [vmem:[%s1 + $0xbb] sm:$0x1] %vm455, %v5613
  %5646 = vst.msk [vmem:[%s1 + $0xdb] sm:$0x1] %vm455, %v5614
  %5647 = vst.msk [vmem:[%s1 + $0xfb] sm:$0x1] %vm455, %v5615
  %5648 = vst.msk [vmem:[%s1 + $0x11b] sm:$0x1] %vm455, %v5616
  %5649 = vst.msk [vmem:[%s1 + $0x13b] sm:$0x1] %vm455, %v5617
  %5650 = vst.msk [vmem:[%s1 + $0x15b] sm:$0x1] %vm455, %v5618
  %5651 = vst.msk [vmem:[%s1 + $0x17b] sm:$0x1] %vm455, %v5619
  %5652 = vst.msk [vmem:[%s1 + $0x19b] sm:$0x1] %vm455, %v5620
  %5653 = vst.msk [vmem:[%s1 + $0x1bb] sm:$0x1] %vm455, %v5621
  %5654 = vst.msk [vmem:[%s1 + $0x1db] sm:$0x1] %vm455, %v5622
  %5655 = vst.msk [vmem:[%s1 + $0x1fb] sm:$0x1] %vm455, %v5623
  %5656 = vst.msk [vmem:[%s1 + $0x21b] sm:$0x1] %vm455, %v5624
  %5657 = vst.msk [vmem:[%s1 + $0x23b] sm:$0x1] %vm455, %v5625
  %5658 = vst.msk [vmem:[%s1 + $0x25b] sm:$0x1] %vm455, %v5626
  %5659 = vst.msk [vmem:[%s1 + $0x27b] sm:$0x1] %vm455, %v5627
  %5660 = vst.msk [vmem:[%s1 + $0x29b] sm:$0x1] %vm455, %v5628
  %5661 = vst.msk [vmem:[%s1 + $0x2bb] sm:$0x1] %vm455, %v5629
  %5662 = vst.msk [vmem:[%s1 + $0x2db] sm:$0x1] %vm455, %v5630
  %5663 = vst.msk [vmem:[%s1 + $0x2fb] sm:$0x1] %vm455, %v5631
  %5664 = vst.msk [vmem:[%s1 + $0x31b] sm:$0x1] %vm455, %v5632
  %5665 = vst.msk [vmem:[%s1 + $0x33b] sm:$0x1] %vm455, %v5633
  %5666 = vst.msk [vmem:[%s1 + $0x35b] sm:$0x1] %vm455, %v5634
  %5667 = vst.msk [vmem:[%s1 + $0x37b] sm:$0x1] %vm455, %v5635
  %5668 = vst.msk [vmem:[%s1 + $0x39b] sm:$0x1] %vm455, %v5636
  %5669 = vst.msk [vmem:[%s1 + $0x3bb] sm:$0x1] %vm455, %v5637
  %5670 = vst.msk [vmem:[%s1 + $0x3db] sm:$0x1] %vm455, %v5638
  %5671 = vst.msk [vmem:[%s1 + $0x3fb] sm:$0x1] %vm455, %v5639
  %v5672 = vld [vmem:[#allocation2 + $0xd] sm:$0x1]
  %v5673 = vld [vmem:[#allocation2 + $0x1d] sm:$0x1]
  %v5674 = vld [vmem:[#allocation2 + $0x2d] sm:$0x1]
  %v5675 = vld [vmem:[#allocation2 + $0x3d] sm:$0x1]
  %v5676 = vld [vmem:[#allocation2 + $0x4d] sm:$0x1]
  %v5677 = vld [vmem:[#allocation2 + $0x5d] sm:$0x1]
  %v5678 = vld [vmem:[#allocation2 + $0x6d] sm:$0x1]
  %v5679 = vld [vmem:[#allocation2 + $0x7d] sm:$0x1]
  %v5680 = vld [vmem:[#allocation2 + $0x8d] sm:$0x1]
  %v5681 = vld [vmem:[#allocation2 + $0x9d] sm:$0x1]
  %v5682 = vld [vmem:[#allocation2 + $0xad] sm:$0x1]
  %v5683 = vld [vmem:[#allocation2 + $0xbd] sm:$0x1]
  %v5684 = vld [vmem:[#allocation2 + $0xcd] sm:$0x1]
  %v5685 = vld [vmem:[#allocation2 + $0xdd] sm:$0x1]
  %v5686 = vld [vmem:[#allocation2 + $0xed] sm:$0x1]
  %v5687 = vld [vmem:[#allocation2 + $0xfd] sm:$0x1]
  %v5688 = vld [vmem:[#allocation2 + $0x10d] sm:$0x1]
  %v5689 = vld [vmem:[#allocation2 + $0x11d] sm:$0x1]
  %v5690 = vld [vmem:[#allocation2 + $0x12d] sm:$0x1]
  %v5691 = vld [vmem:[#allocation2 + $0x13d] sm:$0x1]
  %v5692 = vld [vmem:[#allocation2 + $0x14d] sm:$0x1]
  %v5693 = vld [vmem:[#allocation2 + $0x15d] sm:$0x1]
  %v5694 = vld [vmem:[#allocation2 + $0x16d] sm:$0x1]
  %v5695 = vld [vmem:[#allocation2 + $0x17d] sm:$0x1]
  %v5696 = vld [vmem:[#allocation2 + $0x18d] sm:$0x1]
  %v5697 = vld [vmem:[#allocation2 + $0x19d] sm:$0x1]
  %v5698 = vld [vmem:[#allocation2 + $0x1ad] sm:$0x1]
  %v5699 = vld [vmem:[#allocation2 + $0x1bd] sm:$0x1]
  %v5700 = vld [vmem:[#allocation2 + $0x1cd] sm:$0x1]
  %v5701 = vld [vmem:[#allocation2 + $0x1dd] sm:$0x1]
  %v5702 = vld [vmem:[#allocation2 + $0x1ed] sm:$0x1]
  %v5703 = vld [vmem:[#allocation2 + $0x1fd] sm:$0x1]
  %v5704 = vmul.f32 %v5672, 0.25
  %v5705 = vmul.f32 %v5673, 0.25
  %v5706 = vmul.f32 %v5674, 0.25
  %v5707 = vmul.f32 %v5675, 0.25
  %v5708 = vmul.f32 %v5676, 0.25
  %v5709 = vmul.f32 %v5677, 0.25
  %v5710 = vmul.f32 %v5678, 0.25
  %v5711 = vmul.f32 %v5679, 0.25
  %v5712 = vmul.f32 %v5680, 0.25
  %v5713 = vmul.f32 %v5681, 0.25
  %v5714 = vmul.f32 %v5682, 0.25
  %v5715 = vmul.f32 %v5683, 0.25
  %v5716 = vmul.f32 %v5684, 0.25
  %v5717 = vmul.f32 %v5685, 0.25
  %v5718 = vmul.f32 %v5686, 0.25
  %v5719 = vmul.f32 %v5687, 0.25
  %v5720 = vmul.f32 %v5688, 0.25
  %v5721 = vmul.f32 %v5689, 0.25
  %v5722 = vmul.f32 %v5690, 0.25
  %v5723 = vmul.f32 %v5691, 0.25
  %v5724 = vmul.f32 %v5692, 0.25
  %v5725 = vmul.f32 %v5693, 0.25
  %v5726 = vmul.f32 %v5694, 0.25
  %v5727 = vmul.f32 %v5695, 0.25
  %v5728 = vmul.f32 %v5696, 0.25
  %v5729 = vmul.f32 %v5697, 0.25
  %v5730 = vmul.f32 %v5698, 0.25
  %v5731 = vmul.f32 %v5699, 0.25
  %v5732 = vmul.f32 %v5700, 0.25
  %v5733 = vmul.f32 %v5701, 0.25
  %v5734 = vmul.f32 %v5702, 0.25
  %v5735 = vmul.f32 %v5703, 0.25
  %v5736 = vld [vmem:[#allocation2 + $0xe] sm:$0x1]
  %v5737 = vld [vmem:[#allocation2 + $0x1e] sm:$0x1]
  %v5738 = vld [vmem:[#allocation2 + $0x2e] sm:$0x1]
  %v5739 = vld [vmem:[#allocation2 + $0x3e] sm:$0x1]
  %v5740 = vld [vmem:[#allocation2 + $0x4e] sm:$0x1]
  %v5741 = vld [vmem:[#allocation2 + $0x5e] sm:$0x1]
  %v5742 = vld [vmem:[#allocation2 + $0x6e] sm:$0x1]
  %v5743 = vld [vmem:[#allocation2 + $0x7e] sm:$0x1]
  %v5744 = vld [vmem:[#allocation2 + $0x8e] sm:$0x1]
  %v5745 = vld [vmem:[#allocation2 + $0x9e] sm:$0x1]
  %v5746 = vld [vmem:[#allocation2 + $0xae] sm:$0x1]
  %v5747 = vld [vmem:[#allocation2 + $0xbe] sm:$0x1]
  %v5748 = vld [vmem:[#allocation2 + $0xce] sm:$0x1]
  %v5749 = vld [vmem:[#allocation2 + $0xde] sm:$0x1]
  %v5750 = vld [vmem:[#allocation2 + $0xee] sm:$0x1]
  %v5751 = vld [vmem:[#allocation2 + $0xfe] sm:$0x1]
  %v5752 = vld [vmem:[#allocation2 + $0x10e] sm:$0x1]
  %v5753 = vld [vmem:[#allocation2 + $0x11e] sm:$0x1]
  %v5754 = vld [vmem:[#allocation2 + $0x12e] sm:$0x1]
  %v5755 = vld [vmem:[#allocation2 + $0x13e] sm:$0x1]
  %v5756 = vld [vmem:[#allocation2 + $0x14e] sm:$0x1]
  %v5757 = vld [vmem:[#allocation2 + $0x15e] sm:$0x1]
  %v5758 = vld [vmem:[#allocation2 + $0x16e] sm:$0x1]
  %v5759 = vld [vmem:[#allocation2 + $0x17e] sm:$0x1]
  %v5760 = vld [vmem:[#allocation2 + $0x18e] sm:$0x1]
  %v5761 = vld [vmem:[#allocation2 + $0x19e] sm:$0x1]
  %v5762 = vld [vmem:[#allocation2 + $0x1ae] sm:$0x1]
  %v5763 = vld [vmem:[#allocation2 + $0x1be] sm:$0x1]
  %v5764 = vld [vmem:[#allocation2 + $0x1ce] sm:$0x1]
  %v5765 = vld [vmem:[#allocation2 + $0x1de] sm:$0x1]
  %v5766 = vld [vmem:[#allocation2 + $0x1ee] sm:$0x1]
  %v5767 = vld [vmem:[#allocation2 + $0x1fe] sm:$0x1]
  %v5768 = vmul.f32 %v5736, 0.75
  %v5769 = vmul.f32 %v5737, 0.75
  %v5770 = vmul.f32 %v5738, 0.75
  %v5771 = vmul.f32 %v5739, 0.75
  %v5772 = vmul.f32 %v5740, 0.75
  %v5773 = vmul.f32 %v5741, 0.75
  %v5774 = vmul.f32 %v5742, 0.75
  %v5775 = vmul.f32 %v5743, 0.75
  %v5776 = vmul.f32 %v5744, 0.75
  %v5777 = vmul.f32 %v5745, 0.75
  %v5778 = vmul.f32 %v5746, 0.75
  %v5779 = vmul.f32 %v5747, 0.75
  %v5780 = vmul.f32 %v5748, 0.75
  %v5781 = vmul.f32 %v5749, 0.75
  %v5782 = vmul.f32 %v5750, 0.75
  %v5783 = vmul.f32 %v5751, 0.75
  %v5784 = vmul.f32 %v5752, 0.75
  %v5785 = vmul.f32 %v5753, 0.75
  %v5786 = vmul.f32 %v5754, 0.75
  %v5787 = vmul.f32 %v5755, 0.75
  %v5788 = vmul.f32 %v5756, 0.75
  %v5789 = vmul.f32 %v5757, 0.75
  %v5790 = vmul.f32 %v5758, 0.75
  %v5791 = vmul.f32 %v5759, 0.75
  %v5792 = vmul.f32 %v5760, 0.75
  %v5793 = vmul.f32 %v5761, 0.75
  %v5794 = vmul.f32 %v5762, 0.75
  %v5795 = vmul.f32 %v5763, 0.75
  %v5796 = vmul.f32 %v5764, 0.75
  %v5797 = vmul.f32 %v5765, 0.75
  %v5798 = vmul.f32 %v5766, 0.75
  %v5799 = vmul.f32 %v5767, 0.75
  %v5800 = vadd.f32 %v5704, %v5768
  %v5801 = vadd.f32 %v5705, %v5769
  %v5802 = vadd.f32 %v5706, %v5770
  %v5803 = vadd.f32 %v5707, %v5771
  %v5804 = vadd.f32 %v5708, %v5772
  %v5805 = vadd.f32 %v5709, %v5773
  %v5806 = vadd.f32 %v5710, %v5774
  %v5807 = vadd.f32 %v5711, %v5775
  %v5808 = vadd.f32 %v5712, %v5776
  %v5809 = vadd.f32 %v5713, %v5777
  %v5810 = vadd.f32 %v5714, %v5778
  %v5811 = vadd.f32 %v5715, %v5779
  %v5812 = vadd.f32 %v5716, %v5780
  %v5813 = vadd.f32 %v5717, %v5781
  %v5814 = vadd.f32 %v5718, %v5782
  %v5815 = vadd.f32 %v5719, %v5783
  %v5816 = vadd.f32 %v5720, %v5784
  %v5817 = vadd.f32 %v5721, %v5785
  %v5818 = vadd.f32 %v5722, %v5786
  %v5819 = vadd.f32 %v5723, %v5787
  %v5820 = vadd.f32 %v5724, %v5788
  %v5821 = vadd.f32 %v5725, %v5789
  %v5822 = vadd.f32 %v5726, %v5790
  %v5823 = vadd.f32 %v5727, %v5791
  %v5824 = vadd.f32 %v5728, %v5792
  %v5825 = vadd.f32 %v5729, %v5793
  %v5826 = vadd.f32 %v5730, %v5794
  %v5827 = vadd.f32 %v5731, %v5795
  %v5828 = vadd.f32 %v5732, %v5796
  %v5829 = vadd.f32 %v5733, %v5797
  %v5830 = vadd.f32 %v5734, %v5798
  %v5831 = vadd.f32 %v5735, %v5799
  %5832 = vst.msk [vmem:[%s1 + $0x1c] sm:$0x1] %vm455, %v5800
  %5833 = vst.msk [vmem:[%s1 + $0x3c] sm:$0x1] %vm455, %v5801
  %5834 = vst.msk [vmem:[%s1 + $0x5c] sm:$0x1] %vm455, %v5802
  %5835 = vst.msk [vmem:[%s1 + $0x7c] sm:$0x1] %vm455, %v5803
  %5836 = vst.msk [vmem:[%s1 + $0x9c] sm:$0x1] %vm455, %v5804
  %5837 = vst.msk [vmem:[%s1 + $0xbc] sm:$0x1] %vm455, %v5805
  %5838 = vst.msk [vmem:[%s1 + $0xdc] sm:$0x1] %vm455, %v5806
  %5839 = vst.msk [vmem:[%s1 + $0xfc] sm:$0x1] %vm455, %v5807
  %5840 = vst.msk [vmem:[%s1 + $0x11c] sm:$0x1] %vm455, %v5808
  %5841 = vst.msk [vmem:[%s1 + $0x13c] sm:$0x1] %vm455, %v5809
  %5842 = vst.msk [vmem:[%s1 + $0x15c] sm:$0x1] %vm455, %v5810
  %5843 = vst.msk [vmem:[%s1 + $0x17c] sm:$0x1] %vm455, %v5811
  %5844 = vst.msk [vmem:[%s1 + $0x19c] sm:$0x1] %vm455, %v5812
  %5845 = vst.msk [vmem:[%s1 + $0x1bc] sm:$0x1] %vm455, %v5813
  %5846 = vst.msk [vmem:[%s1 + $0x1dc] sm:$0x1] %vm455, %v5814
  %5847 = vst.msk [vmem:[%s1 + $0x1fc] sm:$0x1] %vm455, %v5815
  %5848 = vst.msk [vmem:[%s1 + $0x21c] sm:$0x1] %vm455, %v5816
  %5849 = vst.msk [vmem:[%s1 + $0x23c] sm:$0x1] %vm455, %v5817
  %5850 = vst.msk [vmem:[%s1 + $0x25c] sm:$0x1] %vm455, %v5818
  %5851 = vst.msk [vmem:[%s1 + $0x27c] sm:$0x1] %vm455, %v5819
  %5852 = vst.msk [vmem:[%s1 + $0x29c] sm:$0x1] %vm455, %v5820
  %5853 = vst.msk [vmem:[%s1 + $0x2bc] sm:$0x1] %vm455, %v5821
  %5854 = vst.msk [vmem:[%s1 + $0x2dc] sm:$0x1] %vm455, %v5822
  %5855 = vst.msk [vmem:[%s1 + $0x2fc] sm:$0x1] %vm455, %v5823
  %5856 = vst.msk [vmem:[%s1 + $0x31c] sm:$0x1] %vm455, %v5824
  %5857 = vst.msk [vmem:[%s1 + $0x33c] sm:$0x1] %vm455, %v5825
  %5858 = vst.msk [vmem:[%s1 + $0x35c] sm:$0x1] %vm455, %v5826
  %5859 = vst.msk [vmem:[%s1 + $0x37c] sm:$0x1] %vm455, %v5827
  %5860 = vst.msk [vmem:[%s1 + $0x39c] sm:$0x1] %vm455, %v5828
  %5861 = vst.msk [vmem:[%s1 + $0x3bc] sm:$0x1] %vm455, %v5829
  %5862 = vst.msk [vmem:[%s1 + $0x3dc] sm:$0x1] %vm455, %v5830
  %5863 = vst.msk [vmem:[%s1 + $0x3fc] sm:$0x1] %vm455, %v5831
  %v5864 = vld [vmem:[#allocation2 + $0xe] sm:$0x1]
  %v5865 = vld [vmem:[#allocation2 + $0x1e] sm:$0x1]
  %v5866 = vld [vmem:[#allocation2 + $0x2e] sm:$0x1]
  %v5867 = vld [vmem:[#allocation2 + $0x3e] sm:$0x1]
  %v5868 = vld [vmem:[#allocation2 + $0x4e] sm:$0x1]
  %v5869 = vld [vmem:[#allocation2 + $0x5e] sm:$0x1]
  %v5870 = vld [vmem:[#allocation2 + $0x6e] sm:$0x1]
  %v5871 = vld [vmem:[#allocation2 + $0x7e] sm:$0x1]
  %v5872 = vld [vmem:[#allocation2 + $0x8e] sm:$0x1]
  %v5873 = vld [vmem:[#allocation2 + $0x9e] sm:$0x1]
  %v5874 = vld [vmem:[#allocation2 + $0xae] sm:$0x1]
  %v5875 = vld [vmem:[#allocation2 + $0xbe] sm:$0x1]
  %v5876 = vld [vmem:[#allocation2 + $0xce] sm:$0x1]
  %v5877 = vld [vmem:[#allocation2 + $0xde] sm:$0x1]
  %v5878 = vld [vmem:[#allocation2 + $0xee] sm:$0x1]
  %v5879 = vld [vmem:[#allocation2 + $0xfe] sm:$0x1]
  %v5880 = vld [vmem:[#allocation2 + $0x10e] sm:$0x1]
  %v5881 = vld [vmem:[#allocation2 + $0x11e] sm:$0x1]
  %v5882 = vld [vmem:[#allocation2 + $0x12e] sm:$0x1]
  %v5883 = vld [vmem:[#allocation2 + $0x13e] sm:$0x1]
  %v5884 = vld [vmem:[#allocation2 + $0x14e] sm:$0x1]
  %v5885 = vld [vmem:[#allocation2 + $0x15e] sm:$0x1]
  %v5886 = vld [vmem:[#allocation2 + $0x16e] sm:$0x1]
  %v5887 = vld [vmem:[#allocation2 + $0x17e] sm:$0x1]
  %v5888 = vld [vmem:[#allocation2 + $0x18e] sm:$0x1]
  %v5889 = vld [vmem:[#allocation2 + $0x19e] sm:$0x1]
  %v5890 = vld [vmem:[#allocation2 + $0x1ae] sm:$0x1]
  %v5891 = vld [vmem:[#allocation2 + $0x1be] sm:$0x1]
  %v5892 = vld [vmem:[#allocation2 + $0x1ce] sm:$0x1]
  %v5893 = vld [vmem:[#allocation2 + $0x1de] sm:$0x1]
  %v5894 = vld [vmem:[#allocation2 + $0x1ee] sm:$0x1]
  %v5895 = vld [vmem:[#allocation2 + $0x1fe] sm:$0x1]
  %v5896 = vmul.f32 %v5864, 0.75
  %v5897 = vmul.f32 %v5865, 0.75
  %v5898 = vmul.f32 %v5866, 0.75
  %v5899 = vmul.f32 %v5867, 0.75
  %v5900 = vmul.f32 %v5868, 0.75
  %v5901 = vmul.f32 %v5869, 0.75
  %v5902 = vmul.f32 %v5870, 0.75
  %v5903 = vmul.f32 %v5871, 0.75
  %v5904 = vmul.f32 %v5872, 0.75
  %v5905 = vmul.f32 %v5873, 0.75
  %v5906 = vmul.f32 %v5874, 0.75
  %v5907 = vmul.f32 %v5875, 0.75
  %v5908 = vmul.f32 %v5876, 0.75
  %v5909 = vmul.f32 %v5877, 0.75
  %v5910 = vmul.f32 %v5878, 0.75
  %v5911 = vmul.f32 %v5879, 0.75
  %v5912 = vmul.f32 %v5880, 0.75
  %v5913 = vmul.f32 %v5881, 0.75
  %v5914 = vmul.f32 %v5882, 0.75
  %v5915 = vmul.f32 %v5883, 0.75
  %v5916 = vmul.f32 %v5884, 0.75
  %v5917 = vmul.f32 %v5885, 0.75
  %v5918 = vmul.f32 %v5886, 0.75
  %v5919 = vmul.f32 %v5887, 0.75
  %v5920 = vmul.f32 %v5888, 0.75
  %v5921 = vmul.f32 %v5889, 0.75
  %v5922 = vmul.f32 %v5890, 0.75
  %v5923 = vmul.f32 %v5891, 0.75
  %v5924 = vmul.f32 %v5892, 0.75
  %v5925 = vmul.f32 %v5893, 0.75
  %v5926 = vmul.f32 %v5894, 0.75
  %v5927 = vmul.f32 %v5895, 0.75
  %v5928 = vld [vmem:[#allocation2 + $0xf] sm:$0x1]
  %v5929 = vld [vmem:[#allocation2 + $0x1f] sm:$0x1]
  %v5930 = vld [vmem:[#allocation2 + $0x2f] sm:$0x1]
  %v5931 = vld [vmem:[#allocation2 + $0x3f] sm:$0x1]
  %v5932 = vld [vmem:[#allocation2 + $0x4f] sm:$0x1]
  %v5933 = vld [vmem:[#allocation2 + $0x5f] sm:$0x1]
  %v5934 = vld [vmem:[#allocation2 + $0x6f] sm:$0x1]
  %v5935 = vld [vmem:[#allocation2 + $0x7f] sm:$0x1]
  %v5936 = vld [vmem:[#allocation2 + $0x8f] sm:$0x1]
  %v5937 = vld [vmem:[#allocation2 + $0x9f] sm:$0x1]
  %v5938 = vld [vmem:[#allocation2 + $0xaf] sm:$0x1]
  %v5939 = vld [vmem:[#allocation2 + $0xbf] sm:$0x1]
  %v5940 = vld [vmem:[#allocation2 + $0xcf] sm:$0x1]
  %v5941 = vld [vmem:[#allocation2 + $0xdf] sm:$0x1]
  %v5942 = vld [vmem:[#allocation2 + $0xef] sm:$0x1]
  %v5943 = vld [vmem:[#allocation2 + $0xff] sm:$0x1]
  %v5944 = vld [vmem:[#allocation2 + $0x10f] sm:$0x1]
  %v5945 = vld [vmem:[#allocation2 + $0x11f] sm:$0x1]
  %v5946 = vld [vmem:[#allocation2 + $0x12f] sm:$0x1]
  %v5947 = vld [vmem:[#allocation2 + $0x13f] sm:$0x1]
  %v5948 = vld [vmem:[#allocation2 + $0x14f] sm:$0x1]
  %v5949 = vld [vmem:[#allocation2 + $0x15f] sm:$0x1]
  %v5950 = vld [vmem:[#allocation2 + $0x16f] sm:$0x1]
  %v5951 = vld [vmem:[#allocation2 + $0x17f] sm:$0x1]
  %v5952 = vld [vmem:[#allocation2 + $0x18f] sm:$0x1]
  %v5953 = vld [vmem:[#allocation2 + $0x19f] sm:$0x1]
  %v5954 = vld [vmem:[#allocation2 + $0x1af] sm:$0x1]
  %v5955 = vld [vmem:[#allocation2 + $0x1bf] sm:$0x1]
  %v5956 = vld [vmem:[#allocation2 + $0x1cf] sm:$0x1]
  %v5957 = vld [vmem:[#allocation2 + $0x1df] sm:$0x1]
  %v5958 = vld [vmem:[#allocation2 + $0x1ef] sm:$0x1]
  %v5959 = vld [vmem:[#allocation2 + $0x1ff] sm:$0x1]
  %v5960 = vmul.f32 %v5928, 0.25
  %v5961 = vmul.f32 %v5929, 0.25
  %v5962 = vmul.f32 %v5930, 0.25
  %v5963 = vmul.f32 %v5931, 0.25
  %v5964 = vmul.f32 %v5932, 0.25
  %v5965 = vmul.f32 %v5933, 0.25
  %v5966 = vmul.f32 %v5934, 0.25
  %v5967 = vmul.f32 %v5935, 0.25
  %v5968 = vmul.f32 %v5936, 0.25
  %v5969 = vmul.f32 %v5937, 0.25
  %v5970 = vmul.f32 %v5938, 0.25
  %v5971 = vmul.f32 %v5939, 0.25
  %v5972 = vmul.f32 %v5940, 0.25
  %v5973 = vmul.f32 %v5941, 0.25
  %v5974 = vmul.f32 %v5942, 0.25
  %v5975 = vmul.f32 %v5943, 0.25
  %v5976 = vmul.f32 %v5944, 0.25
  %v5977 = vmul.f32 %v5945, 0.25
  %v5978 = vmul.f32 %v5946, 0.25
  %v5979 = vmul.f32 %v5947, 0.25
  %v5980 = vmul.f32 %v5948, 0.25
  %v5981 = vmul.f32 %v5949, 0.25
  %v5982 = vmul.f32 %v5950, 0.25
  %v5983 = vmul.f32 %v5951, 0.25
  %v5984 = vmul.f32 %v5952, 0.25
  %v5985 = vmul.f32 %v5953, 0.25
  %v5986 = vmul.f32 %v5954, 0.25
  %v5987 = vmul.f32 %v5955, 0.25
  %v5988 = vmul.f32 %v5956, 0.25
  %v5989 = vmul.f32 %v5957, 0.25
  %v5990 = vmul.f32 %v5958, 0.25
  %v5991 = vmul.f32 %v5959, 0.25
  %v5992 = vadd.f32 %v5896, %v5960
  %v5993 = vadd.f32 %v5897, %v5961
  %v5994 = vadd.f32 %v5898, %v5962
  %v5995 = vadd.f32 %v5899, %v5963
  %v5996 = vadd.f32 %v5900, %v5964
  %v5997 = vadd.f32 %v5901, %v5965
  %v5998 = vadd.f32 %v5902, %v5966
  %v5999 = vadd.f32 %v5903, %v5967
  %v6000 = vadd.f32 %v5904, %v5968
  %v6001 = vadd.f32 %v5905, %v5969
  %v6002 = vadd.f32 %v5906, %v5970
  %v6003 = vadd.f32 %v5907, %v5971
  %v6004 = vadd.f32 %v5908, %v5972
  %v6005 = vadd.f32 %v5909, %v5973
  %v6006 = vadd.f32 %v5910, %v5974
  %v6007 = vadd.f32 %v5911, %v5975
  %v6008 = vadd.f32 %v5912, %v5976
  %v6009 = vadd.f32 %v5913, %v5977
  %v6010 = vadd.f32 %v5914, %v5978
  %v6011 = vadd.f32 %v5915, %v5979
  %v6012 = vadd.f32 %v5916, %v5980
  %v6013 = vadd.f32 %v5917, %v5981
  %v6014 = vadd.f32 %v5918, %v5982
  %v6015 = vadd.f32 %v5919, %v5983
  %v6016 = vadd.f32 %v5920, %v5984
  %v6017 = vadd.f32 %v5921, %v5985
  %v6018 = vadd.f32 %v5922, %v5986
  %v6019 = vadd.f32 %v5923, %v5987
  %v6020 = vadd.f32 %v5924, %v5988
  %v6021 = vadd.f32 %v5925, %v5989
  %v6022 = vadd.f32 %v5926, %v5990
  %v6023 = vadd.f32 %v5927, %v5991
  %6024 = vst.msk [vmem:[%s1 + $0x1d] sm:$0x1] %vm455, %v5992
  %6025 = vst.msk [vmem:[%s1 + $0x3d] sm:$0x1] %vm455, %v5993
  %6026 = vst.msk [vmem:[%s1 + $0x5d] sm:$0x1] %vm455, %v5994
  %6027 = vst.msk [vmem:[%s1 + $0x7d] sm:$0x1] %vm455, %v5995
  %6028 = vst.msk [vmem:[%s1 + $0x9d] sm:$0x1] %vm455, %v5996
  %6029 = vst.msk [vmem:[%s1 + $0xbd] sm:$0x1] %vm455, %v5997
  %6030 = vst.msk [vmem:[%s1 + $0xdd] sm:$0x1] %vm455, %v5998
  %6031 = vst.msk [vmem:[%s1 + $0xfd] sm:$0x1] %vm455, %v5999
  %6032 = vst.msk [vmem:[%s1 + $0x11d] sm:$0x1] %vm455, %v6000
  %6033 = vst.msk [vmem:[%s1 + $0x13d] sm:$0x1] %vm455, %v6001
  %6034 = vst.msk [vmem:[%s1 + $0x15d] sm:$0x1] %vm455, %v6002
  %6035 = vst.msk [vmem:[%s1 + $0x17d] sm:$0x1] %vm455, %v6003
  %6036 = vst.msk [vmem:[%s1 + $0x19d] sm:$0x1] %vm455, %v6004
  %6037 = vst.msk [vmem:[%s1 + $0x1bd] sm:$0x1] %vm455, %v6005
  %6038 = vst.msk [vmem:[%s1 + $0x1dd] sm:$0x1] %vm455, %v6006
  %6039 = vst.msk [vmem:[%s1 + $0x1fd] sm:$0x1] %vm455, %v6007
  %6040 = vst.msk [vmem:[%s1 + $0x21d] sm:$0x1] %vm455, %v6008
  %6041 = vst.msk [vmem:[%s1 + $0x23d] sm:$0x1] %vm455, %v6009
  %6042 = vst.msk [vmem:[%s1 + $0x25d] sm:$0x1] %vm455, %v6010
  %6043 = vst.msk [vmem:[%s1 + $0x27d] sm:$0x1] %vm455, %v6011
  %6044 = vst.msk [vmem:[%s1 + $0x29d] sm:$0x1] %vm455, %v6012
  %6045 = vst.msk [vmem:[%s1 + $0x2bd] sm:$0x1] %vm455, %v6013
  %6046 = vst.msk [vmem:[%s1 + $0x2dd] sm:$0x1] %vm455, %v6014
  %6047 = vst.msk [vmem:[%s1 + $0x2fd] sm:$0x1] %vm455, %v6015
  %6048 = vst.msk [vmem:[%s1 + $0x31d] sm:$0x1] %vm455, %v6016
  %6049 = vst.msk [vmem:[%s1 + $0x33d] sm:$0x1] %vm455, %v6017
  %6050 = vst.msk [vmem:[%s1 + $0x35d] sm:$0x1] %vm455, %v6018
  %6051 = vst.msk [vmem:[%s1 + $0x37d] sm:$0x1] %vm455, %v6019
  %6052 = vst.msk [vmem:[%s1 + $0x39d] sm:$0x1] %vm455, %v6020
  %6053 = vst.msk [vmem:[%s1 + $0x3bd] sm:$0x1] %vm455, %v6021
  %6054 = vst.msk [vmem:[%s1 + $0x3dd] sm:$0x1] %vm455, %v6022
  %6055 = vst.msk [vmem:[%s1 + $0x3fd] sm:$0x1] %vm455, %v6023
  %v6056 = vld [vmem:[#allocation2 + $0xe] sm:$0x1]
  %v6057 = vld [vmem:[#allocation2 + $0x1e] sm:$0x1]
  %v6058 = vld [vmem:[#allocation2 + $0x2e] sm:$0x1]
  %v6059 = vld [vmem:[#allocation2 + $0x3e] sm:$0x1]
  %v6060 = vld [vmem:[#allocation2 + $0x4e] sm:$0x1]
  %v6061 = vld [vmem:[#allocation2 + $0x5e] sm:$0x1]
  %v6062 = vld [vmem:[#allocation2 + $0x6e] sm:$0x1]
  %v6063 = vld [vmem:[#allocation2 + $0x7e] sm:$0x1]
  %v6064 = vld [vmem:[#allocation2 + $0x8e] sm:$0x1]
  %v6065 = vld [vmem:[#allocation2 + $0x9e] sm:$0x1]
  %v6066 = vld [vmem:[#allocation2 + $0xae] sm:$0x1]
  %v6067 = vld [vmem:[#allocation2 + $0xbe] sm:$0x1]
  %v6068 = vld [vmem:[#allocation2 + $0xce] sm:$0x1]
  %v6069 = vld [vmem:[#allocation2 + $0xde] sm:$0x1]
  %v6070 = vld [vmem:[#allocation2 + $0xee] sm:$0x1]
  %v6071 = vld [vmem:[#allocation2 + $0xfe] sm:$0x1]
  %v6072 = vld [vmem:[#allocation2 + $0x10e] sm:$0x1]
  %v6073 = vld [vmem:[#allocation2 + $0x11e] sm:$0x1]
  %v6074 = vld [vmem:[#allocation2 + $0x12e] sm:$0x1]
  %v6075 = vld [vmem:[#allocation2 + $0x13e] sm:$0x1]
  %v6076 = vld [vmem:[#allocation2 + $0x14e] sm:$0x1]
  %v6077 = vld [vmem:[#allocation2 + $0x15e] sm:$0x1]
  %v6078 = vld [vmem:[#allocation2 + $0x16e] sm:$0x1]
  %v6079 = vld [vmem:[#allocation2 + $0x17e] sm:$0x1]
  %v6080 = vld [vmem:[#allocation2 + $0x18e] sm:$0x1]
  %v6081 = vld [vmem:[#allocation2 + $0x19e] sm:$0x1]
  %v6082 = vld [vmem:[#allocation2 + $0x1ae] sm:$0x1]
  %v6083 = vld [vmem:[#allocation2 + $0x1be] sm:$0x1]
  %v6084 = vld [vmem:[#allocation2 + $0x1ce] sm:$0x1]
  %v6085 = vld [vmem:[#allocation2 + $0x1de] sm:$0x1]
  %v6086 = vld [vmem:[#allocation2 + $0x1ee] sm:$0x1]
  %v6087 = vld [vmem:[#allocation2 + $0x1fe] sm:$0x1]
  %v6088 = vmul.f32 %v6056, 0.25
  %v6089 = vmul.f32 %v6057, 0.25
  %v6090 = vmul.f32 %v6058, 0.25
  %v6091 = vmul.f32 %v6059, 0.25
  %v6092 = vmul.f32 %v6060, 0.25
  %v6093 = vmul.f32 %v6061, 0.25
  %v6094 = vmul.f32 %v6062, 0.25
  %v6095 = vmul.f32 %v6063, 0.25
  %v6096 = vmul.f32 %v6064, 0.25
  %v6097 = vmul.f32 %v6065, 0.25
  %v6098 = vmul.f32 %v6066, 0.25
  %v6099 = vmul.f32 %v6067, 0.25
  %v6100 = vmul.f32 %v6068, 0.25
  %v6101 = vmul.f32 %v6069, 0.25
  %v6102 = vmul.f32 %v6070, 0.25
  %v6103 = vmul.f32 %v6071, 0.25
  %v6104 = vmul.f32 %v6072, 0.25
  %v6105 = vmul.f32 %v6073, 0.25
  %v6106 = vmul.f32 %v6074, 0.25
  %v6107 = vmul.f32 %v6075, 0.25
  %v6108 = vmul.f32 %v6076, 0.25
  %v6109 = vmul.f32 %v6077, 0.25
  %v6110 = vmul.f32 %v6078, 0.25
  %v6111 = vmul.f32 %v6079, 0.25
  %v6112 = vmul.f32 %v6080, 0.25
  %v6113 = vmul.f32 %v6081, 0.25
  %v6114 = vmul.f32 %v6082, 0.25
  %v6115 = vmul.f32 %v6083, 0.25
  %v6116 = vmul.f32 %v6084, 0.25
  %v6117 = vmul.f32 %v6085, 0.25
  %v6118 = vmul.f32 %v6086, 0.25
  %v6119 = vmul.f32 %v6087, 0.25
  %v6120 = vld [vmem:[#allocation2 + $0xf] sm:$0x1]
  %v6121 = vld [vmem:[#allocation2 + $0x1f] sm:$0x1]
  %v6122 = vld [vmem:[#allocation2 + $0x2f] sm:$0x1]
  %v6123 = vld [vmem:[#allocation2 + $0x3f] sm:$0x1]
  %v6124 = vld [vmem:[#allocation2 + $0x4f] sm:$0x1]
  %v6125 = vld [vmem:[#allocation2 + $0x5f] sm:$0x1]
  %v6126 = vld [vmem:[#allocation2 + $0x6f] sm:$0x1]
  %v6127 = vld [vmem:[#allocation2 + $0x7f] sm:$0x1]
  %v6128 = vld [vmem:[#allocation2 + $0x8f] sm:$0x1]
  %v6129 = vld [vmem:[#allocation2 + $0x9f] sm:$0x1]
  %v6130 = vld [vmem:[#allocation2 + $0xaf] sm:$0x1]
  %v6131 = vld [vmem:[#allocation2 + $0xbf] sm:$0x1]
  %v6132 = vld [vmem:[#allocation2 + $0xcf] sm:$0x1]
  %v6133 = vld [vmem:[#allocation2 + $0xdf] sm:$0x1]
  %v6134 = vld [vmem:[#allocation2 + $0xef] sm:$0x1]
  %v6135 = vld [vmem:[#allocation2 + $0xff] sm:$0x1]
  %v6136 = vld [vmem:[#allocation2 + $0x10f] sm:$0x1]
  %v6137 = vld [vmem:[#allocation2 + $0x11f] sm:$0x1]
  %v6138 = vld [vmem:[#allocation2 + $0x12f] sm:$0x1]
  %v6139 = vld [vmem:[#allocation2 + $0x13f] sm:$0x1]
  %v6140 = vld [vmem:[#allocation2 + $0x14f] sm:$0x1]
  %v6141 = vld [vmem:[#allocation2 + $0x15f] sm:$0x1]
  %v6142 = vld [vmem:[#allocation2 + $0x16f] sm:$0x1]
  %v6143 = vld [vmem:[#allocation2 + $0x17f] sm:$0x1]
  %v6144 = vld [vmem:[#allocation2 + $0x18f] sm:$0x1]
  %v6145 = vld [vmem:[#allocation2 + $0x19f] sm:$0x1]
  %v6146 = vld [vmem:[#allocation2 + $0x1af] sm:$0x1]
  %v6147 = vld [vmem:[#allocation2 + $0x1bf] sm:$0x1]
  %v6148 = vld [vmem:[#allocation2 + $0x1cf] sm:$0x1]
  %v6149 = vld [vmem:[#allocation2 + $0x1df] sm:$0x1]
  %v6150 = vld [vmem:[#allocation2 + $0x1ef] sm:$0x1]
  %v6151 = vld [vmem:[#allocation2 + $0x1ff] sm:$0x1]
  %v6152 = vmul.f32 %v6120, 0.75
  %v6153 = vmul.f32 %v6121, 0.75
  %v6154 = vmul.f32 %v6122, 0.75
  %v6155 = vmul.f32 %v6123, 0.75
  %v6156 = vmul.f32 %v6124, 0.75
  %v6157 = vmul.f32 %v6125, 0.75
  %v6158 = vmul.f32 %v6126, 0.75
  %v6159 = vmul.f32 %v6127, 0.75
  %v6160 = vmul.f32 %v6128, 0.75
  %v6161 = vmul.f32 %v6129, 0.75
  %v6162 = vmul.f32 %v6130, 0.75
  %v6163 = vmul.f32 %v6131, 0.75
  %v6164 = vmul.f32 %v6132, 0.75
  %v6165 = vmul.f32 %v6133, 0.75
  %v6166 = vmul.f32 %v6134, 0.75
  %v6167 = vmul.f32 %v6135, 0.75
  %v6168 = vmul.f32 %v6136, 0.75
  %v6169 = vmul.f32 %v6137, 0.75
  %v6170 = vmul.f32 %v6138, 0.75
  %v6171 = vmul.f32 %v6139, 0.75
  %v6172 = vmul.f32 %v6140, 0.75
  %v6173 = vmul.f32 %v6141, 0.75
  %v6174 = vmul.f32 %v6142, 0.75
  %v6175 = vmul.f32 %v6143, 0.75
  %v6176 = vmul.f32 %v6144, 0.75
  %v6177 = vmul.f32 %v6145, 0.75
  %v6178 = vmul.f32 %v6146, 0.75
  %v6179 = vmul.f32 %v6147, 0.75
  %v6180 = vmul.f32 %v6148, 0.75
  %v6181 = vmul.f32 %v6149, 0.75
  %v6182 = vmul.f32 %v6150, 0.75
  %v6183 = vmul.f32 %v6151, 0.75
  %v6184 = vadd.f32 %v6088, %v6152
  %v6185 = vadd.f32 %v6089, %v6153
  %v6186 = vadd.f32 %v6090, %v6154
  %v6187 = vadd.f32 %v6091, %v6155
  %v6188 = vadd.f32 %v6092, %v6156
  %v6189 = vadd.f32 %v6093, %v6157
  %v6190 = vadd.f32 %v6094, %v6158
  %v6191 = vadd.f32 %v6095, %v6159
  %v6192 = vadd.f32 %v6096, %v6160
  %v6193 = vadd.f32 %v6097, %v6161
  %v6194 = vadd.f32 %v6098, %v6162
  %v6195 = vadd.f32 %v6099, %v6163
  %v6196 = vadd.f32 %v6100, %v6164
  %v6197 = vadd.f32 %v6101, %v6165
  %v6198 = vadd.f32 %v6102, %v6166
  %v6199 = vadd.f32 %v6103, %v6167
  %v6200 = vadd.f32 %v6104, %v6168
  %v6201 = vadd.f32 %v6105, %v6169
  %v6202 = vadd.f32 %v6106, %v6170
  %v6203 = vadd.f32 %v6107, %v6171
  %v6204 = vadd.f32 %v6108, %v6172
  %v6205 = vadd.f32 %v6109, %v6173
  %v6206 = vadd.f32 %v6110, %v6174
  %v6207 = vadd.f32 %v6111, %v6175
  %v6208 = vadd.f32 %v6112, %v6176
  %v6209 = vadd.f32 %v6113, %v6177
  %v6210 = vadd.f32 %v6114, %v6178
  %v6211 = vadd.f32 %v6115, %v6179
  %v6212 = vadd.f32 %v6116, %v6180
  %v6213 = vadd.f32 %v6117, %v6181
  %v6214 = vadd.f32 %v6118, %v6182
  %v6215 = vadd.f32 %v6119, %v6183
  %6216 = vst.msk [vmem:[%s1 + $0x1e] sm:$0x1] %vm455, %v6184
  %6217 = vst.msk [vmem:[%s1 + $0x3e] sm:$0x1] %vm455, %v6185
  %6218 = vst.msk [vmem:[%s1 + $0x5e] sm:$0x1] %vm455, %v6186
  %6219 = vst.msk [vmem:[%s1 + $0x7e] sm:$0x1] %vm455, %v6187
  %6220 = vst.msk [vmem:[%s1 + $0x9e] sm:$0x1] %vm455, %v6188
  %6221 = vst.msk [vmem:[%s1 + $0xbe] sm:$0x1] %vm455, %v6189
  %6222 = vst.msk [vmem:[%s1 + $0xde] sm:$0x1] %vm455, %v6190
  %6223 = vst.msk [vmem:[%s1 + $0xfe] sm:$0x1] %vm455, %v6191
  %6224 = vst.msk [vmem:[%s1 + $0x11e] sm:$0x1] %vm455, %v6192
  %6225 = vst.msk [vmem:[%s1 + $0x13e] sm:$0x1] %vm455, %v6193
  %6226 = vst.msk [vmem:[%s1 + $0x15e] sm:$0x1] %vm455, %v6194
  %6227 = vst.msk [vmem:[%s1 + $0x17e] sm:$0x1] %vm455, %v6195
  %6228 = vst.msk [vmem:[%s1 + $0x19e] sm:$0x1] %vm455, %v6196
  %6229 = vst.msk [vmem:[%s1 + $0x1be] sm:$0x1] %vm455, %v6197
  %6230 = vst.msk [vmem:[%s1 + $0x1de] sm:$0x1] %vm455, %v6198
  %6231 = vst.msk [vmem:[%s1 + $0x1fe] sm:$0x1] %vm455, %v6199
  %6232 = vst.msk [vmem:[%s1 + $0x21e] sm:$0x1] %vm455, %v6200
  %6233 = vst.msk [vmem:[%s1 + $0x23e] sm:$0x1] %vm455, %v6201
  %6234 = vst.msk [vmem:[%s1 + $0x25e] sm:$0x1] %vm455, %v6202
  %6235 = vst.msk [vmem:[%s1 + $0x27e] sm:$0x1] %vm455, %v6203
  %6236 = vst.msk [vmem:[%s1 + $0x29e] sm:$0x1] %vm455, %v6204
  %6237 = vst.msk [vmem:[%s1 + $0x2be] sm:$0x1] %vm455, %v6205
  %6238 = vst.msk [vmem:[%s1 + $0x2de] sm:$0x1] %vm455, %v6206
  %6239 = vst.msk [vmem:[%s1 + $0x2fe] sm:$0x1] %vm455, %v6207
  %6240 = vst.msk [vmem:[%s1 + $0x31e] sm:$0x1] %vm455, %v6208
  %6241 = vst.msk [vmem:[%s1 + $0x33e] sm:$0x1] %vm455, %v6209
  %6242 = vst.msk [vmem:[%s1 + $0x35e] sm:$0x1] %vm455, %v6210
  %6243 = vst.msk [vmem:[%s1 + $0x37e] sm:$0x1] %vm455, %v6211
  %6244 = vst.msk [vmem:[%s1 + $0x39e] sm:$0x1] %vm455, %v6212
  %6245 = vst.msk [vmem:[%s1 + $0x3be] sm:$0x1] %vm455, %v6213
  %6246 = vst.msk [vmem:[%s1 + $0x3de] sm:$0x1] %vm455, %v6214
  %6247 = vst.msk [vmem:[%s1 + $0x3fe] sm:$0x1] %vm455, %v6215
  %v6248 = vld [vmem:[#allocation2 + $0xf] sm:$0x1]
  %v6249 = vld [vmem:[#allocation2 + $0x1f] sm:$0x1]
  %v6250 = vld [vmem:[#allocation2 + $0x2f] sm:$0x1]
  %v6251 = vld [vmem:[#allocation2 + $0x3f] sm:$0x1]
  %v6252 = vld [vmem:[#allocation2 + $0x4f] sm:$0x1]
  %v6253 = vld [vmem:[#allocation2 + $0x5f] sm:$0x1]
  %v6254 = vld [vmem:[#allocation2 + $0x6f] sm:$0x1]
  %v6255 = vld [vmem:[#allocation2 + $0x7f] sm:$0x1]
  %v6256 = vld [vmem:[#allocation2 + $0x8f] sm:$0x1]
  %v6257 = vld [vmem:[#allocation2 + $0x9f] sm:$0x1]
  %v6258 = vld [vmem:[#allocation2 + $0xaf] sm:$0x1]
  %v6259 = vld [vmem:[#allocation2 + $0xbf] sm:$0x1]
  %v6260 = vld [vmem:[#allocation2 + $0xcf] sm:$0x1]
  %v6261 = vld [vmem:[#allocation2 + $0xdf] sm:$0x1]
  %v6262 = vld [vmem:[#allocation2 + $0xef] sm:$0x1]
  %v6263 = vld [vmem:[#allocation2 + $0xff] sm:$0x1]
  %v6264 = vld [vmem:[#allocation2 + $0x10f] sm:$0x1]
  %v6265 = vld [vmem:[#allocation2 + $0x11f] sm:$0x1]
  %v6266 = vld [vmem:[#allocation2 + $0x12f] sm:$0x1]
  %v6267 = vld [vmem:[#allocation2 + $0x13f] sm:$0x1]
  %v6268 = vld [vmem:[#allocation2 + $0x14f] sm:$0x1]
  %v6269 = vld [vmem:[#allocation2 + $0x15f] sm:$0x1]
  %v6270 = vld [vmem:[#allocation2 + $0x16f] sm:$0x1]
  %v6271 = vld [vmem:[#allocation2 + $0x17f] sm:$0x1]
  %v6272 = vld [vmem:[#allocation2 + $0x18f] sm:$0x1]
  %v6273 = vld [vmem:[#allocation2 + $0x19f] sm:$0x1]
  %v6274 = vld [vmem:[#allocation2 + $0x1af] sm:$0x1]
  %v6275 = vld [vmem:[#allocation2 + $0x1bf] sm:$0x1]
  %v6276 = vld [vmem:[#allocation2 + $0x1cf] sm:$0x1]
  %v6277 = vld [vmem:[#allocation2 + $0x1df] sm:$0x1]
  %v6278 = vld [vmem:[#allocation2 + $0x1ef] sm:$0x1]
  %v6279 = vld [vmem:[#allocation2 + $0x1ff] sm:$0x1]
  %6280 = vst.msk [vmem:[%s1 + $0x1f] sm:$0x1] %vm455, %v6248
  %6281 = vst.msk [vmem:[%s1 + $0x3f] sm:$0x1] %vm455, %v6249
  %6282 = vst.msk [vmem:[%s1 + $0x5f] sm:$0x1] %vm455, %v6250
  %6283 = vst.msk [vmem:[%s1 + $0x7f] sm:$0x1] %vm455, %v6251
  %6284 = vst.msk [vmem:[%s1 + $0x9f] sm:$0x1] %vm455, %v6252
  %6285 = vst.msk [vmem:[%s1 + $0xbf] sm:$0x1] %vm455, %v6253
  %6286 = vst.msk [vmem:[%s1 + $0xdf] sm:$0x1] %vm455, %v6254
  %6287 = vst.msk [vmem:[%s1 + $0xff] sm:$0x1] %vm455, %v6255
  %6288 = vst.msk [vmem:[%s1 + $0x11f] sm:$0x1] %vm455, %v6256
  %6289 = vst.msk [vmem:[%s1 + $0x13f] sm:$0x1] %vm455, %v6257
  %6290 = vst.msk [vmem:[%s1 + $0x15f] sm:$0x1] %vm455, %v6258
  %6291 = vst.msk [vmem:[%s1 + $0x17f] sm:$0x1] %vm455, %v6259
  %6292 = vst.msk [vmem:[%s1 + $0x19f] sm:$0x1] %vm455, %v6260
  %6293 = vst.msk [vmem:[%s1 + $0x1bf] sm:$0x1] %vm455, %v6261
  %6294 = vst.msk [vmem:[%s1 + $0x1df] sm:$0x1] %vm455, %v6262
  %6295 = vst.msk [vmem:[%s1 + $0x1ff] sm:$0x1] %vm455, %v6263
  %6296 = vst.msk [vmem:[%s1 + $0x21f] sm:$0x1] %vm455, %v6264
  %6297 = vst.msk [vmem:[%s1 + $0x23f] sm:$0x1] %vm455, %v6265
  %6298 = vst.msk [vmem:[%s1 + $0x25f] sm:$0x1] %vm455, %v6266
  %6299 = vst.msk [vmem:[%s1 + $0x27f] sm:$0x1] %vm455, %v6267
  %6300 = vst.msk [vmem:[%s1 + $0x29f] sm:$0x1] %vm455, %v6268
  %6301 = vst.msk [vmem:[%s1 + $0x2bf] sm:$0x1] %vm455, %v6269
  %6302 = vst.msk [vmem:[%s1 + $0x2df] sm:$0x1] %vm455, %v6270
  %6303 = vst.msk [vmem:[%s1 + $0x2ff] sm:$0x1] %vm455, %v6271
  %6304 = vst.msk [vmem:[%s1 + $0x31f] sm:$0x1] %vm455, %v6272
  %6305 = vst.msk [vmem:[%s1 + $0x33f] sm:$0x1] %vm455, %v6273
  %6306 = vst.msk [vmem:[%s1 + $0x35f] sm:$0x1] %vm455, %v6274
  %6307 = vst.msk [vmem:[%s1 + $0x37f] sm:$0x1] %vm455, %v6275
  %6308 = vst.msk [vmem:[%s1 + $0x39f] sm:$0x1] %vm455, %v6276
  %6309 = vst.msk [vmem:[%s1 + $0x3bf] sm:$0x1] %vm455, %v6277
  %6310 = vst.msk [vmem:[%s1 + $0x3df] sm:$0x1] %vm455, %v6278
  %6311 = vst.msk [vmem:[%s1 + $0x3ff] sm:$0x1] %vm455, %v6279
  // Predicated region
  $region6: #{interpolate_bilinear.1} parent=0 // pred_check
    _
  $region7: #{interpolate_bilinear.1} parent=0 // pred_check_branch
    %6313 = sbr.rel (0) target = $region9
  $region8: #{interpolate_bilinear.1} parent=0 // pred_region
    _
  $region9: #{interpolate_bilinear.1} parent=0 // pred_fallthru
    _
  // Predicated region
  $region10: #{interpolate_bilinear.1} parent=0 // pred_check
    _
  $region11: #{interpolate_bilinear.1} parent=0 // pred_check_branch
    %6315 = sbr.rel (0) target = $region13
  $region12: #{interpolate_bilinear.1} parent=0 // pred_region
    _
  $region13: #{interpolate_bilinear.1} parent=0 // pred_fallthru
    _

</llo_original>
